<compile_context>
chip_gen: v7x
topology: tpu7x:2x2x1
jax: 0.10.0
libtpu: 0.0.40
codegen_flags: <defaults>
</compile_context>

<pallas_src>
import jax
import jax.numpy as jnp
from jax.experimental import pallas as pl
from jax.experimental.pallas import tpu as pltpu

f32 = jnp.float32
bf16 = jnp.bfloat16

A2_MARGIN = 24   # >= WP2 + 1 = 17, multiple of 8
A3_MARGIN = 16   # >= WP3 + 1 = 9,  multiple of 8


# ----------------------------------------------------------------------------
# Fused whole-network kernel (built per (TB, Bp) at trace time)
# ----------------------------------------------------------------------------

def _build_mnist_call(TB, Bp):
    assert TB % 4 == 0 and Bp % TB == 0
    G = TB // 4                    # lane groups per grid step (4 images / group)
    S = Bp // TB                   # grid steps over the batch
    IMG1, WP1 = 784, 28            # stg1 layout: 28x28, no pad ring (host im2col)
    IMG2, WP2 = 256, 16            # a2/stg2: 14x14 real + 2 trailing pad rows/cols
    IMG3, WP3 = 64, 8              # a3/stg3: 7x7 real + 1 trailing pad row/col
    M1, M2, M3 = G * IMG1, G * IMG2, G * IMG3

    def kernel(x_ref, w1_ref, b1_ref, w2_ref, b2_ref, w3_ref, b3_ref,
               wf1_ref, bf1_ref, wf4_ref, bf4_ref, out_ref,
               a2, a3, stg, cw, p3):

        # Zero the conv-input scratch: pad ring + margins must be 0, interiors
        # are fully overwritten by the pool stages.  Done every step so the
        # kernel stays correct when the batch grid is split across TensorCores.
        a2[...] = jnp.zeros(a2.shape, a2.dtype)
        a3[...] = jnp.zeros(a3.shape, a3.dtype)

        # ---- generic 3x3 conv (9 per-tap (m,128)@(128,128) MXU matmuls) ------
        def conv_tanh(src, margin, wp, m, w_ref, b_ref):
            acc = b_ref[...] + jnp.zeros((m, 128), f32)
            for dh in range(3):
                for dw in range(3):
                    shift = (dh - 1) * wp + (dw - 1)
                    slab = src[pl.ds(margin + shift, m), :]        # (m,128) bf16
                    acc = acc + jnp.dot(slab, w_ref[3 * dh + dw],
                                        preferred_element_type=f32)
            return jnp.tanh(acc)

        # ---- generic 2x2 max-pool (floor mode), vectorized -------------------
        #  1) horizontal pair-max: two global stride-2 reads + whole-slab max
        #     (row pitch is even -> pairs never straddle rows or images),
        #  2) per (group, output row): vertical pair-max of two contiguous
        #     slabs + one 8-aligned contiguous store into the next stage.
        def pool(m_src, img_src, wp_src, h_out, w_out, dst, dst_off, dst_img, dst_wp):
            mc = m_src // 2
            cw[0:mc, :] = jnp.maximum(stg[pl.ds(0, mc, stride=2), :],
                                      stg[pl.ds(1, mc, stride=2), :])
            half_img, half_wp = img_src // 2, wp_src // 2
            for g in range(G):
                for ho in range(h_out):
                    s = g * half_img + 2 * ho * half_wp
                    row = jnp.maximum(cw[pl.ds(s, w_out), :],
                                      cw[pl.ds(s + half_wp, w_out), :])
                    d = dst_off + g * dst_img + ho * dst_wp
                    dst[pl.ds(d, w_out), :] = row.astype(dst.dtype)

        # ---- stage 1: conv1 (1 -> 32) as one im2col matmul per lane group ----
        # x rows: (g, h*28+w); lanes: 4 images x 16 taps (9 real + 7 zero pad).
        for g in range(G):
            y = jnp.dot(x_ref[g * IMG1:(g + 1) * IMG1, :], w1_ref[...],
                        preferred_element_type=f32)
            stg[g * IMG1:(g + 1) * IMG1, :] = jnp.tanh(y + b1_ref[...])

        # ---- pool1 -> conv2 -> pool2 -> conv3 -> pool3 ------------------------
        pool(M1, IMG1, WP1, 14, 14, a2, A2_MARGIN, IMG2, WP2)
        stg[0:M2, :] = conv_tanh(a2, A2_MARGIN, WP2, M2, w2_ref, b2_ref)
        pool(M2, IMG2, WP2, 7, 7, a3, A3_MARGIN, IMG3, WP3)
        stg[0:M3, :] = conv_tanh(a3, A3_MARGIN, WP3, M3, w3_ref, b3_ref)
        pool(M3, IMG3, WP3, 3, 3, p3, 0, 9, 3)

        # ---- fc1 (288 -> 128) + tanh + fc4 (128 -> 10) ------------------------
        # Decomposed over 9 spatial positions x 4 image slots; the slot/lane
        # selection and torch.flatten ordering live in the wf1 weight repack.
        accs = [bf1_ref[...] + jnp.zeros((G, 128), f32) for _ in range(4)]
        for p in range(9):
            xp = p3[pl.ds(p, G, stride=9), :].astype(bf16)          # (G,128)
            for j in range(4):
                accs[j] = accs[j] + jnp.dot(xp, wf1_ref[9 * j + p],
                                            preferred_element_type=f32)
        for j in range(4):
            h = jnp.tanh(accs[j]).astype(bf16)
            logits = jnp.dot(h, wf4_ref[...],
                             preferred_element_type=f32) + bf4_ref[...]
            out_ref[pl.ds(j * G, G), :] = logits.astype(out_ref.dtype)

    def wspec(shape):
        return pl.BlockSpec(shape, lambda i: (0,) * len(shape))

    return pl.pallas_call(
        kernel,
        out_shape=jax.ShapeDtypeStruct((Bp, 10), f32),
        grid=(S,),
        in_specs=[
            pl.BlockSpec((G * IMG1, 64), lambda i: (i, 0)),  # packed im2col input
            wspec((64, 128)),        # conv1 weight (4-slot block, taps padded to 16)
            wspec((1, 128)),         # conv1 bias (tiled x4 image slots)
            wspec((9, 128, 128)),    # conv2 weight (per-tap block-diagonal)
            wspec((1, 128)),
            wspec((9, 128, 128)),    # conv3 weight
            wspec((1, 128)),
            wspec((36, 128, 128)),   # fc1 weight (slot/position-selective)
            wspec((1, 128)),
            wspec((128, 10)),        # fc4 weight
            wspec((1, 10)),
        ],
        out_specs=pl.BlockSpec((TB, 10), lambda i: (i, 0)),
        scratch_shapes=[
            pltpu.VMEM((2 * A2_MARGIN + M2, 128), bf16),   # a2: padded conv2 input
            pltpu.VMEM((2 * A3_MARGIN + M3, 128), bf16),   # a3: padded conv3 input
            pltpu.VMEM((M1, 128), f32),                    # stg: conv outputs
            pltpu.VMEM((M1 // 2, 128), f32),               # cw: pool h-compacted
            pltpu.VMEM((G * 9, 128), f32),                 # p3: pooled 3x3x32
        ],
        compiler_params=pltpu.CompilerParams(
            dimension_semantics=("parallel",),
            vmem_limit_bytes=48 * 1024 * 1024,
        ),
    )


# ----------------------------------------------------------------------------
# Parameters (PyTorch layouts) + one-time repack for the fused kernel
# ----------------------------------------------------------------------------

def init_params(key):
    ks = jax.random.split(key, 10)

    def conv(kw, kb, cin, cout):
        w = jax.random.normal(kw, (cout, cin, 3, 3), f32) * 0.1
        b = jax.random.normal(kb, (cout,), f32) * 0.1
        return w, b

    c1w, c1b = conv(ks[0], ks[1], 1, 32)
    c2w, c2b = conv(ks[2], ks[3], 32, 32)
    c3w, c3b = conv(ks[4], ks[5], 32, 32)
    f1w = jax.random.normal(ks[6], (128, 288), f32) * 0.05
    f1b = jax.random.normal(ks[7], (128,), f32) * 0.05
    f4w = jax.random.normal(ks[8], (10, 128), f32) * 0.05
    f4b = jax.random.normal(ks[9], (10,), f32) * 0.05
    return dict(c1w=c1w, c1b=c1b, c2w=c2w, c2b=c2b, c3w=c3w, c3b=c3b,
                f1w=f1w, f1b=f1b, f4w=f4w, f4b=f4b)


def pack_params(P):
    def conv_blockdiag(w):               # torch OIHW (32,32,3,3) -> (9,128,128)
        k = jnp.transpose(w, (2, 3, 1, 0)).reshape(9, 32, 32)     # (tap, ci, co)
        wbd = jnp.zeros((9, 128, 128), f32)
        for j in range(4):
            wbd = wbd.at[:, 32 * j:32 * (j + 1), 32 * j:32 * (j + 1)].set(k)
        return wbd.astype(bf16)

    def tile_bias(b):                    # (32,) -> (1,128): one copy per image slot
        return jnp.tile(b, 4).reshape(1, 128).astype(f32)

    # conv1 (Cin=1): 9 im2col taps padded to 16, x 4 image slots -> (64,128).
    k1 = jnp.pad(P["c1w"].reshape(32, 9).T, ((0, 7), (0, 0)))     # (16, 32)
    w1c = jnp.zeros((64, 128), f32)
    for j in range(4):
        w1c = w1c.at[16 * j:16 * (j + 1), 32 * j:32 * (j + 1)].set(k1)

    # fc1: torch (128, 288), flatten order f = c*9 + (h*3+w).  Repacked into 36
    # slot/position-selective (128,128) matrices: wf1[j*9+p, 32j+c, out].
    blk = P["f1w"].T.reshape(32, 9, 128).transpose(1, 0, 2)       # (p, c, out)
    wf1 = jnp.zeros((4, 9, 128, 128), f32)
    for j in range(4):
        wf1 = wf1.at[j, :, 32 * j:32 * (j + 1), :].set(blk)

    return dict(
        w1c=w1c.astype(bf16), b1=tile_bias(P["c1b"]),
        w2=conv_blockdiag(P["c2w"]), b2=tile_bias(P["c2b"]),
        w3=conv_blockdiag(P["c3w"]), b3=tile_bias(P["c3b"]),
        wf1=wf1.reshape(36, 128, 128).astype(bf16),
        bf1=P["f1b"].reshape(1, 128).astype(f32),
        wf4=P["f4w"].T.astype(bf16),
        bf4=P["f4b"].reshape(1, 10).astype(f32),
    )


# ----------------------------------------------------------------------------
# Forward pass (matches MNIST.forward; no softmax in forward)
# ----------------------------------------------------------------------------

def _choose_tiling(B):
    if B <= 8:
        TB = max(4, -(-B // 4) * 4)
        return TB, TB
    TB = min(32, max(8, ((B // 2) // 8) * 8))   # >= 2 grid steps (v7x megacore)
    return TB, -(-B // TB) * TB


def _pack_inputs(x, TB, Bp):
    # (B,1,28,28) -> (Bp/4 * 784, 64) bf16: 9-tap im2col (padded to 16 taps),
    # 4 images per 64-lane group.  Pure layout glue, done once per forward.
    B = x.shape[0]
    G, S = TB // 4, Bp // TB
    img = x[:, 0].astype(f32)
    if Bp > B:
        img = jnp.pad(img, ((0, Bp - B), (0, 0), (0, 0)))
    padded = jnp.pad(img, ((0, 0), (1, 1), (1, 1)))                       # (Bp,30,30)
    taps = jnp.stack([padded[:, dh:dh + 28, dw:dw + 28]
                      for dh in range(3) for dw in range(3)], axis=-1)    # (Bp,28,28,9)
    taps = jnp.pad(taps, ((0, 0), (0, 0), (0, 0), (0, 7)))                # taps 9 -> 16
    taps = taps.reshape(S, 4, G, 784, 16)       # batch index = i*TB + j*G + g
    taps = taps.transpose(0, 2, 3, 1, 4).reshape(S * G * 784, 64)
    return taps.astype(bf16)


@jax.jit
def mnist_forward(x, kp):
    B = x.shape[0]
    TB, Bp = _choose_tiling(B)
    xp = _pack_inputs(x, TB, Bp)
    out = _build_mnist_call(TB, Bp)(
        xp, kp["w1c"], kp["b1"], kp["w2"], kp["b2"], kp["w3"], kp["b3"],
        kp["wf1"], kp["bf1"], kp["wf4"], kp["bf4"])
    return out[:B]


# ----------------------------------------------------------------------------
# Pure-JAX f32 reference (for a tolerance check; kernel uses bf16 matmuls)
# ----------------------------------------------------------------------------

def ref_forward(x, P):
    hi = jax.lax.Precision.HIGHEST

    def conv(h, w, b):
        y = jax.lax.conv_general_dilated(
            h, w, (1, 1), ((1, 1), (1, 1)),
            dimension_numbers=("NCHW", "OIHW", "NCHW"), precision=hi)
        return y + b[None, :, None, None]

    def pool(h):
        return jax.lax.reduce_window(h, -jnp.inf, jax.lax.max,
                                     (1, 1, 2, 2), (1, 1, 2, 2), "VALID")

    h = x.astype(f32)
    h = jnp.tanh(conv(h, P["c1w"], P["c1b"]))
    h = jnp.tanh(conv(pool(h), P["c2w"], P["c2b"]))
    h = jnp.tanh(conv(pool(h), P["c3w"], P["c3b"]))
    h = pool(h).reshape(x.shape[0], -1)                   # NCHW flatten -> (B,288)
    h = jnp.tanh(jnp.dot(h, P["f1w"].T, precision=hi) + P["f1b"])
    return jnp.dot(h, P["f4w"].T, precision=hi) + P["f4b"]


if __name__ == "__main__":
    key = jax.random.PRNGKey(0)
    pkey, xkey = jax.random.split(key)
    params = init_params(pkey)
    kparams = pack_params(params)

    x = jax.random.normal(xkey, (2, 1, 28, 28), f32)      # NCHW, like PyTorch
    out = jax.block_until_ready(mnist_forward(x, kparams))

    assert out.shape == (2, 10) and bool(jnp.all(jnp.isfinite(out)))
    # bf16 conv/fc matmuls deviate slightly from the f32 reference (~1e-2).
    ref = ref_forward(x, params)
    err = float(jnp.max(jnp.abs(out - ref)))
    assert err < 0.12, f"kernel deviates from f32 reference by {err}"
    print("KERNEL_OK")
</pallas_src>

<mosaic_0001>
module attributes {stable_mosaic.version = 11 : i64} {
  func.func @kernel(%arg0: i32, %arg1: memref<784x64xbf16, #tpu.memory_space<vmem>>, %arg2: memref<64x128xbf16, #tpu.memory_space<vmem>>, %arg3: memref<1x128xf32, #tpu.memory_space<vmem>>, %arg4: memref<9x128x128xbf16, #tpu.memory_space<vmem>>, %arg5: memref<1x128xf32, #tpu.memory_space<vmem>>, %arg6: memref<9x128x128xbf16, #tpu.memory_space<vmem>>, %arg7: memref<1x128xf32, #tpu.memory_space<vmem>>, %arg8: memref<36x128x128xbf16, #tpu.memory_space<vmem>>, %arg9: memref<1x128xf32, #tpu.memory_space<vmem>>, %arg10: memref<128x10xbf16, #tpu.memory_space<vmem>>, %arg11: memref<1x10xf32, #tpu.memory_space<vmem>>, %arg12: memref<4x10xf32, #tpu.memory_space<vmem>>, %arg13: memref<304x128xbf16, #tpu.memory_space<vmem>>, %arg14: memref<96x128xbf16, #tpu.memory_space<vmem>>, %arg15: memref<784x128xf32, #tpu.memory_space<vmem>>, %arg16: memref<392x128xf32, #tpu.memory_space<vmem>>, %arg17: memref<9x128xf32, #tpu.memory_space<vmem>>) attributes {dimension_semantics = [#tpu.dimension_semantics<parallel>], iteration_bounds = array<i64: 1>, scalar_prefetch = 0 : i64, scratch_operands = 5 : i64, tpu.core_type = #tpu.core_type<tc>, window_params = [{transform_indices = @transform_0, window_bounds = array<i64: 784, 64>}, {pipeline_mode = #tpu.pipeline_mode<synchronous>, transform_indices = @transform_1, window_bounds = array<i64: 64, 128>}, {pipeline_mode = #tpu.pipeline_mode<synchronous>, transform_indices = @transform_2, window_bounds = array<i64: 1, 128>}, {pipeline_mode = #tpu.pipeline_mode<synchronous>, transform_indices = @transform_3, window_bounds = array<i64: 9, 128, 128>}, {pipeline_mode = #tpu.pipeline_mode<synchronous>, transform_indices = @transform_4, window_bounds = array<i64: 1, 128>}, {pipeline_mode = #tpu.pipeline_mode<synchronous>, transform_indices = @transform_5, window_bounds = array<i64: 9, 128, 128>}, {pipeline_mode = #tpu.pipeline_mode<synchronous>, transform_indices = @transform_6, window_bounds = array<i64: 1, 128>}, {pipeline_mode = #tpu.pipeline_mode<synchronous>, transform_indices = @transform_7, window_bounds = array<i64: 36, 128, 128>}, {pipeline_mode = #tpu.pipeline_mode<synchronous>, transform_indices = @transform_8, window_bounds = array<i64: 1, 128>}, {pipeline_mode = #tpu.pipeline_mode<synchronous>, transform_indices = @transform_9, window_bounds = array<i64: 128, 10>}, {pipeline_mode = #tpu.pipeline_mode<synchronous>, transform_indices = @transform_10, window_bounds = array<i64: 1, 10>}, {transform_indices = @transform_11, window_bounds = array<i64: 4, 10>}]} {
    %cst = arith.constant 0.000000e+00 : bf16
    %0 = vector.broadcast %cst : bf16 to vector<304x128xbf16>
    %c0 = arith.constant 0 : index
    %c0_0 = arith.constant 0 : index
    %1 = vector.load %arg13[%c0, %c0_0] : memref<304x128xbf16, #tpu.memory_space<vmem>>, vector<304x128xbf16>
    tpu.vector_store %arg13[%c0, %c0_0], %0 {strides = array<i32>} : memref<304x128xbf16, #tpu.memory_space<vmem>>, vector<304x128xbf16>,
    %cst_1 = arith.constant 0.000000e+00 : bf16
    %2 = vector.broadcast %cst_1 : bf16 to vector<96x128xbf16>
    %c0_2 = arith.constant 0 : index
    %c0_3 = arith.constant 0 : index
    %3 = vector.load %arg14[%c0_2, %c0_3] : memref<96x128xbf16, #tpu.memory_space<vmem>>, vector<96x128xbf16>
    tpu.vector_store %arg14[%c0_2, %c0_3], %2 {strides = array<i32>} : memref<96x128xbf16, #tpu.memory_space<vmem>>, vector<96x128xbf16>,
    %c0_4 = arith.constant 0 : index
    %c0_5 = arith.constant 0 : index
    %4 = vector.load %arg1[%c0_4, %c0_5] : memref<784x64xbf16, #tpu.memory_space<vmem>>, vector<784x64xbf16>
    %c0_6 = arith.constant 0 : index
    %c0_7 = arith.constant 0 : index
    %5 = vector.load %arg2[%c0_6, %c0_7] : memref<64x128xbf16, #tpu.memory_space<vmem>>, vector<64x128xbf16>
    %cst_8 = arith.constant dense<0.000000e+00> : vector<784x128xf32>
    %6 = tpu.matmul %4, %5, %cst_8 {dimension_numbers = #tpu.dot_dimension_numbers<[1], [0], [0], [1], [0, 0, 1, 1], [], []>} : vector<784x64xbf16>, vector<64x128xbf16>, vector<784x128xf32> -> vector<784x128xf32>
    %c0_9 = arith.constant 0 : index
    %c0_10 = arith.constant 0 : index
    %7 = vector.load %arg3[%c0_9, %c0_10] : memref<1x128xf32, #tpu.memory_space<vmem>>, vector<1x128xf32>
    %8 = vector.broadcast %7 : vector<1x128xf32> to vector<784x128xf32>
    %9 = arith.addf %6, %8 : vector<784x128xf32>
    %10 = math.tanh %9 : vector<784x128xf32>
    %c0_11 = arith.constant 0 : index
    %c0_12 = arith.constant 0 : index
    %11 = vector.load %arg15[%c0_11, %c0_12] : memref<784x128xf32, #tpu.memory_space<vmem>>, vector<784x128xf32>
    tpu.vector_store %arg15[%c0_11, %c0_12], %10 {strides = array<i32>} : memref<784x128xf32, #tpu.memory_space<vmem>>, vector<784x128xf32>,
    %c0_13 = arith.constant 0 : index
    %c0_14 = arith.constant 0 : index
    %12 = tpu.strided_load %arg15[%c0_13, %c0_14] {strides = array<i32: 2, 1>} : memref<784x128xf32, #tpu.memory_space<vmem>>, vector<392x128xf32>
    %c1 = arith.constant 1 : index
    %c0_15 = arith.constant 0 : index
    %13 = tpu.strided_load %arg15[%c1, %c0_15] {strides = array<i32: 2, 1>} : memref<784x128xf32, #tpu.memory_space<vmem>>, vector<392x128xf32>
    %14 = arith.maximumf %12, %13 : vector<392x128xf32>
    %c0_16 = arith.constant 0 : index
    %c0_17 = arith.constant 0 : index
    %15 = vector.load %arg16[%c0_16, %c0_17] : memref<392x128xf32, #tpu.memory_space<vmem>>, vector<392x128xf32>
    tpu.vector_store %arg16[%c0_16, %c0_17], %14 {strides = array<i32>} : memref<392x128xf32, #tpu.memory_space<vmem>>, vector<392x128xf32>,
    %c0_18 = arith.constant 0 : index
    %c0_19 = arith.constant 0 : index
    %16 = vector.load %arg16[%c0_18, %c0_19] : memref<392x128xf32, #tpu.memory_space<vmem>>, vector<14x128xf32>
    %c14 = arith.constant 14 : index
    %c0_20 = arith.constant 0 : index
    %17 = vector.load %arg16[%c14, %c0_20] : memref<392x128xf32, #tpu.memory_space<vmem>>, vector<14x128xf32>
    %18 = arith.maximumf %16, %17 : vector<14x128xf32>
    %19 = arith.truncf %18 : vector<14x128xf32> to vector<14x128xbf16>
    %c24 = arith.constant 24 : index
    %c0_21 = arith.constant 0 : index
    %20 = vector.load %arg13[%c24, %c0_21] : memref<304x128xbf16, #tpu.memory_space<vmem>>, vector<14x128xbf16>
    tpu.vector_store %arg13[%c24, %c0_21], %19 {strides = array<i32>} : memref<304x128xbf16, #tpu.memory_space<vmem>>, vector<14x128xbf16>,
    %c28 = arith.constant 28 : index
    %c0_22 = arith.constant 0 : index
    %21 = vector.load %arg16[%c28, %c0_22] : memref<392x128xf32, #tpu.memory_space<vmem>>, vector<14x128xf32>
    %c42 = arith.constant 42 : index
    %c0_23 = arith.constant 0 : index
    %22 = vector.load %arg16[%c42, %c0_23] : memref<392x128xf32, #tpu.memory_space<vmem>>, vector<14x128xf32>
    %23 = arith.maximumf %21, %22 : vector<14x128xf32>
    %24 = arith.truncf %23 : vector<14x128xf32> to vector<14x128xbf16>
    %c40 = arith.constant 40 : index
    %c0_24 = arith.constant 0 : index
    %25 = vector.load %arg13[%c40, %c0_24] : memref<304x128xbf16, #tpu.memory_space<vmem>>, vector<14x128xbf16>
    tpu.vector_store %arg13[%c40, %c0_24], %24 {strides = array<i32>} : memref<304x128xbf16, #tpu.memory_space<vmem>>, vector<14x128xbf16>,
    %c56 = arith.constant 56 : index
    %c0_25 = arith.constant 0 : index
    %26 = vector.load %arg16[%c56, %c0_25] : memref<392x128xf32, #tpu.memory_space<vmem>>, vector<14x128xf32>
    %c70 = arith.constant 70 : index
    %c0_26 = arith.constant 0 : index
    %27 = vector.load %arg16[%c70, %c0_26] : memref<392x128xf32, #tpu.memory_space<vmem>>, vector<14x128xf32>
    %28 = arith.maximumf %26, %27 : vector<14x128xf32>
    %29 = arith.truncf %28 : vector<14x128xf32> to vector<14x128xbf16>
    %c56_27 = arith.constant 56 : index
    %c0_28 = arith.constant 0 : index
    %30 = vector.load %arg13[%c56_27, %c0_28] : memref<304x128xbf16, #tpu.memory_space<vmem>>, vector<14x128xbf16>
    tpu.vector_store %arg13[%c56_27, %c0_28], %29 {strides = array<i32>} : memref<304x128xbf16, #tpu.memory_space<vmem>>, vector<14x128xbf16>,
    %c84 = arith.constant 84 : index
    %c0_29 = arith.constant 0 : index
    %31 = vector.load %arg16[%c84, %c0_29] : memref<392x128xf32, #tpu.memory_space<vmem>>, vector<14x128xf32>
    %c98 = arith.constant 98 : index
    %c0_30 = arith.constant 0 : index
    %32 = vector.load %arg16[%c98, %c0_30] : memref<392x128xf32, #tpu.memory_space<vmem>>, vector<14x128xf32>
    %33 = arith.maximumf %31, %32 : vector<14x128xf32>
    %34 = arith.truncf %33 : vector<14x128xf32> to vector<14x128xbf16>
    %c72 = arith.constant 72 : index
    %c0_31 = arith.constant 0 : index
    %35 = vector.load %arg13[%c72, %c0_31] : memref<304x128xbf16, #tpu.memory_space<vmem>>, vector<14x128xbf16>
    tpu.vector_store %arg13[%c72, %c0_31], %34 {strides = array<i32>} : memref<304x128xbf16, #tpu.memory_space<vmem>>, vector<14x128xbf16>,
    %c112 = arith.constant 112 : index
    %c0_32 = arith.constant 0 : index
    %36 = vector.load %arg16[%c112, %c0_32] : memref<392x128xf32, #tpu.memory_space<vmem>>, vector<14x128xf32>
    %c126 = arith.constant 126 : index
    %c0_33 = arith.constant 0 : index
    %37 = vector.load %arg16[%c126, %c0_33] : memref<392x128xf32, #tpu.memory_space<vmem>>, vector<14x128xf32>
    %38 = arith.maximumf %36, %37 : vector<14x128xf32>
    %39 = arith.truncf %38 : vector<14x128xf32> to vector<14x128xbf16>
    %c88 = arith.constant 88 : index
    %c0_34 = arith.constant 0 : index
    %40 = vector.load %arg13[%c88, %c0_34] : memref<304x128xbf16, #tpu.memory_space<vmem>>, vector<14x128xbf16>
    tpu.vector_store %arg13[%c88, %c0_34], %39 {strides = array<i32>} : memref<304x128xbf16, #tpu.memory_space<vmem>>, vector<14x128xbf16>,
    %c140 = arith.constant 140 : index
    %c0_35 = arith.constant 0 : index
    %41 = vector.load %arg16[%c140, %c0_35] : memref<392x128xf32, #tpu.memory_space<vmem>>, vector<14x128xf32>
    %c154 = arith.constant 154 : index
    %c0_36 = arith.constant 0 : index
    %42 = vector.load %arg16[%c154, %c0_36] : memref<392x128xf32, #tpu.memory_space<vmem>>, vector<14x128xf32>
    %43 = arith.maximumf %41, %42 : vector<14x128xf32>
    %44 = arith.truncf %43 : vector<14x128xf32> to vector<14x128xbf16>
    %c104 = arith.constant 104 : index
    %c0_37 = arith.constant 0 : index
    %45 = vector.load %arg13[%c104, %c0_37] : memref<304x128xbf16, #tpu.memory_space<vmem>>, vector<14x128xbf16>
    tpu.vector_store %arg13[%c104, %c0_37], %44 {strides = array<i32>} : memref<304x128xbf16, #tpu.memory_space<vmem>>, vector<14x128xbf16>,
    %c168 = arith.constant 168 : index
    %c0_38 = arith.constant 0 : index
    %46 = vector.load %arg16[%c168, %c0_38] : memref<392x128xf32, #tpu.memory_space<vmem>>, vector<14x128xf32>
    %c182 = arith.constant 182 : index
    %c0_39 = arith.constant 0 : index
    %47 = vector.load %arg16[%c182, %c0_39] : memref<392x128xf32, #tpu.memory_space<vmem>>, vector<14x128xf32>
    %48 = arith.maximumf %46, %47 : vector<14x128xf32>
    %49 = arith.truncf %48 : vector<14x128xf32> to vector<14x128xbf16>
    %c120 = arith.constant 120 : index
    %c0_40 = arith.constant 0 : index
    %50 = vector.load %arg13[%c120, %c0_40] : memref<304x128xbf16, #tpu.memory_space<vmem>>, vector<14x128xbf16>
    tpu.vector_store %arg13[%c120, %c0_40], %49 {strides = array<i32>} : memref<304x128xbf16, #tpu.memory_space<vmem>>, vector<14x128xbf16>,
    %c196 = arith.constant 196 : index
    %c0_41 = arith.constant 0 : index
    %51 = vector.load %arg16[%c196, %c0_41] : memref<392x128xf32, #tpu.memory_space<vmem>>, vector<14x128xf32>
    %c210 = arith.constant 210 : index
    %c0_42 = arith.constant 0 : index
    %52 = vector.load %arg16[%c210, %c0_42] : memref<392x128xf32, #tpu.memory_space<vmem>>, vector<14x128xf32>
    %53 = arith.maximumf %51, %52 : vector<14x128xf32>
    %54 = arith.truncf %53 : vector<14x128xf32> to vector<14x128xbf16>
    %c136 = arith.constant 136 : index
    %c0_43 = arith.constant 0 : index
    %55 = vector.load %arg13[%c136, %c0_43] : memref<304x128xbf16, #tpu.memory_space<vmem>>, vector<14x128xbf16>
    tpu.vector_store %arg13[%c136, %c0_43], %54 {strides = array<i32>} : memref<304x128xbf16, #tpu.memory_space<vmem>>, vector<14x128xbf16>,
    %c224 = arith.constant 224 : index
    %c0_44 = arith.constant 0 : index
    %56 = vector.load %arg16[%c224, %c0_44] : memref<392x128xf32, #tpu.memory_space<vmem>>, vector<14x128xf32>
    %c238 = arith.constant 238 : index
    %c0_45 = arith.constant 0 : index
    %57 = vector.load %arg16[%c238, %c0_45] : memref<392x128xf32, #tpu.memory_space<vmem>>, vector<14x128xf32>
    %58 = arith.maximumf %56, %57 : vector<14x128xf32>
    %59 = arith.truncf %58 : vector<14x128xf32> to vector<14x128xbf16>
    %c152 = arith.constant 152 : index
    %c0_46 = arith.constant 0 : index
    %60 = vector.load %arg13[%c152, %c0_46] : memref<304x128xbf16, #tpu.memory_space<vmem>>, vector<14x128xbf16>
    tpu.vector_store %arg13[%c152, %c0_46], %59 {strides = array<i32>} : memref<304x128xbf16, #tpu.memory_space<vmem>>, vector<14x128xbf16>,
    %c252 = arith.constant 252 : index
    %c0_47 = arith.constant 0 : index
    %61 = vector.load %arg16[%c252, %c0_47] : memref<392x128xf32, #tpu.memory_space<vmem>>, vector<14x128xf32>
    %c266 = arith.constant 266 : index
    %c0_48 = arith.constant 0 : index
    %62 = vector.load %arg16[%c266, %c0_48] : memref<392x128xf32, #tpu.memory_space<vmem>>, vector<14x128xf32>
    %63 = arith.maximumf %61, %62 : vector<14x128xf32>
    %64 = arith.truncf %63 : vector<14x128xf32> to vector<14x128xbf16>
    %c168_49 = arith.constant 168 : index
    %c0_50 = arith.constant 0 : index
    %65 = vector.load %arg13[%c168_49, %c0_50] : memref<304x128xbf16, #tpu.memory_space<vmem>>, vector<14x128xbf16>
    tpu.vector_store %arg13[%c168_49, %c0_50], %64 {strides = array<i32>} : memref<304x128xbf16, #tpu.memory_space<vmem>>, vector<14x128xbf16>,
    %c280 = arith.constant 280 : index
    %c0_51 = arith.constant 0 : index
    %66 = vector.load %arg16[%c280, %c0_51] : memref<392x128xf32, #tpu.memory_space<vmem>>, vector<14x128xf32>
    %c294 = arith.constant 294 : index
    %c0_52 = arith.constant 0 : index
    %67 = vector.load %arg16[%c294, %c0_52] : memref<392x128xf32, #tpu.memory_space<vmem>>, vector<14x128xf32>
    %68 = arith.maximumf %66, %67 : vector<14x128xf32>
    %69 = arith.truncf %68 : vector<14x128xf32> to vector<14x128xbf16>
    %c184 = arith.constant 184 : index
    %c0_53 = arith.constant 0 : index
    %70 = vector.load %arg13[%c184, %c0_53] : memref<304x128xbf16, #tpu.memory_space<vmem>>, vector<14x128xbf16>
    tpu.vector_store %arg13[%c184, %c0_53], %69 {strides = array<i32>} : memref<304x128xbf16, #tpu.memory_space<vmem>>, vector<14x128xbf16>,
    %c308 = arith.constant 308 : index
    %c0_54 = arith.constant 0 : index
    %71 = vector.load %arg16[%c308, %c0_54] : memref<392x128xf32, #tpu.memory_space<vmem>>, vector<14x128xf32>
    %c322 = arith.constant 322 : index
    %c0_55 = arith.constant 0 : index
    %72 = vector.load %arg16[%c322, %c0_55] : memref<392x128xf32, #tpu.memory_space<vmem>>, vector<14x128xf32>
    %73 = arith.maximumf %71, %72 : vector<14x128xf32>
    %74 = arith.truncf %73 : vector<14x128xf32> to vector<14x128xbf16>
    %c200 = arith.constant 200 : index
    %c0_56 = arith.constant 0 : index
    %75 = vector.load %arg13[%c200, %c0_56] : memref<304x128xbf16, #tpu.memory_space<vmem>>, vector<14x128xbf16>
    tpu.vector_store %arg13[%c200, %c0_56], %74 {strides = array<i32>} : memref<304x128xbf16, #tpu.memory_space<vmem>>, vector<14x128xbf16>,
    %c336 = arith.constant 336 : index
    %c0_57 = arith.constant 0 : index
    %76 = vector.load %arg16[%c336, %c0_57] : memref<392x128xf32, #tpu.memory_space<vmem>>, vector<14x128xf32>
    %c350 = arith.constant 350 : index
    %c0_58 = arith.constant 0 : index
    %77 = vector.load %arg16[%c350, %c0_58] : memref<392x128xf32, #tpu.memory_space<vmem>>, vector<14x128xf32>
    %78 = arith.maximumf %76, %77 : vector<14x128xf32>
    %79 = arith.truncf %78 : vector<14x128xf32> to vector<14x128xbf16>
    %c216 = arith.constant 216 : index
    %c0_59 = arith.constant 0 : index
    %80 = vector.load %arg13[%c216, %c0_59] : memref<304x128xbf16, #tpu.memory_space<vmem>>, vector<14x128xbf16>
    tpu.vector_store %arg13[%c216, %c0_59], %79 {strides = array<i32>} : memref<304x128xbf16, #tpu.memory_space<vmem>>, vector<14x128xbf16>,
    %c364 = arith.constant 364 : index
    %c0_60 = arith.constant 0 : index
    %81 = vector.load %arg16[%c364, %c0_60] : memref<392x128xf32, #tpu.memory_space<vmem>>, vector<14x128xf32>
    %c378 = arith.constant 378 : index
    %c0_61 = arith.constant 0 : index
    %82 = vector.load %arg16[%c378, %c0_61] : memref<392x128xf32, #tpu.memory_space<vmem>>, vector<14x128xf32>
    %83 = arith.maximumf %81, %82 : vector<14x128xf32>
    %84 = arith.truncf %83 : vector<14x128xf32> to vector<14x128xbf16>
    %c232 = arith.constant 232 : index
    %c0_62 = arith.constant 0 : index
    %85 = vector.load %arg13[%c232, %c0_62] : memref<304x128xbf16, #tpu.memory_space<vmem>>, vector<14x128xbf16>
    tpu.vector_store %arg13[%c232, %c0_62], %84 {strides = array<i32>} : memref<304x128xbf16, #tpu.memory_space<vmem>>, vector<14x128xbf16>,
    %c0_63 = arith.constant 0 : index
    %c0_64 = arith.constant 0 : index
    %86 = vector.load %arg5[%c0_63, %c0_64] : memref<1x128xf32, #tpu.memory_space<vmem>>, vector<1x128xf32>
    %cst_65 = arith.constant 0.000000e+00 : f32
    %87 = vector.broadcast %cst_65 : f32 to vector<256x128xf32>
    %88 = vector.broadcast %86 : vector<1x128xf32> to vector<256x128xf32>
    %89 = arith.addf %88, %87 : vector<256x128xf32>
    %c7 = arith.constant 7 : index
    %c0_66 = arith.constant 0 : index
    %90 = vector.load %arg13[%c7, %c0_66] : memref<304x128xbf16, #tpu.memory_space<vmem>>, vector<256x128xbf16>
    %c0_67 = arith.constant 0 : index
    %c0_68 = arith.constant 0 : index
    %c0_69 = arith.constant 0 : index
    %91 = vector.load %arg4[%c0_67, %c0_68, %c0_69] : memref<9x128x128xbf16, #tpu.memory_space<vmem>>, vector<1x128x128xbf16>
    %92 = vector.shape_cast %91 : vector<1x128x128xbf16> to vector<128x128xbf16>
    %cst_70 = arith.constant dense<0.000000e+00> : vector<256x128xf32>
    %93 = tpu.matmul %90, %92, %cst_70 {dimension_numbers = #tpu.dot_dimension_numbers<[1], [0], [0], [1], [0, 0, 1, 1], [], []>} : vector<256x128xbf16>, vector<128x128xbf16>, vector<256x128xf32> -> vector<256x128xf32>
    %94 = arith.addf %89, %93 : vector<256x128xf32>
    %c8 = arith.constant 8 : index
    %c0_71 = arith.constant 0 : index
    %95 = vector.load %arg13[%c8, %c0_71] : memref<304x128xbf16, #tpu.memory_space<vmem>>, vector<256x128xbf16>
    %c1_72 = arith.constant 1 : index
    %c0_73 = arith.constant 0 : index
    %c0_74 = arith.constant 0 : index
    %96 = vector.load %arg4[%c1_72, %c0_73, %c0_74] : memref<9x128x128xbf16, #tpu.memory_space<vmem>>, vector<1x128x128xbf16>
    %97 = vector.shape_cast %96 : vector<1x128x128xbf16> to vector<128x128xbf16>
    %cst_75 = arith.constant dense<0.000000e+00> : vector<256x128xf32>
    %98 = tpu.matmul %95, %97, %cst_75 {dimension_numbers = #tpu.dot_dimension_numbers<[1], [0], [0], [1], [0, 0, 1, 1], [], []>} : vector<256x128xbf16>, vector<128x128xbf16>, vector<256x128xf32> -> vector<256x128xf32>
    %99 = arith.addf %94, %98 : vector<256x128xf32>
    %c9 = arith.constant 9 : index
    %c0_76 = arith.constant 0 : index
    %100 = vector.load %arg13[%c9, %c0_76] : memref<304x128xbf16, #tpu.memory_space<vmem>>, vector<256x128xbf16>
    %c2 = arith.constant 2 : index
    %c0_77 = arith.constant 0 : index
    %c0_78 = arith.constant 0 : index
    %101 = vector.load %arg4[%c2, %c0_77, %c0_78] : memref<9x128x128xbf16, #tpu.memory_space<vmem>>, vector<1x128x128xbf16>
    %102 = vector.shape_cast %101 : vector<1x128x128xbf16> to vector<128x128xbf16>
    %cst_79 = arith.constant dense<0.000000e+00> : vector<256x128xf32>
    %103 = tpu.matmul %100, %102, %cst_79 {dimension_numbers = #tpu.dot_dimension_numbers<[1], [0], [0], [1], [0, 0, 1, 1], [], []>} : vector<256x128xbf16>, vector<128x128xbf16>, vector<256x128xf32> -> vector<256x128xf32>
    %104 = arith.addf %99, %103 : vector<256x128xf32>
    %c23 = arith.constant 23 : index
    %c0_80 = arith.constant 0 : index
    %105 = vector.load %arg13[%c23, %c0_80] : memref<304x128xbf16, #tpu.memory_space<vmem>>, vector<256x128xbf16>
    %c3 = arith.constant 3 : index
    %c0_81 = arith.constant 0 : index
    %c0_82 = arith.constant 0 : index
    %106 = vector.load %arg4[%c3, %c0_81, %c0_82] : memref<9x128x128xbf16, #tpu.memory_space<vmem>>, vector<1x128x128xbf16>
    %107 = vector.shape_cast %106 : vector<1x128x128xbf16> to vector<128x128xbf16>
    %cst_83 = arith.constant dense<0.000000e+00> : vector<256x128xf32>
    %108 = tpu.matmul %105, %107, %cst_83 {dimension_numbers = #tpu.dot_dimension_numbers<[1], [0], [0], [1], [0, 0, 1, 1], [], []>} : vector<256x128xbf16>, vector<128x128xbf16>, vector<256x128xf32> -> vector<256x128xf32>
    %109 = arith.addf %104, %108 : vector<256x128xf32>
    %c24_84 = arith.constant 24 : index
    %c0_85 = arith.constant 0 : index
    %110 = vector.load %arg13[%c24_84, %c0_85] : memref<304x128xbf16, #tpu.memory_space<vmem>>, vector<256x128xbf16>
    %c4 = arith.constant 4 : index
    %c0_86 = arith.constant 0 : index
    %c0_87 = arith.constant 0 : index
    %111 = vector.load %arg4[%c4, %c0_86, %c0_87] : memref<9x128x128xbf16, #tpu.memory_space<vmem>>, vector<1x128x128xbf16>
    %112 = vector.shape_cast %111 : vector<1x128x128xbf16> to vector<128x128xbf16>
    %cst_88 = arith.constant dense<0.000000e+00> : vector<256x128xf32>
    %113 = tpu.matmul %110, %112, %cst_88 {dimension_numbers = #tpu.dot_dimension_numbers<[1], [0], [0], [1], [0, 0, 1, 1], [], []>} : vector<256x128xbf16>, vector<128x128xbf16>, vector<256x128xf32> -> vector<256x128xf32>
    %114 = arith.addf %109, %113 : vector<256x128xf32>
    %c25 = arith.constant 25 : index
    %c0_89 = arith.constant 0 : index
    %115 = vector.load %arg13[%c25, %c0_89] : memref<304x128xbf16, #tpu.memory_space<vmem>>, vector<256x128xbf16>
    %c5 = arith.constant 5 : index
    %c0_90 = arith.constant 0 : index
    %c0_91 = arith.constant 0 : index
    %116 = vector.load %arg4[%c5, %c0_90, %c0_91] : memref<9x128x128xbf16, #tpu.memory_space<vmem>>, vector<1x128x128xbf16>
    %117 = vector.shape_cast %116 : vector<1x128x128xbf16> to vector<128x128xbf16>
    %cst_92 = arith.constant dense<0.000000e+00> : vector<256x128xf32>
    %118 = tpu.matmul %115, %117, %cst_92 {dimension_numbers = #tpu.dot_dimension_numbers<[1], [0], [0], [1], [0, 0, 1, 1], [], []>} : vector<256x128xbf16>, vector<128x128xbf16>, vector<256x128xf32> -> vector<256x128xf32>
    %119 = arith.addf %114, %118 : vector<256x128xf32>
    %c39 = arith.constant 39 : index
    %c0_93 = arith.constant 0 : index
    %120 = vector.load %arg13[%c39, %c0_93] : memref<304x128xbf16, #tpu.memory_space<vmem>>, vector<256x128xbf16>
    %c6 = arith.constant 6 : index
    %c0_94 = arith.constant 0 : index
    %c0_95 = arith.constant 0 : index
    %121 = vector.load %arg4[%c6, %c0_94, %c0_95] : memref<9x128x128xbf16, #tpu.memory_space<vmem>>, vector<1x128x128xbf16>
    %122 = vector.shape_cast %121 : vector<1x128x128xbf16> to vector<128x128xbf16>
    %cst_96 = arith.constant dense<0.000000e+00> : vector<256x128xf32>
    %123 = tpu.matmul %120, %122, %cst_96 {dimension_numbers = #tpu.dot_dimension_numbers<[1], [0], [0], [1], [0, 0, 1, 1], [], []>} : vector<256x128xbf16>, vector<128x128xbf16>, vector<256x128xf32> -> vector<256x128xf32>
    %124 = arith.addf %119, %123 : vector<256x128xf32>
    %c40_97 = arith.constant 40 : index
    %c0_98 = arith.constant 0 : index
    %125 = vector.load %arg13[%c40_97, %c0_98] : memref<304x128xbf16, #tpu.memory_space<vmem>>, vector<256x128xbf16>
    %c7_99 = arith.constant 7 : index
    %c0_100 = arith.constant 0 : index
    %c0_101 = arith.constant 0 : index
    %126 = vector.load %arg4[%c7_99, %c0_100, %c0_101] : memref<9x128x128xbf16, #tpu.memory_space<vmem>>, vector<1x128x128xbf16>
    %127 = vector.shape_cast %126 : vector<1x128x128xbf16> to vector<128x128xbf16>
    %cst_102 = arith.constant dense<0.000000e+00> : vector<256x128xf32>
    %128 = tpu.matmul %125, %127, %cst_102 {dimension_numbers = #tpu.dot_dimension_numbers<[1], [0], [0], [1], [0, 0, 1, 1], [], []>} : vector<256x128xbf16>, vector<128x128xbf16>, vector<256x128xf32> -> vector<256x128xf32>
    %129 = arith.addf %124, %128 : vector<256x128xf32>
    %c41 = arith.constant 41 : index
    %c0_103 = arith.constant 0 : index
    %130 = vector.load %arg13[%c41, %c0_103] : memref<304x128xbf16, #tpu.memory_space<vmem>>, vector<256x128xbf16>
    %c8_104 = arith.constant 8 : index
    %c0_105 = arith.constant 0 : index
    %c0_106 = arith.constant 0 : index
    %131 = vector.load %arg4[%c8_104, %c0_105, %c0_106] : memref<9x128x128xbf16, #tpu.memory_space<vmem>>, vector<1x128x128xbf16>
    %132 = vector.shape_cast %131 : vector<1x128x128xbf16> to vector<128x128xbf16>
    %cst_107 = arith.constant dense<0.000000e+00> : vector<256x128xf32>
    %133 = tpu.matmul %130, %132, %cst_107 {dimension_numbers = #tpu.dot_dimension_numbers<[1], [0], [0], [1], [0, 0, 1, 1], [], []>} : vector<256x128xbf16>, vector<128x128xbf16>, vector<256x128xf32> -> vector<256x128xf32>
    %134 = arith.addf %129, %133 : vector<256x128xf32>
    %135 = math.tanh %134 : vector<256x128xf32>
    %c0_108 = arith.constant 0 : index
    %c0_109 = arith.constant 0 : index
    %136 = vector.load %arg15[%c0_108, %c0_109] : memref<784x128xf32, #tpu.memory_space<vmem>>, vector<256x128xf32>
    tpu.vector_store %arg15[%c0_108, %c0_109], %135 {strides = array<i32>} : memref<784x128xf32, #tpu.memory_space<vmem>>, vector<256x128xf32>,
    %c0_110 = arith.constant 0 : index
    %c0_111 = arith.constant 0 : index
    %137 = tpu.strided_load %arg15[%c0_110, %c0_111] {strides = array<i32: 2, 1>} : memref<784x128xf32, #tpu.memory_space<vmem>>, vector<128x128xf32>
    %c1_112 = arith.constant 1 : index
    %c0_113 = arith.constant 0 : index
    %138 = tpu.strided_load %arg15[%c1_112, %c0_113] {strides = array<i32: 2, 1>} : memref<784x128xf32, #tpu.memory_space<vmem>>, vector<128x128xf32>
    %139 = arith.maximumf %137, %138 : vector<128x128xf32>
    %c0_114 = arith.constant 0 : index
    %c0_115 = arith.constant 0 : index
    %140 = vector.load %arg16[%c0_114, %c0_115] : memref<392x128xf32, #tpu.memory_space<vmem>>, vector<128x128xf32>
    tpu.vector_store %arg16[%c0_114, %c0_115], %139 {strides = array<i32>} : memref<392x128xf32, #tpu.memory_space<vmem>>, vector<128x128xf32>,
    %c0_116 = arith.constant 0 : index
    %c0_117 = arith.constant 0 : index
    %141 = vector.load %arg16[%c0_116, %c0_117] : memref<392x128xf32, #tpu.memory_space<vmem>>, vector<7x128xf32>
    %c8_118 = arith.constant 8 : index
    %c0_119 = arith.constant 0 : index
    %142 = vector.load %arg16[%c8_118, %c0_119] : memref<392x128xf32, #tpu.memory_space<vmem>>, vector<7x128xf32>
    %143 = arith.maximumf %141, %142 : vector<7x128xf32>
    %144 = arith.truncf %143 : vector<7x128xf32> to vector<7x128xbf16>
    %c16 = arith.constant 16 : index
    %c0_120 = arith.constant 0 : index
    %145 = vector.load %arg14[%c16, %c0_120] : memref<96x128xbf16, #tpu.memory_space<vmem>>, vector<7x128xbf16>
    tpu.vector_store %arg14[%c16, %c0_120], %144 {strides = array<i32>} : memref<96x128xbf16, #tpu.memory_space<vmem>>, vector<7x128xbf16>,
    %c16_121 = arith.constant 16 : index
    %c0_122 = arith.constant 0 : index
    %146 = vector.load %arg16[%c16_121, %c0_122] : memref<392x128xf32, #tpu.memory_space<vmem>>, vector<7x128xf32>
    %c24_123 = arith.constant 24 : index
    %c0_124 = arith.constant 0 : index
    %147 = vector.load %arg16[%c24_123, %c0_124] : memref<392x128xf32, #tpu.memory_space<vmem>>, vector<7x128xf32>
    %148 = arith.maximumf %146, %147 : vector<7x128xf32>
    %149 = arith.truncf %148 : vector<7x128xf32> to vector<7x128xbf16>
    %c24_125 = arith.constant 24 : index
    %c0_126 = arith.constant 0 : index
    %150 = vector.load %arg14[%c24_125, %c0_126] : memref<96x128xbf16, #tpu.memory_space<vmem>>, vector<7x128xbf16>
    tpu.vector_store %arg14[%c24_125, %c0_126], %149 {strides = array<i32>} : memref<96x128xbf16, #tpu.memory_space<vmem>>, vector<7x128xbf16>,
    %c32 = arith.constant 32 : index
    %c0_127 = arith.constant 0 : index
    %151 = vector.load %arg16[%c32, %c0_127] : memref<392x128xf32, #tpu.memory_space<vmem>>, vector<7x128xf32>
    %c40_128 = arith.constant 40 : index
    %c0_129 = arith.constant 0 : index
    %152 = vector.load %arg16[%c40_128, %c0_129] : memref<392x128xf32, #tpu.memory_space<vmem>>, vector<7x128xf32>
    %153 = arith.maximumf %151, %152 : vector<7x128xf32>
    %154 = arith.truncf %153 : vector<7x128xf32> to vector<7x128xbf16>
    %c32_130 = arith.constant 32 : index
    %c0_131 = arith.constant 0 : index
    %155 = vector.load %arg14[%c32_130, %c0_131] : memref<96x128xbf16, #tpu.memory_space<vmem>>, vector<7x128xbf16>
    tpu.vector_store %arg14[%c32_130, %c0_131], %154 {strides = array<i32>} : memref<96x128xbf16, #tpu.memory_space<vmem>>, vector<7x128xbf16>,
    %c48 = arith.constant 48 : index
    %c0_132 = arith.constant 0 : index
    %156 = vector.load %arg16[%c48, %c0_132] : memref<392x128xf32, #tpu.memory_space<vmem>>, vector<7x128xf32>
    %c56_133 = arith.constant 56 : index
    %c0_134 = arith.constant 0 : index
    %157 = vector.load %arg16[%c56_133, %c0_134] : memref<392x128xf32, #tpu.memory_space<vmem>>, vector<7x128xf32>
    %158 = arith.maximumf %156, %157 : vector<7x128xf32>
    %159 = arith.truncf %158 : vector<7x128xf32> to vector<7x128xbf16>
    %c40_135 = arith.constant 40 : index
    %c0_136 = arith.constant 0 : index
    %160 = vector.load %arg14[%c40_135, %c0_136] : memref<96x128xbf16, #tpu.memory_space<vmem>>, vector<7x128xbf16>
    tpu.vector_store %arg14[%c40_135, %c0_136], %159 {strides = array<i32>} : memref<96x128xbf16, #tpu.memory_space<vmem>>, vector<7x128xbf16>,
    %c64 = arith.constant 64 : index
    %c0_137 = arith.constant 0 : index
    %161 = vector.load %arg16[%c64, %c0_137] : memref<392x128xf32, #tpu.memory_space<vmem>>, vector<7x128xf32>
    %c72_138 = arith.constant 72 : index
    %c0_139 = arith.constant 0 : index
    %162 = vector.load %arg16[%c72_138, %c0_139] : memref<392x128xf32, #tpu.memory_space<vmem>>, vector<7x128xf32>
    %163 = arith.maximumf %161, %162 : vector<7x128xf32>
    %164 = arith.truncf %163 : vector<7x128xf32> to vector<7x128xbf16>
    %c48_140 = arith.constant 48 : index
    %c0_141 = arith.constant 0 : index
    %165 = vector.load %arg14[%c48_140, %c0_141] : memref<96x128xbf16, #tpu.memory_space<vmem>>, vector<7x128xbf16>
    tpu.vector_store %arg14[%c48_140, %c0_141], %164 {strides = array<i32>} : memref<96x128xbf16, #tpu.memory_space<vmem>>, vector<7x128xbf16>,
    %c80 = arith.constant 80 : index
    %c0_142 = arith.constant 0 : index
    %166 = vector.load %arg16[%c80, %c0_142] : memref<392x128xf32, #tpu.memory_space<vmem>>, vector<7x128xf32>
    %c88_143 = arith.constant 88 : index
    %c0_144 = arith.constant 0 : index
    %167 = vector.load %arg16[%c88_143, %c0_144] : memref<392x128xf32, #tpu.memory_space<vmem>>, vector<7x128xf32>
    %168 = arith.maximumf %166, %167 : vector<7x128xf32>
    %169 = arith.truncf %168 : vector<7x128xf32> to vector<7x128xbf16>
    %c56_145 = arith.constant 56 : index
    %c0_146 = arith.constant 0 : index
    %170 = vector.load %arg14[%c56_145, %c0_146] : memref<96x128xbf16, #tpu.memory_space<vmem>>, vector<7x128xbf16>
    tpu.vector_store %arg14[%c56_145, %c0_146], %169 {strides = array<i32>} : memref<96x128xbf16, #tpu.memory_space<vmem>>, vector<7x128xbf16>,
    %c96 = arith.constant 96 : index
    %c0_147 = arith.constant 0 : index
    %171 = vector.load %arg16[%c96, %c0_147] : memref<392x128xf32, #tpu.memory_space<vmem>>, vector<7x128xf32>
    %c104_148 = arith.constant 104 : index
    %c0_149 = arith.constant 0 : index
    %172 = vector.load %arg16[%c104_148, %c0_149] : memref<392x128xf32, #tpu.memory_space<vmem>>, vector<7x128xf32>
    %173 = arith.maximumf %171, %172 : vector<7x128xf32>
    %174 = arith.truncf %173 : vector<7x128xf32> to vector<7x128xbf16>
    %c64_150 = arith.constant 64 : index
    %c0_151 = arith.constant 0 : index
    %175 = vector.load %arg14[%c64_150, %c0_151] : memref<96x128xbf16, #tpu.memory_space<vmem>>, vector<7x128xbf16>
    tpu.vector_store %arg14[%c64_150, %c0_151], %174 {strides = array<i32>} : memref<96x128xbf16, #tpu.memory_space<vmem>>, vector<7x128xbf16>,
    %c0_152 = arith.constant 0 : index
    %c0_153 = arith.constant 0 : index
    %176 = vector.load %arg7[%c0_152, %c0_153] : memref<1x128xf32, #tpu.memory_space<vmem>>, vector<1x128xf32>
    %cst_154 = arith.constant 0.000000e+00 : f32
    %177 = vector.broadcast %cst_154 : f32 to vector<64x128xf32>
    %178 = vector.broadcast %176 : vector<1x128xf32> to vector<64x128xf32>
    %179 = arith.addf %178, %177 : vector<64x128xf32>
    %c7_155 = arith.constant 7 : index
    %c0_156 = arith.constant 0 : index
    %180 = vector.load %arg14[%c7_155, %c0_156] : memref<96x128xbf16, #tpu.memory_space<vmem>>, vector<64x128xbf16>
    %c0_157 = arith.constant 0 : index
    %c0_158 = arith.constant 0 : index
    %c0_159 = arith.constant 0 : index
    %181 = vector.load %arg6[%c0_157, %c0_158, %c0_159] : memref<9x128x128xbf16, #tpu.memory_space<vmem>>, vector<1x128x128xbf16>
    %182 = vector.shape_cast %181 : vector<1x128x128xbf16> to vector<128x128xbf16>
    %cst_160 = arith.constant dense<0.000000e+00> : vector<64x128xf32>
    %183 = tpu.matmul %180, %182, %cst_160 {dimension_numbers = #tpu.dot_dimension_numbers<[1], [0], [0], [1], [0, 0, 1, 1], [], []>} : vector<64x128xbf16>, vector<128x128xbf16>, vector<64x128xf32> -> vector<64x128xf32>
    %184 = arith.addf %179, %183 : vector<64x128xf32>
    %c8_161 = arith.constant 8 : index
    %c0_162 = arith.constant 0 : index
    %185 = vector.load %arg14[%c8_161, %c0_162] : memref<96x128xbf16, #tpu.memory_space<vmem>>, vector<64x128xbf16>
    %c1_163 = arith.constant 1 : index
    %c0_164 = arith.constant 0 : index
    %c0_165 = arith.constant 0 : index
    %186 = vector.load %arg6[%c1_163, %c0_164, %c0_165] : memref<9x128x128xbf16, #tpu.memory_space<vmem>>, vector<1x128x128xbf16>
    %187 = vector.shape_cast %186 : vector<1x128x128xbf16> to vector<128x128xbf16>
    %cst_166 = arith.constant dense<0.000000e+00> : vector<64x128xf32>
    %188 = tpu.matmul %185, %187, %cst_166 {dimension_numbers = #tpu.dot_dimension_numbers<[1], [0], [0], [1], [0, 0, 1, 1], [], []>} : vector<64x128xbf16>, vector<128x128xbf16>, vector<64x128xf32> -> vector<64x128xf32>
    %189 = arith.addf %184, %188 : vector<64x128xf32>
    %c9_167 = arith.constant 9 : index
    %c0_168 = arith.constant 0 : index
    %190 = vector.load %arg14[%c9_167, %c0_168] : memref<96x128xbf16, #tpu.memory_space<vmem>>, vector<64x128xbf16>
    %c2_169 = arith.constant 2 : index
    %c0_170 = arith.constant 0 : index
    %c0_171 = arith.constant 0 : index
    %191 = vector.load %arg6[%c2_169, %c0_170, %c0_171] : memref<9x128x128xbf16, #tpu.memory_space<vmem>>, vector<1x128x128xbf16>
    %192 = vector.shape_cast %191 : vector<1x128x128xbf16> to vector<128x128xbf16>
    %cst_172 = arith.constant dense<0.000000e+00> : vector<64x128xf32>
    %193 = tpu.matmul %190, %192, %cst_172 {dimension_numbers = #tpu.dot_dimension_numbers<[1], [0], [0], [1], [0, 0, 1, 1], [], []>} : vector<64x128xbf16>, vector<128x128xbf16>, vector<64x128xf32> -> vector<64x128xf32>
    %194 = arith.addf %189, %193 : vector<64x128xf32>
    %c15 = arith.constant 15 : index
    %c0_173 = arith.constant 0 : index
    %195 = vector.load %arg14[%c15, %c0_173] : memref<96x128xbf16, #tpu.memory_space<vmem>>, vector<64x128xbf16>
    %c3_174 = arith.constant 3 : index
    %c0_175 = arith.constant 0 : index
    %c0_176 = arith.constant 0 : index
    %196 = vector.load %arg6[%c3_174, %c0_175, %c0_176] : memref<9x128x128xbf16, #tpu.memory_space<vmem>>, vector<1x128x128xbf16>
    %197 = vector.shape_cast %196 : vector<1x128x128xbf16> to vector<128x128xbf16>
    %cst_177 = arith.constant dense<0.000000e+00> : vector<64x128xf32>
    %198 = tpu.matmul %195, %197, %cst_177 {dimension_numbers = #tpu.dot_dimension_numbers<[1], [0], [0], [1], [0, 0, 1, 1], [], []>} : vector<64x128xbf16>, vector<128x128xbf16>, vector<64x128xf32> -> vector<64x128xf32>
    %199 = arith.addf %194, %198 : vector<64x128xf32>
    %c16_178 = arith.constant 16 : index
    %c0_179 = arith.constant 0 : index
    %200 = vector.load %arg14[%c16_178, %c0_179] : memref<96x128xbf16, #tpu.memory_space<vmem>>, vector<64x128xbf16>
    %c4_180 = arith.constant 4 : index
    %c0_181 = arith.constant 0 : index
    %c0_182 = arith.constant 0 : index
    %201 = vector.load %arg6[%c4_180, %c0_181, %c0_182] : memref<9x128x128xbf16, #tpu.memory_space<vmem>>, vector<1x128x128xbf16>
    %202 = vector.shape_cast %201 : vector<1x128x128xbf16> to vector<128x128xbf16>
    %cst_183 = arith.constant dense<0.000000e+00> : vector<64x128xf32>
    %203 = tpu.matmul %200, %202, %cst_183 {dimension_numbers = #tpu.dot_dimension_numbers<[1], [0], [0], [1], [0, 0, 1, 1], [], []>} : vector<64x128xbf16>, vector<128x128xbf16>, vector<64x128xf32> -> vector<64x128xf32>
    %204 = arith.addf %199, %203 : vector<64x128xf32>
    %c17 = arith.constant 17 : index
    %c0_184 = arith.constant 0 : index
    %205 = vector.load %arg14[%c17, %c0_184] : memref<96x128xbf16, #tpu.memory_space<vmem>>, vector<64x128xbf16>
    %c5_185 = arith.constant 5 : index
    %c0_186 = arith.constant 0 : index
    %c0_187 = arith.constant 0 : index
    %206 = vector.load %arg6[%c5_185, %c0_186, %c0_187] : memref<9x128x128xbf16, #tpu.memory_space<vmem>>, vector<1x128x128xbf16>
    %207 = vector.shape_cast %206 : vector<1x128x128xbf16> to vector<128x128xbf16>
    %cst_188 = arith.constant dense<0.000000e+00> : vector<64x128xf32>
    %208 = tpu.matmul %205, %207, %cst_188 {dimension_numbers = #tpu.dot_dimension_numbers<[1], [0], [0], [1], [0, 0, 1, 1], [], []>} : vector<64x128xbf16>, vector<128x128xbf16>, vector<64x128xf32> -> vector<64x128xf32>
    %209 = arith.addf %204, %208 : vector<64x128xf32>
    %c23_189 = arith.constant 23 : index
    %c0_190 = arith.constant 0 : index
    %210 = vector.load %arg14[%c23_189, %c0_190] : memref<96x128xbf16, #tpu.memory_space<vmem>>, vector<64x128xbf16>
    %c6_191 = arith.constant 6 : index
    %c0_192 = arith.constant 0 : index
    %c0_193 = arith.constant 0 : index
    %211 = vector.load %arg6[%c6_191, %c0_192, %c0_193] : memref<9x128x128xbf16, #tpu.memory_space<vmem>>, vector<1x128x128xbf16>
    %212 = vector.shape_cast %211 : vector<1x128x128xbf16> to vector<128x128xbf16>
    %cst_194 = arith.constant dense<0.000000e+00> : vector<64x128xf32>
    %213 = tpu.matmul %210, %212, %cst_194 {dimension_numbers = #tpu.dot_dimension_numbers<[1], [0], [0], [1], [0, 0, 1, 1], [], []>} : vector<64x128xbf16>, vector<128x128xbf16>, vector<64x128xf32> -> vector<64x128xf32>
    %214 = arith.addf %209, %213 : vector<64x128xf32>
    %c24_195 = arith.constant 24 : index
    %c0_196 = arith.constant 0 : index
    %215 = vector.load %arg14[%c24_195, %c0_196] : memref<96x128xbf16, #tpu.memory_space<vmem>>, vector<64x128xbf16>
    %c7_197 = arith.constant 7 : index
    %c0_198 = arith.constant 0 : index
    %c0_199 = arith.constant 0 : index
    %216 = vector.load %arg6[%c7_197, %c0_198, %c0_199] : memref<9x128x128xbf16, #tpu.memory_space<vmem>>, vector<1x128x128xbf16>
    %217 = vector.shape_cast %216 : vector<1x128x128xbf16> to vector<128x128xbf16>
    %cst_200 = arith.constant dense<0.000000e+00> : vector<64x128xf32>
    %218 = tpu.matmul %215, %217, %cst_200 {dimension_numbers = #tpu.dot_dimension_numbers<[1], [0], [0], [1], [0, 0, 1, 1], [], []>} : vector<64x128xbf16>, vector<128x128xbf16>, vector<64x128xf32> -> vector<64x128xf32>
    %219 = arith.addf %214, %218 : vector<64x128xf32>
    %c25_201 = arith.constant 25 : index
    %c0_202 = arith.constant 0 : index
    %220 = vector.load %arg14[%c25_201, %c0_202] : memref<96x128xbf16, #tpu.memory_space<vmem>>, vector<64x128xbf16>
    %c8_203 = arith.constant 8 : index
    %c0_204 = arith.constant 0 : index
    %c0_205 = arith.constant 0 : index
    %221 = vector.load %arg6[%c8_203, %c0_204, %c0_205] : memref<9x128x128xbf16, #tpu.memory_space<vmem>>, vector<1x128x128xbf16>
    %222 = vector.shape_cast %221 : vector<1x128x128xbf16> to vector<128x128xbf16>
    %cst_206 = arith.constant dense<0.000000e+00> : vector<64x128xf32>
    %223 = tpu.matmul %220, %222, %cst_206 {dimension_numbers = #tpu.dot_dimension_numbers<[1], [0], [0], [1], [0, 0, 1, 1], [], []>} : vector<64x128xbf16>, vector<128x128xbf16>, vector<64x128xf32> -> vector<64x128xf32>
    %224 = arith.addf %219, %223 : vector<64x128xf32>
    %225 = math.tanh %224 : vector<64x128xf32>
    %c0_207 = arith.constant 0 : index
    %c0_208 = arith.constant 0 : index
    %226 = vector.load %arg15[%c0_207, %c0_208] : memref<784x128xf32, #tpu.memory_space<vmem>>, vector<64x128xf32>
    tpu.vector_store %arg15[%c0_207, %c0_208], %225 {strides = array<i32>} : memref<784x128xf32, #tpu.memory_space<vmem>>, vector<64x128xf32>,
    %c0_209 = arith.constant 0 : index
    %c0_210 = arith.constant 0 : index
    %227 = tpu.strided_load %arg15[%c0_209, %c0_210] {strides = array<i32: 2, 1>} : memref<784x128xf32, #tpu.memory_space<vmem>>, vector<32x128xf32>
    %c1_211 = arith.constant 1 : index
    %c0_212 = arith.constant 0 : index
    %228 = tpu.strided_load %arg15[%c1_211, %c0_212] {strides = array<i32: 2, 1>} : memref<784x128xf32, #tpu.memory_space<vmem>>, vector<32x128xf32>
    %229 = arith.maximumf %227, %228 : vector<32x128xf32>
    %c0_213 = arith.constant 0 : index
    %c0_214 = arith.constant 0 : index
    %230 = vector.load %arg16[%c0_213, %c0_214] : memref<392x128xf32, #tpu.memory_space<vmem>>, vector<32x128xf32>
    tpu.vector_store %arg16[%c0_213, %c0_214], %229 {strides = array<i32>} : memref<392x128xf32, #tpu.memory_space<vmem>>, vector<32x128xf32>,
    %c0_215 = arith.constant 0 : index
    %c0_216 = arith.constant 0 : index
    %231 = vector.load %arg16[%c0_215, %c0_216] : memref<392x128xf32, #tpu.memory_space<vmem>>, vector<3x128xf32>
    %c4_217 = arith.constant 4 : index
    %c0_218 = arith.constant 0 : index
    %232 = vector.load %arg16[%c4_217, %c0_218] : memref<392x128xf32, #tpu.memory_space<vmem>>, vector<3x128xf32>
    %233 = arith.maximumf %231, %232 : vector<3x128xf32>
    %c0_219 = arith.constant 0 : index
    %c0_220 = arith.constant 0 : index
    %234 = vector.load %arg17[%c0_219, %c0_220] : memref<9x128xf32, #tpu.memory_space<vmem>>, vector<3x128xf32>
    tpu.vector_store %arg17[%c0_219, %c0_220], %233 {strides = array<i32>} : memref<9x128xf32, #tpu.memory_space<vmem>>, vector<3x128xf32>,
    %c8_221 = arith.constant 8 : index
    %c0_222 = arith.constant 0 : index
    %235 = vector.load %arg16[%c8_221, %c0_222] : memref<392x128xf32, #tpu.memory_space<vmem>>, vector<3x128xf32>
    %c12 = arith.constant 12 : index
    %c0_223 = arith.constant 0 : index
    %236 = vector.load %arg16[%c12, %c0_223] : memref<392x128xf32, #tpu.memory_space<vmem>>, vector<3x128xf32>
    %237 = arith.maximumf %235, %236 : vector<3x128xf32>
    %c3_224 = arith.constant 3 : index
    %c0_225 = arith.constant 0 : index
    %238 = vector.load %arg17[%c3_224, %c0_225] : memref<9x128xf32, #tpu.memory_space<vmem>>, vector<3x128xf32>
    tpu.vector_store %arg17[%c3_224, %c0_225], %237 {strides = array<i32>} : memref<9x128xf32, #tpu.memory_space<vmem>>, vector<3x128xf32>,
    %c16_226 = arith.constant 16 : index
    %c0_227 = arith.constant 0 : index
    %239 = vector.load %arg16[%c16_226, %c0_227] : memref<392x128xf32, #tpu.memory_space<vmem>>, vector<3x128xf32>
    %c20 = arith.constant 20 : index
    %c0_228 = arith.constant 0 : index
    %240 = vector.load %arg16[%c20, %c0_228] : memref<392x128xf32, #tpu.memory_space<vmem>>, vector<3x128xf32>
    %241 = arith.maximumf %239, %240 : vector<3x128xf32>
    %c6_229 = arith.constant 6 : index
    %c0_230 = arith.constant 0 : index
    %242 = vector.load %arg17[%c6_229, %c0_230] : memref<9x128xf32, #tpu.memory_space<vmem>>, vector<3x128xf32>
    tpu.vector_store %arg17[%c6_229, %c0_230], %241 {strides = array<i32>} : memref<9x128xf32, #tpu.memory_space<vmem>>, vector<3x128xf32>,
    %c0_231 = arith.constant 0 : index
    %c0_232 = arith.constant 0 : index
    %243 = vector.load %arg9[%c0_231, %c0_232] : memref<1x128xf32, #tpu.memory_space<vmem>>, vector<1x128xf32>
    %cst_233 = arith.constant 0.000000e+00 : f32
    %244 = vector.broadcast %cst_233 : f32 to vector<1x128xf32>
    %245 = arith.addf %243, %244 : vector<1x128xf32>
    %c0_234 = arith.constant 0 : index
    %c0_235 = arith.constant 0 : index
    %246 = vector.load %arg9[%c0_234, %c0_235] : memref<1x128xf32, #tpu.memory_space<vmem>>, vector<1x128xf32>
    %cst_236 = arith.constant 0.000000e+00 : f32
    %247 = vector.broadcast %cst_236 : f32 to vector<1x128xf32>
    %248 = arith.addf %246, %247 : vector<1x128xf32>
    %c0_237 = arith.constant 0 : index
    %c0_238 = arith.constant 0 : index
    %249 = vector.load %arg9[%c0_237, %c0_238] : memref<1x128xf32, #tpu.memory_space<vmem>>, vector<1x128xf32>
    %cst_239 = arith.constant 0.000000e+00 : f32
    %250 = vector.broadcast %cst_239 : f32 to vector<1x128xf32>
    %251 = arith.addf %249, %250 : vector<1x128xf32>
    %c0_240 = arith.constant 0 : index
    %c0_241 = arith.constant 0 : index
    %252 = vector.load %arg9[%c0_240, %c0_241] : memref<1x128xf32, #tpu.memory_space<vmem>>, vector<1x128xf32>
    %cst_242 = arith.constant 0.000000e+00 : f32
    %253 = vector.broadcast %cst_242 : f32 to vector<1x128xf32>
    %254 = arith.addf %252, %253 : vector<1x128xf32>
    %c0_243 = arith.constant 0 : index
    %c0_244 = arith.constant 0 : index
    %255 = tpu.strided_load %arg17[%c0_243, %c0_244] {strides = array<i32: 9, 1>} : memref<9x128xf32, #tpu.memory_space<vmem>>, vector<1x128xf32>
    %256 = arith.truncf %255 : vector<1x128xf32> to vector<1x128xbf16>
    %c0_245 = arith.constant 0 : index
    %c0_246 = arith.constant 0 : index
    %c0_247 = arith.constant 0 : index
    %257 = vector.load %arg8[%c0_245, %c0_246, %c0_247] : memref<36x128x128xbf16, #tpu.memory_space<vmem>>, vector<1x128x128xbf16>
    %258 = vector.shape_cast %257 : vector<1x128x128xbf16> to vector<128x128xbf16>
    %cst_248 = arith.constant dense<0.000000e+00> : vector<1x128xf32>
    %259 = tpu.matmul %256, %258, %cst_248 {dimension_numbers = #tpu.dot_dimension_numbers<[1], [0], [0], [1], [0, 0, 1, 1], [], []>} : vector<1x128xbf16>, vector<128x128xbf16>, vector<1x128xf32> -> vector<1x128xf32>
    %260 = arith.addf %245, %259 : vector<1x128xf32>
    %c9_249 = arith.constant 9 : index
    %c0_250 = arith.constant 0 : index
    %c0_251 = arith.constant 0 : index
    %261 = vector.load %arg8[%c9_249, %c0_250, %c0_251] : memref<36x128x128xbf16, #tpu.memory_space<vmem>>, vector<1x128x128xbf16>
    %262 = vector.shape_cast %261 : vector<1x128x128xbf16> to vector<128x128xbf16>
    %cst_252 = arith.constant dense<0.000000e+00> : vector<1x128xf32>
    %263 = tpu.matmul %256, %262, %cst_252 {dimension_numbers = #tpu.dot_dimension_numbers<[1], [0], [0], [1], [0, 0, 1, 1], [], []>} : vector<1x128xbf16>, vector<128x128xbf16>, vector<1x128xf32> -> vector<1x128xf32>
    %264 = arith.addf %248, %263 : vector<1x128xf32>
    %c18 = arith.constant 18 : index
    %c0_253 = arith.constant 0 : index
    %c0_254 = arith.constant 0 : index
    %265 = vector.load %arg8[%c18, %c0_253, %c0_254] : memref<36x128x128xbf16, #tpu.memory_space<vmem>>, vector<1x128x128xbf16>
    %266 = vector.shape_cast %265 : vector<1x128x128xbf16> to vector<128x128xbf16>
    %cst_255 = arith.constant dense<0.000000e+00> : vector<1x128xf32>
    %267 = tpu.matmul %256, %266, %cst_255 {dimension_numbers = #tpu.dot_dimension_numbers<[1], [0], [0], [1], [0, 0, 1, 1], [], []>} : vector<1x128xbf16>, vector<128x128xbf16>, vector<1x128xf32> -> vector<1x128xf32>
    %268 = arith.addf %251, %267 : vector<1x128xf32>
    %c27 = arith.constant 27 : index
    %c0_256 = arith.constant 0 : index
    %c0_257 = arith.constant 0 : index
    %269 = vector.load %arg8[%c27, %c0_256, %c0_257] : memref<36x128x128xbf16, #tpu.memory_space<vmem>>, vector<1x128x128xbf16>
    %270 = vector.shape_cast %269 : vector<1x128x128xbf16> to vector<128x128xbf16>
    %cst_258 = arith.constant dense<0.000000e+00> : vector<1x128xf32>
    %271 = tpu.matmul %256, %270, %cst_258 {dimension_numbers = #tpu.dot_dimension_numbers<[1], [0], [0], [1], [0, 0, 1, 1], [], []>} : vector<1x128xbf16>, vector<128x128xbf16>, vector<1x128xf32> -> vector<1x128xf32>
    %272 = arith.addf %254, %271 : vector<1x128xf32>
    %c1_259 = arith.constant 1 : index
    %c0_260 = arith.constant 0 : index
    %273 = tpu.strided_load %arg17[%c1_259, %c0_260] {strides = array<i32: 9, 1>} : memref<9x128xf32, #tpu.memory_space<vmem>>, vector<1x128xf32>
    %274 = arith.truncf %273 : vector<1x128xf32> to vector<1x128xbf16>
    %c1_261 = arith.constant 1 : index
    %c0_262 = arith.constant 0 : index
    %c0_263 = arith.constant 0 : index
    %275 = vector.load %arg8[%c1_261, %c0_262, %c0_263] : memref<36x128x128xbf16, #tpu.memory_space<vmem>>, vector<1x128x128xbf16>
    %276 = vector.shape_cast %275 : vector<1x128x128xbf16> to vector<128x128xbf16>
    %cst_264 = arith.constant dense<0.000000e+00> : vector<1x128xf32>
    %277 = tpu.matmul %274, %276, %cst_264 {dimension_numbers = #tpu.dot_dimension_numbers<[1], [0], [0], [1], [0, 0, 1, 1], [], []>} : vector<1x128xbf16>, vector<128x128xbf16>, vector<1x128xf32> -> vector<1x128xf32>
    %278 = arith.addf %260, %277 : vector<1x128xf32>
    %c10 = arith.constant 10 : index
    %c0_265 = arith.constant 0 : index
    %c0_266 = arith.constant 0 : index
    %279 = vector.load %arg8[%c10, %c0_265, %c0_266] : memref<36x128x128xbf16, #tpu.memory_space<vmem>>, vector<1x128x128xbf16>
    %280 = vector.shape_cast %279 : vector<1x128x128xbf16> to vector<128x128xbf16>
    %cst_267 = arith.constant dense<0.000000e+00> : vector<1x128xf32>
    %281 = tpu.matmul %274, %280, %cst_267 {dimension_numbers = #tpu.dot_dimension_numbers<[1], [0], [0], [1], [0, 0, 1, 1], [], []>} : vector<1x128xbf16>, vector<128x128xbf16>, vector<1x128xf32> -> vector<1x128xf32>
    %282 = arith.addf %264, %281 : vector<1x128xf32>
    %c19 = arith.constant 19 : index
    %c0_268 = arith.constant 0 : index
    %c0_269 = arith.constant 0 : index
    %283 = vector.load %arg8[%c19, %c0_268, %c0_269] : memref<36x128x128xbf16, #tpu.memory_space<vmem>>, vector<1x128x128xbf16>
    %284 = vector.shape_cast %283 : vector<1x128x128xbf16> to vector<128x128xbf16>
    %cst_270 = arith.constant dense<0.000000e+00> : vector<1x128xf32>
    %285 = tpu.matmul %274, %284, %cst_270 {dimension_numbers = #tpu.dot_dimension_numbers<[1], [0], [0], [1], [0, 0, 1, 1], [], []>} : vector<1x128xbf16>, vector<128x128xbf16>, vector<1x128xf32> -> vector<1x128xf32>
    %286 = arith.addf %268, %285 : vector<1x128xf32>
    %c28_271 = arith.constant 28 : index
    %c0_272 = arith.constant 0 : index
    %c0_273 = arith.constant 0 : index
    %287 = vector.load %arg8[%c28_271, %c0_272, %c0_273] : memref<36x128x128xbf16, #tpu.memory_space<vmem>>, vector<1x128x128xbf16>
    %288 = vector.shape_cast %287 : vector<1x128x128xbf16> to vector<128x128xbf16>
    %cst_274 = arith.constant dense<0.000000e+00> : vector<1x128xf32>
    %289 = tpu.matmul %274, %288, %cst_274 {dimension_numbers = #tpu.dot_dimension_numbers<[1], [0], [0], [1], [0, 0, 1, 1], [], []>} : vector<1x128xbf16>, vector<128x128xbf16>, vector<1x128xf32> -> vector<1x128xf32>
    %290 = arith.addf %272, %289 : vector<1x128xf32>
    %c2_275 = arith.constant 2 : index
    %c0_276 = arith.constant 0 : index
    %291 = tpu.strided_load %arg17[%c2_275, %c0_276] {strides = array<i32: 9, 1>} : memref<9x128xf32, #tpu.memory_space<vmem>>, vector<1x128xf32>
    %292 = arith.truncf %291 : vector<1x128xf32> to vector<1x128xbf16>
    %c2_277 = arith.constant 2 : index
    %c0_278 = arith.constant 0 : index
    %c0_279 = arith.constant 0 : index
    %293 = vector.load %arg8[%c2_277, %c0_278, %c0_279] : memref<36x128x128xbf16, #tpu.memory_space<vmem>>, vector<1x128x128xbf16>
    %294 = vector.shape_cast %293 : vector<1x128x128xbf16> to vector<128x128xbf16>
    %cst_280 = arith.constant dense<0.000000e+00> : vector<1x128xf32>
    %295 = tpu.matmul %292, %294, %cst_280 {dimension_numbers = #tpu.dot_dimension_numbers<[1], [0], [0], [1], [0, 0, 1, 1], [], []>} : vector<1x128xbf16>, vector<128x128xbf16>, vector<1x128xf32> -> vector<1x128xf32>
    %296 = arith.addf %278, %295 : vector<1x128xf32>
    %c11 = arith.constant 11 : index
    %c0_281 = arith.constant 0 : index
    %c0_282 = arith.constant 0 : index
    %297 = vector.load %arg8[%c11, %c0_281, %c0_282] : memref<36x128x128xbf16, #tpu.memory_space<vmem>>, vector<1x128x128xbf16>
    %298 = vector.shape_cast %297 : vector<1x128x128xbf16> to vector<128x128xbf16>
    %cst_283 = arith.constant dense<0.000000e+00> : vector<1x128xf32>
    %299 = tpu.matmul %292, %298, %cst_283 {dimension_numbers = #tpu.dot_dimension_numbers<[1], [0], [0], [1], [0, 0, 1, 1], [], []>} : vector<1x128xbf16>, vector<128x128xbf16>, vector<1x128xf32> -> vector<1x128xf32>
    %300 = arith.addf %282, %299 : vector<1x128xf32>
    %c20_284 = arith.constant 20 : index
    %c0_285 = arith.constant 0 : index
    %c0_286 = arith.constant 0 : index
    %301 = vector.load %arg8[%c20_284, %c0_285, %c0_286] : memref<36x128x128xbf16, #tpu.memory_space<vmem>>, vector<1x128x128xbf16>
    %302 = vector.shape_cast %301 : vector<1x128x128xbf16> to vector<128x128xbf16>
    %cst_287 = arith.constant dense<0.000000e+00> : vector<1x128xf32>
    %303 = tpu.matmul %292, %302, %cst_287 {dimension_numbers = #tpu.dot_dimension_numbers<[1], [0], [0], [1], [0, 0, 1, 1], [], []>} : vector<1x128xbf16>, vector<128x128xbf16>, vector<1x128xf32> -> vector<1x128xf32>
    %304 = arith.addf %286, %303 : vector<1x128xf32>
    %c29 = arith.constant 29 : index
    %c0_288 = arith.constant 0 : index
    %c0_289 = arith.constant 0 : index
    %305 = vector.load %arg8[%c29, %c0_288, %c0_289] : memref<36x128x128xbf16, #tpu.memory_space<vmem>>, vector<1x128x128xbf16>
    %306 = vector.shape_cast %305 : vector<1x128x128xbf16> to vector<128x128xbf16>
    %cst_290 = arith.constant dense<0.000000e+00> : vector<1x128xf32>
    %307 = tpu.matmul %292, %306, %cst_290 {dimension_numbers = #tpu.dot_dimension_numbers<[1], [0], [0], [1], [0, 0, 1, 1], [], []>} : vector<1x128xbf16>, vector<128x128xbf16>, vector<1x128xf32> -> vector<1x128xf32>
    %308 = arith.addf %290, %307 : vector<1x128xf32>
    %c3_291 = arith.constant 3 : index
    %c0_292 = arith.constant 0 : index
    %309 = tpu.strided_load %arg17[%c3_291, %c0_292] {strides = array<i32: 9, 1>} : memref<9x128xf32, #tpu.memory_space<vmem>>, vector<1x128xf32>
    %310 = arith.truncf %309 : vector<1x128xf32> to vector<1x128xbf16>
    %c3_293 = arith.constant 3 : index
    %c0_294 = arith.constant 0 : index
    %c0_295 = arith.constant 0 : index
    %311 = vector.load %arg8[%c3_293, %c0_294, %c0_295] : memref<36x128x128xbf16, #tpu.memory_space<vmem>>, vector<1x128x128xbf16>
    %312 = vector.shape_cast %311 : vector<1x128x128xbf16> to vector<128x128xbf16>
    %cst_296 = arith.constant dense<0.000000e+00> : vector<1x128xf32>
    %313 = tpu.matmul %310, %312, %cst_296 {dimension_numbers = #tpu.dot_dimension_numbers<[1], [0], [0], [1], [0, 0, 1, 1], [], []>} : vector<1x128xbf16>, vector<128x128xbf16>, vector<1x128xf32> -> vector<1x128xf32>
    %314 = arith.addf %296, %313 : vector<1x128xf32>
    %c12_297 = arith.constant 12 : index
    %c0_298 = arith.constant 0 : index
    %c0_299 = arith.constant 0 : index
    %315 = vector.load %arg8[%c12_297, %c0_298, %c0_299] : memref<36x128x128xbf16, #tpu.memory_space<vmem>>, vector<1x128x128xbf16>
    %316 = vector.shape_cast %315 : vector<1x128x128xbf16> to vector<128x128xbf16>
    %cst_300 = arith.constant dense<0.000000e+00> : vector<1x128xf32>
    %317 = tpu.matmul %310, %316, %cst_300 {dimension_numbers = #tpu.dot_dimension_numbers<[1], [0], [0], [1], [0, 0, 1, 1], [], []>} : vector<1x128xbf16>, vector<128x128xbf16>, vector<1x128xf32> -> vector<1x128xf32>
    %318 = arith.addf %300, %317 : vector<1x128xf32>
    %c21 = arith.constant 21 : index
    %c0_301 = arith.constant 0 : index
    %c0_302 = arith.constant 0 : index
    %319 = vector.load %arg8[%c21, %c0_301, %c0_302] : memref<36x128x128xbf16, #tpu.memory_space<vmem>>, vector<1x128x128xbf16>
    %320 = vector.shape_cast %319 : vector<1x128x128xbf16> to vector<128x128xbf16>
    %cst_303 = arith.constant dense<0.000000e+00> : vector<1x128xf32>
    %321 = tpu.matmul %310, %320, %cst_303 {dimension_numbers = #tpu.dot_dimension_numbers<[1], [0], [0], [1], [0, 0, 1, 1], [], []>} : vector<1x128xbf16>, vector<128x128xbf16>, vector<1x128xf32> -> vector<1x128xf32>
    %322 = arith.addf %304, %321 : vector<1x128xf32>
    %c30 = arith.constant 30 : index
    %c0_304 = arith.constant 0 : index
    %c0_305 = arith.constant 0 : index
    %323 = vector.load %arg8[%c30, %c0_304, %c0_305] : memref<36x128x128xbf16, #tpu.memory_space<vmem>>, vector<1x128x128xbf16>
    %324 = vector.shape_cast %323 : vector<1x128x128xbf16> to vector<128x128xbf16>
    %cst_306 = arith.constant dense<0.000000e+00> : vector<1x128xf32>
    %325 = tpu.matmul %310, %324, %cst_306 {dimension_numbers = #tpu.dot_dimension_numbers<[1], [0], [0], [1], [0, 0, 1, 1], [], []>} : vector<1x128xbf16>, vector<128x128xbf16>, vector<1x128xf32> -> vector<1x128xf32>
    %326 = arith.addf %308, %325 : vector<1x128xf32>
    %c4_307 = arith.constant 4 : index
    %c0_308 = arith.constant 0 : index
    %327 = tpu.strided_load %arg17[%c4_307, %c0_308] {strides = array<i32: 9, 1>} : memref<9x128xf32, #tpu.memory_space<vmem>>, vector<1x128xf32>
    %328 = arith.truncf %327 : vector<1x128xf32> to vector<1x128xbf16>
    %c4_309 = arith.constant 4 : index
    %c0_310 = arith.constant 0 : index
    %c0_311 = arith.constant 0 : index
    %329 = vector.load %arg8[%c4_309, %c0_310, %c0_311] : memref<36x128x128xbf16, #tpu.memory_space<vmem>>, vector<1x128x128xbf16>
    %330 = vector.shape_cast %329 : vector<1x128x128xbf16> to vector<128x128xbf16>
    %cst_312 = arith.constant dense<0.000000e+00> : vector<1x128xf32>
    %331 = tpu.matmul %328, %330, %cst_312 {dimension_numbers = #tpu.dot_dimension_numbers<[1], [0], [0], [1], [0, 0, 1, 1], [], []>} : vector<1x128xbf16>, vector<128x128xbf16>, vector<1x128xf32> -> vector<1x128xf32>
    %332 = arith.addf %314, %331 : vector<1x128xf32>
    %c13 = arith.constant 13 : index
    %c0_313 = arith.constant 0 : index
    %c0_314 = arith.constant 0 : index
    %333 = vector.load %arg8[%c13, %c0_313, %c0_314] : memref<36x128x128xbf16, #tpu.memory_space<vmem>>, vector<1x128x128xbf16>
    %334 = vector.shape_cast %333 : vector<1x128x128xbf16> to vector<128x128xbf16>
    %cst_315 = arith.constant dense<0.000000e+00> : vector<1x128xf32>
    %335 = tpu.matmul %328, %334, %cst_315 {dimension_numbers = #tpu.dot_dimension_numbers<[1], [0], [0], [1], [0, 0, 1, 1], [], []>} : vector<1x128xbf16>, vector<128x128xbf16>, vector<1x128xf32> -> vector<1x128xf32>
    %336 = arith.addf %318, %335 : vector<1x128xf32>
    %c22 = arith.constant 22 : index
    %c0_316 = arith.constant 0 : index
    %c0_317 = arith.constant 0 : index
    %337 = vector.load %arg8[%c22, %c0_316, %c0_317] : memref<36x128x128xbf16, #tpu.memory_space<vmem>>, vector<1x128x128xbf16>
    %338 = vector.shape_cast %337 : vector<1x128x128xbf16> to vector<128x128xbf16>
    %cst_318 = arith.constant dense<0.000000e+00> : vector<1x128xf32>
    %339 = tpu.matmul %328, %338, %cst_318 {dimension_numbers = #tpu.dot_dimension_numbers<[1], [0], [0], [1], [0, 0, 1, 1], [], []>} : vector<1x128xbf16>, vector<128x128xbf16>, vector<1x128xf32> -> vector<1x128xf32>
    %340 = arith.addf %322, %339 : vector<1x128xf32>
    %c31 = arith.constant 31 : index
    %c0_319 = arith.constant 0 : index
    %c0_320 = arith.constant 0 : index
    %341 = vector.load %arg8[%c31, %c0_319, %c0_320] : memref<36x128x128xbf16, #tpu.memory_space<vmem>>, vector<1x128x128xbf16>
    %342 = vector.shape_cast %341 : vector<1x128x128xbf16> to vector<128x128xbf16>
    %cst_321 = arith.constant dense<0.000000e+00> : vector<1x128xf32>
    %343 = tpu.matmul %328, %342, %cst_321 {dimension_numbers = #tpu.dot_dimension_numbers<[1], [0], [0], [1], [0, 0, 1, 1], [], []>} : vector<1x128xbf16>, vector<128x128xbf16>, vector<1x128xf32> -> vector<1x128xf32>
    %344 = arith.addf %326, %343 : vector<1x128xf32>
    %c5_322 = arith.constant 5 : index
    %c0_323 = arith.constant 0 : index
    %345 = tpu.strided_load %arg17[%c5_322, %c0_323] {strides = array<i32: 9, 1>} : memref<9x128xf32, #tpu.memory_space<vmem>>, vector<1x128xf32>
    %346 = arith.truncf %345 : vector<1x128xf32> to vector<1x128xbf16>
    %c5_324 = arith.constant 5 : index
    %c0_325 = arith.constant 0 : index
    %c0_326 = arith.constant 0 : index
    %347 = vector.load %arg8[%c5_324, %c0_325, %c0_326] : memref<36x128x128xbf16, #tpu.memory_space<vmem>>, vector<1x128x128xbf16>
    %348 = vector.shape_cast %347 : vector<1x128x128xbf16> to vector<128x128xbf16>
    %cst_327 = arith.constant dense<0.000000e+00> : vector<1x128xf32>
    %349 = tpu.matmul %346, %348, %cst_327 {dimension_numbers = #tpu.dot_dimension_numbers<[1], [0], [0], [1], [0, 0, 1, 1], [], []>} : vector<1x128xbf16>, vector<128x128xbf16>, vector<1x128xf32> -> vector<1x128xf32>
    %350 = arith.addf %332, %349 : vector<1x128xf32>
    %c14_328 = arith.constant 14 : index
    %c0_329 = arith.constant 0 : index
    %c0_330 = arith.constant 0 : index
    %351 = vector.load %arg8[%c14_328, %c0_329, %c0_330] : memref<36x128x128xbf16, #tpu.memory_space<vmem>>, vector<1x128x128xbf16>
    %352 = vector.shape_cast %351 : vector<1x128x128xbf16> to vector<128x128xbf16>
    %cst_331 = arith.constant dense<0.000000e+00> : vector<1x128xf32>
    %353 = tpu.matmul %346, %352, %cst_331 {dimension_numbers = #tpu.dot_dimension_numbers<[1], [0], [0], [1], [0, 0, 1, 1], [], []>} : vector<1x128xbf16>, vector<128x128xbf16>, vector<1x128xf32> -> vector<1x128xf32>
    %354 = arith.addf %336, %353 : vector<1x128xf32>
    %c23_332 = arith.constant 23 : index
    %c0_333 = arith.constant 0 : index
    %c0_334 = arith.constant 0 : index
    %355 = vector.load %arg8[%c23_332, %c0_333, %c0_334] : memref<36x128x128xbf16, #tpu.memory_space<vmem>>, vector<1x128x128xbf16>
    %356 = vector.shape_cast %355 : vector<1x128x128xbf16> to vector<128x128xbf16>
    %cst_335 = arith.constant dense<0.000000e+00> : vector<1x128xf32>
    %357 = tpu.matmul %346, %356, %cst_335 {dimension_numbers = #tpu.dot_dimension_numbers<[1], [0], [0], [1], [0, 0, 1, 1], [], []>} : vector<1x128xbf16>, vector<128x128xbf16>, vector<1x128xf32> -> vector<1x128xf32>
    %358 = arith.addf %340, %357 : vector<1x128xf32>
    %c32_336 = arith.constant 32 : index
    %c0_337 = arith.constant 0 : index
    %c0_338 = arith.constant 0 : index
    %359 = vector.load %arg8[%c32_336, %c0_337, %c0_338] : memref<36x128x128xbf16, #tpu.memory_space<vmem>>, vector<1x128x128xbf16>
    %360 = vector.shape_cast %359 : vector<1x128x128xbf16> to vector<128x128xbf16>
    %cst_339 = arith.constant dense<0.000000e+00> : vector<1x128xf32>
    %361 = tpu.matmul %346, %360, %cst_339 {dimension_numbers = #tpu.dot_dimension_numbers<[1], [0], [0], [1], [0, 0, 1, 1], [], []>} : vector<1x128xbf16>, vector<128x128xbf16>, vector<1x128xf32> -> vector<1x128xf32>
    %362 = arith.addf %344, %361 : vector<1x128xf32>
    %c6_340 = arith.constant 6 : index
    %c0_341 = arith.constant 0 : index
    %363 = tpu.strided_load %arg17[%c6_340, %c0_341] {strides = array<i32: 9, 1>} : memref<9x128xf32, #tpu.memory_space<vmem>>, vector<1x128xf32>
    %364 = arith.truncf %363 : vector<1x128xf32> to vector<1x128xbf16>
    %c6_342 = arith.constant 6 : index
    %c0_343 = arith.constant 0 : index
    %c0_344 = arith.constant 0 : index
    %365 = vector.load %arg8[%c6_342, %c0_343, %c0_344] : memref<36x128x128xbf16, #tpu.memory_space<vmem>>, vector<1x128x128xbf16>
    %366 = vector.shape_cast %365 : vector<1x128x128xbf16> to vector<128x128xbf16>
    %cst_345 = arith.constant dense<0.000000e+00> : vector<1x128xf32>
    %367 = tpu.matmul %364, %366, %cst_345 {dimension_numbers = #tpu.dot_dimension_numbers<[1], [0], [0], [1], [0, 0, 1, 1], [], []>} : vector<1x128xbf16>, vector<128x128xbf16>, vector<1x128xf32> -> vector<1x128xf32>
    %368 = arith.addf %350, %367 : vector<1x128xf32>
    %c15_346 = arith.constant 15 : index
    %c0_347 = arith.constant 0 : index
    %c0_348 = arith.constant 0 : index
    %369 = vector.load %arg8[%c15_346, %c0_347, %c0_348] : memref<36x128x128xbf16, #tpu.memory_space<vmem>>, vector<1x128x128xbf16>
    %370 = vector.shape_cast %369 : vector<1x128x128xbf16> to vector<128x128xbf16>
    %cst_349 = arith.constant dense<0.000000e+00> : vector<1x128xf32>
    %371 = tpu.matmul %364, %370, %cst_349 {dimension_numbers = #tpu.dot_dimension_numbers<[1], [0], [0], [1], [0, 0, 1, 1], [], []>} : vector<1x128xbf16>, vector<128x128xbf16>, vector<1x128xf32> -> vector<1x128xf32>
    %372 = arith.addf %354, %371 : vector<1x128xf32>
    %c24_350 = arith.constant 24 : index
    %c0_351 = arith.constant 0 : index
    %c0_352 = arith.constant 0 : index
    %373 = vector.load %arg8[%c24_350, %c0_351, %c0_352] : memref<36x128x128xbf16, #tpu.memory_space<vmem>>, vector<1x128x128xbf16>
    %374 = vector.shape_cast %373 : vector<1x128x128xbf16> to vector<128x128xbf16>
    %cst_353 = arith.constant dense<0.000000e+00> : vector<1x128xf32>
    %375 = tpu.matmul %364, %374, %cst_353 {dimension_numbers = #tpu.dot_dimension_numbers<[1], [0], [0], [1], [0, 0, 1, 1], [], []>} : vector<1x128xbf16>, vector<128x128xbf16>, vector<1x128xf32> -> vector<1x128xf32>
    %376 = arith.addf %358, %375 : vector<1x128xf32>
    %c33 = arith.constant 33 : index
    %c0_354 = arith.constant 0 : index
    %c0_355 = arith.constant 0 : index
    %377 = vector.load %arg8[%c33, %c0_354, %c0_355] : memref<36x128x128xbf16, #tpu.memory_space<vmem>>, vector<1x128x128xbf16>
    %378 = vector.shape_cast %377 : vector<1x128x128xbf16> to vector<128x128xbf16>
    %cst_356 = arith.constant dense<0.000000e+00> : vector<1x128xf32>
    %379 = tpu.matmul %364, %378, %cst_356 {dimension_numbers = #tpu.dot_dimension_numbers<[1], [0], [0], [1], [0, 0, 1, 1], [], []>} : vector<1x128xbf16>, vector<128x128xbf16>, vector<1x128xf32> -> vector<1x128xf32>
    %380 = arith.addf %362, %379 : vector<1x128xf32>
    %c7_357 = arith.constant 7 : index
    %c0_358 = arith.constant 0 : index
    %381 = tpu.strided_load %arg17[%c7_357, %c0_358] {strides = array<i32: 9, 1>} : memref<9x128xf32, #tpu.memory_space<vmem>>, vector<1x128xf32>
    %382 = arith.truncf %381 : vector<1x128xf32> to vector<1x128xbf16>
    %c7_359 = arith.constant 7 : index
    %c0_360 = arith.constant 0 : index
    %c0_361 = arith.constant 0 : index
    %383 = vector.load %arg8[%c7_359, %c0_360, %c0_361] : memref<36x128x128xbf16, #tpu.memory_space<vmem>>, vector<1x128x128xbf16>
    %384 = vector.shape_cast %383 : vector<1x128x128xbf16> to vector<128x128xbf16>
    %cst_362 = arith.constant dense<0.000000e+00> : vector<1x128xf32>
    %385 = tpu.matmul %382, %384, %cst_362 {dimension_numbers = #tpu.dot_dimension_numbers<[1], [0], [0], [1], [0, 0, 1, 1], [], []>} : vector<1x128xbf16>, vector<128x128xbf16>, vector<1x128xf32> -> vector<1x128xf32>
    %386 = arith.addf %368, %385 : vector<1x128xf32>
    %c16_363 = arith.constant 16 : index
    %c0_364 = arith.constant 0 : index
    %c0_365 = arith.constant 0 : index
    %387 = vector.load %arg8[%c16_363, %c0_364, %c0_365] : memref<36x128x128xbf16, #tpu.memory_space<vmem>>, vector<1x128x128xbf16>
    %388 = vector.shape_cast %387 : vector<1x128x128xbf16> to vector<128x128xbf16>
    %cst_366 = arith.constant dense<0.000000e+00> : vector<1x128xf32>
    %389 = tpu.matmul %382, %388, %cst_366 {dimension_numbers = #tpu.dot_dimension_numbers<[1], [0], [0], [1], [0, 0, 1, 1], [], []>} : vector<1x128xbf16>, vector<128x128xbf16>, vector<1x128xf32> -> vector<1x128xf32>
    %390 = arith.addf %372, %389 : vector<1x128xf32>
    %c25_367 = arith.constant 25 : index
    %c0_368 = arith.constant 0 : index
    %c0_369 = arith.constant 0 : index
    %391 = vector.load %arg8[%c25_367, %c0_368, %c0_369] : memref<36x128x128xbf16, #tpu.memory_space<vmem>>, vector<1x128x128xbf16>
    %392 = vector.shape_cast %391 : vector<1x128x128xbf16> to vector<128x128xbf16>
    %cst_370 = arith.constant dense<0.000000e+00> : vector<1x128xf32>
    %393 = tpu.matmul %382, %392, %cst_370 {dimension_numbers = #tpu.dot_dimension_numbers<[1], [0], [0], [1], [0, 0, 1, 1], [], []>} : vector<1x128xbf16>, vector<128x128xbf16>, vector<1x128xf32> -> vector<1x128xf32>
    %394 = arith.addf %376, %393 : vector<1x128xf32>
    %c34 = arith.constant 34 : index
    %c0_371 = arith.constant 0 : index
    %c0_372 = arith.constant 0 : index
    %395 = vector.load %arg8[%c34, %c0_371, %c0_372] : memref<36x128x128xbf16, #tpu.memory_space<vmem>>, vector<1x128x128xbf16>
    %396 = vector.shape_cast %395 : vector<1x128x128xbf16> to vector<128x128xbf16>
    %cst_373 = arith.constant dense<0.000000e+00> : vector<1x128xf32>
    %397 = tpu.matmul %382, %396, %cst_373 {dimension_numbers = #tpu.dot_dimension_numbers<[1], [0], [0], [1], [0, 0, 1, 1], [], []>} : vector<1x128xbf16>, vector<128x128xbf16>, vector<1x128xf32> -> vector<1x128xf32>
    %398 = arith.addf %380, %397 : vector<1x128xf32>
    %c8_374 = arith.constant 8 : index
    %c0_375 = arith.constant 0 : index
    %399 = tpu.strided_load %arg17[%c8_374, %c0_375] {strides = array<i32: 9, 1>} : memref<9x128xf32, #tpu.memory_space<vmem>>, vector<1x128xf32>
    %400 = arith.truncf %399 : vector<1x128xf32> to vector<1x128xbf16>
    %c8_376 = arith.constant 8 : index
    %c0_377 = arith.constant 0 : index
    %c0_378 = arith.constant 0 : index
    %401 = vector.load %arg8[%c8_376, %c0_377, %c0_378] : memref<36x128x128xbf16, #tpu.memory_space<vmem>>, vector<1x128x128xbf16>
    %402 = vector.shape_cast %401 : vector<1x128x128xbf16> to vector<128x128xbf16>
    %cst_379 = arith.constant dense<0.000000e+00> : vector<1x128xf32>
    %403 = tpu.matmul %400, %402, %cst_379 {dimension_numbers = #tpu.dot_dimension_numbers<[1], [0], [0], [1], [0, 0, 1, 1], [], []>} : vector<1x128xbf16>, vector<128x128xbf16>, vector<1x128xf32> -> vector<1x128xf32>
    %404 = arith.addf %386, %403 : vector<1x128xf32>
    %c17_380 = arith.constant 17 : index
    %c0_381 = arith.constant 0 : index
    %c0_382 = arith.constant 0 : index
    %405 = vector.load %arg8[%c17_380, %c0_381, %c0_382] : memref<36x128x128xbf16, #tpu.memory_space<vmem>>, vector<1x128x128xbf16>
    %406 = vector.shape_cast %405 : vector<1x128x128xbf16> to vector<128x128xbf16>
    %cst_383 = arith.constant dense<0.000000e+00> : vector<1x128xf32>
    %407 = tpu.matmul %400, %406, %cst_383 {dimension_numbers = #tpu.dot_dimension_numbers<[1], [0], [0], [1], [0, 0, 1, 1], [], []>} : vector<1x128xbf16>, vector<128x128xbf16>, vector<1x128xf32> -> vector<1x128xf32>
    %408 = arith.addf %390, %407 : vector<1x128xf32>
    %c26 = arith.constant 26 : index
    %c0_384 = arith.constant 0 : index
    %c0_385 = arith.constant 0 : index
    %409 = vector.load %arg8[%c26, %c0_384, %c0_385] : memref<36x128x128xbf16, #tpu.memory_space<vmem>>, vector<1x128x128xbf16>
    %410 = vector.shape_cast %409 : vector<1x128x128xbf16> to vector<128x128xbf16>
    %cst_386 = arith.constant dense<0.000000e+00> : vector<1x128xf32>
    %411 = tpu.matmul %400, %410, %cst_386 {dimension_numbers = #tpu.dot_dimension_numbers<[1], [0], [0], [1], [0, 0, 1, 1], [], []>} : vector<1x128xbf16>, vector<128x128xbf16>, vector<1x128xf32> -> vector<1x128xf32>
    %412 = arith.addf %394, %411 : vector<1x128xf32>
    %c35 = arith.constant 35 : index
    %c0_387 = arith.constant 0 : index
    %c0_388 = arith.constant 0 : index
    %413 = vector.load %arg8[%c35, %c0_387, %c0_388] : memref<36x128x128xbf16, #tpu.memory_space<vmem>>, vector<1x128x128xbf16>
    %414 = vector.shape_cast %413 : vector<1x128x128xbf16> to vector<128x128xbf16>
    %cst_389 = arith.constant dense<0.000000e+00> : vector<1x128xf32>
    %415 = tpu.matmul %400, %414, %cst_389 {dimension_numbers = #tpu.dot_dimension_numbers<[1], [0], [0], [1], [0, 0, 1, 1], [], []>} : vector<1x128xbf16>, vector<128x128xbf16>, vector<1x128xf32> -> vector<1x128xf32>
    %416 = arith.addf %398, %415 : vector<1x128xf32>
    %417 = math.tanh %404 : vector<1x128xf32>
    %418 = arith.truncf %417 : vector<1x128xf32> to vector<1x128xbf16>
    %c0_390 = arith.constant 0 : index
    %c0_391 = arith.constant 0 : index
    %419 = vector.load %arg10[%c0_390, %c0_391] : memref<128x10xbf16, #tpu.memory_space<vmem>>, vector<128x10xbf16>
    %cst_392 = arith.constant dense<0.000000e+00> : vector<1x10xf32>
    %420 = tpu.matmul %418, %419, %cst_392 {dimension_numbers = #tpu.dot_dimension_numbers<[1], [0], [0], [1], [0, 0, 1, 1], [], []>} : vector<1x128xbf16>, vector<128x10xbf16>, vector<1x10xf32> -> vector<1x10xf32>
    %c0_393 = arith.constant 0 : index
    %c0_394 = arith.constant 0 : index
    %421 = vector.load %arg11[%c0_393, %c0_394] : memref<1x10xf32, #tpu.memory_space<vmem>>, vector<1x10xf32>
    %422 = arith.addf %420, %421 : vector<1x10xf32>
    %c0_395 = arith.constant 0 : index
    %c0_396 = arith.constant 0 : index
    %423 = vector.load %arg12[%c0_395, %c0_396] : memref<4x10xf32, #tpu.memory_space<vmem>>, vector<1x10xf32>
    tpu.vector_store %arg12[%c0_395, %c0_396], %422 {strides = array<i32>} : memref<4x10xf32, #tpu.memory_space<vmem>>, vector<1x10xf32>,
    %424 = math.tanh %408 : vector<1x128xf32>
    %425 = arith.truncf %424 : vector<1x128xf32> to vector<1x128xbf16>
    %c0_397 = arith.constant 0 : index
    %c0_398 = arith.constant 0 : index
    %426 = vector.load %arg10[%c0_397, %c0_398] : memref<128x10xbf16, #tpu.memory_space<vmem>>, vector<128x10xbf16>
    %cst_399 = arith.constant dense<0.000000e+00> : vector<1x10xf32>
    %427 = tpu.matmul %425, %426, %cst_399 {dimension_numbers = #tpu.dot_dimension_numbers<[1], [0], [0], [1], [0, 0, 1, 1], [], []>} : vector<1x128xbf16>, vector<128x10xbf16>, vector<1x10xf32> -> vector<1x10xf32>
    %c0_400 = arith.constant 0 : index
    %c0_401 = arith.constant 0 : index
    %428 = vector.load %arg11[%c0_400, %c0_401] : memref<1x10xf32, #tpu.memory_space<vmem>>, vector<1x10xf32>
    %429 = arith.addf %427, %428 : vector<1x10xf32>
    %c1_402 = arith.constant 1 : index
    %c0_403 = arith.constant 0 : index
    %430 = vector.load %arg12[%c1_402, %c0_403] : memref<4x10xf32, #tpu.memory_space<vmem>>, vector<1x10xf32>
    tpu.vector_store %arg12[%c1_402, %c0_403], %429 {strides = array<i32>} : memref<4x10xf32, #tpu.memory_space<vmem>>, vector<1x10xf32>,
    %431 = math.tanh %412 : vector<1x128xf32>
    %432 = arith.truncf %431 : vector<1x128xf32> to vector<1x128xbf16>
    %c0_404 = arith.constant 0 : index
    %c0_405 = arith.constant 0 : index
    %433 = vector.load %arg10[%c0_404, %c0_405] : memref<128x10xbf16, #tpu.memory_space<vmem>>, vector<128x10xbf16>
    %cst_406 = arith.constant dense<0.000000e+00> : vector<1x10xf32>
    %434 = tpu.matmul %432, %433, %cst_406 {dimension_numbers = #tpu.dot_dimension_numbers<[1], [0], [0], [1], [0, 0, 1, 1], [], []>} : vector<1x128xbf16>, vector<128x10xbf16>, vector<1x10xf32> -> vector<1x10xf32>
    %c0_407 = arith.constant 0 : index
    %c0_408 = arith.constant 0 : index
    %435 = vector.load %arg11[%c0_407, %c0_408] : memref<1x10xf32, #tpu.memory_space<vmem>>, vector<1x10xf32>
    %436 = arith.addf %434, %435 : vector<1x10xf32>
    %c2_409 = arith.constant 2 : index
    %c0_410 = arith.constant 0 : index
    %437 = vector.load %arg12[%c2_409, %c0_410] : memref<4x10xf32, #tpu.memory_space<vmem>>, vector<1x10xf32>
    tpu.vector_store %arg12[%c2_409, %c0_410], %436 {strides = array<i32>} : memref<4x10xf32, #tpu.memory_space<vmem>>, vector<1x10xf32>,
    %438 = math.tanh %416 : vector<1x128xf32>
    %439 = arith.truncf %438 : vector<1x128xf32> to vector<1x128xbf16>
    %c0_411 = arith.constant 0 : index
    %c0_412 = arith.constant 0 : index
    %440 = vector.load %arg10[%c0_411, %c0_412] : memref<128x10xbf16, #tpu.memory_space<vmem>>, vector<128x10xbf16>
    %cst_413 = arith.constant dense<0.000000e+00> : vector<1x10xf32>
    %441 = tpu.matmul %439, %440, %cst_413 {dimension_numbers = #tpu.dot_dimension_numbers<[1], [0], [0], [1], [0, 0, 1, 1], [], []>} : vector<1x128xbf16>, vector<128x10xbf16>, vector<1x10xf32> -> vector<1x10xf32>
    %c0_414 = arith.constant 0 : index
    %c0_415 = arith.constant 0 : index
    %442 = vector.load %arg11[%c0_414, %c0_415] : memref<1x10xf32, #tpu.memory_space<vmem>>, vector<1x10xf32>
    %443 = arith.addf %441, %442 : vector<1x10xf32>
    %c3_416 = arith.constant 3 : index
    %c0_417 = arith.constant 0 : index
    %444 = vector.load %arg12[%c3_416, %c0_417] : memref<4x10xf32, #tpu.memory_space<vmem>>, vector<1x10xf32>
    tpu.vector_store %arg12[%c3_416, %c0_417], %443 {strides = array<i32>} : memref<4x10xf32, #tpu.memory_space<vmem>>, vector<1x10xf32>,
    return
  }
  func.func @transform_0(%arg0: i32) -> (i32, i32) {
    %c0_i32 = arith.constant 0 : i32
    %c0_i32_0 = arith.constant 0 : i32
    return %arg0, %c0_i32 : i32, i32
  }
  func.func @transform_1(%arg0: i32) -> (i32, i32) {
    %c0_i32 = arith.constant 0 : i32
    %c0_i32_0 = arith.constant 0 : i32
    %c0_i32_1 = arith.constant 0 : i32
    return %c0_i32, %c0_i32_0 : i32, i32
  }
  func.func @transform_2(%arg0: i32) -> (i32, i32) {
    %c0_i32 = arith.constant 0 : i32
    %c0_i32_0 = arith.constant 0 : i32
    %c0_i32_1 = arith.constant 0 : i32
    return %c0_i32, %c0_i32_0 : i32, i32
  }
  func.func @transform_3(%arg0: i32) -> (i32, i32, i32) {
    %c0_i32 = arith.constant 0 : i32
    %c0_i32_0 = arith.constant 0 : i32
    %c0_i32_1 = arith.constant 0 : i32
    %c0_i32_2 = arith.constant 0 : i32
    return %c0_i32, %c0_i32_0, %c0_i32_1 : i32, i32, i32
  }
  func.func @transform_4(%arg0: i32) -> (i32, i32) {
    %c0_i32 = arith.constant 0 : i32
    %c0_i32_0 = arith.constant 0 : i32
    %c0_i32_1 = arith.constant 0 : i32
    return %c0_i32, %c0_i32_0 : i32, i32
  }
  func.func @transform_5(%arg0: i32) -> (i32, i32, i32) {
    %c0_i32 = arith.constant 0 : i32
    %c0_i32_0 = arith.constant 0 : i32
    %c0_i32_1 = arith.constant 0 : i32
    %c0_i32_2 = arith.constant 0 : i32
    return %c0_i32, %c0_i32_0, %c0_i32_1 : i32, i32, i32
  }
  func.func @transform_6(%arg0: i32) -> (i32, i32) {
    %c0_i32 = arith.constant 0 : i32
    %c0_i32_0 = arith.constant 0 : i32
    %c0_i32_1 = arith.constant 0 : i32
    return %c0_i32, %c0_i32_0 : i32, i32
  }
  func.func @transform_7(%arg0: i32) -> (i32, i32, i32) {
    %c0_i32 = arith.constant 0 : i32
    %c0_i32_0 = arith.constant 0 : i32
    %c0_i32_1 = arith.constant 0 : i32
    %c0_i32_2 = arith.constant 0 : i32
    return %c0_i32, %c0_i32_0, %c0_i32_1 : i32, i32, i32
  }
  func.func @transform_8(%arg0: i32) -> (i32, i32) {
    %c0_i32 = arith.constant 0 : i32
    %c0_i32_0 = arith.constant 0 : i32
    %c0_i32_1 = arith.constant 0 : i32
    return %c0_i32, %c0_i32_0 : i32, i32
  }
  func.func @transform_9(%arg0: i32) -> (i32, i32) {
    %c0_i32 = arith.constant 0 : i32
    %c0_i32_0 = arith.constant 0 : i32
    %c0_i32_1 = arith.constant 0 : i32
    return %c0_i32, %c0_i32_0 : i32, i32
  }
  func.func @transform_10(%arg0: i32) -> (i32, i32) {
    %c0_i32 = arith.constant 0 : i32
    %c0_i32_0 = arith.constant 0 : i32
    %c0_i32_1 = arith.constant 0 : i32
    return %c0_i32, %c0_i32_0 : i32, i32
  }
  func.func @transform_11(%arg0: i32) -> (i32, i32) {
    %c0_i32 = arith.constant 0 : i32
    %c0_i32_0 = arith.constant 0 : i32
    return %arg0, %c0_i32 : i32, i32
  }
}

</mosaic_0001>

<llo_original>
// kernel: mnist_forward.1
$region0: #{mnist_forward.1}
  #allocation0 [shape = 'u32[]', space=smem, size = 0x4, offset = 0x4, fixed_abs, tag = 'smem constant byte address 0x4 - core index']
  #allocation1 [shape = 'u32[144,128]{1,0:T(1,128)}', space=vmem, size = 0x12000, scoped, tag = 'internal scratch']
  #allocation2 [shape = 'bf16[304,128]{1,0:T(16,128)(2,1)}', space=vmem, size = 0x13000, scoped, tag = 'scratch operand']
  #allocation3 [shape = 'bf16[96,128]{1,0:T(16,128)(2,1)}', space=vmem, size = 0x6000, scoped, tag = 'scratch operand']
  #allocation4 [shape = 'f32[784,128]{1,0:T(8,128)}', space=vmem, size = 0x62000, scoped, tag = 'scratch operand']
  #allocation5 [shape = 'f32[392,128]{1,0:T(8,128)}', space=vmem, size = 0x31000, scoped, tag = 'scratch operand']
  #allocation6 [shape = 'f32[9,128]{1,0:T(8,128)}', space=vmem, size = 0x2000, scoped, tag = 'scratch operand']
  %s0 = inlined_call_operand.vmem [shape: bf16[784,64], index: 0, kind: input, shape index: {}]
  %s1 = inlined_call_operand.vmem [shape: bf16[64,128], index: 1, kind: input, shape index: {}]
  %s2 = inlined_call_operand.vmem [shape: f32[1,128], index: 2, kind: input, shape index: {}]
  %s3 = inlined_call_operand.vmem [shape: bf16[9,128,128], index: 3, kind: input, shape index: {}]
  %s4 = inlined_call_operand.vmem [shape: f32[1,128], index: 4, kind: input, shape index: {}]
  %s5 = inlined_call_operand.vmem [shape: bf16[9,128,128], index: 5, kind: input, shape index: {}]
  %s6 = inlined_call_operand.vmem [shape: f32[1,128], index: 6, kind: input, shape index: {}]
  %s7 = inlined_call_operand.vmem [shape: bf16[36,128,128], index: 7, kind: input, shape index: {}]
  %s8 = inlined_call_operand.vmem [shape: f32[1,128], index: 8, kind: input, shape index: {}]
  %s9 = inlined_call_operand.vmem [shape: bf16[128,10], index: 9, kind: input, shape index: {}]
  %s10 = inlined_call_operand.vmem [shape: f32[1,10], index: 10, kind: input, shape index: {}]
  %s11 = inlined_call_operand.vmem [shape: f32[4,10], index: 11, kind: output, shape index: {}]
  %s12 = sld [smem:[#allocation0]]
  $region54: #{mnist_forward.1} parent=0
    _
  %s14 = ssub.s32 1, %s12
  %s15 = scalar_select 0, %s14, %s12
  // Predicated region
  $region2: #{mnist_forward.1} parent=0 // pred_check
    _
  $region3: #{mnist_forward.1} parent=0 // pred_check_branch
    %17 = sbr.rel (0) target = $region5
  $region4: #{mnist_forward.1} parent=0 // pred_region
    _
  $region5: #{mnist_forward.1} parent=0 // pred_fallthru
    _
  // Predicated region
  $region6: #{mnist_forward.1} parent=0 // pred_check
    _
  $region7: #{mnist_forward.1} parent=0 // pred_check_branch
    %19 = sbr.rel (0) target = $region9
  $region8: #{mnist_forward.1} parent=0 // pred_region
    _
  $region9: #{mnist_forward.1} parent=0 // pred_fallthru
    _
  // Predicated region
  $region10: #{mnist_forward.1} parent=0 // pred_check
    _
  $region11: #{mnist_forward.1} parent=0 // pred_check_branch
    %21 = sbr.rel (0) target = $region13
  $region12: #{mnist_forward.1} parent=0 // pred_region
    _
  $region13: #{mnist_forward.1} parent=0 // pred_fallthru
    _
  // Predicated region
  $region14: #{mnist_forward.1} parent=0 // pred_check
    _
  $region15: #{mnist_forward.1} parent=0 // pred_check_branch
    %23 = sbr.rel (0) target = $region17
  $region16: #{mnist_forward.1} parent=0 // pred_region
    _
  $region17: #{mnist_forward.1} parent=0 // pred_fallthru
    _
  // Predicated region
  $region18: #{mnist_forward.1} parent=0 // pred_check
    _
  $region19: #{mnist_forward.1} parent=0 // pred_check_branch
    %25 = sbr.rel (0) target = $region21
  $region20: #{mnist_forward.1} parent=0 // pred_region
    _
  $region21: #{mnist_forward.1} parent=0 // pred_fallthru
    _
  // Predicated region
  $region22: #{mnist_forward.1} parent=0 // pred_check
    _
  $region23: #{mnist_forward.1} parent=0 // pred_check_branch
    %27 = sbr.rel (0) target = $region25
  $region24: #{mnist_forward.1} parent=0 // pred_region
    _
  $region25: #{mnist_forward.1} parent=0 // pred_fallthru
    _
  // Predicated region
  $region26: #{mnist_forward.1} parent=0 // pred_check
    _
  $region27: #{mnist_forward.1} parent=0 // pred_check_branch
    %29 = sbr.rel (0) target = $region29
  $region28: #{mnist_forward.1} parent=0 // pred_region
    _
  $region29: #{mnist_forward.1} parent=0 // pred_fallthru
    _
  // Predicated region
  $region30: #{mnist_forward.1} parent=0 // pred_check
    _
  $region31: #{mnist_forward.1} parent=0 // pred_check_branch
    %31 = sbr.rel (0) target = $region33
  $region32: #{mnist_forward.1} parent=0 // pred_region
    _
  $region33: #{mnist_forward.1} parent=0 // pred_fallthru
    _
  // Predicated region
  $region34: #{mnist_forward.1} parent=0 // pred_check
    _
  $region35: #{mnist_forward.1} parent=0 // pred_check_branch
    %33 = sbr.rel (0) target = $region37
  $region36: #{mnist_forward.1} parent=0 // pred_region
    _
  $region37: #{mnist_forward.1} parent=0 // pred_fallthru
    _
  // Predicated region
  $region38: #{mnist_forward.1} parent=0 // pred_check
    _
  $region39: #{mnist_forward.1} parent=0 // pred_check_branch
    %35 = sbr.rel (0) target = $region41
  $region40: #{mnist_forward.1} parent=0 // pred_region
    _
  $region41: #{mnist_forward.1} parent=0 // pred_fallthru
    _
  // Predicated region
  $region42: #{mnist_forward.1} parent=0 // pred_check
    _
  $region43: #{mnist_forward.1} parent=0 // pred_check_branch
    %37 = sbr.rel (0) target = $region45
  $region44: #{mnist_forward.1} parent=0 // pred_region
    _
  $region45: #{mnist_forward.1} parent=0 // pred_fallthru
    _
  %39 = vst [vmem:[#allocation2] sm:$0xff] 0
  %40 = vst [vmem:[#allocation2 + $0x8] sm:$0xff] 0
  %41 = vst [vmem:[#allocation2 + $0x10] sm:$0xff] 0
  %42 = vst [vmem:[#allocation2 + $0x18] sm:$0xff] 0
  %43 = vst [vmem:[#allocation2 + $0x20] sm:$0xff] 0
  %44 = vst [vmem:[#allocation2 + $0x28] sm:$0xff] 0
  %45 = vst [vmem:[#allocation2 + $0x30] sm:$0xff] 0
  %46 = vst [vmem:[#allocation2 + $0x38] sm:$0xff] 0
  %47 = vst [vmem:[#allocation2 + $0x40] sm:$0xff] 0
  %48 = vst [vmem:[#allocation2 + $0x48] sm:$0xff] 0
  %49 = vst [vmem:[#allocation2 + $0x50] sm:$0xff] 0
  %50 = vst [vmem:[#allocation2 + $0x58] sm:$0xff] 0
  %51 = vst [vmem:[#allocation2 + $0x60] sm:$0xff] 0
  %52 = vst [vmem:[#allocation2 + $0x68] sm:$0xff] 0
  %53 = vst [vmem:[#allocation2 + $0x70] sm:$0xff] 0
  %54 = vst [vmem:[#allocation2 + $0x78] sm:$0xff] 0
  %55 = vst [vmem:[#allocation2 + $0x80] sm:$0xff] 0
  %56 = vst [vmem:[#allocation2 + $0x88] sm:$0xff] 0
  %57 = vst [vmem:[#allocation2 + $0x90] sm:$0xff] 0
  %58 = vst [vmem:[#allocation3] sm:$0xff] 0
  %59 = vst [vmem:[#allocation3 + $0x8] sm:$0xff] 0
  %60 = vst [vmem:[#allocation3 + $0x10] sm:$0xff] 0
  %61 = vst [vmem:[#allocation3 + $0x18] sm:$0xff] 0
  %62 = vst [vmem:[#allocation3 + $0x20] sm:$0xff] 0
  %63 = vst [vmem:[#allocation3 + $0x28] sm:$0xff] 0
  %v64 = vld [vmem:[%s0] sm:$0xf]
  %v65 = vld [vmem:[%s0 + $0x4] sm:$0xf]
  %v66 = vld [vmem:[%s0 + $0x8] sm:$0xf]
  %v67 = vld [vmem:[%s0 + $0xc] sm:$0xf]
  %v68 = vld [vmem:[%s0 + $0x10] sm:$0xf]
  %v69 = vld [vmem:[%s0 + $0x14] sm:$0xf]
  %v70 = vld [vmem:[%s0 + $0x18] sm:$0xf]
  %v71 = vld [vmem:[%s0 + $0x1c] sm:$0xf]
  %v72 = vld [vmem:[%s0 + $0x20] sm:$0xf]
  %v73 = vld [vmem:[%s0 + $0x24] sm:$0xf]
  %v74 = vld [vmem:[%s0 + $0x28] sm:$0xf]
  %v75 = vld [vmem:[%s0 + $0x2c] sm:$0xf]
  %v76 = vld [vmem:[%s0 + $0x30] sm:$0xf]
  %v77 = vld [vmem:[%s0 + $0x34] sm:$0xf]
  %v78 = vld [vmem:[%s0 + $0x38] sm:$0xf]
  %v79 = vld [vmem:[%s0 + $0x3c] sm:$0xf]
  %v80 = vld [vmem:[%s0 + $0x40] sm:$0xf]
  %v81 = vld [vmem:[%s0 + $0x44] sm:$0xf]
  %v82 = vld [vmem:[%s0 + $0x48] sm:$0xf]
  %v83 = vld [vmem:[%s0 + $0x4c] sm:$0xf]
  %v84 = vld [vmem:[%s0 + $0x50] sm:$0xf]
  %v85 = vld [vmem:[%s0 + $0x54] sm:$0xf]
  %v86 = vld [vmem:[%s0 + $0x58] sm:$0xf]
  %v87 = vld [vmem:[%s0 + $0x5c] sm:$0xf]
  %v88 = vld [vmem:[%s0 + $0x60] sm:$0xf]
  %v89 = vld [vmem:[%s0 + $0x64] sm:$0xf]
  %v90 = vld [vmem:[%s0 + $0x68] sm:$0xf]
  %v91 = vld [vmem:[%s0 + $0x6c] sm:$0xf]
  %v92 = vld [vmem:[%s0 + $0x70] sm:$0xf]
  %v93 = vld [vmem:[%s0 + $0x74] sm:$0xf]
  %v94 = vld [vmem:[%s0 + $0x78] sm:$0xf]
  %v95 = vld [vmem:[%s0 + $0x7c] sm:$0xf]
  %v96 = vld [vmem:[%s0 + $0x80] sm:$0xf]
  %v97 = vld [vmem:[%s0 + $0x84] sm:$0xf]
  %v98 = vld [vmem:[%s0 + $0x88] sm:$0xf]
  %v99 = vld [vmem:[%s0 + $0x8c] sm:$0xf]
  %v100 = vld [vmem:[%s0 + $0x90] sm:$0xf]
  %v101 = vld [vmem:[%s0 + $0x94] sm:$0xf]
  %v102 = vld [vmem:[%s0 + $0x98] sm:$0xf]
  %v103 = vld [vmem:[%s0 + $0x9c] sm:$0xf]
  %v104 = vld [vmem:[%s0 + $0xa0] sm:$0xf]
  %v105 = vld [vmem:[%s0 + $0xa4] sm:$0xf]
  %v106 = vld [vmem:[%s0 + $0xa8] sm:$0xf]
  %v107 = vld [vmem:[%s0 + $0xac] sm:$0xf]
  %v108 = vld [vmem:[%s0 + $0xb0] sm:$0xf]
  %v109 = vld [vmem:[%s0 + $0xb4] sm:$0xf]
  %v110 = vld [vmem:[%s0 + $0xb8] sm:$0xf]
  %v111 = vld [vmem:[%s0 + $0xbc] sm:$0xf]
  %v112 = vld [vmem:[%s0 + $0xc0] sm:$0xf]
  %v113 = vld [vmem:[%s0 + $0xc4] sm:$0xf]
  %v114 = vld [vmem:[%s0 + $0xc8] sm:$0xf]
  %v115 = vld [vmem:[%s0 + $0xcc] sm:$0xf]
  %v116 = vld [vmem:[%s0 + $0xd0] sm:$0xf]
  %v117 = vld [vmem:[%s0 + $0xd4] sm:$0xf]
  %v118 = vld [vmem:[%s0 + $0xd8] sm:$0xf]
  %v119 = vld [vmem:[%s0 + $0xdc] sm:$0xf]
  %v120 = vld [vmem:[%s0 + $0xe0] sm:$0xf]
  %v121 = vld [vmem:[%s0 + $0xe4] sm:$0xf]
  %v122 = vld [vmem:[%s0 + $0xe8] sm:$0xf]
  %v123 = vld [vmem:[%s0 + $0xec] sm:$0xf]
  %v124 = vld [vmem:[%s0 + $0xf0] sm:$0xf]
  %v125 = vld [vmem:[%s0 + $0xf4] sm:$0xf]
  %v126 = vld [vmem:[%s0 + $0xf8] sm:$0xf]
  %v127 = vld [vmem:[%s0 + $0xfc] sm:$0xf]
  %v128 = vld [vmem:[%s0 + $0x100] sm:$0xf]
  %v129 = vld [vmem:[%s0 + $0x104] sm:$0xf]
  %v130 = vld [vmem:[%s0 + $0x108] sm:$0xf]
  %v131 = vld [vmem:[%s0 + $0x10c] sm:$0xf]
  %v132 = vld [vmem:[%s0 + $0x110] sm:$0xf]
  %v133 = vld [vmem:[%s0 + $0x114] sm:$0xf]
  %v134 = vld [vmem:[%s0 + $0x118] sm:$0xf]
  %v135 = vld [vmem:[%s0 + $0x11c] sm:$0xf]
  %v136 = vld [vmem:[%s0 + $0x120] sm:$0xf]
  %v137 = vld [vmem:[%s0 + $0x124] sm:$0xf]
  %v138 = vld [vmem:[%s0 + $0x128] sm:$0xf]
  %v139 = vld [vmem:[%s0 + $0x12c] sm:$0xf]
  %v140 = vld [vmem:[%s0 + $0x130] sm:$0xf]
  %v141 = vld [vmem:[%s0 + $0x134] sm:$0xf]
  %v142 = vld [vmem:[%s0 + $0x138] sm:$0xf]
  %v143 = vld [vmem:[%s0 + $0x13c] sm:$0xf]
  %v144 = vld [vmem:[%s0 + $0x140] sm:$0xf]
  %v145 = vld [vmem:[%s0 + $0x144] sm:$0xf]
  %v146 = vld [vmem:[%s0 + $0x148] sm:$0xf]
  %v147 = vld [vmem:[%s0 + $0x14c] sm:$0xf]
  %v148 = vld [vmem:[%s0 + $0x150] sm:$0xf]
  %v149 = vld [vmem:[%s0 + $0x154] sm:$0xf]
  %v150 = vld [vmem:[%s0 + $0x158] sm:$0xf]
  %v151 = vld [vmem:[%s0 + $0x15c] sm:$0xf]
  %v152 = vld [vmem:[%s0 + $0x160] sm:$0xf]
  %v153 = vld [vmem:[%s0 + $0x164] sm:$0xf]
  %v154 = vld [vmem:[%s0 + $0x168] sm:$0xf]
  %v155 = vld [vmem:[%s0 + $0x16c] sm:$0xf]
  %v156 = vld [vmem:[%s0 + $0x170] sm:$0xf]
  %v157 = vld [vmem:[%s0 + $0x174] sm:$0xf]
  %v158 = vld [vmem:[%s0 + $0x178] sm:$0xf]
  %v159 = vld [vmem:[%s0 + $0x17c] sm:$0xf]
  %v160 = vld [vmem:[%s0 + $0x180] sm:$0xf]
  %v161 = vld [vmem:[%s0 + $0x184] sm:$0xf]
  %v162 = vld [vmem:[%s1] sm:$0xf]
  %v163 = vld [vmem:[%s1 + $0x4] sm:$0xf]
  %v164 = vld [vmem:[%s1 + $0x8] sm:$0xf]
  %v165 = vld [vmem:[%s1 + $0xc] sm:$0xf]
  %v166 = vld [vmem:[%s1 + $0x10] sm:$0xf]
  %v167 = vld [vmem:[%s1 + $0x14] sm:$0xf]
  %v168 = vld [vmem:[%s1 + $0x18] sm:$0xf]
  %v169 = vld [vmem:[%s1 + $0x1c] sm:$0xf]
  %v170 = vld [vmem:[%s2] sm:$0x1]
  %v172 = vlaneseq
  %v173 = vshrl.u32 %v172, 7
  %v174 = vsub.s32 0, %v173
  %v175 = vrot.slane %v170, %v174
  %v275 = vunpack.c.l.b16 %v64
  %v276 = vunpack.c.l.b16 %v65
  %v277 = vunpack.c.l.b16 %v66
  %v278 = vunpack.c.l.b16 %v67
  %v279 = vunpack.c.l.b16 %v68
  %v280 = vunpack.c.l.b16 %v69
  %v281 = vunpack.c.l.b16 %v70
  %v282 = vunpack.c.l.b16 %v71
  %v283 = vunpack.c.l.b16 %v72
  %v284 = vunpack.c.l.b16 %v73
  %v285 = vunpack.c.l.b16 %v74
  %v286 = vunpack.c.l.b16 %v75
  %v287 = vunpack.c.l.b16 %v76
  %v288 = vunpack.c.l.b16 %v77
  %v289 = vunpack.c.l.b16 %v78
  %v290 = vunpack.c.l.b16 %v79
  %v291 = vunpack.c.l.b16 %v80
  %v292 = vunpack.c.l.b16 %v81
  %v293 = vunpack.c.l.b16 %v82
  %v294 = vunpack.c.l.b16 %v83
  %v295 = vunpack.c.l.b16 %v84
  %v296 = vunpack.c.l.b16 %v85
  %v297 = vunpack.c.l.b16 %v86
  %v298 = vunpack.c.l.b16 %v87
  %v299 = vunpack.c.l.b16 %v88
  %v300 = vunpack.c.l.b16 %v89
  %v301 = vunpack.c.l.b16 %v90
  %v302 = vunpack.c.l.b16 %v91
  %v303 = vunpack.c.l.b16 %v92
  %v304 = vunpack.c.l.b16 %v93
  %v305 = vunpack.c.l.b16 %v94
  %v306 = vunpack.c.l.b16 %v95
  %v307 = vunpack.c.l.b16 %v96
  %v308 = vunpack.c.l.b16 %v97
  %v309 = vunpack.c.l.b16 %v98
  %v310 = vunpack.c.l.b16 %v99
  %v311 = vunpack.c.l.b16 %v100
  %v312 = vunpack.c.l.b16 %v101
  %v313 = vunpack.c.l.b16 %v102
  %v314 = vunpack.c.l.b16 %v103
  %v315 = vunpack.c.l.b16 %v104
  %v316 = vunpack.c.l.b16 %v105
  %v317 = vunpack.c.l.b16 %v106
  %v318 = vunpack.c.l.b16 %v107
  %v319 = vunpack.c.l.b16 %v108
  %v320 = vunpack.c.l.b16 %v109
  %v321 = vunpack.c.l.b16 %v110
  %v322 = vunpack.c.l.b16 %v111
  %v323 = vunpack.c.l.b16 %v112
  %v324 = vunpack.c.l.b16 %v113
  %v325 = vunpack.c.l.b16 %v114
  %v326 = vunpack.c.l.b16 %v115
  %v327 = vunpack.c.l.b16 %v116
  %v328 = vunpack.c.l.b16 %v117
  %v329 = vunpack.c.l.b16 %v118
  %v330 = vunpack.c.l.b16 %v119
  %v331 = vunpack.c.l.b16 %v120
  %v332 = vunpack.c.l.b16 %v121
  %v333 = vunpack.c.l.b16 %v122
  %v334 = vunpack.c.l.b16 %v123
  %v335 = vunpack.c.l.b16 %v124
  %v336 = vunpack.c.l.b16 %v125
  %v337 = vunpack.c.l.b16 %v126
  %v338 = vunpack.c.l.b16 %v127
  %v339 = vunpack.c.l.b16 %v128
  %v340 = vunpack.c.l.b16 %v129
  %v341 = vunpack.c.l.b16 %v130
  %v342 = vunpack.c.l.b16 %v131
  %v343 = vunpack.c.l.b16 %v132
  %v344 = vunpack.c.l.b16 %v133
  %v345 = vunpack.c.l.b16 %v134
  %v346 = vunpack.c.l.b16 %v135
  %v347 = vunpack.c.l.b16 %v136
  %v348 = vunpack.c.l.b16 %v137
  %v349 = vunpack.c.l.b16 %v138
  %v350 = vunpack.c.l.b16 %v139
  %v351 = vunpack.c.l.b16 %v140
  %v352 = vunpack.c.l.b16 %v141
  %v353 = vunpack.c.l.b16 %v142
  %v354 = vunpack.c.l.b16 %v143
  %v355 = vunpack.c.l.b16 %v144
  %v356 = vunpack.c.l.b16 %v145
  %v357 = vunpack.c.l.b16 %v146
  %v358 = vunpack.c.l.b16 %v147
  %v359 = vunpack.c.l.b16 %v148
  %v360 = vunpack.c.l.b16 %v149
  %v361 = vunpack.c.l.b16 %v150
  %v362 = vunpack.c.l.b16 %v151
  %v363 = vunpack.c.l.b16 %v152
  %v364 = vunpack.c.l.b16 %v153
  %v365 = vunpack.c.l.b16 %v154
  %v366 = vunpack.c.l.b16 %v155
  %v367 = vunpack.c.l.b16 %v156
  %v368 = vunpack.c.l.b16 %v157
  %v369 = vunpack.c.l.b16 %v158
  %v370 = vunpack.c.l.b16 %v159
  %v371 = vunpack.c.l.b16 %v160
  %v372 = vunpack.c.l.b16 %v161
  %v373 = vpack.c.b16 %v276, %v275
  %v374 = vpack.c.b16 %v278, %v277
  %v375 = vpack.c.b16 %v280, %v279
  %v376 = vpack.c.b16 %v282, %v281
  %v377 = vpack.c.b16 %v284, %v283
  %v378 = vpack.c.b16 %v286, %v285
  %v379 = vpack.c.b16 %v288, %v287
  %v380 = vpack.c.b16 %v290, %v289
  %v381 = vpack.c.b16 %v292, %v291
  %v382 = vpack.c.b16 %v294, %v293
  %v383 = vpack.c.b16 %v296, %v295
  %v384 = vpack.c.b16 %v298, %v297
  %v385 = vpack.c.b16 %v300, %v299
  %v386 = vpack.c.b16 %v302, %v301
  %v387 = vpack.c.b16 %v304, %v303
  %v388 = vpack.c.b16 %v306, %v305
  %v389 = vpack.c.b16 %v308, %v307
  %v390 = vpack.c.b16 %v310, %v309
  %v391 = vpack.c.b16 %v312, %v311
  %v392 = vpack.c.b16 %v314, %v313
  %v393 = vpack.c.b16 %v316, %v315
  %v394 = vpack.c.b16 %v318, %v317
  %v395 = vpack.c.b16 %v320, %v319
  %v396 = vpack.c.b16 %v322, %v321
  %v397 = vpack.c.b16 %v324, %v323
  %v398 = vpack.c.b16 %v326, %v325
  %v399 = vpack.c.b16 %v328, %v327
  %v400 = vpack.c.b16 %v330, %v329
  %v401 = vpack.c.b16 %v332, %v331
  %v402 = vpack.c.b16 %v334, %v333
  %v403 = vpack.c.b16 %v336, %v335
  %v404 = vpack.c.b16 %v338, %v337
  %v405 = vpack.c.b16 %v340, %v339
  %v406 = vpack.c.b16 %v342, %v341
  %v407 = vpack.c.b16 %v344, %v343
  %v408 = vpack.c.b16 %v346, %v345
  %v409 = vpack.c.b16 %v348, %v347
  %v410 = vpack.c.b16 %v350, %v349
  %v411 = vpack.c.b16 %v352, %v351
  %v412 = vpack.c.b16 %v354, %v353
  %v413 = vpack.c.b16 %v356, %v355
  %v414 = vpack.c.b16 %v358, %v357
  %v415 = vpack.c.b16 %v360, %v359
  %v416 = vpack.c.b16 %v362, %v361
  %v417 = vpack.c.b16 %v364, %v363
  %v418 = vpack.c.b16 %v366, %v365
  %v419 = vpack.c.b16 %v368, %v367
  %v420 = vpack.c.b16 %v370, %v369
  %v421 = vpack.c.b16 %v372, %v371
  %v430 = vunpack.c.l.b16 %v162
  %v431 = vunpack.c.l.b16 %v163
  %v432 = vunpack.c.l.b16 %v164
  %v433 = vunpack.c.l.b16 %v165
  %v434 = vunpack.c.l.b16 %v166
  %v435 = vunpack.c.l.b16 %v167
  %v436 = vunpack.c.l.b16 %v168
  %v437 = vunpack.c.l.b16 %v169
  %v438 = vpack.c.b16 %v431, %v430
  %v439 = vpack.c.b16 %v433, %v432
  %v440 = vpack.c.b16 %v435, %v434
  %v441 = vpack.c.b16 %v437, %v436
  %vm446 = vcmask 523264
  %v448 = vsel %vm446, %v373, 0
  %v451 = vsel %vm446, %v374, 0
  %v454 = vsel %vm446, %v375, 0
  %v457 = vsel %vm446, %v376, 0
  %v460 = vsel %vm446, %v377, 0
  %v463 = vsel %vm446, %v378, 0
  %v466 = vsel %vm446, %v379, 0
  %v469 = vsel %vm446, %v380, 0
  %v472 = vsel %vm446, %v381, 0
  %v475 = vsel %vm446, %v382, 0
  %v478 = vsel %vm446, %v383, 0
  %v481 = vsel %vm446, %v384, 0
  %v484 = vsel %vm446, %v385, 0
  %v487 = vsel %vm446, %v386, 0
  %v490 = vsel %vm446, %v387, 0
  %v493 = vsel %vm446, %v388, 0
  %v496 = vsel %vm446, %v389, 0
  %v499 = vsel %vm446, %v390, 0
  %v502 = vsel %vm446, %v391, 0
  %v505 = vsel %vm446, %v392, 0
  %v508 = vsel %vm446, %v393, 0
  %v511 = vsel %vm446, %v394, 0
  %v514 = vsel %vm446, %v395, 0
  %v517 = vsel %vm446, %v396, 0
  %v520 = vsel %vm446, %v397, 0
  %v523 = vsel %vm446, %v398, 0
  %v526 = vsel %vm446, %v399, 0
  %v529 = vsel %vm446, %v400, 0
  %v532 = vsel %vm446, %v401, 0
  %v535 = vsel %vm446, %v402, 0
  %v538 = vsel %vm446, %v403, 0
  %v541 = vsel %vm446, %v404, 0
  %v544 = vsel %vm446, %v405, 0
  %v547 = vsel %vm446, %v406, 0
  %v550 = vsel %vm446, %v407, 0
  %v553 = vsel %vm446, %v408, 0
  %v556 = vsel %vm446, %v409, 0
  %v559 = vsel %vm446, %v410, 0
  %v562 = vsel %vm446, %v411, 0
  %v565 = vsel %vm446, %v412, 0
  %v568 = vsel %vm446, %v413, 0
  %v571 = vsel %vm446, %v414, 0
  %v574 = vsel %vm446, %v415, 0
  %v577 = vsel %vm446, %v416, 0
  %v580 = vsel %vm446, %v417, 0
  %v583 = vsel %vm446, %v418, 0
  %v586 = vsel %vm446, %v419, 0
  %v589 = vsel %vm446, %v420, 0
  %v592 = vsel %vm446, %v421, 0
  %594 = vmatprep.subr.bf16.mxu0 0
  %595 = vmatpush1.bf16.msra.mxu0 %v438
  %596 = vmatprep.subr.bf16.mxu0 0
  %597 = vmatpush1.bf16.msra.mxu0 %v439
  %598 = vmatprep.subr.bf16.mxu0 0
  %599 = vmatpush1.bf16.msra.mxu0 %v440
  %600 = vmatprep.subr.bf16.mxu0 0
  %601 = vmatpush1.bf16.msra.mxu0 %v441
  %602 = vmatprep.subr.bf16.mxu0 0
  %603 = vmatpush1.bf16.msra.mxu0 0
  %604 = vmatprep.subr.bf16.mxu0 0
  %605 = vmatpush1.bf16.msra.mxu0 0
  %606 = vmatprep.subr.bf16.mxu0 0
  %607 = vmatpush1.bf16.msra.mxu0 0
  %608 = vmatprep.subr.bf16.mxu0 0
  %609 = vmatpush1.bf16.msra.mxu0 0
  %610 = vmatprep.subr.bf16.mxu0 0
  %611 = vmatpush1.bf16.msra.mxu0 0
  %612 = vmatprep.subr.bf16.mxu0 0
  %613 = vmatpush1.bf16.msra.mxu0 0
  %614 = vmatprep.subr.bf16.mxu0 0
  %615 = vmatpush1.bf16.msra.mxu0 0
  %616 = vmatprep.subr.bf16.mxu0 0
  %617 = vmatpush1.bf16.msra.mxu0 0
  %618 = vmatprep.subr.bf16.mxu0 0
  %619 = vmatpush1.bf16.msra.mxu0 0
  %620 = vmatprep.subr.bf16.mxu0 0
  %621 = vmatpush1.bf16.msra.mxu0 0
  %622 = vmatprep.subr.bf16.mxu0 0
  %623 = vmatpush1.bf16.msra.mxu0 0
  %624 = vmatprep.subr.bf16.mxu0 0
  %625 = vmatpush1.bf16.msra.mxu0 0
  %626 = vmatprep.mubr.bf16.mxu0 0
  %627 = vmatmul.mubr.bf16.gmra.mrb[0].mxu0 %v448
  %v628 = vpop.f32.mrb[0].mxu0
  %v629 = vadd.f32 %v175, %v628
  %v630 = vpop.f32.mrb[0].mxu0
  %v631 = vpop.f32.mrb[0].mxu0
  %v632 = vadd.f32 %v175, %v631
  %v633 = vpop.f32.mrb[0].mxu0
  %634 = vmatprep.mubr.bf16.mxu0 0
  %635 = vmatmul.mubr.bf16.gmra.mrb[0].mxu0 %v451
  %v636 = vpop.f32.mrb[0].mxu0
  %v637 = vadd.f32 %v175, %v636
  %v638 = vpop.f32.mrb[0].mxu0
  %v639 = vpop.f32.mrb[0].mxu0
  %v640 = vadd.f32 %v175, %v639
  %v641 = vpop.f32.mrb[0].mxu0
  %642 = vmatprep.mubr.bf16.mxu0 0
  %643 = vmatmul.mubr.bf16.gmra.mrb[0].mxu0 %v454
  %v644 = vpop.f32.mrb[0].mxu0
  %v645 = vadd.f32 %v175, %v644
  %v646 = vpop.f32.mrb[0].mxu0
  %v647 = vpop.f32.mrb[0].mxu0
  %v648 = vadd.f32 %v175, %v647
  %v649 = vpop.f32.mrb[0].mxu0
  %650 = vmatprep.mubr.bf16.mxu0 0
  %651 = vmatmul.mubr.bf16.gmra.mrb[0].mxu0 %v457
  %v652 = vpop.f32.mrb[0].mxu0
  %v653 = vadd.f32 %v175, %v652
  %v654 = vpop.f32.mrb[0].mxu0
  %v655 = vpop.f32.mrb[0].mxu0
  %v656 = vadd.f32 %v175, %v655
  %v657 = vpop.f32.mrb[0].mxu0
  %658 = vmatprep.mubr.bf16.mxu0 0
  %659 = vmatmul.mubr.bf16.gmra.mrb[0].mxu0 %v460
  %v660 = vpop.f32.mrb[0].mxu0
  %v661 = vadd.f32 %v175, %v660
  %v662 = vpop.f32.mrb[0].mxu0
  %v663 = vpop.f32.mrb[0].mxu0
  %v664 = vadd.f32 %v175, %v663
  %v665 = vpop.f32.mrb[0].mxu0
  %666 = vmatprep.mubr.bf16.mxu0 0
  %667 = vmatmul.mubr.bf16.gmra.mrb[0].mxu0 %v463
  %v668 = vpop.f32.mrb[0].mxu0
  %v669 = vadd.f32 %v175, %v668
  %v670 = vpop.f32.mrb[0].mxu0
  %v671 = vpop.f32.mrb[0].mxu0
  %v672 = vadd.f32 %v175, %v671
  %v673 = vpop.f32.mrb[0].mxu0
  %674 = vmatprep.mubr.bf16.mxu0 0
  %675 = vmatmul.mubr.bf16.gmra.mrb[0].mxu0 %v466
  %v676 = vpop.f32.mrb[0].mxu0
  %v677 = vadd.f32 %v175, %v676
  %v678 = vpop.f32.mrb[0].mxu0
  %v679 = vpop.f32.mrb[0].mxu0
  %v680 = vadd.f32 %v175, %v679
  %v681 = vpop.f32.mrb[0].mxu0
  %682 = vmatprep.mubr.bf16.mxu0 0
  %683 = vmatmul.mubr.bf16.gmra.mrb[0].mxu0 %v469
  %v684 = vpop.f32.mrb[0].mxu0
  %v685 = vadd.f32 %v175, %v684
  %v686 = vpop.f32.mrb[0].mxu0
  %v687 = vpop.f32.mrb[0].mxu0
  %v688 = vadd.f32 %v175, %v687
  %v689 = vpop.f32.mrb[0].mxu0
  %690 = vmatprep.mubr.bf16.mxu0 0
  %691 = vmatmul.mubr.bf16.gmra.mrb[0].mxu0 %v472
  %v692 = vpop.f32.mrb[0].mxu0
  %v693 = vadd.f32 %v175, %v692
  %v694 = vpop.f32.mrb[0].mxu0
  %v695 = vpop.f32.mrb[0].mxu0
  %v696 = vadd.f32 %v175, %v695
  %v697 = vpop.f32.mrb[0].mxu0
  %698 = vmatprep.mubr.bf16.mxu0 0
  %699 = vmatmul.mubr.bf16.gmra.mrb[0].mxu0 %v475
  %v700 = vpop.f32.mrb[0].mxu0
  %v701 = vadd.f32 %v175, %v700
  %v702 = vpop.f32.mrb[0].mxu0
  %v703 = vpop.f32.mrb[0].mxu0
  %v704 = vadd.f32 %v175, %v703
  %v705 = vpop.f32.mrb[0].mxu0
  %706 = vmatprep.mubr.bf16.mxu0 0
  %707 = vmatmul.mubr.bf16.gmra.mrb[0].mxu0 %v478
  %v708 = vpop.f32.mrb[0].mxu0
  %v709 = vadd.f32 %v175, %v708
  %v710 = vpop.f32.mrb[0].mxu0
  %v711 = vpop.f32.mrb[0].mxu0
  %v712 = vadd.f32 %v175, %v711
  %v713 = vpop.f32.mrb[0].mxu0
  %714 = vmatprep.mubr.bf16.mxu0 0
  %715 = vmatmul.mubr.bf16.gmra.mrb[0].mxu0 %v481
  %v716 = vpop.f32.mrb[0].mxu0
  %v717 = vadd.f32 %v175, %v716
  %v718 = vpop.f32.mrb[0].mxu0
  %v719 = vpop.f32.mrb[0].mxu0
  %v720 = vadd.f32 %v175, %v719
  %v721 = vpop.f32.mrb[0].mxu0
  %722 = vmatprep.mubr.bf16.mxu0 0
  %723 = vmatmul.mubr.bf16.gmra.mrb[0].mxu0 %v484
  %v724 = vpop.f32.mrb[0].mxu0
  %v725 = vadd.f32 %v175, %v724
  %v726 = vpop.f32.mrb[0].mxu0
  %v727 = vpop.f32.mrb[0].mxu0
  %v728 = vadd.f32 %v175, %v727
  %v729 = vpop.f32.mrb[0].mxu0
  %730 = vmatprep.mubr.bf16.mxu0 0
  %731 = vmatmul.mubr.bf16.gmra.mrb[0].mxu0 %v487
  %v732 = vpop.f32.mrb[0].mxu0
  %v733 = vadd.f32 %v175, %v732
  %v734 = vpop.f32.mrb[0].mxu0
  %v735 = vpop.f32.mrb[0].mxu0
  %v736 = vadd.f32 %v175, %v735
  %v737 = vpop.f32.mrb[0].mxu0
  %738 = vmatprep.mubr.bf16.mxu0 0
  %739 = vmatmul.mubr.bf16.gmra.mrb[0].mxu0 %v490
  %v740 = vpop.f32.mrb[0].mxu0
  %v741 = vadd.f32 %v175, %v740
  %v742 = vpop.f32.mrb[0].mxu0
  %v743 = vpop.f32.mrb[0].mxu0
  %v744 = vadd.f32 %v175, %v743
  %v745 = vpop.f32.mrb[0].mxu0
  %746 = vmatprep.mubr.bf16.mxu0 0
  %747 = vmatmul.mubr.bf16.gmra.mrb[0].mxu0 %v493
  %v748 = vpop.f32.mrb[0].mxu0
  %v749 = vadd.f32 %v175, %v748
  %v750 = vpop.f32.mrb[0].mxu0
  %v751 = vpop.f32.mrb[0].mxu0
  %v752 = vadd.f32 %v175, %v751
  %v753 = vpop.f32.mrb[0].mxu0
  %754 = vmatprep.mubr.bf16.mxu0 0
  %755 = vmatmul.mubr.bf16.gmra.mrb[0].mxu0 %v496
  %v756 = vpop.f32.mrb[0].mxu0
  %v757 = vadd.f32 %v175, %v756
  %v758 = vpop.f32.mrb[0].mxu0
  %v759 = vpop.f32.mrb[0].mxu0
  %v760 = vadd.f32 %v175, %v759
  %v761 = vpop.f32.mrb[0].mxu0
  %762 = vmatprep.mubr.bf16.mxu0 0
  %763 = vmatmul.mubr.bf16.gmra.mrb[0].mxu0 %v499
  %v764 = vpop.f32.mrb[0].mxu0
  %v765 = vadd.f32 %v175, %v764
  %v766 = vpop.f32.mrb[0].mxu0
  %v767 = vpop.f32.mrb[0].mxu0
  %v768 = vadd.f32 %v175, %v767
  %v769 = vpop.f32.mrb[0].mxu0
  %770 = vmatprep.mubr.bf16.mxu0 0
  %771 = vmatmul.mubr.bf16.gmra.mrb[0].mxu0 %v502
  %v772 = vpop.f32.mrb[0].mxu0
  %v773 = vadd.f32 %v175, %v772
  %v774 = vpop.f32.mrb[0].mxu0
  %v775 = vpop.f32.mrb[0].mxu0
  %v776 = vadd.f32 %v175, %v775
  %v777 = vpop.f32.mrb[0].mxu0
  %778 = vmatprep.mubr.bf16.mxu0 0
  %779 = vmatmul.mubr.bf16.gmra.mrb[0].mxu0 %v505
  %v780 = vpop.f32.mrb[0].mxu0
  %v781 = vadd.f32 %v175, %v780
  %v782 = vpop.f32.mrb[0].mxu0
  %v783 = vpop.f32.mrb[0].mxu0
  %v784 = vadd.f32 %v175, %v783
  %v785 = vpop.f32.mrb[0].mxu0
  %786 = vmatprep.mubr.bf16.mxu0 0
  %787 = vmatmul.mubr.bf16.gmra.mrb[0].mxu0 %v508
  %v788 = vpop.f32.mrb[0].mxu0
  %v789 = vadd.f32 %v175, %v788
  %v790 = vpop.f32.mrb[0].mxu0
  %v791 = vpop.f32.mrb[0].mxu0
  %v792 = vadd.f32 %v175, %v791
  %v793 = vpop.f32.mrb[0].mxu0
  %794 = vmatprep.mubr.bf16.mxu0 0
  %795 = vmatmul.mubr.bf16.gmra.mrb[0].mxu0 %v511
  %v796 = vpop.f32.mrb[0].mxu0
  %v797 = vadd.f32 %v175, %v796
  %v798 = vpop.f32.mrb[0].mxu0
  %v799 = vpop.f32.mrb[0].mxu0
  %v800 = vadd.f32 %v175, %v799
  %v801 = vpop.f32.mrb[0].mxu0
  %802 = vmatprep.mubr.bf16.mxu0 0
  %803 = vmatmul.mubr.bf16.gmra.mrb[0].mxu0 %v514
  %v804 = vpop.f32.mrb[0].mxu0
  %v805 = vadd.f32 %v175, %v804
  %v806 = vpop.f32.mrb[0].mxu0
  %v807 = vpop.f32.mrb[0].mxu0
  %v808 = vadd.f32 %v175, %v807
  %v809 = vpop.f32.mrb[0].mxu0
  %810 = vmatprep.mubr.bf16.mxu0 0
  %811 = vmatmul.mubr.bf16.gmra.mrb[0].mxu0 %v517
  %v812 = vpop.f32.mrb[0].mxu0
  %v813 = vadd.f32 %v175, %v812
  %v814 = vpop.f32.mrb[0].mxu0
  %v815 = vpop.f32.mrb[0].mxu0
  %v816 = vadd.f32 %v175, %v815
  %v817 = vpop.f32.mrb[0].mxu0
  %818 = vmatprep.mubr.bf16.mxu0 0
  %819 = vmatmul.mubr.bf16.gmra.mrb[0].mxu0 %v520
  %v820 = vpop.f32.mrb[0].mxu0
  %v821 = vadd.f32 %v175, %v820
  %v822 = vpop.f32.mrb[0].mxu0
  %v823 = vpop.f32.mrb[0].mxu0
  %v824 = vadd.f32 %v175, %v823
  %v825 = vpop.f32.mrb[0].mxu0
  %826 = vmatprep.mubr.bf16.mxu0 0
  %827 = vmatmul.mubr.bf16.gmra.mrb[0].mxu0 %v523
  %v828 = vpop.f32.mrb[0].mxu0
  %v829 = vadd.f32 %v175, %v828
  %v830 = vpop.f32.mrb[0].mxu0
  %v831 = vpop.f32.mrb[0].mxu0
  %v832 = vadd.f32 %v175, %v831
  %v833 = vpop.f32.mrb[0].mxu0
  %834 = vmatprep.mubr.bf16.mxu0 0
  %835 = vmatmul.mubr.bf16.gmra.mrb[0].mxu0 %v526
  %v836 = vpop.f32.mrb[0].mxu0
  %v837 = vadd.f32 %v175, %v836
  %v838 = vpop.f32.mrb[0].mxu0
  %v839 = vpop.f32.mrb[0].mxu0
  %v840 = vadd.f32 %v175, %v839
  %v841 = vpop.f32.mrb[0].mxu0
  %842 = vmatprep.mubr.bf16.mxu0 0
  %843 = vmatmul.mubr.bf16.gmra.mrb[0].mxu0 %v529
  %v844 = vpop.f32.mrb[0].mxu0
  %v845 = vadd.f32 %v175, %v844
  %v846 = vpop.f32.mrb[0].mxu0
  %v847 = vpop.f32.mrb[0].mxu0
  %v848 = vadd.f32 %v175, %v847
  %v849 = vpop.f32.mrb[0].mxu0
  %850 = vmatprep.mubr.bf16.mxu0 0
  %851 = vmatmul.mubr.bf16.gmra.mrb[0].mxu0 %v532
  %v852 = vpop.f32.mrb[0].mxu0
  %v853 = vadd.f32 %v175, %v852
  %v854 = vpop.f32.mrb[0].mxu0
  %v855 = vpop.f32.mrb[0].mxu0
  %v856 = vadd.f32 %v175, %v855
  %v857 = vpop.f32.mrb[0].mxu0
  %858 = vmatprep.mubr.bf16.mxu0 0
  %859 = vmatmul.mubr.bf16.gmra.mrb[0].mxu0 %v535
  %v860 = vpop.f32.mrb[0].mxu0
  %v861 = vadd.f32 %v175, %v860
  %v862 = vpop.f32.mrb[0].mxu0
  %v863 = vpop.f32.mrb[0].mxu0
  %v864 = vadd.f32 %v175, %v863
  %v865 = vpop.f32.mrb[0].mxu0
  %866 = vmatprep.mubr.bf16.mxu0 0
  %867 = vmatmul.mubr.bf16.gmra.mrb[0].mxu0 %v538
  %v868 = vpop.f32.mrb[0].mxu0
  %v869 = vadd.f32 %v175, %v868
  %v870 = vpop.f32.mrb[0].mxu0
  %v871 = vpop.f32.mrb[0].mxu0
  %v872 = vadd.f32 %v175, %v871
  %v873 = vpop.f32.mrb[0].mxu0
  %874 = vmatprep.mubr.bf16.mxu0 0
  %875 = vmatmul.mubr.bf16.gmra.mrb[0].mxu0 %v541
  %v876 = vpop.f32.mrb[0].mxu0
  %v877 = vadd.f32 %v175, %v876
  %v878 = vpop.f32.mrb[0].mxu0
  %v879 = vpop.f32.mrb[0].mxu0
  %v880 = vadd.f32 %v175, %v879
  %v881 = vpop.f32.mrb[0].mxu0
  %882 = vmatprep.mubr.bf16.mxu0 0
  %883 = vmatmul.mubr.bf16.gmra.mrb[0].mxu0 %v544
  %v884 = vpop.f32.mrb[0].mxu0
  %v885 = vadd.f32 %v175, %v884
  %v886 = vpop.f32.mrb[0].mxu0
  %v887 = vpop.f32.mrb[0].mxu0
  %v888 = vadd.f32 %v175, %v887
  %v889 = vpop.f32.mrb[0].mxu0
  %890 = vmatprep.mubr.bf16.mxu0 0
  %891 = vmatmul.mubr.bf16.gmra.mrb[0].mxu0 %v547
  %v892 = vpop.f32.mrb[0].mxu0
  %v893 = vadd.f32 %v175, %v892
  %v894 = vpop.f32.mrb[0].mxu0
  %v895 = vpop.f32.mrb[0].mxu0
  %v896 = vadd.f32 %v175, %v895
  %v897 = vpop.f32.mrb[0].mxu0
  %898 = vmatprep.mubr.bf16.mxu0 0
  %899 = vmatmul.mubr.bf16.gmra.mrb[0].mxu0 %v550
  %v900 = vpop.f32.mrb[0].mxu0
  %v901 = vadd.f32 %v175, %v900
  %v902 = vpop.f32.mrb[0].mxu0
  %v903 = vpop.f32.mrb[0].mxu0
  %v904 = vadd.f32 %v175, %v903
  %v905 = vpop.f32.mrb[0].mxu0
  %906 = vmatprep.mubr.bf16.mxu0 0
  %907 = vmatmul.mubr.bf16.gmra.mrb[0].mxu0 %v553
  %v908 = vpop.f32.mrb[0].mxu0
  %v909 = vadd.f32 %v175, %v908
  %v910 = vpop.f32.mrb[0].mxu0
  %v911 = vpop.f32.mrb[0].mxu0
  %v912 = vadd.f32 %v175, %v911
  %v913 = vpop.f32.mrb[0].mxu0
  %914 = vmatprep.mubr.bf16.mxu0 0
  %915 = vmatmul.mubr.bf16.gmra.mrb[0].mxu0 %v556
  %v916 = vpop.f32.mrb[0].mxu0
  %v917 = vadd.f32 %v175, %v916
  %v918 = vpop.f32.mrb[0].mxu0
  %v919 = vpop.f32.mrb[0].mxu0
  %v920 = vadd.f32 %v175, %v919
  %v921 = vpop.f32.mrb[0].mxu0
  %922 = vmatprep.mubr.bf16.mxu0 0
  %923 = vmatmul.mubr.bf16.gmra.mrb[0].mxu0 %v559
  %v924 = vpop.f32.mrb[0].mxu0
  %v925 = vadd.f32 %v175, %v924
  %v926 = vpop.f32.mrb[0].mxu0
  %v927 = vpop.f32.mrb[0].mxu0
  %v928 = vadd.f32 %v175, %v927
  %v929 = vpop.f32.mrb[0].mxu0
  %930 = vmatprep.mubr.bf16.mxu0 0
  %931 = vmatmul.mubr.bf16.gmra.mrb[0].mxu0 %v562
  %v932 = vpop.f32.mrb[0].mxu0
  %v933 = vadd.f32 %v175, %v932
  %v934 = vpop.f32.mrb[0].mxu0
  %v935 = vpop.f32.mrb[0].mxu0
  %v936 = vadd.f32 %v175, %v935
  %v937 = vpop.f32.mrb[0].mxu0
  %938 = vmatprep.mubr.bf16.mxu0 0
  %939 = vmatmul.mubr.bf16.gmra.mrb[0].mxu0 %v565
  %v940 = vpop.f32.mrb[0].mxu0
  %v941 = vadd.f32 %v175, %v940
  %v942 = vpop.f32.mrb[0].mxu0
  %v943 = vpop.f32.mrb[0].mxu0
  %v944 = vadd.f32 %v175, %v943
  %v945 = vpop.f32.mrb[0].mxu0
  %946 = vmatprep.mubr.bf16.mxu0 0
  %947 = vmatmul.mubr.bf16.gmra.mrb[0].mxu0 %v568
  %v948 = vpop.f32.mrb[0].mxu0
  %v949 = vadd.f32 %v175, %v948
  %v950 = vpop.f32.mrb[0].mxu0
  %v951 = vpop.f32.mrb[0].mxu0
  %v952 = vadd.f32 %v175, %v951
  %v953 = vpop.f32.mrb[0].mxu0
  %954 = vmatprep.mubr.bf16.mxu0 0
  %955 = vmatmul.mubr.bf16.gmra.mrb[0].mxu0 %v571
  %v956 = vpop.f32.mrb[0].mxu0
  %v957 = vadd.f32 %v175, %v956
  %v958 = vpop.f32.mrb[0].mxu0
  %v959 = vpop.f32.mrb[0].mxu0
  %v960 = vadd.f32 %v175, %v959
  %v961 = vpop.f32.mrb[0].mxu0
  %962 = vmatprep.mubr.bf16.mxu0 0
  %963 = vmatmul.mubr.bf16.gmra.mrb[0].mxu0 %v574
  %v964 = vpop.f32.mrb[0].mxu0
  %v965 = vadd.f32 %v175, %v964
  %v966 = vpop.f32.mrb[0].mxu0
  %v967 = vpop.f32.mrb[0].mxu0
  %v968 = vadd.f32 %v175, %v967
  %v969 = vpop.f32.mrb[0].mxu0
  %970 = vmatprep.mubr.bf16.mxu0 0
  %971 = vmatmul.mubr.bf16.gmra.mrb[0].mxu0 %v577
  %v972 = vpop.f32.mrb[0].mxu0
  %v973 = vadd.f32 %v175, %v972
  %v974 = vpop.f32.mrb[0].mxu0
  %v975 = vpop.f32.mrb[0].mxu0
  %v976 = vadd.f32 %v175, %v975
  %v977 = vpop.f32.mrb[0].mxu0
  %978 = vmatprep.mubr.bf16.mxu0 0
  %979 = vmatmul.mubr.bf16.gmra.mrb[0].mxu0 %v580
  %v980 = vpop.f32.mrb[0].mxu0
  %v981 = vadd.f32 %v175, %v980
  %v982 = vpop.f32.mrb[0].mxu0
  %v983 = vpop.f32.mrb[0].mxu0
  %v984 = vadd.f32 %v175, %v983
  %v985 = vpop.f32.mrb[0].mxu0
  %986 = vmatprep.mubr.bf16.mxu0 0
  %987 = vmatmul.mubr.bf16.gmra.mrb[0].mxu0 %v583
  %v988 = vpop.f32.mrb[0].mxu0
  %v989 = vadd.f32 %v175, %v988
  %v990 = vpop.f32.mrb[0].mxu0
  %v991 = vpop.f32.mrb[0].mxu0
  %v992 = vadd.f32 %v175, %v991
  %v993 = vpop.f32.mrb[0].mxu0
  %994 = vmatprep.mubr.bf16.mxu0 0
  %995 = vmatmul.mubr.bf16.gmra.mrb[0].mxu0 %v586
  %v996 = vpop.f32.mrb[0].mxu0
  %v997 = vadd.f32 %v175, %v996
  %v998 = vpop.f32.mrb[0].mxu0
  %v999 = vpop.f32.mrb[0].mxu0
  %v1000 = vadd.f32 %v175, %v999
  %v1001 = vpop.f32.mrb[0].mxu0
  %1002 = vmatprep.mubr.bf16.mxu0 0
  %1003 = vmatmul.mubr.bf16.gmra.mrb[0].mxu0 %v589
  %v1004 = vpop.f32.mrb[0].mxu0
  %v1005 = vadd.f32 %v175, %v1004
  %v1006 = vpop.f32.mrb[0].mxu0
  %v1007 = vpop.f32.mrb[0].mxu0
  %v1008 = vadd.f32 %v175, %v1007
  %v1009 = vpop.f32.mrb[0].mxu0
  %1010 = vmatprep.mubr.bf16.mxu0 0
  %1011 = vmatmul.mubr.bf16.gmra.mrb[0].mxu0 %v592
  %v1012 = vpop.f32.mrb[0].mxu0
  %v1013 = vadd.f32 %v175, %v1012
  %v1014 = vpop.f32.mrb[0].mxu0
  %v1015 = vpop.f32.mrb[0].mxu0
  %v1016 = vadd.f32 %v175, %v1015
  %v1017 = vpop.f32.mrb[0].mxu0
  %1018 = vdwg.mxu0
  %v1019 = vtanh.pop %v629
  %v1020 = vtanh.pop %v632
  %v1021 = vtanh.pop %v637
  %v1022 = vtanh.pop %v640
  %v1023 = vtanh.pop %v645
  %v1024 = vtanh.pop %v648
  %v1025 = vtanh.pop %v653
  %v1026 = vtanh.pop %v656
  %v1027 = vtanh.pop %v661
  %v1028 = vtanh.pop %v664
  %v1029 = vtanh.pop %v669
  %v1030 = vtanh.pop %v672
  %v1031 = vtanh.pop %v677
  %v1032 = vtanh.pop %v680
  %v1033 = vtanh.pop %v685
  %v1034 = vtanh.pop %v688
  %v1035 = vtanh.pop %v693
  %v1036 = vtanh.pop %v696
  %v1037 = vtanh.pop %v701
  %v1038 = vtanh.pop %v704
  %v1039 = vtanh.pop %v709
  %v1040 = vtanh.pop %v712
  %v1041 = vtanh.pop %v717
  %v1042 = vtanh.pop %v720
  %v1043 = vtanh.pop %v725
  %v1044 = vtanh.pop %v728
  %v1045 = vtanh.pop %v733
  %v1046 = vtanh.pop %v736
  %v1047 = vtanh.pop %v741
  %v1048 = vtanh.pop %v744
  %v1049 = vtanh.pop %v749
  %v1050 = vtanh.pop %v752
  %v1051 = vtanh.pop %v757
  %v1052 = vtanh.pop %v760
  %v1053 = vtanh.pop %v765
  %v1054 = vtanh.pop %v768
  %v1055 = vtanh.pop %v773
  %v1056 = vtanh.pop %v776
  %v1057 = vtanh.pop %v781
  %v1058 = vtanh.pop %v784
  %v1059 = vtanh.pop %v789
  %v1060 = vtanh.pop %v792
  %v1061 = vtanh.pop %v797
  %v1062 = vtanh.pop %v800
  %v1063 = vtanh.pop %v805
  %v1064 = vtanh.pop %v808
  %v1065 = vtanh.pop %v813
  %v1066 = vtanh.pop %v816
  %v1067 = vtanh.pop %v821
  %v1068 = vtanh.pop %v824
  %v1069 = vtanh.pop %v829
  %v1070 = vtanh.pop %v832
  %v1071 = vtanh.pop %v837
  %v1072 = vtanh.pop %v840
  %v1073 = vtanh.pop %v845
  %v1074 = vtanh.pop %v848
  %v1075 = vtanh.pop %v853
  %v1076 = vtanh.pop %v856
  %v1077 = vtanh.pop %v861
  %v1078 = vtanh.pop %v864
  %v1079 = vtanh.pop %v869
  %v1080 = vtanh.pop %v872
  %v1081 = vtanh.pop %v877
  %v1082 = vtanh.pop %v880
  %v1083 = vtanh.pop %v885
  %v1084 = vtanh.pop %v888
  %v1085 = vtanh.pop %v893
  %v1086 = vtanh.pop %v896
  %v1087 = vtanh.pop %v901
  %v1088 = vtanh.pop %v904
  %v1089 = vtanh.pop %v909
  %v1090 = vtanh.pop %v912
  %v1091 = vtanh.pop %v917
  %v1092 = vtanh.pop %v920
  %v1093 = vtanh.pop %v925
  %v1094 = vtanh.pop %v928
  %v1095 = vtanh.pop %v933
  %v1096 = vtanh.pop %v936
  %v1097 = vtanh.pop %v941
  %v1098 = vtanh.pop %v944
  %v1099 = vtanh.pop %v949
  %v1100 = vtanh.pop %v952
  %v1101 = vtanh.pop %v957
  %v1102 = vtanh.pop %v960
  %v1103 = vtanh.pop %v965
  %v1104 = vtanh.pop %v968
  %v1105 = vtanh.pop %v973
  %v1106 = vtanh.pop %v976
  %v1107 = vtanh.pop %v981
  %v1108 = vtanh.pop %v984
  %v1109 = vtanh.pop %v989
  %v1110 = vtanh.pop %v992
  %v1111 = vtanh.pop %v997
  %v1112 = vtanh.pop %v1000
  %v1113 = vtanh.pop %v1005
  %v1114 = vtanh.pop %v1008
  %v1115 = vtanh.pop %v1013
  %v1116 = vtanh.pop %v1016
  %1117 = vst [vmem:[#allocation4] sm:$0xff] %v1019
  %1118 = vst [vmem:[#allocation4 + $0x8] sm:$0xff] %v1020
  %1119 = vst [vmem:[#allocation4 + $0x10] sm:$0xff] %v1021
  %1120 = vst [vmem:[#allocation4 + $0x18] sm:$0xff] %v1022
  %1121 = vst [vmem:[#allocation4 + $0x20] sm:$0xff] %v1023
  %1122 = vst [vmem:[#allocation4 + $0x28] sm:$0xff] %v1024
  %1123 = vst [vmem:[#allocation4 + $0x30] sm:$0xff] %v1025
  %1124 = vst [vmem:[#allocation4 + $0x38] sm:$0xff] %v1026
  %1125 = vst [vmem:[#allocation4 + $0x40] sm:$0xff] %v1027
  %1126 = vst [vmem:[#allocation4 + $0x48] sm:$0xff] %v1028
  %1127 = vst [vmem:[#allocation4 + $0x50] sm:$0xff] %v1029
  %1128 = vst [vmem:[#allocation4 + $0x58] sm:$0xff] %v1030
  %1129 = vst [vmem:[#allocation4 + $0x60] sm:$0xff] %v1031
  %1130 = vst [vmem:[#allocation4 + $0x68] sm:$0xff] %v1032
  %1131 = vst [vmem:[#allocation4 + $0x70] sm:$0xff] %v1033
  %1132 = vst [vmem:[#allocation4 + $0x78] sm:$0xff] %v1034
  %1133 = vst [vmem:[#allocation4 + $0x80] sm:$0xff] %v1035
  %1134 = vst [vmem:[#allocation4 + $0x88] sm:$0xff] %v1036
  %1135 = vst [vmem:[#allocation4 + $0x90] sm:$0xff] %v1037
  %1136 = vst [vmem:[#allocation4 + $0x98] sm:$0xff] %v1038
  %1137 = vst [vmem:[#allocation4 + $0xa0] sm:$0xff] %v1039
  %1138 = vst [vmem:[#allocation4 + $0xa8] sm:$0xff] %v1040
  %1139 = vst [vmem:[#allocation4 + $0xb0] sm:$0xff] %v1041
  %1140 = vst [vmem:[#allocation4 + $0xb8] sm:$0xff] %v1042
  %1141 = vst [vmem:[#allocation4 + $0xc0] sm:$0xff] %v1043
  %1142 = vst [vmem:[#allocation4 + $0xc8] sm:$0xff] %v1044
  %1143 = vst [vmem:[#allocation4 + $0xd0] sm:$0xff] %v1045
  %1144 = vst [vmem:[#allocation4 + $0xd8] sm:$0xff] %v1046
  %1145 = vst [vmem:[#allocation4 + $0xe0] sm:$0xff] %v1047
  %1146 = vst [vmem:[#allocation4 + $0xe8] sm:$0xff] %v1048
  %1147 = vst [vmem:[#allocation4 + $0xf0] sm:$0xff] %v1049
  %1148 = vst [vmem:[#allocation4 + $0xf8] sm:$0xff] %v1050
  %1149 = vst [vmem:[#allocation4 + $0x100] sm:$0xff] %v1051
  %1150 = vst [vmem:[#allocation4 + $0x108] sm:$0xff] %v1052
  %1151 = vst [vmem:[#allocation4 + $0x110] sm:$0xff] %v1053
  %1152 = vst [vmem:[#allocation4 + $0x118] sm:$0xff] %v1054
  %1153 = vst [vmem:[#allocation4 + $0x120] sm:$0xff] %v1055
  %1154 = vst [vmem:[#allocation4 + $0x128] sm:$0xff] %v1056
  %1155 = vst [vmem:[#allocation4 + $0x130] sm:$0xff] %v1057
  %1156 = vst [vmem:[#allocation4 + $0x138] sm:$0xff] %v1058
  %1157 = vst [vmem:[#allocation4 + $0x140] sm:$0xff] %v1059
  %1158 = vst [vmem:[#allocation4 + $0x148] sm:$0xff] %v1060
  %1159 = vst [vmem:[#allocation4 + $0x150] sm:$0xff] %v1061
  %1160 = vst [vmem:[#allocation4 + $0x158] sm:$0xff] %v1062
  %1161 = vst [vmem:[#allocation4 + $0x160] sm:$0xff] %v1063
  %1162 = vst [vmem:[#allocation4 + $0x168] sm:$0xff] %v1064
  %1163 = vst [vmem:[#allocation4 + $0x170] sm:$0xff] %v1065
  %1164 = vst [vmem:[#allocation4 + $0x178] sm:$0xff] %v1066
  %1165 = vst [vmem:[#allocation4 + $0x180] sm:$0xff] %v1067
  %1166 = vst [vmem:[#allocation4 + $0x188] sm:$0xff] %v1068
  %1167 = vst [vmem:[#allocation4 + $0x190] sm:$0xff] %v1069
  %1168 = vst [vmem:[#allocation4 + $0x198] sm:$0xff] %v1070
  %1169 = vst [vmem:[#allocation4 + $0x1a0] sm:$0xff] %v1071
  %1170 = vst [vmem:[#allocation4 + $0x1a8] sm:$0xff] %v1072
  %1171 = vst [vmem:[#allocation4 + $0x1b0] sm:$0xff] %v1073
  %1172 = vst [vmem:[#allocation4 + $0x1b8] sm:$0xff] %v1074
  %1173 = vst [vmem:[#allocation4 + $0x1c0] sm:$0xff] %v1075
  %1174 = vst [vmem:[#allocation4 + $0x1c8] sm:$0xff] %v1076
  %1175 = vst [vmem:[#allocation4 + $0x1d0] sm:$0xff] %v1077
  %1176 = vst [vmem:[#allocation4 + $0x1d8] sm:$0xff] %v1078
  %1177 = vst [vmem:[#allocation4 + $0x1e0] sm:$0xff] %v1079
  %1178 = vst [vmem:[#allocation4 + $0x1e8] sm:$0xff] %v1080
  %1179 = vst [vmem:[#allocation4 + $0x1f0] sm:$0xff] %v1081
  %1180 = vst [vmem:[#allocation4 + $0x1f8] sm:$0xff] %v1082
  %1181 = vst [vmem:[#allocation4 + $0x200] sm:$0xff] %v1083
  %1182 = vst [vmem:[#allocation4 + $0x208] sm:$0xff] %v1084
  %1183 = vst [vmem:[#allocation4 + $0x210] sm:$0xff] %v1085
  %1184 = vst [vmem:[#allocation4 + $0x218] sm:$0xff] %v1086
  %1185 = vst [vmem:[#allocation4 + $0x220] sm:$0xff] %v1087
  %1186 = vst [vmem:[#allocation4 + $0x228] sm:$0xff] %v1088
  %1187 = vst [vmem:[#allocation4 + $0x230] sm:$0xff] %v1089
  %1188 = vst [vmem:[#allocation4 + $0x238] sm:$0xff] %v1090
  %1189 = vst [vmem:[#allocation4 + $0x240] sm:$0xff] %v1091
  %1190 = vst [vmem:[#allocation4 + $0x248] sm:$0xff] %v1092
  %1191 = vst [vmem:[#allocation4 + $0x250] sm:$0xff] %v1093
  %1192 = vst [vmem:[#allocation4 + $0x258] sm:$0xff] %v1094
  %1193 = vst [vmem:[#allocation4 + $0x260] sm:$0xff] %v1095
  %1194 = vst [vmem:[#allocation4 + $0x268] sm:$0xff] %v1096
  %1195 = vst [vmem:[#allocation4 + $0x270] sm:$0xff] %v1097
  %1196 = vst [vmem:[#allocation4 + $0x278] sm:$0xff] %v1098
  %1197 = vst [vmem:[#allocation4 + $0x280] sm:$0xff] %v1099
  %1198 = vst [vmem:[#allocation4 + $0x288] sm:$0xff] %v1100
  %1199 = vst [vmem:[#allocation4 + $0x290] sm:$0xff] %v1101
  %1200 = vst [vmem:[#allocation4 + $0x298] sm:$0xff] %v1102
  %1201 = vst [vmem:[#allocation4 + $0x2a0] sm:$0xff] %v1103
  %1202 = vst [vmem:[#allocation4 + $0x2a8] sm:$0xff] %v1104
  %1203 = vst [vmem:[#allocation4 + $0x2b0] sm:$0xff] %v1105
  %1204 = vst [vmem:[#allocation4 + $0x2b8] sm:$0xff] %v1106
  %1205 = vst [vmem:[#allocation4 + $0x2c0] sm:$0xff] %v1107
  %1206 = vst [vmem:[#allocation4 + $0x2c8] sm:$0xff] %v1108
  %1207 = vst [vmem:[#allocation4 + $0x2d0] sm:$0xff] %v1109
  %1208 = vst [vmem:[#allocation4 + $0x2d8] sm:$0xff] %v1110
  %1209 = vst [vmem:[#allocation4 + $0x2e0] sm:$0xff] %v1111
  %1210 = vst [vmem:[#allocation4 + $0x2e8] sm:$0xff] %v1112
  %1211 = vst [vmem:[#allocation4 + $0x2f0] sm:$0xff] %v1113
  %1212 = vst [vmem:[#allocation4 + $0x2f8] sm:$0xff] %v1114
  %1213 = vst [vmem:[#allocation4 + $0x300] sm:$0xff] %v1115
  %1214 = vst [vmem:[#allocation4 + $0x308] sm:$0xff] %v1116
  %v1215 = vld [vmem:[#allocation4] ss:$2 sm:$0xff]
  %s1216 = scalar_lea.vmem [#allocation4], 16
  %v1217 = vld [vmem:[%s1216] ss:$2 sm:$0xff]
  %s1218 = scalar_lea.vmem [#allocation4], 32
  %v1219 = vld [vmem:[%s1218] ss:$2 sm:$0xff]
  %s1220 = scalar_lea.vmem [#allocation4], 48
  %v1221 = vld [vmem:[%s1220] ss:$2 sm:$0xff]
  %s1222 = scalar_lea.vmem [#allocation4], 64
  %v1223 = vld [vmem:[%s1222] ss:$2 sm:$0xff]
  %s1224 = scalar_lea.vmem [#allocation4], 80
  %v1225 = vld [vmem:[%s1224] ss:$2 sm:$0xff]
  %s1226 = scalar_lea.vmem [#allocation4], 96
  %v1227 = vld [vmem:[%s1226] ss:$2 sm:$0xff]
  %s1228 = scalar_lea.vmem [#allocation4], 112
  %v1229 = vld [vmem:[%s1228] ss:$2 sm:$0xff]
  %s1230 = scalar_lea.vmem [#allocation4], 128
  %v1231 = vld [vmem:[%s1230] ss:$2 sm:$0xff]
  %s1232 = scalar_lea.vmem [#allocation4], 144
  %v1233 = vld [vmem:[%s1232] ss:$2 sm:$0xff]
  %s1234 = scalar_lea.vmem [#allocation4], 160
  %v1235 = vld [vmem:[%s1234] ss:$2 sm:$0xff]
  %s1236 = scalar_lea.vmem [#allocation4], 176
  %v1237 = vld [vmem:[%s1236] ss:$2 sm:$0xff]
  %s1238 = scalar_lea.vmem [#allocation4], 192
  %v1239 = vld [vmem:[%s1238] ss:$2 sm:$0xff]
  %s1240 = scalar_lea.vmem [#allocation4], 208
  %v1241 = vld [vmem:[%s1240] ss:$2 sm:$0xff]
  %s1242 = scalar_lea.vmem [#allocation4], 224
  %v1243 = vld [vmem:[%s1242] ss:$2 sm:$0xff]
  %s1244 = scalar_lea.vmem [#allocation4], 240
  %v1245 = vld [vmem:[%s1244] ss:$2 sm:$0xff]
  %s1246 = scalar_lea.vmem [#allocation4], 256
  %v1247 = vld [vmem:[%s1246] ss:$2 sm:$0xff]
  %s1248 = scalar_lea.vmem [#allocation4], 272
  %v1249 = vld [vmem:[%s1248] ss:$2 sm:$0xff]
  %s1250 = scalar_lea.vmem [#allocation4], 288
  %v1251 = vld [vmem:[%s1250] ss:$2 sm:$0xff]
  %s1252 = scalar_lea.vmem [#allocation4], 304
  %v1253 = vld [vmem:[%s1252] ss:$2 sm:$0xff]
  %s1254 = scalar_lea.vmem [#allocation4], 320
  %v1255 = vld [vmem:[%s1254] ss:$2 sm:$0xff]
  %s1256 = scalar_lea.vmem [#allocation4], 336
  %v1257 = vld [vmem:[%s1256] ss:$2 sm:$0xff]
  %s1258 = scalar_lea.vmem [#allocation4], 352
  %v1259 = vld [vmem:[%s1258] ss:$2 sm:$0xff]
  %s1260 = scalar_lea.vmem [#allocation4], 368
  %v1261 = vld [vmem:[%s1260] ss:$2 sm:$0xff]
  %s1262 = scalar_lea.vmem [#allocation4], 384
  %v1263 = vld [vmem:[%s1262] ss:$2 sm:$0xff]
  %s1264 = scalar_lea.vmem [#allocation4], 400
  %v1265 = vld [vmem:[%s1264] ss:$2 sm:$0xff]
  %s1266 = scalar_lea.vmem [#allocation4], 416
  %v1267 = vld [vmem:[%s1266] ss:$2 sm:$0xff]
  %s1268 = scalar_lea.vmem [#allocation4], 432
  %v1269 = vld [vmem:[%s1268] ss:$2 sm:$0xff]
  %s1270 = scalar_lea.vmem [#allocation4], 448
  %v1271 = vld [vmem:[%s1270] ss:$2 sm:$0xff]
  %s1272 = scalar_lea.vmem [#allocation4], 464
  %v1273 = vld [vmem:[%s1272] ss:$2 sm:$0xff]
  %s1274 = scalar_lea.vmem [#allocation4], 480
  %v1275 = vld [vmem:[%s1274] ss:$2 sm:$0xff]
  %s1276 = scalar_lea.vmem [#allocation4], 496
  %v1277 = vld [vmem:[%s1276] ss:$2 sm:$0xff]
  %s1278 = scalar_lea.vmem [#allocation4], 512
  %v1279 = vld [vmem:[%s1278] ss:$2 sm:$0xff]
  %s1280 = scalar_lea.vmem [#allocation4], 528
  %v1281 = vld [vmem:[%s1280] ss:$2 sm:$0xff]
  %s1282 = scalar_lea.vmem [#allocation4], 544
  %v1283 = vld [vmem:[%s1282] ss:$2 sm:$0xff]
  %s1284 = scalar_lea.vmem [#allocation4], 560
  %v1285 = vld [vmem:[%s1284] ss:$2 sm:$0xff]
  %s1286 = scalar_lea.vmem [#allocation4], 576
  %v1287 = vld [vmem:[%s1286] ss:$2 sm:$0xff]
  %s1288 = scalar_lea.vmem [#allocation4], 592
  %v1289 = vld [vmem:[%s1288] ss:$2 sm:$0xff]
  %s1290 = scalar_lea.vmem [#allocation4], 608
  %v1291 = vld [vmem:[%s1290] ss:$2 sm:$0xff]
  %s1292 = scalar_lea.vmem [#allocation4], 624
  %v1293 = vld [vmem:[%s1292] ss:$2 sm:$0xff]
  %s1294 = scalar_lea.vmem [#allocation4], 640
  %v1295 = vld [vmem:[%s1294] ss:$2 sm:$0xff]
  %s1296 = scalar_lea.vmem [#allocation4], 656
  %v1297 = vld [vmem:[%s1296] ss:$2 sm:$0xff]
  %s1298 = scalar_lea.vmem [#allocation4], 672
  %v1299 = vld [vmem:[%s1298] ss:$2 sm:$0xff]
  %s1300 = scalar_lea.vmem [#allocation4], 688
  %v1301 = vld [vmem:[%s1300] ss:$2 sm:$0xff]
  %s1302 = scalar_lea.vmem [#allocation4], 704
  %v1303 = vld [vmem:[%s1302] ss:$2 sm:$0xff]
  %s1304 = scalar_lea.vmem [#allocation4], 720
  %v1305 = vld [vmem:[%s1304] ss:$2 sm:$0xff]
  %s1306 = scalar_lea.vmem [#allocation4], 736
  %v1307 = vld [vmem:[%s1306] ss:$2 sm:$0xff]
  %s1308 = scalar_lea.vmem [#allocation4], 752
  %v1309 = vld [vmem:[%s1308] ss:$2 sm:$0xff]
  %s1310 = scalar_lea.vmem [#allocation4], 768
  %v1311 = vld [vmem:[%s1310] ss:$2 sm:$0xff]
  %s1312 = scalar_lea.vmem [#allocation4], 1
  %v1313 = vld [vmem:[%s1312] ss:$2 sm:$0xff]
  %s1314 = scalar_lea.vmem [#allocation4], 17
  %v1315 = vld [vmem:[%s1314] ss:$2 sm:$0xff]
  %s1316 = scalar_lea.vmem [#allocation4], 33
  %v1317 = vld [vmem:[%s1316] ss:$2 sm:$0xff]
  %s1318 = scalar_lea.vmem [#allocation4], 49
  %v1319 = vld [vmem:[%s1318] ss:$2 sm:$0xff]
  %s1320 = scalar_lea.vmem [#allocation4], 65
  %v1321 = vld [vmem:[%s1320] ss:$2 sm:$0xff]
  %s1322 = scalar_lea.vmem [#allocation4], 81
  %v1323 = vld [vmem:[%s1322] ss:$2 sm:$0xff]
  %s1324 = scalar_lea.vmem [#allocation4], 97
  %v1325 = vld [vmem:[%s1324] ss:$2 sm:$0xff]
  %s1326 = scalar_lea.vmem [#allocation4], 113
  %v1327 = vld [vmem:[%s1326] ss:$2 sm:$0xff]
  %s1328 = scalar_lea.vmem [#allocation4], 129
  %v1329 = vld [vmem:[%s1328] ss:$2 sm:$0xff]
  %s1330 = scalar_lea.vmem [#allocation4], 145
  %v1331 = vld [vmem:[%s1330] ss:$2 sm:$0xff]
  %s1332 = scalar_lea.vmem [#allocation4], 161
  %v1333 = vld [vmem:[%s1332] ss:$2 sm:$0xff]
  %s1334 = scalar_lea.vmem [#allocation4], 177
  %v1335 = vld [vmem:[%s1334] ss:$2 sm:$0xff]
  %s1336 = scalar_lea.vmem [#allocation4], 193
  %v1337 = vld [vmem:[%s1336] ss:$2 sm:$0xff]
  %s1338 = scalar_lea.vmem [#allocation4], 209
  %v1339 = vld [vmem:[%s1338] ss:$2 sm:$0xff]
  %s1340 = scalar_lea.vmem [#allocation4], 225
  %v1341 = vld [vmem:[%s1340] ss:$2 sm:$0xff]
  %s1342 = scalar_lea.vmem [#allocation4], 241
  %v1343 = vld [vmem:[%s1342] ss:$2 sm:$0xff]
  %s1344 = scalar_lea.vmem [#allocation4], 257
  %v1345 = vld [vmem:[%s1344] ss:$2 sm:$0xff]
  %s1346 = scalar_lea.vmem [#allocation4], 273
  %v1347 = vld [vmem:[%s1346] ss:$2 sm:$0xff]
  %s1348 = scalar_lea.vmem [#allocation4], 289
  %v1349 = vld [vmem:[%s1348] ss:$2 sm:$0xff]
  %s1350 = scalar_lea.vmem [#allocation4], 305
  %v1351 = vld [vmem:[%s1350] ss:$2 sm:$0xff]
  %s1352 = scalar_lea.vmem [#allocation4], 321
  %v1353 = vld [vmem:[%s1352] ss:$2 sm:$0xff]
  %s1354 = scalar_lea.vmem [#allocation4], 337
  %v1355 = vld [vmem:[%s1354] ss:$2 sm:$0xff]
  %s1356 = scalar_lea.vmem [#allocation4], 353
  %v1357 = vld [vmem:[%s1356] ss:$2 sm:$0xff]
  %s1358 = scalar_lea.vmem [#allocation4], 369
  %v1359 = vld [vmem:[%s1358] ss:$2 sm:$0xff]
  %s1360 = scalar_lea.vmem [#allocation4], 385
  %v1361 = vld [vmem:[%s1360] ss:$2 sm:$0xff]
  %s1362 = scalar_lea.vmem [#allocation4], 401
  %v1363 = vld [vmem:[%s1362] ss:$2 sm:$0xff]
  %s1364 = scalar_lea.vmem [#allocation4], 417
  %v1365 = vld [vmem:[%s1364] ss:$2 sm:$0xff]
  %s1366 = scalar_lea.vmem [#allocation4], 433
  %v1367 = vld [vmem:[%s1366] ss:$2 sm:$0xff]
  %s1368 = scalar_lea.vmem [#allocation4], 449
  %v1369 = vld [vmem:[%s1368] ss:$2 sm:$0xff]
  %s1370 = scalar_lea.vmem [#allocation4], 465
  %v1371 = vld [vmem:[%s1370] ss:$2 sm:$0xff]
  %s1372 = scalar_lea.vmem [#allocation4], 481
  %v1373 = vld [vmem:[%s1372] ss:$2 sm:$0xff]
  %s1374 = scalar_lea.vmem [#allocation4], 497
  %v1375 = vld [vmem:[%s1374] ss:$2 sm:$0xff]
  %s1376 = scalar_lea.vmem [#allocation4], 513
  %v1377 = vld [vmem:[%s1376] ss:$2 sm:$0xff]
  %s1378 = scalar_lea.vmem [#allocation4], 529
  %v1379 = vld [vmem:[%s1378] ss:$2 sm:$0xff]
  %s1380 = scalar_lea.vmem [#allocation4], 545
  %v1381 = vld [vmem:[%s1380] ss:$2 sm:$0xff]
  %s1382 = scalar_lea.vmem [#allocation4], 561
  %v1383 = vld [vmem:[%s1382] ss:$2 sm:$0xff]
  %s1384 = scalar_lea.vmem [#allocation4], 577
  %v1385 = vld [vmem:[%s1384] ss:$2 sm:$0xff]
  %s1386 = scalar_lea.vmem [#allocation4], 593
  %v1387 = vld [vmem:[%s1386] ss:$2 sm:$0xff]
  %s1388 = scalar_lea.vmem [#allocation4], 609
  %v1389 = vld [vmem:[%s1388] ss:$2 sm:$0xff]
  %s1390 = scalar_lea.vmem [#allocation4], 625
  %v1391 = vld [vmem:[%s1390] ss:$2 sm:$0xff]
  %s1392 = scalar_lea.vmem [#allocation4], 641
  %v1393 = vld [vmem:[%s1392] ss:$2 sm:$0xff]
  %s1394 = scalar_lea.vmem [#allocation4], 657
  %v1395 = vld [vmem:[%s1394] ss:$2 sm:$0xff]
  %s1396 = scalar_lea.vmem [#allocation4], 673
  %v1397 = vld [vmem:[%s1396] ss:$2 sm:$0xff]
  %s1398 = scalar_lea.vmem [#allocation4], 689
  %v1399 = vld [vmem:[%s1398] ss:$2 sm:$0xff]
  %s1400 = scalar_lea.vmem [#allocation4], 705
  %v1401 = vld [vmem:[%s1400] ss:$2 sm:$0xff]
  %s1402 = scalar_lea.vmem [#allocation4], 721
  %v1403 = vld [vmem:[%s1402] ss:$2 sm:$0xff]
  %s1404 = scalar_lea.vmem [#allocation4], 737
  %v1405 = vld [vmem:[%s1404] ss:$2 sm:$0xff]
  %s1406 = scalar_lea.vmem [#allocation4], 753
  %v1407 = vld [vmem:[%s1406] ss:$2 sm:$0xff]
  %s1408 = scalar_lea.vmem [#allocation4], 769
  %v1409 = vld [vmem:[%s1408] ss:$2 sm:$0xff]
  %v1410 = vmax.f32 %v1215, %v1313
  %v1411 = vmax.f32 %v1217, %v1315
  %v1412 = vmax.f32 %v1219, %v1317
  %v1413 = vmax.f32 %v1221, %v1319
  %v1414 = vmax.f32 %v1223, %v1321
  %v1415 = vmax.f32 %v1225, %v1323
  %v1416 = vmax.f32 %v1227, %v1325
  %v1417 = vmax.f32 %v1229, %v1327
  %v1418 = vmax.f32 %v1231, %v1329
  %v1419 = vmax.f32 %v1233, %v1331
  %v1420 = vmax.f32 %v1235, %v1333
  %v1421 = vmax.f32 %v1237, %v1335
  %v1422 = vmax.f32 %v1239, %v1337
  %v1423 = vmax.f32 %v1241, %v1339
  %v1424 = vmax.f32 %v1243, %v1341
  %v1425 = vmax.f32 %v1245, %v1343
  %v1426 = vmax.f32 %v1247, %v1345
  %v1427 = vmax.f32 %v1249, %v1347
  %v1428 = vmax.f32 %v1251, %v1349
  %v1429 = vmax.f32 %v1253, %v1351
  %v1430 = vmax.f32 %v1255, %v1353
  %v1431 = vmax.f32 %v1257, %v1355
  %v1432 = vmax.f32 %v1259, %v1357
  %v1433 = vmax.f32 %v1261, %v1359
  %v1434 = vmax.f32 %v1263, %v1361
  %v1435 = vmax.f32 %v1265, %v1363
  %v1436 = vmax.f32 %v1267, %v1365
  %v1437 = vmax.f32 %v1269, %v1367
  %v1438 = vmax.f32 %v1271, %v1369
  %v1439 = vmax.f32 %v1273, %v1371
  %v1440 = vmax.f32 %v1275, %v1373
  %v1441 = vmax.f32 %v1277, %v1375
  %v1442 = vmax.f32 %v1279, %v1377
  %v1443 = vmax.f32 %v1281, %v1379
  %v1444 = vmax.f32 %v1283, %v1381
  %v1445 = vmax.f32 %v1285, %v1383
  %v1446 = vmax.f32 %v1287, %v1385
  %v1447 = vmax.f32 %v1289, %v1387
  %v1448 = vmax.f32 %v1291, %v1389
  %v1449 = vmax.f32 %v1293, %v1391
  %v1450 = vmax.f32 %v1295, %v1393
  %v1451 = vmax.f32 %v1297, %v1395
  %v1452 = vmax.f32 %v1299, %v1397
  %v1453 = vmax.f32 %v1301, %v1399
  %v1454 = vmax.f32 %v1303, %v1401
  %v1455 = vmax.f32 %v1305, %v1403
  %v1456 = vmax.f32 %v1307, %v1405
  %v1457 = vmax.f32 %v1309, %v1407
  %v1458 = vmax.f32 %v1311, %v1409
  %1459 = vst [vmem:[#allocation5] sm:$0xff] %v1410
  %1460 = vst [vmem:[#allocation5 + $0x8] sm:$0xff] %v1411
  %1461 = vst [vmem:[#allocation5 + $0x10] sm:$0xff] %v1412
  %1462 = vst [vmem:[#allocation5 + $0x18] sm:$0xff] %v1413
  %1463 = vst [vmem:[#allocation5 + $0x20] sm:$0xff] %v1414
  %1464 = vst [vmem:[#allocation5 + $0x28] sm:$0xff] %v1415
  %1465 = vst [vmem:[#allocation5 + $0x30] sm:$0xff] %v1416
  %1466 = vst [vmem:[#allocation5 + $0x38] sm:$0xff] %v1417
  %1467 = vst [vmem:[#allocation5 + $0x40] sm:$0xff] %v1418
  %1468 = vst [vmem:[#allocation5 + $0x48] sm:$0xff] %v1419
  %1469 = vst [vmem:[#allocation5 + $0x50] sm:$0xff] %v1420
  %1470 = vst [vmem:[#allocation5 + $0x58] sm:$0xff] %v1421
  %1471 = vst [vmem:[#allocation5 + $0x60] sm:$0xff] %v1422
  %1472 = vst [vmem:[#allocation5 + $0x68] sm:$0xff] %v1423
  %1473 = vst [vmem:[#allocation5 + $0x70] sm:$0xff] %v1424
  %1474 = vst [vmem:[#allocation5 + $0x78] sm:$0xff] %v1425
  %1475 = vst [vmem:[#allocation5 + $0x80] sm:$0xff] %v1426
  %1476 = vst [vmem:[#allocation5 + $0x88] sm:$0xff] %v1427
  %1477 = vst [vmem:[#allocation5 + $0x90] sm:$0xff] %v1428
  %1478 = vst [vmem:[#allocation5 + $0x98] sm:$0xff] %v1429
  %1479 = vst [vmem:[#allocation5 + $0xa0] sm:$0xff] %v1430
  %1480 = vst [vmem:[#allocation5 + $0xa8] sm:$0xff] %v1431
  %1481 = vst [vmem:[#allocation5 + $0xb0] sm:$0xff] %v1432
  %1482 = vst [vmem:[#allocation5 + $0xb8] sm:$0xff] %v1433
  %1483 = vst [vmem:[#allocation5 + $0xc0] sm:$0xff] %v1434
  %1484 = vst [vmem:[#allocation5 + $0xc8] sm:$0xff] %v1435
  %1485 = vst [vmem:[#allocation5 + $0xd0] sm:$0xff] %v1436
  %1486 = vst [vmem:[#allocation5 + $0xd8] sm:$0xff] %v1437
  %1487 = vst [vmem:[#allocation5 + $0xe0] sm:$0xff] %v1438
  %1488 = vst [vmem:[#allocation5 + $0xe8] sm:$0xff] %v1439
  %1489 = vst [vmem:[#allocation5 + $0xf0] sm:$0xff] %v1440
  %1490 = vst [vmem:[#allocation5 + $0xf8] sm:$0xff] %v1441
  %1491 = vst [vmem:[#allocation5 + $0x100] sm:$0xff] %v1442
  %1492 = vst [vmem:[#allocation5 + $0x108] sm:$0xff] %v1443
  %1493 = vst [vmem:[#allocation5 + $0x110] sm:$0xff] %v1444
  %1494 = vst [vmem:[#allocation5 + $0x118] sm:$0xff] %v1445
  %1495 = vst [vmem:[#allocation5 + $0x120] sm:$0xff] %v1446
  %1496 = vst [vmem:[#allocation5 + $0x128] sm:$0xff] %v1447
  %1497 = vst [vmem:[#allocation5 + $0x130] sm:$0xff] %v1448
  %1498 = vst [vmem:[#allocation5 + $0x138] sm:$0xff] %v1449
  %1499 = vst [vmem:[#allocation5 + $0x140] sm:$0xff] %v1450
  %1500 = vst [vmem:[#allocation5 + $0x148] sm:$0xff] %v1451
  %1501 = vst [vmem:[#allocation5 + $0x150] sm:$0xff] %v1452
  %1502 = vst [vmem:[#allocation5 + $0x158] sm:$0xff] %v1453
  %1503 = vst [vmem:[#allocation5 + $0x160] sm:$0xff] %v1454
  %1504 = vst [vmem:[#allocation5 + $0x168] sm:$0xff] %v1455
  %1505 = vst [vmem:[#allocation5 + $0x170] sm:$0xff] %v1456
  %1506 = vst [vmem:[#allocation5 + $0x178] sm:$0xff] %v1457
  %1507 = vst [vmem:[#allocation5 + $0x180] sm:$0xff] %v1458
  %v1508 = vld [vmem:[#allocation5] sm:$0xff]
  %v1509 = vld [vmem:[#allocation5 + $0x8] sm:$0x3f]
  %v1510 = vld [vmem:[#allocation5 + $0xe] sm:$0xff]
  %v1511 = vld [vmem:[#allocation5 + $0x16] sm:$0x3f]
  %v1512 = vmax.f32 %v1508, %v1510
  %v1513 = vmax.f32 %v1509, %v1511
  %v1514 = vpack.c.bf16 %v1513, %v1512
  %v1516 = vrot.slane %v1514, 4
  %1518 = vst [vmem:[#allocation2 + $0x8] sm:$0xf0] %v1516
  %1519 = vst [vmem:[#allocation2 + $0x10] sm:$0x7] %v1516
  %v1520 = vld [vmem:[#allocation5 + $0x1c] sm:$0xff]
  %v1521 = vld [vmem:[#allocation5 + $0x24] sm:$0x3f]
  %v1522 = vld [vmem:[#allocation5 + $0x2a] sm:$0xff]
  %v1523 = vld [vmem:[#allocation5 + $0x32] sm:$0x3f]
  %v1524 = vmax.f32 %v1520, %v1522
  %v1525 = vmax.f32 %v1521, %v1523
  %v1526 = vpack.c.bf16 %v1525, %v1524
  %v1528 = vrot.slane %v1526, 4
  %1530 = vst [vmem:[#allocation2 + $0x10] sm:$0xf0] %v1528
  %1531 = vst [vmem:[#allocation2 + $0x18] sm:$0x7] %v1528
  %v1532 = vld [vmem:[#allocation5 + $0x38] sm:$0xff]
  %v1533 = vld [vmem:[#allocation5 + $0x40] sm:$0x3f]
  %v1534 = vld [vmem:[#allocation5 + $0x46] sm:$0xff]
  %v1535 = vld [vmem:[#allocation5 + $0x4e] sm:$0x3f]
  %v1536 = vmax.f32 %v1532, %v1534
  %v1537 = vmax.f32 %v1533, %v1535
  %v1538 = vpack.c.bf16 %v1537, %v1536
  %v1540 = vrot.slane %v1538, 4
  %1542 = vst [vmem:[#allocation2 + $0x18] sm:$0xf0] %v1540
  %1543 = vst [vmem:[#allocation2 + $0x20] sm:$0x7] %v1540
  %v1544 = vld [vmem:[#allocation5 + $0x54] sm:$0xff]
  %v1545 = vld [vmem:[#allocation5 + $0x5c] sm:$0x3f]
  %v1546 = vld [vmem:[#allocation5 + $0x62] sm:$0xff]
  %v1547 = vld [vmem:[#allocation5 + $0x6a] sm:$0x3f]
  %v1548 = vmax.f32 %v1544, %v1546
  %v1549 = vmax.f32 %v1545, %v1547
  %v1550 = vpack.c.bf16 %v1549, %v1548
  %v1552 = vrot.slane %v1550, 4
  %1554 = vst [vmem:[#allocation2 + $0x20] sm:$0xf0] %v1552
  %1555 = vst [vmem:[#allocation2 + $0x28] sm:$0x7] %v1552
  %v1556 = vld [vmem:[#allocation5 + $0x70] sm:$0xff]
  %v1557 = vld [vmem:[#allocation5 + $0x78] sm:$0x3f]
  %v1558 = vld [vmem:[#allocation5 + $0x7e] sm:$0xff]
  %v1559 = vld [vmem:[#allocation5 + $0x86] sm:$0x3f]
  %v1560 = vmax.f32 %v1556, %v1558
  %v1561 = vmax.f32 %v1557, %v1559
  %v1562 = vpack.c.bf16 %v1561, %v1560
  %v1564 = vrot.slane %v1562, 4
  %1566 = vst [vmem:[#allocation2 + $0x28] sm:$0xf0] %v1564
  %1567 = vst [vmem:[#allocation2 + $0x30] sm:$0x7] %v1564
  %v1568 = vld [vmem:[#allocation5 + $0x8c] sm:$0xff]
  %v1569 = vld [vmem:[#allocation5 + $0x94] sm:$0x3f]
  %v1570 = vld [vmem:[#allocation5 + $0x9a] sm:$0xff]
  %v1571 = vld [vmem:[#allocation5 + $0xa2] sm:$0x3f]
  %v1572 = vmax.f32 %v1568, %v1570
  %v1573 = vmax.f32 %v1569, %v1571
  %v1574 = vpack.c.bf16 %v1573, %v1572
  %v1576 = vrot.slane %v1574, 4
  %1578 = vst [vmem:[#allocation2 + $0x30] sm:$0xf0] %v1576
  %1579 = vst [vmem:[#allocation2 + $0x38] sm:$0x7] %v1576
  %v1580 = vld [vmem:[#allocation5 + $0xa8] sm:$0xff]
  %v1581 = vld [vmem:[#allocation5 + $0xb0] sm:$0x3f]
  %v1582 = vld [vmem:[#allocation5 + $0xb6] sm:$0xff]
  %v1583 = vld [vmem:[#allocation5 + $0xbe] sm:$0x3f]
  %v1584 = vmax.f32 %v1580, %v1582
  %v1585 = vmax.f32 %v1581, %v1583
  %v1586 = vpack.c.bf16 %v1585, %v1584
  %v1588 = vrot.slane %v1586, 4
  %1590 = vst [vmem:[#allocation2 + $0x38] sm:$0xf0] %v1588
  %1591 = vst [vmem:[#allocation2 + $0x40] sm:$0x7] %v1588
  %v1592 = vld [vmem:[#allocation5 + $0xc4] sm:$0xff]
  %v1593 = vld [vmem:[#allocation5 + $0xcc] sm:$0x3f]
  %v1594 = vld [vmem:[#allocation5 + $0xd2] sm:$0xff]
  %v1595 = vld [vmem:[#allocation5 + $0xda] sm:$0x3f]
  %v1596 = vmax.f32 %v1592, %v1594
  %v1597 = vmax.f32 %v1593, %v1595
  %v1598 = vpack.c.bf16 %v1597, %v1596
  %v1600 = vrot.slane %v1598, 4
  %1602 = vst [vmem:[#allocation2 + $0x40] sm:$0xf0] %v1600
  %1603 = vst [vmem:[#allocation2 + $0x48] sm:$0x7] %v1600
  %v1604 = vld [vmem:[#allocation5 + $0xe0] sm:$0xff]
  %v1605 = vld [vmem:[#allocation5 + $0xe8] sm:$0x3f]
  %v1606 = vld [vmem:[#allocation5 + $0xee] sm:$0xff]
  %v1607 = vld [vmem:[#allocation5 + $0xf6] sm:$0x3f]
  %v1608 = vmax.f32 %v1604, %v1606
  %v1609 = vmax.f32 %v1605, %v1607
  %v1610 = vpack.c.bf16 %v1609, %v1608
  %v1612 = vrot.slane %v1610, 4
  %1614 = vst [vmem:[#allocation2 + $0x48] sm:$0xf0] %v1612
  %1615 = vst [vmem:[#allocation2 + $0x50] sm:$0x7] %v1612
  %v1616 = vld [vmem:[#allocation5 + $0xfc] sm:$0xff]
  %v1617 = vld [vmem:[#allocation5 + $0x104] sm:$0x3f]
  %v1618 = vld [vmem:[#allocation5 + $0x10a] sm:$0xff]
  %v1619 = vld [vmem:[#allocation5 + $0x112] sm:$0x3f]
  %v1620 = vmax.f32 %v1616, %v1618
  %v1621 = vmax.f32 %v1617, %v1619
  %v1622 = vpack.c.bf16 %v1621, %v1620
  %v1624 = vrot.slane %v1622, 4
  %1626 = vst [vmem:[#allocation2 + $0x50] sm:$0xf0] %v1624
  %1627 = vst [vmem:[#allocation2 + $0x58] sm:$0x7] %v1624
  %v1628 = vld [vmem:[#allocation5 + $0x118] sm:$0xff]
  %v1629 = vld [vmem:[#allocation5 + $0x120] sm:$0x3f]
  %v1630 = vld [vmem:[#allocation5 + $0x126] sm:$0xff]
  %v1631 = vld [vmem:[#allocation5 + $0x12e] sm:$0x3f]
  %v1632 = vmax.f32 %v1628, %v1630
  %v1633 = vmax.f32 %v1629, %v1631
  %v1634 = vpack.c.bf16 %v1633, %v1632
  %v1636 = vrot.slane %v1634, 4
  %1638 = vst [vmem:[#allocation2 + $0x58] sm:$0xf0] %v1636
  %1639 = vst [vmem:[#allocation2 + $0x60] sm:$0x7] %v1636
  %v1640 = vld [vmem:[#allocation5 + $0x134] sm:$0xff]
  %v1641 = vld [vmem:[#allocation5 + $0x13c] sm:$0x3f]
  %v1642 = vld [vmem:[#allocation5 + $0x142] sm:$0xff]
  %v1643 = vld [vmem:[#allocation5 + $0x14a] sm:$0x3f]
  %v1644 = vmax.f32 %v1640, %v1642
  %v1645 = vmax.f32 %v1641, %v1643
  %v1646 = vpack.c.bf16 %v1645, %v1644
  %v1648 = vrot.slane %v1646, 4
  %1650 = vst [vmem:[#allocation2 + $0x60] sm:$0xf0] %v1648
  %1651 = vst [vmem:[#allocation2 + $0x68] sm:$0x7] %v1648
  %v1652 = vld [vmem:[#allocation5 + $0x150] sm:$0xff]
  %v1653 = vld [vmem:[#allocation5 + $0x158] sm:$0x3f]
  %v1654 = vld [vmem:[#allocation5 + $0x15e] sm:$0xff]
  %v1655 = vld [vmem:[#allocation5 + $0x166] sm:$0x3f]
  %v1656 = vmax.f32 %v1652, %v1654
  %v1657 = vmax.f32 %v1653, %v1655
  %v1658 = vpack.c.bf16 %v1657, %v1656
  %v1660 = vrot.slane %v1658, 4
  %1662 = vst [vmem:[#allocation2 + $0x68] sm:$0xf0] %v1660
  %1663 = vst [vmem:[#allocation2 + $0x70] sm:$0x7] %v1660
  %v1664 = vld [vmem:[#allocation5 + $0x16c] sm:$0xff]
  %v1665 = vld [vmem:[#allocation5 + $0x174] sm:$0x3f]
  %v1666 = vld [vmem:[#allocation5 + $0x17a] sm:$0xff]
  %v1667 = vld [vmem:[#allocation5 + $0x182] sm:$0x3f]
  %v1668 = vmax.f32 %v1664, %v1666
  %v1669 = vmax.f32 %v1665, %v1667
  %v1670 = vpack.c.bf16 %v1669, %v1668
  %v1672 = vrot.slane %v1670, 4
  %1674 = vst [vmem:[#allocation2 + $0x70] sm:$0xf0] %v1672
  %1675 = vst [vmem:[#allocation2 + $0x78] sm:$0x7] %v1672
  %v1676 = vld [vmem:[%s4] sm:$0x1]
  %v1678 = vlaneseq
  %v1679 = vshrl.u32 %v1678, 7
  %v1680 = vsub.s32 0, %v1679
  %v1681 = vrot.slane %v1676, %v1680
  %v1683 = vadd.f32 %v1681, 0.0
  %v1684 = vld [vmem:[#allocation2] sm:$0xf8]
  %v1685 = vld [vmem:[#allocation2 + $0x8] sm:$0xff]
  %v1686 = vld [vmem:[#allocation2 + $0x10] sm:$0xff]
  %v1687 = vld [vmem:[#allocation2 + $0x18] sm:$0xff]
  %v1688 = vld [vmem:[#allocation2 + $0x20] sm:$0xff]
  %v1689 = vld [vmem:[#allocation2 + $0x28] sm:$0xff]
  %v1690 = vld [vmem:[#allocation2 + $0x30] sm:$0xff]
  %v1691 = vld [vmem:[#allocation2 + $0x38] sm:$0xff]
  %v1692 = vld [vmem:[#allocation2 + $0x40] sm:$0xff]
  %v1693 = vld [vmem:[#allocation2 + $0x48] sm:$0xff]
  %v1694 = vld [vmem:[#allocation2 + $0x50] sm:$0xff]
  %v1695 = vld [vmem:[#allocation2 + $0x58] sm:$0xff]
  %v1696 = vld [vmem:[#allocation2 + $0x60] sm:$0xff]
  %v1697 = vld [vmem:[#allocation2 + $0x68] sm:$0xff]
  %v1698 = vld [vmem:[#allocation2 + $0x70] sm:$0xff]
  %v1699 = vld [vmem:[#allocation2 + $0x78] sm:$0xff]
  %v1700 = vld [vmem:[#allocation2 + $0x80] sm:$0xf]
  %v1701 = vld [vmem:[%s3] sm:$0xf]
  %v1702 = vld [vmem:[%s3 + $0x4] sm:$0xf]
  %v1703 = vld [vmem:[%s3 + $0x8] sm:$0xf]
  %v1704 = vld [vmem:[%s3 + $0xc] sm:$0xf]
  %v1705 = vld [vmem:[%s3 + $0x10] sm:$0xf]
  %v1706 = vld [vmem:[%s3 + $0x14] sm:$0xf]
  %v1707 = vld [vmem:[%s3 + $0x18] sm:$0xf]
  %v1708 = vld [vmem:[%s3 + $0x1c] sm:$0xf]
  %v1709 = vld [vmem:[%s3 + $0x20] sm:$0xf]
  %v1710 = vld [vmem:[%s3 + $0x24] sm:$0xf]
  %v1711 = vld [vmem:[%s3 + $0x28] sm:$0xf]
  %v1712 = vld [vmem:[%s3 + $0x2c] sm:$0xf]
  %v1713 = vld [vmem:[%s3 + $0x30] sm:$0xf]
  %v1714 = vld [vmem:[%s3 + $0x34] sm:$0xf]
  %v1715 = vld [vmem:[%s3 + $0x38] sm:$0xf]
  %v1716 = vld [vmem:[%s3 + $0x3c] sm:$0xf]
  %vm1717 = vsmask.f32 4352
  %v1719 = vshrl.u32 %v1684, 16
  %v1721 = vrot.slane %v1719, 3
  %v1722 = vshll.u32 %v1684, 16
  %v1724 = vrot.slane %v1722, 4
  %v1725 = vor.u32 %v1721, %v1724
  %v1727 = vshrl.u32 %v1685, 16
  %v1729 = vrot.slane %v1727, 3
  %v1730 = vshll.u32 %v1685, 16
  %v1732 = vrot.slane %v1730, 4
  %v1733 = vor.u32 %v1729, %v1732
  %v1734 = vsel %vm1717, %v1725, %v1733
  %v1736 = vshrl.u32 %v1686, 16
  %v1738 = vrot.slane %v1736, 3
  %v1739 = vshll.u32 %v1686, 16
  %v1741 = vrot.slane %v1739, 4
  %v1742 = vor.u32 %v1738, %v1741
  %v1743 = vsel %vm1717, %v1733, %v1742
  %v1745 = vshrl.u32 %v1687, 16
  %v1747 = vrot.slane %v1745, 3
  %v1748 = vshll.u32 %v1687, 16
  %v1750 = vrot.slane %v1748, 4
  %v1751 = vor.u32 %v1747, %v1750
  %v1752 = vsel %vm1717, %v1742, %v1751
  %v1754 = vshrl.u32 %v1688, 16
  %v1756 = vrot.slane %v1754, 3
  %v1757 = vshll.u32 %v1688, 16
  %v1759 = vrot.slane %v1757, 4
  %v1760 = vor.u32 %v1756, %v1759
  %v1761 = vsel %vm1717, %v1751, %v1760
  %v1763 = vshrl.u32 %v1689, 16
  %v1765 = vrot.slane %v1763, 3
  %v1766 = vshll.u32 %v1689, 16
  %v1768 = vrot.slane %v1766, 4
  %v1769 = vor.u32 %v1765, %v1768
  %v1770 = vsel %vm1717, %v1760, %v1769
  %v1772 = vshrl.u32 %v1690, 16
  %v1774 = vrot.slane %v1772, 3
  %v1775 = vshll.u32 %v1690, 16
  %v1777 = vrot.slane %v1775, 4
  %v1778 = vor.u32 %v1774, %v1777
  %v1779 = vsel %vm1717, %v1769, %v1778
  %v1781 = vshrl.u32 %v1691, 16
  %v1783 = vrot.slane %v1781, 3
  %v1784 = vshll.u32 %v1691, 16
  %v1786 = vrot.slane %v1784, 4
  %v1787 = vor.u32 %v1783, %v1786
  %v1788 = vsel %vm1717, %v1778, %v1787
  %v1790 = vshrl.u32 %v1692, 16
  %v1792 = vrot.slane %v1790, 3
  %v1793 = vshll.u32 %v1692, 16
  %v1795 = vrot.slane %v1793, 4
  %v1796 = vor.u32 %v1792, %v1795
  %v1797 = vsel %vm1717, %v1787, %v1796
  %v1799 = vshrl.u32 %v1693, 16
  %v1801 = vrot.slane %v1799, 3
  %v1802 = vshll.u32 %v1693, 16
  %v1804 = vrot.slane %v1802, 4
  %v1805 = vor.u32 %v1801, %v1804
  %v1806 = vsel %vm1717, %v1796, %v1805
  %v1808 = vshrl.u32 %v1694, 16
  %v1810 = vrot.slane %v1808, 3
  %v1811 = vshll.u32 %v1694, 16
  %v1813 = vrot.slane %v1811, 4
  %v1814 = vor.u32 %v1810, %v1813
  %v1815 = vsel %vm1717, %v1805, %v1814
  %v1817 = vshrl.u32 %v1695, 16
  %v1819 = vrot.slane %v1817, 3
  %v1820 = vshll.u32 %v1695, 16
  %v1822 = vrot.slane %v1820, 4
  %v1823 = vor.u32 %v1819, %v1822
  %v1824 = vsel %vm1717, %v1814, %v1823
  %v1826 = vshrl.u32 %v1696, 16
  %v1828 = vrot.slane %v1826, 3
  %v1829 = vshll.u32 %v1696, 16
  %v1831 = vrot.slane %v1829, 4
  %v1832 = vor.u32 %v1828, %v1831
  %v1833 = vsel %vm1717, %v1823, %v1832
  %v1835 = vshrl.u32 %v1697, 16
  %v1837 = vrot.slane %v1835, 3
  %v1838 = vshll.u32 %v1697, 16
  %v1840 = vrot.slane %v1838, 4
  %v1841 = vor.u32 %v1837, %v1840
  %v1842 = vsel %vm1717, %v1832, %v1841
  %v1844 = vshrl.u32 %v1698, 16
  %v1846 = vrot.slane %v1844, 3
  %v1847 = vshll.u32 %v1698, 16
  %v1849 = vrot.slane %v1847, 4
  %v1850 = vor.u32 %v1846, %v1849
  %v1851 = vsel %vm1717, %v1841, %v1850
  %v1853 = vshrl.u32 %v1699, 16
  %v1855 = vrot.slane %v1853, 3
  %v1856 = vshll.u32 %v1699, 16
  %v1858 = vrot.slane %v1856, 4
  %v1859 = vor.u32 %v1855, %v1858
  %v1860 = vsel %vm1717, %v1850, %v1859
  %v1862 = vshrl.u32 %v1700, 16
  %v1864 = vrot.slane %v1862, 3
  %v1865 = vshll.u32 %v1700, 16
  %v1867 = vrot.slane %v1865, 4
  %v1868 = vor.u32 %v1864, %v1867
  %v1869 = vsel %vm1717, %v1859, %v1868
  %v1902 = vunpack.c.l.b16 %v1701
  %v1903 = vunpack.c.l.b16 %v1702
  %v1904 = vunpack.c.l.b16 %v1703
  %v1905 = vunpack.c.l.b16 %v1704
  %v1906 = vunpack.c.l.b16 %v1705
  %v1907 = vunpack.c.l.b16 %v1706
  %v1908 = vunpack.c.l.b16 %v1707
  %v1909 = vunpack.c.l.b16 %v1708
  %v1910 = vunpack.c.l.b16 %v1709
  %v1911 = vunpack.c.l.b16 %v1710
  %v1912 = vunpack.c.l.b16 %v1711
  %v1913 = vunpack.c.l.b16 %v1712
  %v1914 = vunpack.c.l.b16 %v1713
  %v1915 = vunpack.c.l.b16 %v1714
  %v1916 = vunpack.c.l.b16 %v1715
  %v1917 = vunpack.c.l.b16 %v1716
  %v1918 = vpack.c.b16 %v1903, %v1902
  %v1919 = vpack.c.b16 %v1905, %v1904
  %v1920 = vpack.c.b16 %v1907, %v1906
  %v1921 = vpack.c.b16 %v1909, %v1908
  %v1922 = vpack.c.b16 %v1911, %v1910
  %v1923 = vpack.c.b16 %v1913, %v1912
  %v1924 = vpack.c.b16 %v1915, %v1914
  %v1925 = vpack.c.b16 %v1917, %v1916
  %1934 = vmatprep.subr.bf16.mxu0 0
  %1935 = vmatpush1.bf16.msra.mxu0 %v1918
  %1936 = vmatprep.subr.bf16.mxu0 0
  %1937 = vmatpush1.bf16.msra.mxu0 %v1919
  %1938 = vmatprep.subr.bf16.mxu0 0
  %1939 = vmatpush1.bf16.msra.mxu0 %v1920
  %1940 = vmatprep.subr.bf16.mxu0 0
  %1941 = vmatpush1.bf16.msra.mxu0 %v1921
  %1942 = vmatprep.subr.bf16.mxu0 0
  %1943 = vmatpush1.bf16.msra.mxu0 %v1922
  %1944 = vmatprep.subr.bf16.mxu0 0
  %1945 = vmatpush1.bf16.msra.mxu0 %v1923
  %1946 = vmatprep.subr.bf16.mxu0 0
  %1947 = vmatpush1.bf16.msra.mxu0 %v1924
  %1948 = vmatprep.subr.bf16.mxu0 0
  %1949 = vmatpush1.bf16.msra.mxu0 %v1925
  %1950 = vmatprep.subr.bf16.mxu0 0
  %1951 = vmatpush1.bf16.msra.mxu0 0
  %1952 = vmatprep.subr.bf16.mxu0 0
  %1953 = vmatpush1.bf16.msra.mxu0 0
  %1954 = vmatprep.subr.bf16.mxu0 0
  %1955 = vmatpush1.bf16.msra.mxu0 0
  %1956 = vmatprep.subr.bf16.mxu0 0
  %1957 = vmatpush1.bf16.msra.mxu0 0
  %1958 = vmatprep.subr.bf16.mxu0 0
  %1959 = vmatpush1.bf16.msra.mxu0 0
  %1960 = vmatprep.subr.bf16.mxu0 0
  %1961 = vmatpush1.bf16.msra.mxu0 0
  %1962 = vmatprep.subr.bf16.mxu0 0
  %1963 = vmatpush1.bf16.msra.mxu0 0
  %1964 = vmatprep.subr.bf16.mxu0 0
  %1965 = vmatpush1.bf16.msra.mxu0 0
  %1966 = vmatprep.mubr.bf16.mxu0 0
  %1967 = vmatmul.mubr.bf16.gmra.mrb[0].mxu0 %v1734
  %v1968 = vpop.f32.mrb[0].mxu0
  %v1969 = vadd.f32 0.0, %v1968
  %v1970 = vpop.f32.mrb[0].mxu0
  %v1971 = vpop.f32.mrb[0].mxu0
  %v1972 = vadd.f32 0.0, %v1971
  %v1973 = vpop.f32.mrb[0].mxu0
  %1974 = vmatprep.mubr.bf16.mxu0 0
  %1975 = vmatmul.mubr.bf16.gmra.mrb[0].mxu0 %v1743
  %v1976 = vpop.f32.mrb[0].mxu0
  %v1977 = vadd.f32 0.0, %v1976
  %v1978 = vpop.f32.mrb[0].mxu0
  %v1979 = vpop.f32.mrb[0].mxu0
  %v1980 = vadd.f32 0.0, %v1979
  %v1981 = vpop.f32.mrb[0].mxu0
  %1982 = vmatprep.mubr.bf16.mxu0 0
  %1983 = vmatmul.mubr.bf16.gmra.mrb[0].mxu0 %v1752
  %v1984 = vpop.f32.mrb[0].mxu0
  %v1985 = vadd.f32 0.0, %v1984
  %v1986 = vpop.f32.mrb[0].mxu0
  %v1987 = vpop.f32.mrb[0].mxu0
  %v1988 = vadd.f32 0.0, %v1987
  %v1989 = vpop.f32.mrb[0].mxu0
  %1990 = vmatprep.mubr.bf16.mxu0 0
  %1991 = vmatmul.mubr.bf16.gmra.mrb[0].mxu0 %v1761
  %v1992 = vpop.f32.mrb[0].mxu0
  %v1993 = vadd.f32 0.0, %v1992
  %v1994 = vpop.f32.mrb[0].mxu0
  %v1995 = vpop.f32.mrb[0].mxu0
  %v1996 = vadd.f32 0.0, %v1995
  %v1997 = vpop.f32.mrb[0].mxu0
  %1998 = vmatprep.mubr.bf16.mxu0 0
  %1999 = vmatmul.mubr.bf16.gmra.mrb[0].mxu0 %v1770
  %v2000 = vpop.f32.mrb[0].mxu0
  %v2001 = vadd.f32 0.0, %v2000
  %v2002 = vpop.f32.mrb[0].mxu0
  %v2003 = vpop.f32.mrb[0].mxu0
  %v2004 = vadd.f32 0.0, %v2003
  %v2005 = vpop.f32.mrb[0].mxu0
  %2006 = vmatprep.mubr.bf16.mxu0 0
  %2007 = vmatmul.mubr.bf16.gmra.mrb[0].mxu0 %v1779
  %v2008 = vpop.f32.mrb[0].mxu0
  %v2009 = vadd.f32 0.0, %v2008
  %v2010 = vpop.f32.mrb[0].mxu0
  %v2011 = vpop.f32.mrb[0].mxu0
  %v2012 = vadd.f32 0.0, %v2011
  %v2013 = vpop.f32.mrb[0].mxu0
  %2014 = vmatprep.mubr.bf16.mxu0 0
  %2015 = vmatmul.mubr.bf16.gmra.mrb[0].mxu0 %v1788
  %v2016 = vpop.f32.mrb[0].mxu0
  %v2017 = vadd.f32 0.0, %v2016
  %v2018 = vpop.f32.mrb[0].mxu0
  %v2019 = vpop.f32.mrb[0].mxu0
  %v2020 = vadd.f32 0.0, %v2019
  %v2021 = vpop.f32.mrb[0].mxu0
  %2022 = vmatprep.mubr.bf16.mxu0 0
  %2023 = vmatmul.mubr.bf16.gmra.mrb[0].mxu0 %v1797
  %v2024 = vpop.f32.mrb[0].mxu0
  %v2025 = vadd.f32 0.0, %v2024
  %v2026 = vpop.f32.mrb[0].mxu0
  %v2027 = vpop.f32.mrb[0].mxu0
  %v2028 = vadd.f32 0.0, %v2027
  %v2029 = vpop.f32.mrb[0].mxu0
  %2030 = vmatprep.mubr.bf16.mxu0 0
  %2031 = vmatmul.mubr.bf16.gmra.mrb[0].mxu0 %v1806
  %v2032 = vpop.f32.mrb[0].mxu0
  %v2033 = vadd.f32 0.0, %v2032
  %v2034 = vpop.f32.mrb[0].mxu0
  %v2035 = vpop.f32.mrb[0].mxu0
  %v2036 = vadd.f32 0.0, %v2035
  %v2037 = vpop.f32.mrb[0].mxu0
  %2038 = vmatprep.mubr.bf16.mxu0 0
  %2039 = vmatmul.mubr.bf16.gmra.mrb[0].mxu0 %v1815
  %v2040 = vpop.f32.mrb[0].mxu0
  %v2041 = vadd.f32 0.0, %v2040
  %v2042 = vpop.f32.mrb[0].mxu0
  %v2043 = vpop.f32.mrb[0].mxu0
  %v2044 = vadd.f32 0.0, %v2043
  %v2045 = vpop.f32.mrb[0].mxu0
  %2046 = vmatprep.mubr.bf16.mxu0 0
  %2047 = vmatmul.mubr.bf16.gmra.mrb[0].mxu0 %v1824
  %v2048 = vpop.f32.mrb[0].mxu0
  %v2049 = vadd.f32 0.0, %v2048
  %v2050 = vpop.f32.mrb[0].mxu0
  %v2051 = vpop.f32.mrb[0].mxu0
  %v2052 = vadd.f32 0.0, %v2051
  %v2053 = vpop.f32.mrb[0].mxu0
  %2054 = vmatprep.mubr.bf16.mxu0 0
  %2055 = vmatmul.mubr.bf16.gmra.mrb[0].mxu0 %v1833
  %v2056 = vpop.f32.mrb[0].mxu0
  %v2057 = vadd.f32 0.0, %v2056
  %v2058 = vpop.f32.mrb[0].mxu0
  %v2059 = vpop.f32.mrb[0].mxu0
  %v2060 = vadd.f32 0.0, %v2059
  %v2061 = vpop.f32.mrb[0].mxu0
  %2062 = vmatprep.mubr.bf16.mxu0 0
  %2063 = vmatmul.mubr.bf16.gmra.mrb[0].mxu0 %v1842
  %v2064 = vpop.f32.mrb[0].mxu0
  %v2065 = vadd.f32 0.0, %v2064
  %v2066 = vpop.f32.mrb[0].mxu0
  %v2067 = vpop.f32.mrb[0].mxu0
  %v2068 = vadd.f32 0.0, %v2067
  %v2069 = vpop.f32.mrb[0].mxu0
  %2070 = vmatprep.mubr.bf16.mxu0 0
  %2071 = vmatmul.mubr.bf16.gmra.mrb[0].mxu0 %v1851
  %v2072 = vpop.f32.mrb[0].mxu0
  %v2073 = vadd.f32 0.0, %v2072
  %v2074 = vpop.f32.mrb[0].mxu0
  %v2075 = vpop.f32.mrb[0].mxu0
  %v2076 = vadd.f32 0.0, %v2075
  %v2077 = vpop.f32.mrb[0].mxu0
  %2078 = vmatprep.mubr.bf16.mxu0 0
  %2079 = vmatmul.mubr.bf16.gmra.mrb[0].mxu0 %v1860
  %v2080 = vpop.f32.mrb[0].mxu0
  %v2081 = vadd.f32 0.0, %v2080
  %v2082 = vpop.f32.mrb[0].mxu0
  %v2083 = vpop.f32.mrb[0].mxu0
  %v2084 = vadd.f32 0.0, %v2083
  %v2085 = vpop.f32.mrb[0].mxu0
  %2086 = vmatprep.mubr.bf16.mxu0 0
  %2087 = vmatmul.mubr.bf16.gmra.mrb[0].mxu0 %v1869
  %v2088 = vpop.f32.mrb[0].mxu0
  %v2089 = vadd.f32 0.0, %v2088
  %v2090 = vpop.f32.mrb[0].mxu0
  %v2091 = vpop.f32.mrb[0].mxu0
  %v2092 = vadd.f32 0.0, %v2091
  %v2093 = vpop.f32.mrb[0].mxu0
  %2094 = vdwg.mxu0
  %v2095 = vadd.f32 %v1683, %v1969
  %v2096 = vadd.f32 %v1683, %v1972
  %v2097 = vadd.f32 %v1683, %v1977
  %v2098 = vadd.f32 %v1683, %v1980
  %v2099 = vadd.f32 %v1683, %v1985
  %v2100 = vadd.f32 %v1683, %v1988
  %v2101 = vadd.f32 %v1683, %v1993
  %v2102 = vadd.f32 %v1683, %v1996
  %v2103 = vadd.f32 %v1683, %v2001
  %v2104 = vadd.f32 %v1683, %v2004
  %v2105 = vadd.f32 %v1683, %v2009
  %v2106 = vadd.f32 %v1683, %v2012
  %v2107 = vadd.f32 %v1683, %v2017
  %v2108 = vadd.f32 %v1683, %v2020
  %v2109 = vadd.f32 %v1683, %v2025
  %v2110 = vadd.f32 %v1683, %v2028
  %v2111 = vadd.f32 %v1683, %v2033
  %v2112 = vadd.f32 %v1683, %v2036
  %v2113 = vadd.f32 %v1683, %v2041
  %v2114 = vadd.f32 %v1683, %v2044
  %v2115 = vadd.f32 %v1683, %v2049
  %v2116 = vadd.f32 %v1683, %v2052
  %v2117 = vadd.f32 %v1683, %v2057
  %v2118 = vadd.f32 %v1683, %v2060
  %v2119 = vadd.f32 %v1683, %v2065
  %v2120 = vadd.f32 %v1683, %v2068
  %v2121 = vadd.f32 %v1683, %v2073
  %v2122 = vadd.f32 %v1683, %v2076
  %v2123 = vadd.f32 %v1683, %v2081
  %v2124 = vadd.f32 %v1683, %v2084
  %v2125 = vadd.f32 %v1683, %v2089
  %v2126 = vadd.f32 %v1683, %v2092
  %v2127 = vld [vmem:[#allocation2] sm:$0xf0]
  %s2128 = scalar_lea.vmem %s3, 64
  %v2129 = vld [vmem:[%s2128] sm:$0xf]
  %v2130 = vld [vmem:[%s2128 + $0x4] sm:$0xf]
  %v2131 = vld [vmem:[%s2128 + $0x8] sm:$0xf]
  %v2132 = vld [vmem:[%s2128 + $0xc] sm:$0xf]
  %v2133 = vld [vmem:[%s2128 + $0x10] sm:$0xf]
  %v2134 = vld [vmem:[%s2128 + $0x14] sm:$0xf]
  %v2135 = vld [vmem:[%s2128 + $0x18] sm:$0xf]
  %v2136 = vld [vmem:[%s2128 + $0x1c] sm:$0xf]
  %v2137 = vld [vmem:[%s2128 + $0x20] sm:$0xf]
  %v2138 = vld [vmem:[%s2128 + $0x24] sm:$0xf]
  %v2139 = vld [vmem:[%s2128 + $0x28] sm:$0xf]
  %v2140 = vld [vmem:[%s2128 + $0x2c] sm:$0xf]
  %v2141 = vld [vmem:[%s2128 + $0x30] sm:$0xf]
  %v2142 = vld [vmem:[%s2128 + $0x34] sm:$0xf]
  %v2143 = vld [vmem:[%s2128 + $0x38] sm:$0xf]
  %v2144 = vld [vmem:[%s2128 + $0x3c] sm:$0xf]
  %vm2162 = vcmask 1043456
  %v2163 = vrot.slane %v2127, 4
  %v2164 = vrot.slane %v1685, 4
  %v2165 = vsel %vm2162, %v2163, %v2164
  %v2166 = vrot.slane %v1686, 4
  %v2167 = vsel %vm2162, %v2164, %v2166
  %v2168 = vrot.slane %v1687, 4
  %v2169 = vsel %vm2162, %v2166, %v2168
  %v2170 = vrot.slane %v1688, 4
  %v2171 = vsel %vm2162, %v2168, %v2170
  %v2172 = vrot.slane %v1689, 4
  %v2173 = vsel %vm2162, %v2170, %v2172
  %v2174 = vrot.slane %v1690, 4
  %v2175 = vsel %vm2162, %v2172, %v2174
  %v2176 = vrot.slane %v1691, 4
  %v2177 = vsel %vm2162, %v2174, %v2176
  %v2178 = vrot.slane %v1692, 4
  %v2179 = vsel %vm2162, %v2176, %v2178
  %v2180 = vrot.slane %v1693, 4
  %v2181 = vsel %vm2162, %v2178, %v2180
  %v2182 = vrot.slane %v1694, 4
  %v2183 = vsel %vm2162, %v2180, %v2182
  %v2184 = vrot.slane %v1695, 4
  %v2185 = vsel %vm2162, %v2182, %v2184
  %v2186 = vrot.slane %v1696, 4
  %v2187 = vsel %vm2162, %v2184, %v2186
  %v2188 = vrot.slane %v1697, 4
  %v2189 = vsel %vm2162, %v2186, %v2188
  %v2190 = vrot.slane %v1698, 4
  %v2191 = vsel %vm2162, %v2188, %v2190
  %v2192 = vrot.slane %v1699, 4
  %v2193 = vsel %vm2162, %v2190, %v2192
  %v2194 = vrot.slane %v1700, 4
  %v2195 = vsel %vm2162, %v2192, %v2194
  %v2228 = vunpack.c.l.b16 %v2129
  %v2229 = vunpack.c.l.b16 %v2130
  %v2230 = vunpack.c.l.b16 %v2131
  %v2231 = vunpack.c.l.b16 %v2132
  %v2232 = vunpack.c.l.b16 %v2133
  %v2233 = vunpack.c.l.b16 %v2134
  %v2234 = vunpack.c.l.b16 %v2135
  %v2235 = vunpack.c.l.b16 %v2136
  %v2236 = vunpack.c.l.b16 %v2137
  %v2237 = vunpack.c.l.b16 %v2138
  %v2238 = vunpack.c.l.b16 %v2139
  %v2239 = vunpack.c.l.b16 %v2140
  %v2240 = vunpack.c.l.b16 %v2141
  %v2241 = vunpack.c.l.b16 %v2142
  %v2242 = vunpack.c.l.b16 %v2143
  %v2243 = vunpack.c.l.b16 %v2144
  %v2244 = vpack.c.b16 %v2229, %v2228
  %v2245 = vpack.c.b16 %v2231, %v2230
  %v2246 = vpack.c.b16 %v2233, %v2232
  %v2247 = vpack.c.b16 %v2235, %v2234
  %v2248 = vpack.c.b16 %v2237, %v2236
  %v2249 = vpack.c.b16 %v2239, %v2238
  %v2250 = vpack.c.b16 %v2241, %v2240
  %v2251 = vpack.c.b16 %v2243, %v2242
  %2260 = vmatprep.subr.bf16.mxu0 0
  %2261 = vmatpush1.bf16.msra.mxu0 %v2244
  %2262 = vmatprep.subr.bf16.mxu0 0
  %2263 = vmatpush1.bf16.msra.mxu0 %v2245
  %2264 = vmatprep.subr.bf16.mxu0 0
  %2265 = vmatpush1.bf16.msra.mxu0 %v2246
  %2266 = vmatprep.subr.bf16.mxu0 0
  %2267 = vmatpush1.bf16.msra.mxu0 %v2247
  %2268 = vmatprep.subr.bf16.mxu0 0
  %2269 = vmatpush1.bf16.msra.mxu0 %v2248
  %2270 = vmatprep.subr.bf16.mxu0 0
  %2271 = vmatpush1.bf16.msra.mxu0 %v2249
  %2272 = vmatprep.subr.bf16.mxu0 0
  %2273 = vmatpush1.bf16.msra.mxu0 %v2250
  %2274 = vmatprep.subr.bf16.mxu0 0
  %2275 = vmatpush1.bf16.msra.mxu0 %v2251
  %2276 = vmatprep.subr.bf16.mxu0 0
  %2277 = vmatpush1.bf16.msra.mxu0 0
  %2278 = vmatprep.subr.bf16.mxu0 0
  %2279 = vmatpush1.bf16.msra.mxu0 0
  %2280 = vmatprep.subr.bf16.mxu0 0
  %2281 = vmatpush1.bf16.msra.mxu0 0
  %2282 = vmatprep.subr.bf16.mxu0 0
  %2283 = vmatpush1.bf16.msra.mxu0 0
  %2284 = vmatprep.subr.bf16.mxu0 0
  %2285 = vmatpush1.bf16.msra.mxu0 0
  %2286 = vmatprep.subr.bf16.mxu0 0
  %2287 = vmatpush1.bf16.msra.mxu0 0
  %2288 = vmatprep.subr.bf16.mxu0 0
  %2289 = vmatpush1.bf16.msra.mxu0 0
  %2290 = vmatprep.subr.bf16.mxu0 0
  %2291 = vmatpush1.bf16.msra.mxu0 0
  %2292 = vmatprep.mubr.bf16.mxu0 0
  %2293 = vmatmul.mubr.bf16.gmra.mrb[0].mxu0 %v2165
  %v2294 = vpop.f32.mrb[0].mxu0
  %v2295 = vadd.f32 0.0, %v2294
  %v2296 = vpop.f32.mrb[0].mxu0
  %v2297 = vpop.f32.mrb[0].mxu0
  %v2298 = vadd.f32 0.0, %v2297
  %v2299 = vpop.f32.mrb[0].mxu0
  %2300 = vmatprep.mubr.bf16.mxu0 0
  %2301 = vmatmul.mubr.bf16.gmra.mrb[0].mxu0 %v2167
  %v2302 = vpop.f32.mrb[0].mxu0
  %v2303 = vadd.f32 0.0, %v2302
  %v2304 = vpop.f32.mrb[0].mxu0
  %v2305 = vpop.f32.mrb[0].mxu0
  %v2306 = vadd.f32 0.0, %v2305
  %v2307 = vpop.f32.mrb[0].mxu0
  %2308 = vmatprep.mubr.bf16.mxu0 0
  %2309 = vmatmul.mubr.bf16.gmra.mrb[0].mxu0 %v2169
  %v2310 = vpop.f32.mrb[0].mxu0
  %v2311 = vadd.f32 0.0, %v2310
  %v2312 = vpop.f32.mrb[0].mxu0
  %v2313 = vpop.f32.mrb[0].mxu0
  %v2314 = vadd.f32 0.0, %v2313
  %v2315 = vpop.f32.mrb[0].mxu0
  %2316 = vmatprep.mubr.bf16.mxu0 0
  %2317 = vmatmul.mubr.bf16.gmra.mrb[0].mxu0 %v2171
  %v2318 = vpop.f32.mrb[0].mxu0
  %v2319 = vadd.f32 0.0, %v2318
  %v2320 = vpop.f32.mrb[0].mxu0
  %v2321 = vpop.f32.mrb[0].mxu0
  %v2322 = vadd.f32 0.0, %v2321
  %v2323 = vpop.f32.mrb[0].mxu0
  %2324 = vmatprep.mubr.bf16.mxu0 0
  %2325 = vmatmul.mubr.bf16.gmra.mrb[0].mxu0 %v2173
  %v2326 = vpop.f32.mrb[0].mxu0
  %v2327 = vadd.f32 0.0, %v2326
  %v2328 = vpop.f32.mrb[0].mxu0
  %v2329 = vpop.f32.mrb[0].mxu0
  %v2330 = vadd.f32 0.0, %v2329
  %v2331 = vpop.f32.mrb[0].mxu0
  %2332 = vmatprep.mubr.bf16.mxu0 0
  %2333 = vmatmul.mubr.bf16.gmra.mrb[0].mxu0 %v2175
  %v2334 = vpop.f32.mrb[0].mxu0
  %v2335 = vadd.f32 0.0, %v2334
  %v2336 = vpop.f32.mrb[0].mxu0
  %v2337 = vpop.f32.mrb[0].mxu0
  %v2338 = vadd.f32 0.0, %v2337
  %v2339 = vpop.f32.mrb[0].mxu0
  %2340 = vmatprep.mubr.bf16.mxu0 0
  %2341 = vmatmul.mubr.bf16.gmra.mrb[0].mxu0 %v2177
  %v2342 = vpop.f32.mrb[0].mxu0
  %v2343 = vadd.f32 0.0, %v2342
  %v2344 = vpop.f32.mrb[0].mxu0
  %v2345 = vpop.f32.mrb[0].mxu0
  %v2346 = vadd.f32 0.0, %v2345
  %v2347 = vpop.f32.mrb[0].mxu0
  %2348 = vmatprep.mubr.bf16.mxu0 0
  %2349 = vmatmul.mubr.bf16.gmra.mrb[0].mxu0 %v2179
  %v2350 = vpop.f32.mrb[0].mxu0
  %v2351 = vadd.f32 0.0, %v2350
  %v2352 = vpop.f32.mrb[0].mxu0
  %v2353 = vpop.f32.mrb[0].mxu0
  %v2354 = vadd.f32 0.0, %v2353
  %v2355 = vpop.f32.mrb[0].mxu0
  %2356 = vmatprep.mubr.bf16.mxu0 0
  %2357 = vmatmul.mubr.bf16.gmra.mrb[0].mxu0 %v2181
  %v2358 = vpop.f32.mrb[0].mxu0
  %v2359 = vadd.f32 0.0, %v2358
  %v2360 = vpop.f32.mrb[0].mxu0
  %v2361 = vpop.f32.mrb[0].mxu0
  %v2362 = vadd.f32 0.0, %v2361
  %v2363 = vpop.f32.mrb[0].mxu0
  %2364 = vmatprep.mubr.bf16.mxu0 0
  %2365 = vmatmul.mubr.bf16.gmra.mrb[0].mxu0 %v2183
  %v2366 = vpop.f32.mrb[0].mxu0
  %v2367 = vadd.f32 0.0, %v2366
  %v2368 = vpop.f32.mrb[0].mxu0
  %v2369 = vpop.f32.mrb[0].mxu0
  %v2370 = vadd.f32 0.0, %v2369
  %v2371 = vpop.f32.mrb[0].mxu0
  %2372 = vmatprep.mubr.bf16.mxu0 0
  %2373 = vmatmul.mubr.bf16.gmra.mrb[0].mxu0 %v2185
  %v2374 = vpop.f32.mrb[0].mxu0
  %v2375 = vadd.f32 0.0, %v2374
  %v2376 = vpop.f32.mrb[0].mxu0
  %v2377 = vpop.f32.mrb[0].mxu0
  %v2378 = vadd.f32 0.0, %v2377
  %v2379 = vpop.f32.mrb[0].mxu0
  %2380 = vmatprep.mubr.bf16.mxu0 0
  %2381 = vmatmul.mubr.bf16.gmra.mrb[0].mxu0 %v2187
  %v2382 = vpop.f32.mrb[0].mxu0
  %v2383 = vadd.f32 0.0, %v2382
  %v2384 = vpop.f32.mrb[0].mxu0
  %v2385 = vpop.f32.mrb[0].mxu0
  %v2386 = vadd.f32 0.0, %v2385
  %v2387 = vpop.f32.mrb[0].mxu0
  %2388 = vmatprep.mubr.bf16.mxu0 0
  %2389 = vmatmul.mubr.bf16.gmra.mrb[0].mxu0 %v2189
  %v2390 = vpop.f32.mrb[0].mxu0
  %v2391 = vadd.f32 0.0, %v2390
  %v2392 = vpop.f32.mrb[0].mxu0
  %v2393 = vpop.f32.mrb[0].mxu0
  %v2394 = vadd.f32 0.0, %v2393
  %v2395 = vpop.f32.mrb[0].mxu0
  %2396 = vmatprep.mubr.bf16.mxu0 0
  %2397 = vmatmul.mubr.bf16.gmra.mrb[0].mxu0 %v2191
  %v2398 = vpop.f32.mrb[0].mxu0
  %v2399 = vadd.f32 0.0, %v2398
  %v2400 = vpop.f32.mrb[0].mxu0
  %v2401 = vpop.f32.mrb[0].mxu0
  %v2402 = vadd.f32 0.0, %v2401
  %v2403 = vpop.f32.mrb[0].mxu0
  %2404 = vmatprep.mubr.bf16.mxu0 0
  %2405 = vmatmul.mubr.bf16.gmra.mrb[0].mxu0 %v2193
  %v2406 = vpop.f32.mrb[0].mxu0
  %v2407 = vadd.f32 0.0, %v2406
  %v2408 = vpop.f32.mrb[0].mxu0
  %v2409 = vpop.f32.mrb[0].mxu0
  %v2410 = vadd.f32 0.0, %v2409
  %v2411 = vpop.f32.mrb[0].mxu0
  %2412 = vmatprep.mubr.bf16.mxu0 0
  %2413 = vmatmul.mubr.bf16.gmra.mrb[0].mxu0 %v2195
  %v2414 = vpop.f32.mrb[0].mxu0
  %v2415 = vadd.f32 0.0, %v2414
  %v2416 = vpop.f32.mrb[0].mxu0
  %v2417 = vpop.f32.mrb[0].mxu0
  %v2418 = vadd.f32 0.0, %v2417
  %v2419 = vpop.f32.mrb[0].mxu0
  %2420 = vdwg.mxu0
  %v2421 = vadd.f32 %v2095, %v2295
  %v2422 = vadd.f32 %v2096, %v2298
  %v2423 = vadd.f32 %v2097, %v2303
  %v2424 = vadd.f32 %v2098, %v2306
  %v2425 = vadd.f32 %v2099, %v2311
  %v2426 = vadd.f32 %v2100, %v2314
  %v2427 = vadd.f32 %v2101, %v2319
  %v2428 = vadd.f32 %v2102, %v2322
  %v2429 = vadd.f32 %v2103, %v2327
  %v2430 = vadd.f32 %v2104, %v2330
  %v2431 = vadd.f32 %v2105, %v2335
  %v2432 = vadd.f32 %v2106, %v2338
  %v2433 = vadd.f32 %v2107, %v2343
  %v2434 = vadd.f32 %v2108, %v2346
  %v2435 = vadd.f32 %v2109, %v2351
  %v2436 = vadd.f32 %v2110, %v2354
  %v2437 = vadd.f32 %v2111, %v2359
  %v2438 = vadd.f32 %v2112, %v2362
  %v2439 = vadd.f32 %v2113, %v2367
  %v2440 = vadd.f32 %v2114, %v2370
  %v2441 = vadd.f32 %v2115, %v2375
  %v2442 = vadd.f32 %v2116, %v2378
  %v2443 = vadd.f32 %v2117, %v2383
  %v2444 = vadd.f32 %v2118, %v2386
  %v2445 = vadd.f32 %v2119, %v2391
  %v2446 = vadd.f32 %v2120, %v2394
  %v2447 = vadd.f32 %v2121, %v2399
  %v2448 = vadd.f32 %v2122, %v2402
  %v2449 = vadd.f32 %v2123, %v2407
  %v2450 = vadd.f32 %v2124, %v2410
  %v2451 = vadd.f32 %v2125, %v2415
  %v2452 = vadd.f32 %v2126, %v2418
  %v2453 = vld [vmem:[#allocation2 + $0x80] sm:$0x1f]
  %s2454 = scalar_lea.vmem %s3, 128
  %v2455 = vld [vmem:[%s2454] sm:$0xf]
  %v2456 = vld [vmem:[%s2454 + $0x4] sm:$0xf]
  %v2457 = vld [vmem:[%s2454 + $0x8] sm:$0xf]
  %v2458 = vld [vmem:[%s2454 + $0xc] sm:$0xf]
  %v2459 = vld [vmem:[%s2454 + $0x10] sm:$0xf]
  %v2460 = vld [vmem:[%s2454 + $0x14] sm:$0xf]
  %v2461 = vld [vmem:[%s2454 + $0x18] sm:$0xf]
  %v2462 = vld [vmem:[%s2454 + $0x1c] sm:$0xf]
  %v2463 = vld [vmem:[%s2454 + $0x20] sm:$0xf]
  %v2464 = vld [vmem:[%s2454 + $0x24] sm:$0xf]
  %v2465 = vld [vmem:[%s2454 + $0x28] sm:$0xf]
  %v2466 = vld [vmem:[%s2454 + $0x2c] sm:$0xf]
  %v2467 = vld [vmem:[%s2454 + $0x30] sm:$0xf]
  %v2468 = vld [vmem:[%s2454 + $0x34] sm:$0xf]
  %v2469 = vld [vmem:[%s2454 + $0x38] sm:$0xf]
  %v2470 = vld [vmem:[%s2454 + $0x3c] sm:$0xf]
  %vm2471 = vsmask.f32 3328
  %v2473 = vshrl.u32 %v2127, 16
  %v2475 = vrot.slane %v2473, 4
  %v2476 = vshll.u32 %v2127, 16
  %v2478 = vrot.slane %v2476, 5
  %v2479 = vor.u32 %v2475, %v2478
  %v2480 = vrot.slane %v1727, 4
  %v2481 = vrot.slane %v1730, 5
  %v2482 = vor.u32 %v2480, %v2481
  %v2483 = vsel %vm2471, %v2479, %v2482
  %v2484 = vrot.slane %v1736, 4
  %v2485 = vrot.slane %v1739, 5
  %v2486 = vor.u32 %v2484, %v2485
  %v2487 = vsel %vm2471, %v2482, %v2486
  %v2488 = vrot.slane %v1745, 4
  %v2489 = vrot.slane %v1748, 5
  %v2490 = vor.u32 %v2488, %v2489
  %v2491 = vsel %vm2471, %v2486, %v2490
  %v2492 = vrot.slane %v1754, 4
  %v2493 = vrot.slane %v1757, 5
  %v2494 = vor.u32 %v2492, %v2493
  %v2495 = vsel %vm2471, %v2490, %v2494
  %v2496 = vrot.slane %v1763, 4
  %v2497 = vrot.slane %v1766, 5
  %v2498 = vor.u32 %v2496, %v2497
  %v2499 = vsel %vm2471, %v2494, %v2498
  %v2500 = vrot.slane %v1772, 4
  %v2501 = vrot.slane %v1775, 5
  %v2502 = vor.u32 %v2500, %v2501
  %v2503 = vsel %vm2471, %v2498, %v2502
  %v2504 = vrot.slane %v1781, 4
  %v2505 = vrot.slane %v1784, 5
  %v2506 = vor.u32 %v2504, %v2505
  %v2507 = vsel %vm2471, %v2502, %v2506
  %v2508 = vrot.slane %v1790, 4
  %v2509 = vrot.slane %v1793, 5
  %v2510 = vor.u32 %v2508, %v2509
  %v2511 = vsel %vm2471, %v2506, %v2510
  %v2512 = vrot.slane %v1799, 4
  %v2513 = vrot.slane %v1802, 5
  %v2514 = vor.u32 %v2512, %v2513
  %v2515 = vsel %vm2471, %v2510, %v2514
  %v2516 = vrot.slane %v1808, 4
  %v2517 = vrot.slane %v1811, 5
  %v2518 = vor.u32 %v2516, %v2517
  %v2519 = vsel %vm2471, %v2514, %v2518
  %v2520 = vrot.slane %v1817, 4
  %v2521 = vrot.slane %v1820, 5
  %v2522 = vor.u32 %v2520, %v2521
  %v2523 = vsel %vm2471, %v2518, %v2522
  %v2524 = vrot.slane %v1826, 4
  %v2525 = vrot.slane %v1829, 5
  %v2526 = vor.u32 %v2524, %v2525
  %v2527 = vsel %vm2471, %v2522, %v2526
  %v2528 = vrot.slane %v1835, 4
  %v2529 = vrot.slane %v1838, 5
  %v2530 = vor.u32 %v2528, %v2529
  %v2531 = vsel %vm2471, %v2526, %v2530
  %v2532 = vrot.slane %v1844, 4
  %v2533 = vrot.slane %v1847, 5
  %v2534 = vor.u32 %v2532, %v2533
  %v2535 = vsel %vm2471, %v2530, %v2534
  %v2536 = vrot.slane %v1853, 4
  %v2537 = vrot.slane %v1856, 5
  %v2538 = vor.u32 %v2536, %v2537
  %v2539 = vsel %vm2471, %v2534, %v2538
  %v2541 = vshrl.u32 %v2453, 16
  %v2543 = vrot.slane %v2541, 4
  %v2544 = vshll.u32 %v2453, 16
  %v2546 = vrot.slane %v2544, 5
  %v2547 = vor.u32 %v2543, %v2546
  %v2548 = vsel %vm2471, %v2538, %v2547
  %v2581 = vunpack.c.l.b16 %v2455
  %v2582 = vunpack.c.l.b16 %v2456
  %v2583 = vunpack.c.l.b16 %v2457
  %v2584 = vunpack.c.l.b16 %v2458
  %v2585 = vunpack.c.l.b16 %v2459
  %v2586 = vunpack.c.l.b16 %v2460
  %v2587 = vunpack.c.l.b16 %v2461
  %v2588 = vunpack.c.l.b16 %v2462
  %v2589 = vunpack.c.l.b16 %v2463
  %v2590 = vunpack.c.l.b16 %v2464
  %v2591 = vunpack.c.l.b16 %v2465
  %v2592 = vunpack.c.l.b16 %v2466
  %v2593 = vunpack.c.l.b16 %v2467
  %v2594 = vunpack.c.l.b16 %v2468
  %v2595 = vunpack.c.l.b16 %v2469
  %v2596 = vunpack.c.l.b16 %v2470
  %v2597 = vpack.c.b16 %v2582, %v2581
  %v2598 = vpack.c.b16 %v2584, %v2583
  %v2599 = vpack.c.b16 %v2586, %v2585
  %v2600 = vpack.c.b16 %v2588, %v2587
  %v2601 = vpack.c.b16 %v2590, %v2589
  %v2602 = vpack.c.b16 %v2592, %v2591
  %v2603 = vpack.c.b16 %v2594, %v2593
  %v2604 = vpack.c.b16 %v2596, %v2595
  %2613 = vmatprep.subr.bf16.mxu0 0
  %2614 = vmatpush1.bf16.msra.mxu0 %v2597
  %2615 = vmatprep.subr.bf16.mxu0 0
  %2616 = vmatpush1.bf16.msra.mxu0 %v2598
  %2617 = vmatprep.subr.bf16.mxu0 0
  %2618 = vmatpush1.bf16.msra.mxu0 %v2599
  %2619 = vmatprep.subr.bf16.mxu0 0
  %2620 = vmatpush1.bf16.msra.mxu0 %v2600
  %2621 = vmatprep.subr.bf16.mxu0 0
  %2622 = vmatpush1.bf16.msra.mxu0 %v2601
  %2623 = vmatprep.subr.bf16.mxu0 0
  %2624 = vmatpush1.bf16.msra.mxu0 %v2602
  %2625 = vmatprep.subr.bf16.mxu0 0
  %2626 = vmatpush1.bf16.msra.mxu0 %v2603
  %2627 = vmatprep.subr.bf16.mxu0 0
  %2628 = vmatpush1.bf16.msra.mxu0 %v2604
  %2629 = vmatprep.subr.bf16.mxu0 0
  %2630 = vmatpush1.bf16.msra.mxu0 0
  %2631 = vmatprep.subr.bf16.mxu0 0
  %2632 = vmatpush1.bf16.msra.mxu0 0
  %2633 = vmatprep.subr.bf16.mxu0 0
  %2634 = vmatpush1.bf16.msra.mxu0 0
  %2635 = vmatprep.subr.bf16.mxu0 0
  %2636 = vmatpush1.bf16.msra.mxu0 0
  %2637 = vmatprep.subr.bf16.mxu0 0
  %2638 = vmatpush1.bf16.msra.mxu0 0
  %2639 = vmatprep.subr.bf16.mxu0 0
  %2640 = vmatpush1.bf16.msra.mxu0 0
  %2641 = vmatprep.subr.bf16.mxu0 0
  %2642 = vmatpush1.bf16.msra.mxu0 0
  %2643 = vmatprep.subr.bf16.mxu0 0
  %2644 = vmatpush1.bf16.msra.mxu0 0
  %2645 = vmatprep.mubr.bf16.mxu0 0
  %2646 = vmatmul.mubr.bf16.gmra.mrb[0].mxu0 %v2483
  %v2647 = vpop.f32.mrb[0].mxu0
  %v2648 = vadd.f32 0.0, %v2647
  %v2649 = vpop.f32.mrb[0].mxu0
  %v2650 = vpop.f32.mrb[0].mxu0
  %v2651 = vadd.f32 0.0, %v2650
  %v2652 = vpop.f32.mrb[0].mxu0
  %2653 = vmatprep.mubr.bf16.mxu0 0
  %2654 = vmatmul.mubr.bf16.gmra.mrb[0].mxu0 %v2487
  %v2655 = vpop.f32.mrb[0].mxu0
  %v2656 = vadd.f32 0.0, %v2655
  %v2657 = vpop.f32.mrb[0].mxu0
  %v2658 = vpop.f32.mrb[0].mxu0
  %v2659 = vadd.f32 0.0, %v2658
  %v2660 = vpop.f32.mrb[0].mxu0
  %2661 = vmatprep.mubr.bf16.mxu0 0
  %2662 = vmatmul.mubr.bf16.gmra.mrb[0].mxu0 %v2491
  %v2663 = vpop.f32.mrb[0].mxu0
  %v2664 = vadd.f32 0.0, %v2663
  %v2665 = vpop.f32.mrb[0].mxu0
  %v2666 = vpop.f32.mrb[0].mxu0
  %v2667 = vadd.f32 0.0, %v2666
  %v2668 = vpop.f32.mrb[0].mxu0
  %2669 = vmatprep.mubr.bf16.mxu0 0
  %2670 = vmatmul.mubr.bf16.gmra.mrb[0].mxu0 %v2495
  %v2671 = vpop.f32.mrb[0].mxu0
  %v2672 = vadd.f32 0.0, %v2671
  %v2673 = vpop.f32.mrb[0].mxu0
  %v2674 = vpop.f32.mrb[0].mxu0
  %v2675 = vadd.f32 0.0, %v2674
  %v2676 = vpop.f32.mrb[0].mxu0
  %2677 = vmatprep.mubr.bf16.mxu0 0
  %2678 = vmatmul.mubr.bf16.gmra.mrb[0].mxu0 %v2499
  %v2679 = vpop.f32.mrb[0].mxu0
  %v2680 = vadd.f32 0.0, %v2679
  %v2681 = vpop.f32.mrb[0].mxu0
  %v2682 = vpop.f32.mrb[0].mxu0
  %v2683 = vadd.f32 0.0, %v2682
  %v2684 = vpop.f32.mrb[0].mxu0
  %2685 = vmatprep.mubr.bf16.mxu0 0
  %2686 = vmatmul.mubr.bf16.gmra.mrb[0].mxu0 %v2503
  %v2687 = vpop.f32.mrb[0].mxu0
  %v2688 = vadd.f32 0.0, %v2687
  %v2689 = vpop.f32.mrb[0].mxu0
  %v2690 = vpop.f32.mrb[0].mxu0
  %v2691 = vadd.f32 0.0, %v2690
  %v2692 = vpop.f32.mrb[0].mxu0
  %2693 = vmatprep.mubr.bf16.mxu0 0
  %2694 = vmatmul.mubr.bf16.gmra.mrb[0].mxu0 %v2507
  %v2695 = vpop.f32.mrb[0].mxu0
  %v2696 = vadd.f32 0.0, %v2695
  %v2697 = vpop.f32.mrb[0].mxu0
  %v2698 = vpop.f32.mrb[0].mxu0
  %v2699 = vadd.f32 0.0, %v2698
  %v2700 = vpop.f32.mrb[0].mxu0
  %2701 = vmatprep.mubr.bf16.mxu0 0
  %2702 = vmatmul.mubr.bf16.gmra.mrb[0].mxu0 %v2511
  %v2703 = vpop.f32.mrb[0].mxu0
  %v2704 = vadd.f32 0.0, %v2703
  %v2705 = vpop.f32.mrb[0].mxu0
  %v2706 = vpop.f32.mrb[0].mxu0
  %v2707 = vadd.f32 0.0, %v2706
  %v2708 = vpop.f32.mrb[0].mxu0
  %2709 = vmatprep.mubr.bf16.mxu0 0
  %2710 = vmatmul.mubr.bf16.gmra.mrb[0].mxu0 %v2515
  %v2711 = vpop.f32.mrb[0].mxu0
  %v2712 = vadd.f32 0.0, %v2711
  %v2713 = vpop.f32.mrb[0].mxu0
  %v2714 = vpop.f32.mrb[0].mxu0
  %v2715 = vadd.f32 0.0, %v2714
  %v2716 = vpop.f32.mrb[0].mxu0
  %2717 = vmatprep.mubr.bf16.mxu0 0
  %2718 = vmatmul.mubr.bf16.gmra.mrb[0].mxu0 %v2519
  %v2719 = vpop.f32.mrb[0].mxu0
  %v2720 = vadd.f32 0.0, %v2719
  %v2721 = vpop.f32.mrb[0].mxu0
  %v2722 = vpop.f32.mrb[0].mxu0
  %v2723 = vadd.f32 0.0, %v2722
  %v2724 = vpop.f32.mrb[0].mxu0
  %2725 = vmatprep.mubr.bf16.mxu0 0
  %2726 = vmatmul.mubr.bf16.gmra.mrb[0].mxu0 %v2523
  %v2727 = vpop.f32.mrb[0].mxu0
  %v2728 = vadd.f32 0.0, %v2727
  %v2729 = vpop.f32.mrb[0].mxu0
  %v2730 = vpop.f32.mrb[0].mxu0
  %v2731 = vadd.f32 0.0, %v2730
  %v2732 = vpop.f32.mrb[0].mxu0
  %2733 = vmatprep.mubr.bf16.mxu0 0
  %2734 = vmatmul.mubr.bf16.gmra.mrb[0].mxu0 %v2527
  %v2735 = vpop.f32.mrb[0].mxu0
  %v2736 = vadd.f32 0.0, %v2735
  %v2737 = vpop.f32.mrb[0].mxu0
  %v2738 = vpop.f32.mrb[0].mxu0
  %v2739 = vadd.f32 0.0, %v2738
  %v2740 = vpop.f32.mrb[0].mxu0
  %2741 = vmatprep.mubr.bf16.mxu0 0
  %2742 = vmatmul.mubr.bf16.gmra.mrb[0].mxu0 %v2531
  %v2743 = vpop.f32.mrb[0].mxu0
  %v2744 = vadd.f32 0.0, %v2743
  %v2745 = vpop.f32.mrb[0].mxu0
  %v2746 = vpop.f32.mrb[0].mxu0
  %v2747 = vadd.f32 0.0, %v2746
  %v2748 = vpop.f32.mrb[0].mxu0
  %2749 = vmatprep.mubr.bf16.mxu0 0
  %2750 = vmatmul.mubr.bf16.gmra.mrb[0].mxu0 %v2535
  %v2751 = vpop.f32.mrb[0].mxu0
  %v2752 = vadd.f32 0.0, %v2751
  %v2753 = vpop.f32.mrb[0].mxu0
  %v2754 = vpop.f32.mrb[0].mxu0
  %v2755 = vadd.f32 0.0, %v2754
  %v2756 = vpop.f32.mrb[0].mxu0
  %2757 = vmatprep.mubr.bf16.mxu0 0
  %2758 = vmatmul.mubr.bf16.gmra.mrb[0].mxu0 %v2539
  %v2759 = vpop.f32.mrb[0].mxu0
  %v2760 = vadd.f32 0.0, %v2759
  %v2761 = vpop.f32.mrb[0].mxu0
  %v2762 = vpop.f32.mrb[0].mxu0
  %v2763 = vadd.f32 0.0, %v2762
  %v2764 = vpop.f32.mrb[0].mxu0
  %2765 = vmatprep.mubr.bf16.mxu0 0
  %2766 = vmatmul.mubr.bf16.gmra.mrb[0].mxu0 %v2548
  %v2767 = vpop.f32.mrb[0].mxu0
  %v2768 = vadd.f32 0.0, %v2767
  %v2769 = vpop.f32.mrb[0].mxu0
  %v2770 = vpop.f32.mrb[0].mxu0
  %v2771 = vadd.f32 0.0, %v2770
  %v2772 = vpop.f32.mrb[0].mxu0
  %2773 = vdwg.mxu0
  %v2774 = vadd.f32 %v2421, %v2648
  %v2775 = vadd.f32 %v2422, %v2651
  %v2776 = vadd.f32 %v2423, %v2656
  %v2777 = vadd.f32 %v2424, %v2659
  %v2778 = vadd.f32 %v2425, %v2664
  %v2779 = vadd.f32 %v2426, %v2667
  %v2780 = vadd.f32 %v2427, %v2672
  %v2781 = vadd.f32 %v2428, %v2675
  %v2782 = vadd.f32 %v2429, %v2680
  %v2783 = vadd.f32 %v2430, %v2683
  %v2784 = vadd.f32 %v2431, %v2688
  %v2785 = vadd.f32 %v2432, %v2691
  %v2786 = vadd.f32 %v2433, %v2696
  %v2787 = vadd.f32 %v2434, %v2699
  %v2788 = vadd.f32 %v2435, %v2704
  %v2789 = vadd.f32 %v2436, %v2707
  %v2790 = vadd.f32 %v2437, %v2712
  %v2791 = vadd.f32 %v2438, %v2715
  %v2792 = vadd.f32 %v2439, %v2720
  %v2793 = vadd.f32 %v2440, %v2723
  %v2794 = vadd.f32 %v2441, %v2728
  %v2795 = vadd.f32 %v2442, %v2731
  %v2796 = vadd.f32 %v2443, %v2736
  %v2797 = vadd.f32 %v2444, %v2739
  %v2798 = vadd.f32 %v2445, %v2744
  %v2799 = vadd.f32 %v2446, %v2747
  %v2800 = vadd.f32 %v2447, %v2752
  %v2801 = vadd.f32 %v2448, %v2755
  %v2802 = vadd.f32 %v2449, %v2760
  %v2803 = vadd.f32 %v2450, %v2763
  %v2804 = vadd.f32 %v2451, %v2768
  %v2805 = vadd.f32 %v2452, %v2771
  %v2806 = vld [vmem:[#allocation2 + $0x8] sm:$0xf8]
  %v2807 = vld [vmem:[#allocation2 + $0x10] sm:$0xff]
  %v2808 = vld [vmem:[#allocation2 + $0x18] sm:$0xff]
  %v2809 = vld [vmem:[#allocation2 + $0x20] sm:$0xff]
  %v2810 = vld [vmem:[#allocation2 + $0x28] sm:$0xff]
  %v2811 = vld [vmem:[#allocation2 + $0x30] sm:$0xff]
  %v2812 = vld [vmem:[#allocation2 + $0x38] sm:$0xff]
  %v2813 = vld [vmem:[#allocation2 + $0x40] sm:$0xff]
  %v2814 = vld [vmem:[#allocation2 + $0x48] sm:$0xff]
  %v2815 = vld [vmem:[#allocation2 + $0x50] sm:$0xff]
  %v2816 = vld [vmem:[#allocation2 + $0x58] sm:$0xff]
  %v2817 = vld [vmem:[#allocation2 + $0x60] sm:$0xff]
  %v2818 = vld [vmem:[#allocation2 + $0x68] sm:$0xff]
  %v2819 = vld [vmem:[#allocation2 + $0x70] sm:$0xff]
  %v2820 = vld [vmem:[#allocation2 + $0x78] sm:$0xff]
  %v2821 = vld [vmem:[#allocation2 + $0x80] sm:$0xff]
  %v2822 = vld [vmem:[#allocation2 + $0x88] sm:$0xf]
  %s2823 = scalar_lea.vmem %s3, 192
  %v2824 = vld [vmem:[%s2823] sm:$0xf]
  %v2825 = vld [vmem:[%s2823 + $0x4] sm:$0xf]
  %v2826 = vld [vmem:[%s2823 + $0x8] sm:$0xf]
  %v2827 = vld [vmem:[%s2823 + $0xc] sm:$0xf]
  %v2828 = vld [vmem:[%s2823 + $0x10] sm:$0xf]
  %v2829 = vld [vmem:[%s2823 + $0x14] sm:$0xf]
  %v2830 = vld [vmem:[%s2823 + $0x18] sm:$0xf]
  %v2831 = vld [vmem:[%s2823 + $0x1c] sm:$0xf]
  %v2832 = vld [vmem:[%s2823 + $0x20] sm:$0xf]
  %v2833 = vld [vmem:[%s2823 + $0x24] sm:$0xf]
  %v2834 = vld [vmem:[%s2823 + $0x28] sm:$0xf]
  %v2835 = vld [vmem:[%s2823 + $0x2c] sm:$0xf]
  %v2836 = vld [vmem:[%s2823 + $0x30] sm:$0xf]
  %v2837 = vld [vmem:[%s2823 + $0x34] sm:$0xf]
  %v2838 = vld [vmem:[%s2823 + $0x38] sm:$0xf]
  %v2839 = vld [vmem:[%s2823 + $0x3c] sm:$0xf]
  %v2841 = vshrl.u32 %v2806, 16
  %v2843 = vrot.slane %v2841, 3
  %v2844 = vshll.u32 %v2806, 16
  %v2846 = vrot.slane %v2844, 4
  %v2847 = vor.u32 %v2843, %v2846
  %v2849 = vshrl.u32 %v2807, 16
  %v2851 = vrot.slane %v2849, 3
  %v2852 = vshll.u32 %v2807, 16
  %v2854 = vrot.slane %v2852, 4
  %v2855 = vor.u32 %v2851, %v2854
  %v2856 = vsel %vm1717, %v2847, %v2855
  %v2858 = vshrl.u32 %v2808, 16
  %v2860 = vrot.slane %v2858, 3
  %v2861 = vshll.u32 %v2808, 16
  %v2863 = vrot.slane %v2861, 4
  %v2864 = vor.u32 %v2860, %v2863
  %v2865 = vsel %vm1717, %v2855, %v2864
  %v2867 = vshrl.u32 %v2809, 16
  %v2869 = vrot.slane %v2867, 3
  %v2870 = vshll.u32 %v2809, 16
  %v2872 = vrot.slane %v2870, 4
  %v2873 = vor.u32 %v2869, %v2872
  %v2874 = vsel %vm1717, %v2864, %v2873
  %v2876 = vshrl.u32 %v2810, 16
  %v2878 = vrot.slane %v2876, 3
  %v2879 = vshll.u32 %v2810, 16
  %v2881 = vrot.slane %v2879, 4
  %v2882 = vor.u32 %v2878, %v2881
  %v2883 = vsel %vm1717, %v2873, %v2882
  %v2885 = vshrl.u32 %v2811, 16
  %v2887 = vrot.slane %v2885, 3
  %v2888 = vshll.u32 %v2811, 16
  %v2890 = vrot.slane %v2888, 4
  %v2891 = vor.u32 %v2887, %v2890
  %v2892 = vsel %vm1717, %v2882, %v2891
  %v2894 = vshrl.u32 %v2812, 16
  %v2896 = vrot.slane %v2894, 3
  %v2897 = vshll.u32 %v2812, 16
  %v2899 = vrot.slane %v2897, 4
  %v2900 = vor.u32 %v2896, %v2899
  %v2901 = vsel %vm1717, %v2891, %v2900
  %v2903 = vshrl.u32 %v2813, 16
  %v2905 = vrot.slane %v2903, 3
  %v2906 = vshll.u32 %v2813, 16
  %v2908 = vrot.slane %v2906, 4
  %v2909 = vor.u32 %v2905, %v2908
  %v2910 = vsel %vm1717, %v2900, %v2909
  %v2912 = vshrl.u32 %v2814, 16
  %v2914 = vrot.slane %v2912, 3
  %v2915 = vshll.u32 %v2814, 16
  %v2917 = vrot.slane %v2915, 4
  %v2918 = vor.u32 %v2914, %v2917
  %v2919 = vsel %vm1717, %v2909, %v2918
  %v2921 = vshrl.u32 %v2815, 16
  %v2923 = vrot.slane %v2921, 3
  %v2924 = vshll.u32 %v2815, 16
  %v2926 = vrot.slane %v2924, 4
  %v2927 = vor.u32 %v2923, %v2926
  %v2928 = vsel %vm1717, %v2918, %v2927
  %v2930 = vshrl.u32 %v2816, 16
  %v2932 = vrot.slane %v2930, 3
  %v2933 = vshll.u32 %v2816, 16
  %v2935 = vrot.slane %v2933, 4
  %v2936 = vor.u32 %v2932, %v2935
  %v2937 = vsel %vm1717, %v2927, %v2936
  %v2939 = vshrl.u32 %v2817, 16
  %v2941 = vrot.slane %v2939, 3
  %v2942 = vshll.u32 %v2817, 16
  %v2944 = vrot.slane %v2942, 4
  %v2945 = vor.u32 %v2941, %v2944
  %v2946 = vsel %vm1717, %v2936, %v2945
  %v2948 = vshrl.u32 %v2818, 16
  %v2950 = vrot.slane %v2948, 3
  %v2951 = vshll.u32 %v2818, 16
  %v2953 = vrot.slane %v2951, 4
  %v2954 = vor.u32 %v2950, %v2953
  %v2955 = vsel %vm1717, %v2945, %v2954
  %v2957 = vshrl.u32 %v2819, 16
  %v2959 = vrot.slane %v2957, 3
  %v2960 = vshll.u32 %v2819, 16
  %v2962 = vrot.slane %v2960, 4
  %v2963 = vor.u32 %v2959, %v2962
  %v2964 = vsel %vm1717, %v2954, %v2963
  %v2966 = vshrl.u32 %v2820, 16
  %v2968 = vrot.slane %v2966, 3
  %v2969 = vshll.u32 %v2820, 16
  %v2971 = vrot.slane %v2969, 4
  %v2972 = vor.u32 %v2968, %v2971
  %v2973 = vsel %vm1717, %v2963, %v2972
  %v2975 = vshrl.u32 %v2821, 16
  %v2977 = vrot.slane %v2975, 3
  %v2978 = vshll.u32 %v2821, 16
  %v2980 = vrot.slane %v2978, 4
  %v2981 = vor.u32 %v2977, %v2980
  %v2982 = vsel %vm1717, %v2972, %v2981
  %v2984 = vshrl.u32 %v2822, 16
  %v2986 = vrot.slane %v2984, 3
  %v2987 = vshll.u32 %v2822, 16
  %v2989 = vrot.slane %v2987, 4
  %v2990 = vor.u32 %v2986, %v2989
  %v2991 = vsel %vm1717, %v2981, %v2990
  %v3024 = vunpack.c.l.b16 %v2824
  %v3025 = vunpack.c.l.b16 %v2825
  %v3026 = vunpack.c.l.b16 %v2826
  %v3027 = vunpack.c.l.b16 %v2827
  %v3028 = vunpack.c.l.b16 %v2828
  %v3029 = vunpack.c.l.b16 %v2829
  %v3030 = vunpack.c.l.b16 %v2830
  %v3031 = vunpack.c.l.b16 %v2831
  %v3032 = vunpack.c.l.b16 %v2832
  %v3033 = vunpack.c.l.b16 %v2833
  %v3034 = vunpack.c.l.b16 %v2834
  %v3035 = vunpack.c.l.b16 %v2835
  %v3036 = vunpack.c.l.b16 %v2836
  %v3037 = vunpack.c.l.b16 %v2837
  %v3038 = vunpack.c.l.b16 %v2838
  %v3039 = vunpack.c.l.b16 %v2839
  %v3040 = vpack.c.b16 %v3025, %v3024
  %v3041 = vpack.c.b16 %v3027, %v3026
  %v3042 = vpack.c.b16 %v3029, %v3028
  %v3043 = vpack.c.b16 %v3031, %v3030
  %v3044 = vpack.c.b16 %v3033, %v3032
  %v3045 = vpack.c.b16 %v3035, %v3034
  %v3046 = vpack.c.b16 %v3037, %v3036
  %v3047 = vpack.c.b16 %v3039, %v3038
  %3056 = vmatprep.subr.bf16.mxu0 0
  %3057 = vmatpush1.bf16.msra.mxu0 %v3040
  %3058 = vmatprep.subr.bf16.mxu0 0
  %3059 = vmatpush1.bf16.msra.mxu0 %v3041
  %3060 = vmatprep.subr.bf16.mxu0 0
  %3061 = vmatpush1.bf16.msra.mxu0 %v3042
  %3062 = vmatprep.subr.bf16.mxu0 0
  %3063 = vmatpush1.bf16.msra.mxu0 %v3043
  %3064 = vmatprep.subr.bf16.mxu0 0
  %3065 = vmatpush1.bf16.msra.mxu0 %v3044
  %3066 = vmatprep.subr.bf16.mxu0 0
  %3067 = vmatpush1.bf16.msra.mxu0 %v3045
  %3068 = vmatprep.subr.bf16.mxu0 0
  %3069 = vmatpush1.bf16.msra.mxu0 %v3046
  %3070 = vmatprep.subr.bf16.mxu0 0
  %3071 = vmatpush1.bf16.msra.mxu0 %v3047
  %3072 = vmatprep.subr.bf16.mxu0 0
  %3073 = vmatpush1.bf16.msra.mxu0 0
  %3074 = vmatprep.subr.bf16.mxu0 0
  %3075 = vmatpush1.bf16.msra.mxu0 0
  %3076 = vmatprep.subr.bf16.mxu0 0
  %3077 = vmatpush1.bf16.msra.mxu0 0
  %3078 = vmatprep.subr.bf16.mxu0 0
  %3079 = vmatpush1.bf16.msra.mxu0 0
  %3080 = vmatprep.subr.bf16.mxu0 0
  %3081 = vmatpush1.bf16.msra.mxu0 0
  %3082 = vmatprep.subr.bf16.mxu0 0
  %3083 = vmatpush1.bf16.msra.mxu0 0
  %3084 = vmatprep.subr.bf16.mxu0 0
  %3085 = vmatpush1.bf16.msra.mxu0 0
  %3086 = vmatprep.subr.bf16.mxu0 0
  %3087 = vmatpush1.bf16.msra.mxu0 0
  %3088 = vmatprep.mubr.bf16.mxu0 0
  %3089 = vmatmul.mubr.bf16.gmra.mrb[0].mxu0 %v2856
  %v3090 = vpop.f32.mrb[0].mxu0
  %v3091 = vadd.f32 0.0, %v3090
  %v3092 = vpop.f32.mrb[0].mxu0
  %v3093 = vpop.f32.mrb[0].mxu0
  %v3094 = vadd.f32 0.0, %v3093
  %v3095 = vpop.f32.mrb[0].mxu0
  %3096 = vmatprep.mubr.bf16.mxu0 0
  %3097 = vmatmul.mubr.bf16.gmra.mrb[0].mxu0 %v2865
  %v3098 = vpop.f32.mrb[0].mxu0
  %v3099 = vadd.f32 0.0, %v3098
  %v3100 = vpop.f32.mrb[0].mxu0
  %v3101 = vpop.f32.mrb[0].mxu0
  %v3102 = vadd.f32 0.0, %v3101
  %v3103 = vpop.f32.mrb[0].mxu0
  %3104 = vmatprep.mubr.bf16.mxu0 0
  %3105 = vmatmul.mubr.bf16.gmra.mrb[0].mxu0 %v2874
  %v3106 = vpop.f32.mrb[0].mxu0
  %v3107 = vadd.f32 0.0, %v3106
  %v3108 = vpop.f32.mrb[0].mxu0
  %v3109 = vpop.f32.mrb[0].mxu0
  %v3110 = vadd.f32 0.0, %v3109
  %v3111 = vpop.f32.mrb[0].mxu0
  %3112 = vmatprep.mubr.bf16.mxu0 0
  %3113 = vmatmul.mubr.bf16.gmra.mrb[0].mxu0 %v2883
  %v3114 = vpop.f32.mrb[0].mxu0
  %v3115 = vadd.f32 0.0, %v3114
  %v3116 = vpop.f32.mrb[0].mxu0
  %v3117 = vpop.f32.mrb[0].mxu0
  %v3118 = vadd.f32 0.0, %v3117
  %v3119 = vpop.f32.mrb[0].mxu0
  %3120 = vmatprep.mubr.bf16.mxu0 0
  %3121 = vmatmul.mubr.bf16.gmra.mrb[0].mxu0 %v2892
  %v3122 = vpop.f32.mrb[0].mxu0
  %v3123 = vadd.f32 0.0, %v3122
  %v3124 = vpop.f32.mrb[0].mxu0
  %v3125 = vpop.f32.mrb[0].mxu0
  %v3126 = vadd.f32 0.0, %v3125
  %v3127 = vpop.f32.mrb[0].mxu0
  %3128 = vmatprep.mubr.bf16.mxu0 0
  %3129 = vmatmul.mubr.bf16.gmra.mrb[0].mxu0 %v2901
  %v3130 = vpop.f32.mrb[0].mxu0
  %v3131 = vadd.f32 0.0, %v3130
  %v3132 = vpop.f32.mrb[0].mxu0
  %v3133 = vpop.f32.mrb[0].mxu0
  %v3134 = vadd.f32 0.0, %v3133
  %v3135 = vpop.f32.mrb[0].mxu0
  %3136 = vmatprep.mubr.bf16.mxu0 0
  %3137 = vmatmul.mubr.bf16.gmra.mrb[0].mxu0 %v2910
  %v3138 = vpop.f32.mrb[0].mxu0
  %v3139 = vadd.f32 0.0, %v3138
  %v3140 = vpop.f32.mrb[0].mxu0
  %v3141 = vpop.f32.mrb[0].mxu0
  %v3142 = vadd.f32 0.0, %v3141
  %v3143 = vpop.f32.mrb[0].mxu0
  %3144 = vmatprep.mubr.bf16.mxu0 0
  %3145 = vmatmul.mubr.bf16.gmra.mrb[0].mxu0 %v2919
  %v3146 = vpop.f32.mrb[0].mxu0
  %v3147 = vadd.f32 0.0, %v3146
  %v3148 = vpop.f32.mrb[0].mxu0
  %v3149 = vpop.f32.mrb[0].mxu0
  %v3150 = vadd.f32 0.0, %v3149
  %v3151 = vpop.f32.mrb[0].mxu0
  %3152 = vmatprep.mubr.bf16.mxu0 0
  %3153 = vmatmul.mubr.bf16.gmra.mrb[0].mxu0 %v2928
  %v3154 = vpop.f32.mrb[0].mxu0
  %v3155 = vadd.f32 0.0, %v3154
  %v3156 = vpop.f32.mrb[0].mxu0
  %v3157 = vpop.f32.mrb[0].mxu0
  %v3158 = vadd.f32 0.0, %v3157
  %v3159 = vpop.f32.mrb[0].mxu0
  %3160 = vmatprep.mubr.bf16.mxu0 0
  %3161 = vmatmul.mubr.bf16.gmra.mrb[0].mxu0 %v2937
  %v3162 = vpop.f32.mrb[0].mxu0
  %v3163 = vadd.f32 0.0, %v3162
  %v3164 = vpop.f32.mrb[0].mxu0
  %v3165 = vpop.f32.mrb[0].mxu0
  %v3166 = vadd.f32 0.0, %v3165
  %v3167 = vpop.f32.mrb[0].mxu0
  %3168 = vmatprep.mubr.bf16.mxu0 0
  %3169 = vmatmul.mubr.bf16.gmra.mrb[0].mxu0 %v2946
  %v3170 = vpop.f32.mrb[0].mxu0
  %v3171 = vadd.f32 0.0, %v3170
  %v3172 = vpop.f32.mrb[0].mxu0
  %v3173 = vpop.f32.mrb[0].mxu0
  %v3174 = vadd.f32 0.0, %v3173
  %v3175 = vpop.f32.mrb[0].mxu0
  %3176 = vmatprep.mubr.bf16.mxu0 0
  %3177 = vmatmul.mubr.bf16.gmra.mrb[0].mxu0 %v2955
  %v3178 = vpop.f32.mrb[0].mxu0
  %v3179 = vadd.f32 0.0, %v3178
  %v3180 = vpop.f32.mrb[0].mxu0
  %v3181 = vpop.f32.mrb[0].mxu0
  %v3182 = vadd.f32 0.0, %v3181
  %v3183 = vpop.f32.mrb[0].mxu0
  %3184 = vmatprep.mubr.bf16.mxu0 0
  %3185 = vmatmul.mubr.bf16.gmra.mrb[0].mxu0 %v2964
  %v3186 = vpop.f32.mrb[0].mxu0
  %v3187 = vadd.f32 0.0, %v3186
  %v3188 = vpop.f32.mrb[0].mxu0
  %v3189 = vpop.f32.mrb[0].mxu0
  %v3190 = vadd.f32 0.0, %v3189
  %v3191 = vpop.f32.mrb[0].mxu0
  %3192 = vmatprep.mubr.bf16.mxu0 0
  %3193 = vmatmul.mubr.bf16.gmra.mrb[0].mxu0 %v2973
  %v3194 = vpop.f32.mrb[0].mxu0
  %v3195 = vadd.f32 0.0, %v3194
  %v3196 = vpop.f32.mrb[0].mxu0
  %v3197 = vpop.f32.mrb[0].mxu0
  %v3198 = vadd.f32 0.0, %v3197
  %v3199 = vpop.f32.mrb[0].mxu0
  %3200 = vmatprep.mubr.bf16.mxu0 0
  %3201 = vmatmul.mubr.bf16.gmra.mrb[0].mxu0 %v2982
  %v3202 = vpop.f32.mrb[0].mxu0
  %v3203 = vadd.f32 0.0, %v3202
  %v3204 = vpop.f32.mrb[0].mxu0
  %v3205 = vpop.f32.mrb[0].mxu0
  %v3206 = vadd.f32 0.0, %v3205
  %v3207 = vpop.f32.mrb[0].mxu0
  %3208 = vmatprep.mubr.bf16.mxu0 0
  %3209 = vmatmul.mubr.bf16.gmra.mrb[0].mxu0 %v2991
  %v3210 = vpop.f32.mrb[0].mxu0
  %v3211 = vadd.f32 0.0, %v3210
  %v3212 = vpop.f32.mrb[0].mxu0
  %v3213 = vpop.f32.mrb[0].mxu0
  %v3214 = vadd.f32 0.0, %v3213
  %v3215 = vpop.f32.mrb[0].mxu0
  %3216 = vdwg.mxu0
  %v3217 = vadd.f32 %v2774, %v3091
  %v3218 = vadd.f32 %v2775, %v3094
  %v3219 = vadd.f32 %v2776, %v3099
  %v3220 = vadd.f32 %v2777, %v3102
  %v3221 = vadd.f32 %v2778, %v3107
  %v3222 = vadd.f32 %v2779, %v3110
  %v3223 = vadd.f32 %v2780, %v3115
  %v3224 = vadd.f32 %v2781, %v3118
  %v3225 = vadd.f32 %v2782, %v3123
  %v3226 = vadd.f32 %v2783, %v3126
  %v3227 = vadd.f32 %v2784, %v3131
  %v3228 = vadd.f32 %v2785, %v3134
  %v3229 = vadd.f32 %v2786, %v3139
  %v3230 = vadd.f32 %v2787, %v3142
  %v3231 = vadd.f32 %v2788, %v3147
  %v3232 = vadd.f32 %v2789, %v3150
  %v3233 = vadd.f32 %v2790, %v3155
  %v3234 = vadd.f32 %v2791, %v3158
  %v3235 = vadd.f32 %v2792, %v3163
  %v3236 = vadd.f32 %v2793, %v3166
  %v3237 = vadd.f32 %v2794, %v3171
  %v3238 = vadd.f32 %v2795, %v3174
  %v3239 = vadd.f32 %v2796, %v3179
  %v3240 = vadd.f32 %v2797, %v3182
  %v3241 = vadd.f32 %v2798, %v3187
  %v3242 = vadd.f32 %v2799, %v3190
  %v3243 = vadd.f32 %v2800, %v3195
  %v3244 = vadd.f32 %v2801, %v3198
  %v3245 = vadd.f32 %v2802, %v3203
  %v3246 = vadd.f32 %v2803, %v3206
  %v3247 = vadd.f32 %v2804, %v3211
  %v3248 = vadd.f32 %v2805, %v3214
  %v3249 = vld [vmem:[#allocation2 + $0x8] sm:$0xf0]
  %s3250 = scalar_lea.vmem %s3, 256
  %v3251 = vld [vmem:[%s3250] sm:$0xf]
  %v3252 = vld [vmem:[%s3250 + $0x4] sm:$0xf]
  %v3253 = vld [vmem:[%s3250 + $0x8] sm:$0xf]
  %v3254 = vld [vmem:[%s3250 + $0xc] sm:$0xf]
  %v3255 = vld [vmem:[%s3250 + $0x10] sm:$0xf]
  %v3256 = vld [vmem:[%s3250 + $0x14] sm:$0xf]
  %v3257 = vld [vmem:[%s3250 + $0x18] sm:$0xf]
  %v3258 = vld [vmem:[%s3250 + $0x1c] sm:$0xf]
  %v3259 = vld [vmem:[%s3250 + $0x20] sm:$0xf]
  %v3260 = vld [vmem:[%s3250 + $0x24] sm:$0xf]
  %v3261 = vld [vmem:[%s3250 + $0x28] sm:$0xf]
  %v3262 = vld [vmem:[%s3250 + $0x2c] sm:$0xf]
  %v3263 = vld [vmem:[%s3250 + $0x30] sm:$0xf]
  %v3264 = vld [vmem:[%s3250 + $0x34] sm:$0xf]
  %v3265 = vld [vmem:[%s3250 + $0x38] sm:$0xf]
  %v3266 = vld [vmem:[%s3250 + $0x3c] sm:$0xf]
  %v3284 = vrot.slane %v3249, 4
  %v3285 = vrot.slane %v2807, 4
  %v3286 = vsel %vm2162, %v3284, %v3285
  %v3287 = vrot.slane %v2808, 4
  %v3288 = vsel %vm2162, %v3285, %v3287
  %v3289 = vrot.slane %v2809, 4
  %v3290 = vsel %vm2162, %v3287, %v3289
  %v3291 = vrot.slane %v2810, 4
  %v3292 = vsel %vm2162, %v3289, %v3291
  %v3293 = vrot.slane %v2811, 4
  %v3294 = vsel %vm2162, %v3291, %v3293
  %v3295 = vrot.slane %v2812, 4
  %v3296 = vsel %vm2162, %v3293, %v3295
  %v3297 = vrot.slane %v2813, 4
  %v3298 = vsel %vm2162, %v3295, %v3297
  %v3299 = vrot.slane %v2814, 4
  %v3300 = vsel %vm2162, %v3297, %v3299
  %v3301 = vrot.slane %v2815, 4
  %v3302 = vsel %vm2162, %v3299, %v3301
  %v3303 = vrot.slane %v2816, 4
  %v3304 = vsel %vm2162, %v3301, %v3303
  %v3305 = vrot.slane %v2817, 4
  %v3306 = vsel %vm2162, %v3303, %v3305
  %v3307 = vrot.slane %v2818, 4
  %v3308 = vsel %vm2162, %v3305, %v3307
  %v3309 = vrot.slane %v2819, 4
  %v3310 = vsel %vm2162, %v3307, %v3309
  %v3311 = vrot.slane %v2820, 4
  %v3312 = vsel %vm2162, %v3309, %v3311
  %v3313 = vrot.slane %v2821, 4
  %v3314 = vsel %vm2162, %v3311, %v3313
  %v3315 = vrot.slane %v2822, 4
  %v3316 = vsel %vm2162, %v3313, %v3315
  %v3349 = vunpack.c.l.b16 %v3251
  %v3350 = vunpack.c.l.b16 %v3252
  %v3351 = vunpack.c.l.b16 %v3253
  %v3352 = vunpack.c.l.b16 %v3254
  %v3353 = vunpack.c.l.b16 %v3255
  %v3354 = vunpack.c.l.b16 %v3256
  %v3355 = vunpack.c.l.b16 %v3257
  %v3356 = vunpack.c.l.b16 %v3258
  %v3357 = vunpack.c.l.b16 %v3259
  %v3358 = vunpack.c.l.b16 %v3260
  %v3359 = vunpack.c.l.b16 %v3261
  %v3360 = vunpack.c.l.b16 %v3262
  %v3361 = vunpack.c.l.b16 %v3263
  %v3362 = vunpack.c.l.b16 %v3264
  %v3363 = vunpack.c.l.b16 %v3265
  %v3364 = vunpack.c.l.b16 %v3266
  %v3365 = vpack.c.b16 %v3350, %v3349
  %v3366 = vpack.c.b16 %v3352, %v3351
  %v3367 = vpack.c.b16 %v3354, %v3353
  %v3368 = vpack.c.b16 %v3356, %v3355
  %v3369 = vpack.c.b16 %v3358, %v3357
  %v3370 = vpack.c.b16 %v3360, %v3359
  %v3371 = vpack.c.b16 %v3362, %v3361
  %v3372 = vpack.c.b16 %v3364, %v3363
  %3381 = vmatprep.subr.bf16.mxu0 0
  %3382 = vmatpush1.bf16.msra.mxu0 %v3365
  %3383 = vmatprep.subr.bf16.mxu0 0
  %3384 = vmatpush1.bf16.msra.mxu0 %v3366
  %3385 = vmatprep.subr.bf16.mxu0 0
  %3386 = vmatpush1.bf16.msra.mxu0 %v3367
  %3387 = vmatprep.subr.bf16.mxu0 0
  %3388 = vmatpush1.bf16.msra.mxu0 %v3368
  %3389 = vmatprep.subr.bf16.mxu0 0
  %3390 = vmatpush1.bf16.msra.mxu0 %v3369
  %3391 = vmatprep.subr.bf16.mxu0 0
  %3392 = vmatpush1.bf16.msra.mxu0 %v3370
  %3393 = vmatprep.subr.bf16.mxu0 0
  %3394 = vmatpush1.bf16.msra.mxu0 %v3371
  %3395 = vmatprep.subr.bf16.mxu0 0
  %3396 = vmatpush1.bf16.msra.mxu0 %v3372
  %3397 = vmatprep.subr.bf16.mxu0 0
  %3398 = vmatpush1.bf16.msra.mxu0 0
  %3399 = vmatprep.subr.bf16.mxu0 0
  %3400 = vmatpush1.bf16.msra.mxu0 0
  %3401 = vmatprep.subr.bf16.mxu0 0
  %3402 = vmatpush1.bf16.msra.mxu0 0
  %3403 = vmatprep.subr.bf16.mxu0 0
  %3404 = vmatpush1.bf16.msra.mxu0 0
  %3405 = vmatprep.subr.bf16.mxu0 0
  %3406 = vmatpush1.bf16.msra.mxu0 0
  %3407 = vmatprep.subr.bf16.mxu0 0
  %3408 = vmatpush1.bf16.msra.mxu0 0
  %3409 = vmatprep.subr.bf16.mxu0 0
  %3410 = vmatpush1.bf16.msra.mxu0 0
  %3411 = vmatprep.subr.bf16.mxu0 0
  %3412 = vmatpush1.bf16.msra.mxu0 0
  %3413 = vmatprep.mubr.bf16.mxu0 0
  %3414 = vmatmul.mubr.bf16.gmra.mrb[0].mxu0 %v3286
  %v3415 = vpop.f32.mrb[0].mxu0
  %v3416 = vadd.f32 0.0, %v3415
  %v3417 = vpop.f32.mrb[0].mxu0
  %v3418 = vpop.f32.mrb[0].mxu0
  %v3419 = vadd.f32 0.0, %v3418
  %v3420 = vpop.f32.mrb[0].mxu0
  %3421 = vmatprep.mubr.bf16.mxu0 0
  %3422 = vmatmul.mubr.bf16.gmra.mrb[0].mxu0 %v3288
  %v3423 = vpop.f32.mrb[0].mxu0
  %v3424 = vadd.f32 0.0, %v3423
  %v3425 = vpop.f32.mrb[0].mxu0
  %v3426 = vpop.f32.mrb[0].mxu0
  %v3427 = vadd.f32 0.0, %v3426
  %v3428 = vpop.f32.mrb[0].mxu0
  %3429 = vmatprep.mubr.bf16.mxu0 0
  %3430 = vmatmul.mubr.bf16.gmra.mrb[0].mxu0 %v3290
  %v3431 = vpop.f32.mrb[0].mxu0
  %v3432 = vadd.f32 0.0, %v3431
  %v3433 = vpop.f32.mrb[0].mxu0
  %v3434 = vpop.f32.mrb[0].mxu0
  %v3435 = vadd.f32 0.0, %v3434
  %v3436 = vpop.f32.mrb[0].mxu0
  %3437 = vmatprep.mubr.bf16.mxu0 0
  %3438 = vmatmul.mubr.bf16.gmra.mrb[0].mxu0 %v3292
  %v3439 = vpop.f32.mrb[0].mxu0
  %v3440 = vadd.f32 0.0, %v3439
  %v3441 = vpop.f32.mrb[0].mxu0
  %v3442 = vpop.f32.mrb[0].mxu0
  %v3443 = vadd.f32 0.0, %v3442
  %v3444 = vpop.f32.mrb[0].mxu0
  %3445 = vmatprep.mubr.bf16.mxu0 0
  %3446 = vmatmul.mubr.bf16.gmra.mrb[0].mxu0 %v3294
  %v3447 = vpop.f32.mrb[0].mxu0
  %v3448 = vadd.f32 0.0, %v3447
  %v3449 = vpop.f32.mrb[0].mxu0
  %v3450 = vpop.f32.mrb[0].mxu0
  %v3451 = vadd.f32 0.0, %v3450
  %v3452 = vpop.f32.mrb[0].mxu0
  %3453 = vmatprep.mubr.bf16.mxu0 0
  %3454 = vmatmul.mubr.bf16.gmra.mrb[0].mxu0 %v3296
  %v3455 = vpop.f32.mrb[0].mxu0
  %v3456 = vadd.f32 0.0, %v3455
  %v3457 = vpop.f32.mrb[0].mxu0
  %v3458 = vpop.f32.mrb[0].mxu0
  %v3459 = vadd.f32 0.0, %v3458
  %v3460 = vpop.f32.mrb[0].mxu0
  %3461 = vmatprep.mubr.bf16.mxu0 0
  %3462 = vmatmul.mubr.bf16.gmra.mrb[0].mxu0 %v3298
  %v3463 = vpop.f32.mrb[0].mxu0
  %v3464 = vadd.f32 0.0, %v3463
  %v3465 = vpop.f32.mrb[0].mxu0
  %v3466 = vpop.f32.mrb[0].mxu0
  %v3467 = vadd.f32 0.0, %v3466
  %v3468 = vpop.f32.mrb[0].mxu0
  %3469 = vmatprep.mubr.bf16.mxu0 0
  %3470 = vmatmul.mubr.bf16.gmra.mrb[0].mxu0 %v3300
  %v3471 = vpop.f32.mrb[0].mxu0
  %v3472 = vadd.f32 0.0, %v3471
  %v3473 = vpop.f32.mrb[0].mxu0
  %v3474 = vpop.f32.mrb[0].mxu0
  %v3475 = vadd.f32 0.0, %v3474
  %v3476 = vpop.f32.mrb[0].mxu0
  %3477 = vmatprep.mubr.bf16.mxu0 0
  %3478 = vmatmul.mubr.bf16.gmra.mrb[0].mxu0 %v3302
  %v3479 = vpop.f32.mrb[0].mxu0
  %v3480 = vadd.f32 0.0, %v3479
  %v3481 = vpop.f32.mrb[0].mxu0
  %v3482 = vpop.f32.mrb[0].mxu0
  %v3483 = vadd.f32 0.0, %v3482
  %v3484 = vpop.f32.mrb[0].mxu0
  %3485 = vmatprep.mubr.bf16.mxu0 0
  %3486 = vmatmul.mubr.bf16.gmra.mrb[0].mxu0 %v3304
  %v3487 = vpop.f32.mrb[0].mxu0
  %v3488 = vadd.f32 0.0, %v3487
  %v3489 = vpop.f32.mrb[0].mxu0
  %v3490 = vpop.f32.mrb[0].mxu0
  %v3491 = vadd.f32 0.0, %v3490
  %v3492 = vpop.f32.mrb[0].mxu0
  %3493 = vmatprep.mubr.bf16.mxu0 0
  %3494 = vmatmul.mubr.bf16.gmra.mrb[0].mxu0 %v3306
  %v3495 = vpop.f32.mrb[0].mxu0
  %v3496 = vadd.f32 0.0, %v3495
  %v3497 = vpop.f32.mrb[0].mxu0
  %v3498 = vpop.f32.mrb[0].mxu0
  %v3499 = vadd.f32 0.0, %v3498
  %v3500 = vpop.f32.mrb[0].mxu0
  %3501 = vmatprep.mubr.bf16.mxu0 0
  %3502 = vmatmul.mubr.bf16.gmra.mrb[0].mxu0 %v3308
  %v3503 = vpop.f32.mrb[0].mxu0
  %v3504 = vadd.f32 0.0, %v3503
  %v3505 = vpop.f32.mrb[0].mxu0
  %v3506 = vpop.f32.mrb[0].mxu0
  %v3507 = vadd.f32 0.0, %v3506
  %v3508 = vpop.f32.mrb[0].mxu0
  %3509 = vmatprep.mubr.bf16.mxu0 0
  %3510 = vmatmul.mubr.bf16.gmra.mrb[0].mxu0 %v3310
  %v3511 = vpop.f32.mrb[0].mxu0
  %v3512 = vadd.f32 0.0, %v3511
  %v3513 = vpop.f32.mrb[0].mxu0
  %v3514 = vpop.f32.mrb[0].mxu0
  %v3515 = vadd.f32 0.0, %v3514
  %v3516 = vpop.f32.mrb[0].mxu0
  %3517 = vmatprep.mubr.bf16.mxu0 0
  %3518 = vmatmul.mubr.bf16.gmra.mrb[0].mxu0 %v3312
  %v3519 = vpop.f32.mrb[0].mxu0
  %v3520 = vadd.f32 0.0, %v3519
  %v3521 = vpop.f32.mrb[0].mxu0
  %v3522 = vpop.f32.mrb[0].mxu0
  %v3523 = vadd.f32 0.0, %v3522
  %v3524 = vpop.f32.mrb[0].mxu0
  %3525 = vmatprep.mubr.bf16.mxu0 0
  %3526 = vmatmul.mubr.bf16.gmra.mrb[0].mxu0 %v3314
  %v3527 = vpop.f32.mrb[0].mxu0
  %v3528 = vadd.f32 0.0, %v3527
  %v3529 = vpop.f32.mrb[0].mxu0
  %v3530 = vpop.f32.mrb[0].mxu0
  %v3531 = vadd.f32 0.0, %v3530
  %v3532 = vpop.f32.mrb[0].mxu0
  %3533 = vmatprep.mubr.bf16.mxu0 0
  %3534 = vmatmul.mubr.bf16.gmra.mrb[0].mxu0 %v3316
  %v3535 = vpop.f32.mrb[0].mxu0
  %v3536 = vadd.f32 0.0, %v3535
  %v3537 = vpop.f32.mrb[0].mxu0
  %v3538 = vpop.f32.mrb[0].mxu0
  %v3539 = vadd.f32 0.0, %v3538
  %v3540 = vpop.f32.mrb[0].mxu0
  %3541 = vdwg.mxu0
  %v3542 = vadd.f32 %v3217, %v3416
  %v3543 = vadd.f32 %v3218, %v3419
  %v3544 = vadd.f32 %v3219, %v3424
  %v3545 = vadd.f32 %v3220, %v3427
  %v3546 = vadd.f32 %v3221, %v3432
  %v3547 = vadd.f32 %v3222, %v3435
  %v3548 = vadd.f32 %v3223, %v3440
  %v3549 = vadd.f32 %v3224, %v3443
  %v3550 = vadd.f32 %v3225, %v3448
  %v3551 = vadd.f32 %v3226, %v3451
  %v3552 = vadd.f32 %v3227, %v3456
  %v3553 = vadd.f32 %v3228, %v3459
  %v3554 = vadd.f32 %v3229, %v3464
  %v3555 = vadd.f32 %v3230, %v3467
  %v3556 = vadd.f32 %v3231, %v3472
  %v3557 = vadd.f32 %v3232, %v3475
  %v3558 = vadd.f32 %v3233, %v3480
  %v3559 = vadd.f32 %v3234, %v3483
  %v3560 = vadd.f32 %v3235, %v3488
  %v3561 = vadd.f32 %v3236, %v3491
  %v3562 = vadd.f32 %v3237, %v3496
  %v3563 = vadd.f32 %v3238, %v3499
  %v3564 = vadd.f32 %v3239, %v3504
  %v3565 = vadd.f32 %v3240, %v3507
  %v3566 = vadd.f32 %v3241, %v3512
  %v3567 = vadd.f32 %v3242, %v3515
  %v3568 = vadd.f32 %v3243, %v3520
  %v3569 = vadd.f32 %v3244, %v3523
  %v3570 = vadd.f32 %v3245, %v3528
  %v3571 = vadd.f32 %v3246, %v3531
  %v3572 = vadd.f32 %v3247, %v3536
  %v3573 = vadd.f32 %v3248, %v3539
  %v3574 = vld [vmem:[#allocation2 + $0x88] sm:$0x1f]
  %s3575 = scalar_lea.vmem %s3, 320
  %v3576 = vld [vmem:[%s3575] sm:$0xf]
  %v3577 = vld [vmem:[%s3575 + $0x4] sm:$0xf]
  %v3578 = vld [vmem:[%s3575 + $0x8] sm:$0xf]
  %v3579 = vld [vmem:[%s3575 + $0xc] sm:$0xf]
  %v3580 = vld [vmem:[%s3575 + $0x10] sm:$0xf]
  %v3581 = vld [vmem:[%s3575 + $0x14] sm:$0xf]
  %v3582 = vld [vmem:[%s3575 + $0x18] sm:$0xf]
  %v3583 = vld [vmem:[%s3575 + $0x1c] sm:$0xf]
  %v3584 = vld [vmem:[%s3575 + $0x20] sm:$0xf]
  %v3585 = vld [vmem:[%s3575 + $0x24] sm:$0xf]
  %v3586 = vld [vmem:[%s3575 + $0x28] sm:$0xf]
  %v3587 = vld [vmem:[%s3575 + $0x2c] sm:$0xf]
  %v3588 = vld [vmem:[%s3575 + $0x30] sm:$0xf]
  %v3589 = vld [vmem:[%s3575 + $0x34] sm:$0xf]
  %v3590 = vld [vmem:[%s3575 + $0x38] sm:$0xf]
  %v3591 = vld [vmem:[%s3575 + $0x3c] sm:$0xf]
  %v3593 = vshrl.u32 %v3249, 16
  %v3595 = vrot.slane %v3593, 4
  %v3596 = vshll.u32 %v3249, 16
  %v3598 = vrot.slane %v3596, 5
  %v3599 = vor.u32 %v3595, %v3598
  %v3600 = vrot.slane %v2849, 4
  %v3601 = vrot.slane %v2852, 5
  %v3602 = vor.u32 %v3600, %v3601
  %v3603 = vsel %vm2471, %v3599, %v3602
  %v3604 = vrot.slane %v2858, 4
  %v3605 = vrot.slane %v2861, 5
  %v3606 = vor.u32 %v3604, %v3605
  %v3607 = vsel %vm2471, %v3602, %v3606
  %v3608 = vrot.slane %v2867, 4
  %v3609 = vrot.slane %v2870, 5
  %v3610 = vor.u32 %v3608, %v3609
  %v3611 = vsel %vm2471, %v3606, %v3610
  %v3612 = vrot.slane %v2876, 4
  %v3613 = vrot.slane %v2879, 5
  %v3614 = vor.u32 %v3612, %v3613
  %v3615 = vsel %vm2471, %v3610, %v3614
  %v3616 = vrot.slane %v2885, 4
  %v3617 = vrot.slane %v2888, 5
  %v3618 = vor.u32 %v3616, %v3617
  %v3619 = vsel %vm2471, %v3614, %v3618
  %v3620 = vrot.slane %v2894, 4
  %v3621 = vrot.slane %v2897, 5
  %v3622 = vor.u32 %v3620, %v3621
  %v3623 = vsel %vm2471, %v3618, %v3622
  %v3624 = vrot.slane %v2903, 4
  %v3625 = vrot.slane %v2906, 5
  %v3626 = vor.u32 %v3624, %v3625
  %v3627 = vsel %vm2471, %v3622, %v3626
  %v3628 = vrot.slane %v2912, 4
  %v3629 = vrot.slane %v2915, 5
  %v3630 = vor.u32 %v3628, %v3629
  %v3631 = vsel %vm2471, %v3626, %v3630
  %v3632 = vrot.slane %v2921, 4
  %v3633 = vrot.slane %v2924, 5
  %v3634 = vor.u32 %v3632, %v3633
  %v3635 = vsel %vm2471, %v3630, %v3634
  %v3636 = vrot.slane %v2930, 4
  %v3637 = vrot.slane %v2933, 5
  %v3638 = vor.u32 %v3636, %v3637
  %v3639 = vsel %vm2471, %v3634, %v3638
  %v3640 = vrot.slane %v2939, 4
  %v3641 = vrot.slane %v2942, 5
  %v3642 = vor.u32 %v3640, %v3641
  %v3643 = vsel %vm2471, %v3638, %v3642
  %v3644 = vrot.slane %v2948, 4
  %v3645 = vrot.slane %v2951, 5
  %v3646 = vor.u32 %v3644, %v3645
  %v3647 = vsel %vm2471, %v3642, %v3646
  %v3648 = vrot.slane %v2957, 4
  %v3649 = vrot.slane %v2960, 5
  %v3650 = vor.u32 %v3648, %v3649
  %v3651 = vsel %vm2471, %v3646, %v3650
  %v3652 = vrot.slane %v2966, 4
  %v3653 = vrot.slane %v2969, 5
  %v3654 = vor.u32 %v3652, %v3653
  %v3655 = vsel %vm2471, %v3650, %v3654
  %v3656 = vrot.slane %v2975, 4
  %v3657 = vrot.slane %v2978, 5
  %v3658 = vor.u32 %v3656, %v3657
  %v3659 = vsel %vm2471, %v3654, %v3658
  %v3661 = vshrl.u32 %v3574, 16
  %v3663 = vrot.slane %v3661, 4
  %v3664 = vshll.u32 %v3574, 16
  %v3666 = vrot.slane %v3664, 5
  %v3667 = vor.u32 %v3663, %v3666
  %v3668 = vsel %vm2471, %v3658, %v3667
  %v3701 = vunpack.c.l.b16 %v3576
  %v3702 = vunpack.c.l.b16 %v3577
  %v3703 = vunpack.c.l.b16 %v3578
  %v3704 = vunpack.c.l.b16 %v3579
  %v3705 = vunpack.c.l.b16 %v3580
  %v3706 = vunpack.c.l.b16 %v3581
  %v3707 = vunpack.c.l.b16 %v3582
  %v3708 = vunpack.c.l.b16 %v3583
  %v3709 = vunpack.c.l.b16 %v3584
  %v3710 = vunpack.c.l.b16 %v3585
  %v3711 = vunpack.c.l.b16 %v3586
  %v3712 = vunpack.c.l.b16 %v3587
  %v3713 = vunpack.c.l.b16 %v3588
  %v3714 = vunpack.c.l.b16 %v3589
  %v3715 = vunpack.c.l.b16 %v3590
  %v3716 = vunpack.c.l.b16 %v3591
  %v3717 = vpack.c.b16 %v3702, %v3701
  %v3718 = vpack.c.b16 %v3704, %v3703
  %v3719 = vpack.c.b16 %v3706, %v3705
  %v3720 = vpack.c.b16 %v3708, %v3707
  %v3721 = vpack.c.b16 %v3710, %v3709
  %v3722 = vpack.c.b16 %v3712, %v3711
  %v3723 = vpack.c.b16 %v3714, %v3713
  %v3724 = vpack.c.b16 %v3716, %v3715
  %3733 = vmatprep.subr.bf16.mxu0 0
  %3734 = vmatpush1.bf16.msra.mxu0 %v3717
  %3735 = vmatprep.subr.bf16.mxu0 0
  %3736 = vmatpush1.bf16.msra.mxu0 %v3718
  %3737 = vmatprep.subr.bf16.mxu0 0
  %3738 = vmatpush1.bf16.msra.mxu0 %v3719
  %3739 = vmatprep.subr.bf16.mxu0 0
  %3740 = vmatpush1.bf16.msra.mxu0 %v3720
  %3741 = vmatprep.subr.bf16.mxu0 0
  %3742 = vmatpush1.bf16.msra.mxu0 %v3721
  %3743 = vmatprep.subr.bf16.mxu0 0
  %3744 = vmatpush1.bf16.msra.mxu0 %v3722
  %3745 = vmatprep.subr.bf16.mxu0 0
  %3746 = vmatpush1.bf16.msra.mxu0 %v3723
  %3747 = vmatprep.subr.bf16.mxu0 0
  %3748 = vmatpush1.bf16.msra.mxu0 %v3724
  %3749 = vmatprep.subr.bf16.mxu0 0
  %3750 = vmatpush1.bf16.msra.mxu0 0
  %3751 = vmatprep.subr.bf16.mxu0 0
  %3752 = vmatpush1.bf16.msra.mxu0 0
  %3753 = vmatprep.subr.bf16.mxu0 0
  %3754 = vmatpush1.bf16.msra.mxu0 0
  %3755 = vmatprep.subr.bf16.mxu0 0
  %3756 = vmatpush1.bf16.msra.mxu0 0
  %3757 = vmatprep.subr.bf16.mxu0 0
  %3758 = vmatpush1.bf16.msra.mxu0 0
  %3759 = vmatprep.subr.bf16.mxu0 0
  %3760 = vmatpush1.bf16.msra.mxu0 0
  %3761 = vmatprep.subr.bf16.mxu0 0
  %3762 = vmatpush1.bf16.msra.mxu0 0
  %3763 = vmatprep.subr.bf16.mxu0 0
  %3764 = vmatpush1.bf16.msra.mxu0 0
  %3765 = vmatprep.mubr.bf16.mxu0 0
  %3766 = vmatmul.mubr.bf16.gmra.mrb[0].mxu0 %v3603
  %v3767 = vpop.f32.mrb[0].mxu0
  %v3768 = vadd.f32 0.0, %v3767
  %v3769 = vpop.f32.mrb[0].mxu0
  %v3770 = vpop.f32.mrb[0].mxu0
  %v3771 = vadd.f32 0.0, %v3770
  %v3772 = vpop.f32.mrb[0].mxu0
  %3773 = vmatprep.mubr.bf16.mxu0 0
  %3774 = vmatmul.mubr.bf16.gmra.mrb[0].mxu0 %v3607
  %v3775 = vpop.f32.mrb[0].mxu0
  %v3776 = vadd.f32 0.0, %v3775
  %v3777 = vpop.f32.mrb[0].mxu0
  %v3778 = vpop.f32.mrb[0].mxu0
  %v3779 = vadd.f32 0.0, %v3778
  %v3780 = vpop.f32.mrb[0].mxu0
  %3781 = vmatprep.mubr.bf16.mxu0 0
  %3782 = vmatmul.mubr.bf16.gmra.mrb[0].mxu0 %v3611
  %v3783 = vpop.f32.mrb[0].mxu0
  %v3784 = vadd.f32 0.0, %v3783
  %v3785 = vpop.f32.mrb[0].mxu0
  %v3786 = vpop.f32.mrb[0].mxu0
  %v3787 = vadd.f32 0.0, %v3786
  %v3788 = vpop.f32.mrb[0].mxu0
  %3789 = vmatprep.mubr.bf16.mxu0 0
  %3790 = vmatmul.mubr.bf16.gmra.mrb[0].mxu0 %v3615
  %v3791 = vpop.f32.mrb[0].mxu0
  %v3792 = vadd.f32 0.0, %v3791
  %v3793 = vpop.f32.mrb[0].mxu0
  %v3794 = vpop.f32.mrb[0].mxu0
  %v3795 = vadd.f32 0.0, %v3794
  %v3796 = vpop.f32.mrb[0].mxu0
  %3797 = vmatprep.mubr.bf16.mxu0 0
  %3798 = vmatmul.mubr.bf16.gmra.mrb[0].mxu0 %v3619
  %v3799 = vpop.f32.mrb[0].mxu0
  %v3800 = vadd.f32 0.0, %v3799
  %v3801 = vpop.f32.mrb[0].mxu0
  %v3802 = vpop.f32.mrb[0].mxu0
  %v3803 = vadd.f32 0.0, %v3802
  %v3804 = vpop.f32.mrb[0].mxu0
  %3805 = vmatprep.mubr.bf16.mxu0 0
  %3806 = vmatmul.mubr.bf16.gmra.mrb[0].mxu0 %v3623
  %v3807 = vpop.f32.mrb[0].mxu0
  %v3808 = vadd.f32 0.0, %v3807
  %v3809 = vpop.f32.mrb[0].mxu0
  %v3810 = vpop.f32.mrb[0].mxu0
  %v3811 = vadd.f32 0.0, %v3810
  %v3812 = vpop.f32.mrb[0].mxu0
  %3813 = vmatprep.mubr.bf16.mxu0 0
  %3814 = vmatmul.mubr.bf16.gmra.mrb[0].mxu0 %v3627
  %v3815 = vpop.f32.mrb[0].mxu0
  %v3816 = vadd.f32 0.0, %v3815
  %v3817 = vpop.f32.mrb[0].mxu0
  %v3818 = vpop.f32.mrb[0].mxu0
  %v3819 = vadd.f32 0.0, %v3818
  %v3820 = vpop.f32.mrb[0].mxu0
  %3821 = vmatprep.mubr.bf16.mxu0 0
  %3822 = vmatmul.mubr.bf16.gmra.mrb[0].mxu0 %v3631
  %v3823 = vpop.f32.mrb[0].mxu0
  %v3824 = vadd.f32 0.0, %v3823
  %v3825 = vpop.f32.mrb[0].mxu0
  %v3826 = vpop.f32.mrb[0].mxu0
  %v3827 = vadd.f32 0.0, %v3826
  %v3828 = vpop.f32.mrb[0].mxu0
  %3829 = vmatprep.mubr.bf16.mxu0 0
  %3830 = vmatmul.mubr.bf16.gmra.mrb[0].mxu0 %v3635
  %v3831 = vpop.f32.mrb[0].mxu0
  %v3832 = vadd.f32 0.0, %v3831
  %v3833 = vpop.f32.mrb[0].mxu0
  %v3834 = vpop.f32.mrb[0].mxu0
  %v3835 = vadd.f32 0.0, %v3834
  %v3836 = vpop.f32.mrb[0].mxu0
  %3837 = vmatprep.mubr.bf16.mxu0 0
  %3838 = vmatmul.mubr.bf16.gmra.mrb[0].mxu0 %v3639
  %v3839 = vpop.f32.mrb[0].mxu0
  %v3840 = vadd.f32 0.0, %v3839
  %v3841 = vpop.f32.mrb[0].mxu0
  %v3842 = vpop.f32.mrb[0].mxu0
  %v3843 = vadd.f32 0.0, %v3842
  %v3844 = vpop.f32.mrb[0].mxu0
  %3845 = vmatprep.mubr.bf16.mxu0 0
  %3846 = vmatmul.mubr.bf16.gmra.mrb[0].mxu0 %v3643
  %v3847 = vpop.f32.mrb[0].mxu0
  %v3848 = vadd.f32 0.0, %v3847
  %v3849 = vpop.f32.mrb[0].mxu0
  %v3850 = vpop.f32.mrb[0].mxu0
  %v3851 = vadd.f32 0.0, %v3850
  %v3852 = vpop.f32.mrb[0].mxu0
  %3853 = vmatprep.mubr.bf16.mxu0 0
  %3854 = vmatmul.mubr.bf16.gmra.mrb[0].mxu0 %v3647
  %v3855 = vpop.f32.mrb[0].mxu0
  %v3856 = vadd.f32 0.0, %v3855
  %v3857 = vpop.f32.mrb[0].mxu0
  %v3858 = vpop.f32.mrb[0].mxu0
  %v3859 = vadd.f32 0.0, %v3858
  %v3860 = vpop.f32.mrb[0].mxu0
  %3861 = vmatprep.mubr.bf16.mxu0 0
  %3862 = vmatmul.mubr.bf16.gmra.mrb[0].mxu0 %v3651
  %v3863 = vpop.f32.mrb[0].mxu0
  %v3864 = vadd.f32 0.0, %v3863
  %v3865 = vpop.f32.mrb[0].mxu0
  %v3866 = vpop.f32.mrb[0].mxu0
  %v3867 = vadd.f32 0.0, %v3866
  %v3868 = vpop.f32.mrb[0].mxu0
  %3869 = vmatprep.mubr.bf16.mxu0 0
  %3870 = vmatmul.mubr.bf16.gmra.mrb[0].mxu0 %v3655
  %v3871 = vpop.f32.mrb[0].mxu0
  %v3872 = vadd.f32 0.0, %v3871
  %v3873 = vpop.f32.mrb[0].mxu0
  %v3874 = vpop.f32.mrb[0].mxu0
  %v3875 = vadd.f32 0.0, %v3874
  %v3876 = vpop.f32.mrb[0].mxu0
  %3877 = vmatprep.mubr.bf16.mxu0 0
  %3878 = vmatmul.mubr.bf16.gmra.mrb[0].mxu0 %v3659
  %v3879 = vpop.f32.mrb[0].mxu0
  %v3880 = vadd.f32 0.0, %v3879
  %v3881 = vpop.f32.mrb[0].mxu0
  %v3882 = vpop.f32.mrb[0].mxu0
  %v3883 = vadd.f32 0.0, %v3882
  %v3884 = vpop.f32.mrb[0].mxu0
  %3885 = vmatprep.mubr.bf16.mxu0 0
  %3886 = vmatmul.mubr.bf16.gmra.mrb[0].mxu0 %v3668
  %v3887 = vpop.f32.mrb[0].mxu0
  %v3888 = vadd.f32 0.0, %v3887
  %v3889 = vpop.f32.mrb[0].mxu0
  %v3890 = vpop.f32.mrb[0].mxu0
  %v3891 = vadd.f32 0.0, %v3890
  %v3892 = vpop.f32.mrb[0].mxu0
  %3893 = vdwg.mxu0
  %v3894 = vadd.f32 %v3542, %v3768
  %v3895 = vadd.f32 %v3543, %v3771
  %v3896 = vadd.f32 %v3544, %v3776
  %v3897 = vadd.f32 %v3545, %v3779
  %v3898 = vadd.f32 %v3546, %v3784
  %v3899 = vadd.f32 %v3547, %v3787
  %v3900 = vadd.f32 %v3548, %v3792
  %v3901 = vadd.f32 %v3549, %v3795
  %v3902 = vadd.f32 %v3550, %v3800
  %v3903 = vadd.f32 %v3551, %v3803
  %v3904 = vadd.f32 %v3552, %v3808
  %v3905 = vadd.f32 %v3553, %v3811
  %v3906 = vadd.f32 %v3554, %v3816
  %v3907 = vadd.f32 %v3555, %v3819
  %v3908 = vadd.f32 %v3556, %v3824
  %v3909 = vadd.f32 %v3557, %v3827
  %v3910 = vadd.f32 %v3558, %v3832
  %v3911 = vadd.f32 %v3559, %v3835
  %v3912 = vadd.f32 %v3560, %v3840
  %v3913 = vadd.f32 %v3561, %v3843
  %v3914 = vadd.f32 %v3562, %v3848
  %v3915 = vadd.f32 %v3563, %v3851
  %v3916 = vadd.f32 %v3564, %v3856
  %v3917 = vadd.f32 %v3565, %v3859
  %v3918 = vadd.f32 %v3566, %v3864
  %v3919 = vadd.f32 %v3567, %v3867
  %v3920 = vadd.f32 %v3568, %v3872
  %v3921 = vadd.f32 %v3569, %v3875
  %v3922 = vadd.f32 %v3570, %v3880
  %v3923 = vadd.f32 %v3571, %v3883
  %v3924 = vadd.f32 %v3572, %v3888
  %v3925 = vadd.f32 %v3573, %v3891
  %v3926 = vld [vmem:[#allocation2 + $0x10] sm:$0xf8]
  %v3927 = vld [vmem:[#allocation2 + $0x18] sm:$0xff]
  %v3928 = vld [vmem:[#allocation2 + $0x20] sm:$0xff]
  %v3929 = vld [vmem:[#allocation2 + $0x28] sm:$0xff]
  %v3930 = vld [vmem:[#allocation2 + $0x30] sm:$0xff]
  %v3931 = vld [vmem:[#allocation2 + $0x38] sm:$0xff]
  %v3932 = vld [vmem:[#allocation2 + $0x40] sm:$0xff]
  %v3933 = vld [vmem:[#allocation2 + $0x48] sm:$0xff]
  %v3934 = vld [vmem:[#allocation2 + $0x50] sm:$0xff]
  %v3935 = vld [vmem:[#allocation2 + $0x58] sm:$0xff]
  %v3936 = vld [vmem:[#allocation2 + $0x60] sm:$0xff]
  %v3937 = vld [vmem:[#allocation2 + $0x68] sm:$0xff]
  %v3938 = vld [vmem:[#allocation2 + $0x70] sm:$0xff]
  %v3939 = vld [vmem:[#allocation2 + $0x78] sm:$0xff]
  %v3940 = vld [vmem:[#allocation2 + $0x80] sm:$0xff]
  %v3941 = vld [vmem:[#allocation2 + $0x88] sm:$0xff]
  %v3942 = vld [vmem:[#allocation2 + $0x90] sm:$0xf]
  %s3943 = scalar_lea.vmem %s3, 384
  %v3944 = vld [vmem:[%s3943] sm:$0xf]
  %v3945 = vld [vmem:[%s3943 + $0x4] sm:$0xf]
  %v3946 = vld [vmem:[%s3943 + $0x8] sm:$0xf]
  %v3947 = vld [vmem:[%s3943 + $0xc] sm:$0xf]
  %v3948 = vld [vmem:[%s3943 + $0x10] sm:$0xf]
  %v3949 = vld [vmem:[%s3943 + $0x14] sm:$0xf]
  %v3950 = vld [vmem:[%s3943 + $0x18] sm:$0xf]
  %v3951 = vld [vmem:[%s3943 + $0x1c] sm:$0xf]
  %v3952 = vld [vmem:[%s3943 + $0x20] sm:$0xf]
  %v3953 = vld [vmem:[%s3943 + $0x24] sm:$0xf]
  %v3954 = vld [vmem:[%s3943 + $0x28] sm:$0xf]
  %v3955 = vld [vmem:[%s3943 + $0x2c] sm:$0xf]
  %v3956 = vld [vmem:[%s3943 + $0x30] sm:$0xf]
  %v3957 = vld [vmem:[%s3943 + $0x34] sm:$0xf]
  %v3958 = vld [vmem:[%s3943 + $0x38] sm:$0xf]
  %v3959 = vld [vmem:[%s3943 + $0x3c] sm:$0xf]
  %v3961 = vshrl.u32 %v3926, 16
  %v3963 = vrot.slane %v3961, 3
  %v3964 = vshll.u32 %v3926, 16
  %v3966 = vrot.slane %v3964, 4
  %v3967 = vor.u32 %v3963, %v3966
  %v3969 = vshrl.u32 %v3927, 16
  %v3971 = vrot.slane %v3969, 3
  %v3972 = vshll.u32 %v3927, 16
  %v3974 = vrot.slane %v3972, 4
  %v3975 = vor.u32 %v3971, %v3974
  %v3976 = vsel %vm1717, %v3967, %v3975
  %v3978 = vshrl.u32 %v3928, 16
  %v3980 = vrot.slane %v3978, 3
  %v3981 = vshll.u32 %v3928, 16
  %v3983 = vrot.slane %v3981, 4
  %v3984 = vor.u32 %v3980, %v3983
  %v3985 = vsel %vm1717, %v3975, %v3984
  %v3987 = vshrl.u32 %v3929, 16
  %v3989 = vrot.slane %v3987, 3
  %v3990 = vshll.u32 %v3929, 16
  %v3992 = vrot.slane %v3990, 4
  %v3993 = vor.u32 %v3989, %v3992
  %v3994 = vsel %vm1717, %v3984, %v3993
  %v3996 = vshrl.u32 %v3930, 16
  %v3998 = vrot.slane %v3996, 3
  %v3999 = vshll.u32 %v3930, 16
  %v4001 = vrot.slane %v3999, 4
  %v4002 = vor.u32 %v3998, %v4001
  %v4003 = vsel %vm1717, %v3993, %v4002
  %v4005 = vshrl.u32 %v3931, 16
  %v4007 = vrot.slane %v4005, 3
  %v4008 = vshll.u32 %v3931, 16
  %v4010 = vrot.slane %v4008, 4
  %v4011 = vor.u32 %v4007, %v4010
  %v4012 = vsel %vm1717, %v4002, %v4011
  %v4014 = vshrl.u32 %v3932, 16
  %v4016 = vrot.slane %v4014, 3
  %v4017 = vshll.u32 %v3932, 16
  %v4019 = vrot.slane %v4017, 4
  %v4020 = vor.u32 %v4016, %v4019
  %v4021 = vsel %vm1717, %v4011, %v4020
  %v4023 = vshrl.u32 %v3933, 16
  %v4025 = vrot.slane %v4023, 3
  %v4026 = vshll.u32 %v3933, 16
  %v4028 = vrot.slane %v4026, 4
  %v4029 = vor.u32 %v4025, %v4028
  %v4030 = vsel %vm1717, %v4020, %v4029
  %v4032 = vshrl.u32 %v3934, 16
  %v4034 = vrot.slane %v4032, 3
  %v4035 = vshll.u32 %v3934, 16
  %v4037 = vrot.slane %v4035, 4
  %v4038 = vor.u32 %v4034, %v4037
  %v4039 = vsel %vm1717, %v4029, %v4038
  %v4041 = vshrl.u32 %v3935, 16
  %v4043 = vrot.slane %v4041, 3
  %v4044 = vshll.u32 %v3935, 16
  %v4046 = vrot.slane %v4044, 4
  %v4047 = vor.u32 %v4043, %v4046
  %v4048 = vsel %vm1717, %v4038, %v4047
  %v4050 = vshrl.u32 %v3936, 16
  %v4052 = vrot.slane %v4050, 3
  %v4053 = vshll.u32 %v3936, 16
  %v4055 = vrot.slane %v4053, 4
  %v4056 = vor.u32 %v4052, %v4055
  %v4057 = vsel %vm1717, %v4047, %v4056
  %v4059 = vshrl.u32 %v3937, 16
  %v4061 = vrot.slane %v4059, 3
  %v4062 = vshll.u32 %v3937, 16
  %v4064 = vrot.slane %v4062, 4
  %v4065 = vor.u32 %v4061, %v4064
  %v4066 = vsel %vm1717, %v4056, %v4065
  %v4068 = vshrl.u32 %v3938, 16
  %v4070 = vrot.slane %v4068, 3
  %v4071 = vshll.u32 %v3938, 16
  %v4073 = vrot.slane %v4071, 4
  %v4074 = vor.u32 %v4070, %v4073
  %v4075 = vsel %vm1717, %v4065, %v4074
  %v4077 = vshrl.u32 %v3939, 16
  %v4079 = vrot.slane %v4077, 3
  %v4080 = vshll.u32 %v3939, 16
  %v4082 = vrot.slane %v4080, 4
  %v4083 = vor.u32 %v4079, %v4082
  %v4084 = vsel %vm1717, %v4074, %v4083
  %v4086 = vshrl.u32 %v3940, 16
  %v4088 = vrot.slane %v4086, 3
  %v4089 = vshll.u32 %v3940, 16
  %v4091 = vrot.slane %v4089, 4
  %v4092 = vor.u32 %v4088, %v4091
  %v4093 = vsel %vm1717, %v4083, %v4092
  %v4095 = vshrl.u32 %v3941, 16
  %v4097 = vrot.slane %v4095, 3
  %v4098 = vshll.u32 %v3941, 16
  %v4100 = vrot.slane %v4098, 4
  %v4101 = vor.u32 %v4097, %v4100
  %v4102 = vsel %vm1717, %v4092, %v4101
  %v4104 = vshrl.u32 %v3942, 16
  %v4106 = vrot.slane %v4104, 3
  %v4107 = vshll.u32 %v3942, 16
  %v4109 = vrot.slane %v4107, 4
  %v4110 = vor.u32 %v4106, %v4109
  %v4111 = vsel %vm1717, %v4101, %v4110
  %v4144 = vunpack.c.l.b16 %v3944
  %v4145 = vunpack.c.l.b16 %v3945
  %v4146 = vunpack.c.l.b16 %v3946
  %v4147 = vunpack.c.l.b16 %v3947
  %v4148 = vunpack.c.l.b16 %v3948
  %v4149 = vunpack.c.l.b16 %v3949
  %v4150 = vunpack.c.l.b16 %v3950
  %v4151 = vunpack.c.l.b16 %v3951
  %v4152 = vunpack.c.l.b16 %v3952
  %v4153 = vunpack.c.l.b16 %v3953
  %v4154 = vunpack.c.l.b16 %v3954
  %v4155 = vunpack.c.l.b16 %v3955
  %v4156 = vunpack.c.l.b16 %v3956
  %v4157 = vunpack.c.l.b16 %v3957
  %v4158 = vunpack.c.l.b16 %v3958
  %v4159 = vunpack.c.l.b16 %v3959
  %v4160 = vpack.c.b16 %v4145, %v4144
  %v4161 = vpack.c.b16 %v4147, %v4146
  %v4162 = vpack.c.b16 %v4149, %v4148
  %v4163 = vpack.c.b16 %v4151, %v4150
  %v4164 = vpack.c.b16 %v4153, %v4152
  %v4165 = vpack.c.b16 %v4155, %v4154
  %v4166 = vpack.c.b16 %v4157, %v4156
  %v4167 = vpack.c.b16 %v4159, %v4158
  %4176 = vmatprep.subr.bf16.mxu0 0
  %4177 = vmatpush1.bf16.msra.mxu0 %v4160
  %4178 = vmatprep.subr.bf16.mxu0 0
  %4179 = vmatpush1.bf16.msra.mxu0 %v4161
  %4180 = vmatprep.subr.bf16.mxu0 0
  %4181 = vmatpush1.bf16.msra.mxu0 %v4162
  %4182 = vmatprep.subr.bf16.mxu0 0
  %4183 = vmatpush1.bf16.msra.mxu0 %v4163
  %4184 = vmatprep.subr.bf16.mxu0 0
  %4185 = vmatpush1.bf16.msra.mxu0 %v4164
  %4186 = vmatprep.subr.bf16.mxu0 0
  %4187 = vmatpush1.bf16.msra.mxu0 %v4165
  %4188 = vmatprep.subr.bf16.mxu0 0
  %4189 = vmatpush1.bf16.msra.mxu0 %v4166
  %4190 = vmatprep.subr.bf16.mxu0 0
  %4191 = vmatpush1.bf16.msra.mxu0 %v4167
  %4192 = vmatprep.subr.bf16.mxu0 0
  %4193 = vmatpush1.bf16.msra.mxu0 0
  %4194 = vmatprep.subr.bf16.mxu0 0
  %4195 = vmatpush1.bf16.msra.mxu0 0
  %4196 = vmatprep.subr.bf16.mxu0 0
  %4197 = vmatpush1.bf16.msra.mxu0 0
  %4198 = vmatprep.subr.bf16.mxu0 0
  %4199 = vmatpush1.bf16.msra.mxu0 0
  %4200 = vmatprep.subr.bf16.mxu0 0
  %4201 = vmatpush1.bf16.msra.mxu0 0
  %4202 = vmatprep.subr.bf16.mxu0 0
  %4203 = vmatpush1.bf16.msra.mxu0 0
  %4204 = vmatprep.subr.bf16.mxu0 0
  %4205 = vmatpush1.bf16.msra.mxu0 0
  %4206 = vmatprep.subr.bf16.mxu0 0
  %4207 = vmatpush1.bf16.msra.mxu0 0
  %4208 = vmatprep.mubr.bf16.mxu0 0
  %4209 = vmatmul.mubr.bf16.gmra.mrb[0].mxu0 %v3976
  %v4210 = vpop.f32.mrb[0].mxu0
  %v4211 = vadd.f32 0.0, %v4210
  %v4212 = vpop.f32.mrb[0].mxu0
  %v4213 = vpop.f32.mrb[0].mxu0
  %v4214 = vadd.f32 0.0, %v4213
  %v4215 = vpop.f32.mrb[0].mxu0
  %4216 = vmatprep.mubr.bf16.mxu0 0
  %4217 = vmatmul.mubr.bf16.gmra.mrb[0].mxu0 %v3985
  %v4218 = vpop.f32.mrb[0].mxu0
  %v4219 = vadd.f32 0.0, %v4218
  %v4220 = vpop.f32.mrb[0].mxu0
  %v4221 = vpop.f32.mrb[0].mxu0
  %v4222 = vadd.f32 0.0, %v4221
  %v4223 = vpop.f32.mrb[0].mxu0
  %4224 = vmatprep.mubr.bf16.mxu0 0
  %4225 = vmatmul.mubr.bf16.gmra.mrb[0].mxu0 %v3994
  %v4226 = vpop.f32.mrb[0].mxu0
  %v4227 = vadd.f32 0.0, %v4226
  %v4228 = vpop.f32.mrb[0].mxu0
  %v4229 = vpop.f32.mrb[0].mxu0
  %v4230 = vadd.f32 0.0, %v4229
  %v4231 = vpop.f32.mrb[0].mxu0
  %4232 = vmatprep.mubr.bf16.mxu0 0
  %4233 = vmatmul.mubr.bf16.gmra.mrb[0].mxu0 %v4003
  %v4234 = vpop.f32.mrb[0].mxu0
  %v4235 = vadd.f32 0.0, %v4234
  %v4236 = vpop.f32.mrb[0].mxu0
  %v4237 = vpop.f32.mrb[0].mxu0
  %v4238 = vadd.f32 0.0, %v4237
  %v4239 = vpop.f32.mrb[0].mxu0
  %4240 = vmatprep.mubr.bf16.mxu0 0
  %4241 = vmatmul.mubr.bf16.gmra.mrb[0].mxu0 %v4012
  %v4242 = vpop.f32.mrb[0].mxu0
  %v4243 = vadd.f32 0.0, %v4242
  %v4244 = vpop.f32.mrb[0].mxu0
  %v4245 = vpop.f32.mrb[0].mxu0
  %v4246 = vadd.f32 0.0, %v4245
  %v4247 = vpop.f32.mrb[0].mxu0
  %4248 = vmatprep.mubr.bf16.mxu0 0
  %4249 = vmatmul.mubr.bf16.gmra.mrb[0].mxu0 %v4021
  %v4250 = vpop.f32.mrb[0].mxu0
  %v4251 = vadd.f32 0.0, %v4250
  %v4252 = vpop.f32.mrb[0].mxu0
  %v4253 = vpop.f32.mrb[0].mxu0
  %v4254 = vadd.f32 0.0, %v4253
  %v4255 = vpop.f32.mrb[0].mxu0
  %4256 = vmatprep.mubr.bf16.mxu0 0
  %4257 = vmatmul.mubr.bf16.gmra.mrb[0].mxu0 %v4030
  %v4258 = vpop.f32.mrb[0].mxu0
  %v4259 = vadd.f32 0.0, %v4258
  %v4260 = vpop.f32.mrb[0].mxu0
  %v4261 = vpop.f32.mrb[0].mxu0
  %v4262 = vadd.f32 0.0, %v4261
  %v4263 = vpop.f32.mrb[0].mxu0
  %4264 = vmatprep.mubr.bf16.mxu0 0
  %4265 = vmatmul.mubr.bf16.gmra.mrb[0].mxu0 %v4039
  %v4266 = vpop.f32.mrb[0].mxu0
  %v4267 = vadd.f32 0.0, %v4266
  %v4268 = vpop.f32.mrb[0].mxu0
  %v4269 = vpop.f32.mrb[0].mxu0
  %v4270 = vadd.f32 0.0, %v4269
  %v4271 = vpop.f32.mrb[0].mxu0
  %4272 = vmatprep.mubr.bf16.mxu0 0
  %4273 = vmatmul.mubr.bf16.gmra.mrb[0].mxu0 %v4048
  %v4274 = vpop.f32.mrb[0].mxu0
  %v4275 = vadd.f32 0.0, %v4274
  %v4276 = vpop.f32.mrb[0].mxu0
  %v4277 = vpop.f32.mrb[0].mxu0
  %v4278 = vadd.f32 0.0, %v4277
  %v4279 = vpop.f32.mrb[0].mxu0
  %4280 = vmatprep.mubr.bf16.mxu0 0
  %4281 = vmatmul.mubr.bf16.gmra.mrb[0].mxu0 %v4057
  %v4282 = vpop.f32.mrb[0].mxu0
  %v4283 = vadd.f32 0.0, %v4282
  %v4284 = vpop.f32.mrb[0].mxu0
  %v4285 = vpop.f32.mrb[0].mxu0
  %v4286 = vadd.f32 0.0, %v4285
  %v4287 = vpop.f32.mrb[0].mxu0
  %4288 = vmatprep.mubr.bf16.mxu0 0
  %4289 = vmatmul.mubr.bf16.gmra.mrb[0].mxu0 %v4066
  %v4290 = vpop.f32.mrb[0].mxu0
  %v4291 = vadd.f32 0.0, %v4290
  %v4292 = vpop.f32.mrb[0].mxu0
  %v4293 = vpop.f32.mrb[0].mxu0
  %v4294 = vadd.f32 0.0, %v4293
  %v4295 = vpop.f32.mrb[0].mxu0
  %4296 = vmatprep.mubr.bf16.mxu0 0
  %4297 = vmatmul.mubr.bf16.gmra.mrb[0].mxu0 %v4075
  %v4298 = vpop.f32.mrb[0].mxu0
  %v4299 = vadd.f32 0.0, %v4298
  %v4300 = vpop.f32.mrb[0].mxu0
  %v4301 = vpop.f32.mrb[0].mxu0
  %v4302 = vadd.f32 0.0, %v4301
  %v4303 = vpop.f32.mrb[0].mxu0
  %4304 = vmatprep.mubr.bf16.mxu0 0
  %4305 = vmatmul.mubr.bf16.gmra.mrb[0].mxu0 %v4084
  %v4306 = vpop.f32.mrb[0].mxu0
  %v4307 = vadd.f32 0.0, %v4306
  %v4308 = vpop.f32.mrb[0].mxu0
  %v4309 = vpop.f32.mrb[0].mxu0
  %v4310 = vadd.f32 0.0, %v4309
  %v4311 = vpop.f32.mrb[0].mxu0
  %4312 = vmatprep.mubr.bf16.mxu0 0
  %4313 = vmatmul.mubr.bf16.gmra.mrb[0].mxu0 %v4093
  %v4314 = vpop.f32.mrb[0].mxu0
  %v4315 = vadd.f32 0.0, %v4314
  %v4316 = vpop.f32.mrb[0].mxu0
  %v4317 = vpop.f32.mrb[0].mxu0
  %v4318 = vadd.f32 0.0, %v4317
  %v4319 = vpop.f32.mrb[0].mxu0
  %4320 = vmatprep.mubr.bf16.mxu0 0
  %4321 = vmatmul.mubr.bf16.gmra.mrb[0].mxu0 %v4102
  %v4322 = vpop.f32.mrb[0].mxu0
  %v4323 = vadd.f32 0.0, %v4322
  %v4324 = vpop.f32.mrb[0].mxu0
  %v4325 = vpop.f32.mrb[0].mxu0
  %v4326 = vadd.f32 0.0, %v4325
  %v4327 = vpop.f32.mrb[0].mxu0
  %4328 = vmatprep.mubr.bf16.mxu0 0
  %4329 = vmatmul.mubr.bf16.gmra.mrb[0].mxu0 %v4111
  %v4330 = vpop.f32.mrb[0].mxu0
  %v4331 = vadd.f32 0.0, %v4330
  %v4332 = vpop.f32.mrb[0].mxu0
  %v4333 = vpop.f32.mrb[0].mxu0
  %v4334 = vadd.f32 0.0, %v4333
  %v4335 = vpop.f32.mrb[0].mxu0
  %4336 = vdwg.mxu0
  %v4337 = vadd.f32 %v3894, %v4211
  %v4338 = vadd.f32 %v3895, %v4214
  %v4339 = vadd.f32 %v3896, %v4219
  %v4340 = vadd.f32 %v3897, %v4222
  %v4341 = vadd.f32 %v3898, %v4227
  %v4342 = vadd.f32 %v3899, %v4230
  %v4343 = vadd.f32 %v3900, %v4235
  %v4344 = vadd.f32 %v3901, %v4238
  %v4345 = vadd.f32 %v3902, %v4243
  %v4346 = vadd.f32 %v3903, %v4246
  %v4347 = vadd.f32 %v3904, %v4251
  %v4348 = vadd.f32 %v3905, %v4254
  %v4349 = vadd.f32 %v3906, %v4259
  %v4350 = vadd.f32 %v3907, %v4262
  %v4351 = vadd.f32 %v3908, %v4267
  %v4352 = vadd.f32 %v3909, %v4270
  %v4353 = vadd.f32 %v3910, %v4275
  %v4354 = vadd.f32 %v3911, %v4278
  %v4355 = vadd.f32 %v3912, %v4283
  %v4356 = vadd.f32 %v3913, %v4286
  %v4357 = vadd.f32 %v3914, %v4291
  %v4358 = vadd.f32 %v3915, %v4294
  %v4359 = vadd.f32 %v3916, %v4299
  %v4360 = vadd.f32 %v3917, %v4302
  %v4361 = vadd.f32 %v3918, %v4307
  %v4362 = vadd.f32 %v3919, %v4310
  %v4363 = vadd.f32 %v3920, %v4315
  %v4364 = vadd.f32 %v3921, %v4318
  %v4365 = vadd.f32 %v3922, %v4323
  %v4366 = vadd.f32 %v3923, %v4326
  %v4367 = vadd.f32 %v3924, %v4331
  %v4368 = vadd.f32 %v3925, %v4334
  %v4369 = vld [vmem:[#allocation2 + $0x10] sm:$0xf0]
  %s4370 = scalar_lea.vmem %s3, 448
  %v4371 = vld [vmem:[%s4370] sm:$0xf]
  %v4372 = vld [vmem:[%s4370 + $0x4] sm:$0xf]
  %v4373 = vld [vmem:[%s4370 + $0x8] sm:$0xf]
  %v4374 = vld [vmem:[%s4370 + $0xc] sm:$0xf]
  %v4375 = vld [vmem:[%s4370 + $0x10] sm:$0xf]
  %v4376 = vld [vmem:[%s4370 + $0x14] sm:$0xf]
  %v4377 = vld [vmem:[%s4370 + $0x18] sm:$0xf]
  %v4378 = vld [vmem:[%s4370 + $0x1c] sm:$0xf]
  %v4379 = vld [vmem:[%s4370 + $0x20] sm:$0xf]
  %v4380 = vld [vmem:[%s4370 + $0x24] sm:$0xf]
  %v4381 = vld [vmem:[%s4370 + $0x28] sm:$0xf]
  %v4382 = vld [vmem:[%s4370 + $0x2c] sm:$0xf]
  %v4383 = vld [vmem:[%s4370 + $0x30] sm:$0xf]
  %v4384 = vld [vmem:[%s4370 + $0x34] sm:$0xf]
  %v4385 = vld [vmem:[%s4370 + $0x38] sm:$0xf]
  %v4386 = vld [vmem:[%s4370 + $0x3c] sm:$0xf]
  %v4404 = vrot.slane %v4369, 4
  %v4405 = vrot.slane %v3927, 4
  %v4406 = vsel %vm2162, %v4404, %v4405
  %v4407 = vrot.slane %v3928, 4
  %v4408 = vsel %vm2162, %v4405, %v4407
  %v4409 = vrot.slane %v3929, 4
  %v4410 = vsel %vm2162, %v4407, %v4409
  %v4411 = vrot.slane %v3930, 4
  %v4412 = vsel %vm2162, %v4409, %v4411
  %v4413 = vrot.slane %v3931, 4
  %v4414 = vsel %vm2162, %v4411, %v4413
  %v4415 = vrot.slane %v3932, 4
  %v4416 = vsel %vm2162, %v4413, %v4415
  %v4417 = vrot.slane %v3933, 4
  %v4418 = vsel %vm2162, %v4415, %v4417
  %v4419 = vrot.slane %v3934, 4
  %v4420 = vsel %vm2162, %v4417, %v4419
  %v4421 = vrot.slane %v3935, 4
  %v4422 = vsel %vm2162, %v4419, %v4421
  %v4423 = vrot.slane %v3936, 4
  %v4424 = vsel %vm2162, %v4421, %v4423
  %v4425 = vrot.slane %v3937, 4
  %v4426 = vsel %vm2162, %v4423, %v4425
  %v4427 = vrot.slane %v3938, 4
  %v4428 = vsel %vm2162, %v4425, %v4427
  %v4429 = vrot.slane %v3939, 4
  %v4430 = vsel %vm2162, %v4427, %v4429
  %v4431 = vrot.slane %v3940, 4
  %v4432 = vsel %vm2162, %v4429, %v4431
  %v4433 = vrot.slane %v3941, 4
  %v4434 = vsel %vm2162, %v4431, %v4433
  %v4435 = vrot.slane %v3942, 4
  %v4436 = vsel %vm2162, %v4433, %v4435
  %v4469 = vunpack.c.l.b16 %v4371
  %v4470 = vunpack.c.l.b16 %v4372
  %v4471 = vunpack.c.l.b16 %v4373
  %v4472 = vunpack.c.l.b16 %v4374
  %v4473 = vunpack.c.l.b16 %v4375
  %v4474 = vunpack.c.l.b16 %v4376
  %v4475 = vunpack.c.l.b16 %v4377
  %v4476 = vunpack.c.l.b16 %v4378
  %v4477 = vunpack.c.l.b16 %v4379
  %v4478 = vunpack.c.l.b16 %v4380
  %v4479 = vunpack.c.l.b16 %v4381
  %v4480 = vunpack.c.l.b16 %v4382
  %v4481 = vunpack.c.l.b16 %v4383
  %v4482 = vunpack.c.l.b16 %v4384
  %v4483 = vunpack.c.l.b16 %v4385
  %v4484 = vunpack.c.l.b16 %v4386
  %v4485 = vpack.c.b16 %v4470, %v4469
  %v4486 = vpack.c.b16 %v4472, %v4471
  %v4487 = vpack.c.b16 %v4474, %v4473
  %v4488 = vpack.c.b16 %v4476, %v4475
  %v4489 = vpack.c.b16 %v4478, %v4477
  %v4490 = vpack.c.b16 %v4480, %v4479
  %v4491 = vpack.c.b16 %v4482, %v4481
  %v4492 = vpack.c.b16 %v4484, %v4483
  %4501 = vmatprep.subr.bf16.mxu0 0
  %4502 = vmatpush1.bf16.msra.mxu0 %v4485
  %4503 = vmatprep.subr.bf16.mxu0 0
  %4504 = vmatpush1.bf16.msra.mxu0 %v4486
  %4505 = vmatprep.subr.bf16.mxu0 0
  %4506 = vmatpush1.bf16.msra.mxu0 %v4487
  %4507 = vmatprep.subr.bf16.mxu0 0
  %4508 = vmatpush1.bf16.msra.mxu0 %v4488
  %4509 = vmatprep.subr.bf16.mxu0 0
  %4510 = vmatpush1.bf16.msra.mxu0 %v4489
  %4511 = vmatprep.subr.bf16.mxu0 0
  %4512 = vmatpush1.bf16.msra.mxu0 %v4490
  %4513 = vmatprep.subr.bf16.mxu0 0
  %4514 = vmatpush1.bf16.msra.mxu0 %v4491
  %4515 = vmatprep.subr.bf16.mxu0 0
  %4516 = vmatpush1.bf16.msra.mxu0 %v4492
  %4517 = vmatprep.subr.bf16.mxu0 0
  %4518 = vmatpush1.bf16.msra.mxu0 0
  %4519 = vmatprep.subr.bf16.mxu0 0
  %4520 = vmatpush1.bf16.msra.mxu0 0
  %4521 = vmatprep.subr.bf16.mxu0 0
  %4522 = vmatpush1.bf16.msra.mxu0 0
  %4523 = vmatprep.subr.bf16.mxu0 0
  %4524 = vmatpush1.bf16.msra.mxu0 0
  %4525 = vmatprep.subr.bf16.mxu0 0
  %4526 = vmatpush1.bf16.msra.mxu0 0
  %4527 = vmatprep.subr.bf16.mxu0 0
  %4528 = vmatpush1.bf16.msra.mxu0 0
  %4529 = vmatprep.subr.bf16.mxu0 0
  %4530 = vmatpush1.bf16.msra.mxu0 0
  %4531 = vmatprep.subr.bf16.mxu0 0
  %4532 = vmatpush1.bf16.msra.mxu0 0
  %4533 = vmatprep.mubr.bf16.mxu0 0
  %4534 = vmatmul.mubr.bf16.gmra.mrb[0].mxu0 %v4406
  %v4535 = vpop.f32.mrb[0].mxu0
  %v4536 = vadd.f32 0.0, %v4535
  %v4537 = vpop.f32.mrb[0].mxu0
  %v4538 = vpop.f32.mrb[0].mxu0
  %v4539 = vadd.f32 0.0, %v4538
  %v4540 = vpop.f32.mrb[0].mxu0
  %4541 = vmatprep.mubr.bf16.mxu0 0
  %4542 = vmatmul.mubr.bf16.gmra.mrb[0].mxu0 %v4408
  %v4543 = vpop.f32.mrb[0].mxu0
  %v4544 = vadd.f32 0.0, %v4543
  %v4545 = vpop.f32.mrb[0].mxu0
  %v4546 = vpop.f32.mrb[0].mxu0
  %v4547 = vadd.f32 0.0, %v4546
  %v4548 = vpop.f32.mrb[0].mxu0
  %4549 = vmatprep.mubr.bf16.mxu0 0
  %4550 = vmatmul.mubr.bf16.gmra.mrb[0].mxu0 %v4410
  %v4551 = vpop.f32.mrb[0].mxu0
  %v4552 = vadd.f32 0.0, %v4551
  %v4553 = vpop.f32.mrb[0].mxu0
  %v4554 = vpop.f32.mrb[0].mxu0
  %v4555 = vadd.f32 0.0, %v4554
  %v4556 = vpop.f32.mrb[0].mxu0
  %4557 = vmatprep.mubr.bf16.mxu0 0
  %4558 = vmatmul.mubr.bf16.gmra.mrb[0].mxu0 %v4412
  %v4559 = vpop.f32.mrb[0].mxu0
  %v4560 = vadd.f32 0.0, %v4559
  %v4561 = vpop.f32.mrb[0].mxu0
  %v4562 = vpop.f32.mrb[0].mxu0
  %v4563 = vadd.f32 0.0, %v4562
  %v4564 = vpop.f32.mrb[0].mxu0
  %4565 = vmatprep.mubr.bf16.mxu0 0
  %4566 = vmatmul.mubr.bf16.gmra.mrb[0].mxu0 %v4414
  %v4567 = vpop.f32.mrb[0].mxu0
  %v4568 = vadd.f32 0.0, %v4567
  %v4569 = vpop.f32.mrb[0].mxu0
  %v4570 = vpop.f32.mrb[0].mxu0
  %v4571 = vadd.f32 0.0, %v4570
  %v4572 = vpop.f32.mrb[0].mxu0
  %4573 = vmatprep.mubr.bf16.mxu0 0
  %4574 = vmatmul.mubr.bf16.gmra.mrb[0].mxu0 %v4416
  %v4575 = vpop.f32.mrb[0].mxu0
  %v4576 = vadd.f32 0.0, %v4575
  %v4577 = vpop.f32.mrb[0].mxu0
  %v4578 = vpop.f32.mrb[0].mxu0
  %v4579 = vadd.f32 0.0, %v4578
  %v4580 = vpop.f32.mrb[0].mxu0
  %4581 = vmatprep.mubr.bf16.mxu0 0
  %4582 = vmatmul.mubr.bf16.gmra.mrb[0].mxu0 %v4418
  %v4583 = vpop.f32.mrb[0].mxu0
  %v4584 = vadd.f32 0.0, %v4583
  %v4585 = vpop.f32.mrb[0].mxu0
  %v4586 = vpop.f32.mrb[0].mxu0
  %v4587 = vadd.f32 0.0, %v4586
  %v4588 = vpop.f32.mrb[0].mxu0
  %4589 = vmatprep.mubr.bf16.mxu0 0
  %4590 = vmatmul.mubr.bf16.gmra.mrb[0].mxu0 %v4420
  %v4591 = vpop.f32.mrb[0].mxu0
  %v4592 = vadd.f32 0.0, %v4591
  %v4593 = vpop.f32.mrb[0].mxu0
  %v4594 = vpop.f32.mrb[0].mxu0
  %v4595 = vadd.f32 0.0, %v4594
  %v4596 = vpop.f32.mrb[0].mxu0
  %4597 = vmatprep.mubr.bf16.mxu0 0
  %4598 = vmatmul.mubr.bf16.gmra.mrb[0].mxu0 %v4422
  %v4599 = vpop.f32.mrb[0].mxu0
  %v4600 = vadd.f32 0.0, %v4599
  %v4601 = vpop.f32.mrb[0].mxu0
  %v4602 = vpop.f32.mrb[0].mxu0
  %v4603 = vadd.f32 0.0, %v4602
  %v4604 = vpop.f32.mrb[0].mxu0
  %4605 = vmatprep.mubr.bf16.mxu0 0
  %4606 = vmatmul.mubr.bf16.gmra.mrb[0].mxu0 %v4424
  %v4607 = vpop.f32.mrb[0].mxu0
  %v4608 = vadd.f32 0.0, %v4607
  %v4609 = vpop.f32.mrb[0].mxu0
  %v4610 = vpop.f32.mrb[0].mxu0
  %v4611 = vadd.f32 0.0, %v4610
  %v4612 = vpop.f32.mrb[0].mxu0
  %4613 = vmatprep.mubr.bf16.mxu0 0
  %4614 = vmatmul.mubr.bf16.gmra.mrb[0].mxu0 %v4426
  %v4615 = vpop.f32.mrb[0].mxu0
  %v4616 = vadd.f32 0.0, %v4615
  %v4617 = vpop.f32.mrb[0].mxu0
  %v4618 = vpop.f32.mrb[0].mxu0
  %v4619 = vadd.f32 0.0, %v4618
  %v4620 = vpop.f32.mrb[0].mxu0
  %4621 = vmatprep.mubr.bf16.mxu0 0
  %4622 = vmatmul.mubr.bf16.gmra.mrb[0].mxu0 %v4428
  %v4623 = vpop.f32.mrb[0].mxu0
  %v4624 = vadd.f32 0.0, %v4623
  %v4625 = vpop.f32.mrb[0].mxu0
  %v4626 = vpop.f32.mrb[0].mxu0
  %v4627 = vadd.f32 0.0, %v4626
  %v4628 = vpop.f32.mrb[0].mxu0
  %4629 = vmatprep.mubr.bf16.mxu0 0
  %4630 = vmatmul.mubr.bf16.gmra.mrb[0].mxu0 %v4430
  %v4631 = vpop.f32.mrb[0].mxu0
  %v4632 = vadd.f32 0.0, %v4631
  %v4633 = vpop.f32.mrb[0].mxu0
  %v4634 = vpop.f32.mrb[0].mxu0
  %v4635 = vadd.f32 0.0, %v4634
  %v4636 = vpop.f32.mrb[0].mxu0
  %4637 = vmatprep.mubr.bf16.mxu0 0
  %4638 = vmatmul.mubr.bf16.gmra.mrb[0].mxu0 %v4432
  %v4639 = vpop.f32.mrb[0].mxu0
  %v4640 = vadd.f32 0.0, %v4639
  %v4641 = vpop.f32.mrb[0].mxu0
  %v4642 = vpop.f32.mrb[0].mxu0
  %v4643 = vadd.f32 0.0, %v4642
  %v4644 = vpop.f32.mrb[0].mxu0
  %4645 = vmatprep.mubr.bf16.mxu0 0
  %4646 = vmatmul.mubr.bf16.gmra.mrb[0].mxu0 %v4434
  %v4647 = vpop.f32.mrb[0].mxu0
  %v4648 = vadd.f32 0.0, %v4647
  %v4649 = vpop.f32.mrb[0].mxu0
  %v4650 = vpop.f32.mrb[0].mxu0
  %v4651 = vadd.f32 0.0, %v4650
  %v4652 = vpop.f32.mrb[0].mxu0
  %4653 = vmatprep.mubr.bf16.mxu0 0
  %4654 = vmatmul.mubr.bf16.gmra.mrb[0].mxu0 %v4436
  %v4655 = vpop.f32.mrb[0].mxu0
  %v4656 = vadd.f32 0.0, %v4655
  %v4657 = vpop.f32.mrb[0].mxu0
  %v4658 = vpop.f32.mrb[0].mxu0
  %v4659 = vadd.f32 0.0, %v4658
  %v4660 = vpop.f32.mrb[0].mxu0
  %4661 = vdwg.mxu0
  %v4662 = vadd.f32 %v4337, %v4536
  %v4663 = vadd.f32 %v4338, %v4539
  %v4664 = vadd.f32 %v4339, %v4544
  %v4665 = vadd.f32 %v4340, %v4547
  %v4666 = vadd.f32 %v4341, %v4552
  %v4667 = vadd.f32 %v4342, %v4555
  %v4668 = vadd.f32 %v4343, %v4560
  %v4669 = vadd.f32 %v4344, %v4563
  %v4670 = vadd.f32 %v4345, %v4568
  %v4671 = vadd.f32 %v4346, %v4571
  %v4672 = vadd.f32 %v4347, %v4576
  %v4673 = vadd.f32 %v4348, %v4579
  %v4674 = vadd.f32 %v4349, %v4584
  %v4675 = vadd.f32 %v4350, %v4587
  %v4676 = vadd.f32 %v4351, %v4592
  %v4677 = vadd.f32 %v4352, %v4595
  %v4678 = vadd.f32 %v4353, %v4600
  %v4679 = vadd.f32 %v4354, %v4603
  %v4680 = vadd.f32 %v4355, %v4608
  %v4681 = vadd.f32 %v4356, %v4611
  %v4682 = vadd.f32 %v4357, %v4616
  %v4683 = vadd.f32 %v4358, %v4619
  %v4684 = vadd.f32 %v4359, %v4624
  %v4685 = vadd.f32 %v4360, %v4627
  %v4686 = vadd.f32 %v4361, %v4632
  %v4687 = vadd.f32 %v4362, %v4635
  %v4688 = vadd.f32 %v4363, %v4640
  %v4689 = vadd.f32 %v4364, %v4643
  %v4690 = vadd.f32 %v4365, %v4648
  %v4691 = vadd.f32 %v4366, %v4651
  %v4692 = vadd.f32 %v4367, %v4656
  %v4693 = vadd.f32 %v4368, %v4659
  %v4694 = vld [vmem:[#allocation2 + $0x90] sm:$0x1f]
  %s4695 = scalar_lea.vmem %s3, 512
  %v4696 = vld [vmem:[%s4695] sm:$0xf]
  %v4697 = vld [vmem:[%s4695 + $0x4] sm:$0xf]
  %v4698 = vld [vmem:[%s4695 + $0x8] sm:$0xf]
  %v4699 = vld [vmem:[%s4695 + $0xc] sm:$0xf]
  %v4700 = vld [vmem:[%s4695 + $0x10] sm:$0xf]
  %v4701 = vld [vmem:[%s4695 + $0x14] sm:$0xf]
  %v4702 = vld [vmem:[%s4695 + $0x18] sm:$0xf]
  %v4703 = vld [vmem:[%s4695 + $0x1c] sm:$0xf]
  %v4704 = vld [vmem:[%s4695 + $0x20] sm:$0xf]
  %v4705 = vld [vmem:[%s4695 + $0x24] sm:$0xf]
  %v4706 = vld [vmem:[%s4695 + $0x28] sm:$0xf]
  %v4707 = vld [vmem:[%s4695 + $0x2c] sm:$0xf]
  %v4708 = vld [vmem:[%s4695 + $0x30] sm:$0xf]
  %v4709 = vld [vmem:[%s4695 + $0x34] sm:$0xf]
  %v4710 = vld [vmem:[%s4695 + $0x38] sm:$0xf]
  %v4711 = vld [vmem:[%s4695 + $0x3c] sm:$0xf]
  %v4713 = vshrl.u32 %v4369, 16
  %v4715 = vrot.slane %v4713, 4
  %v4716 = vshll.u32 %v4369, 16
  %v4718 = vrot.slane %v4716, 5
  %v4719 = vor.u32 %v4715, %v4718
  %v4720 = vrot.slane %v3969, 4
  %v4721 = vrot.slane %v3972, 5
  %v4722 = vor.u32 %v4720, %v4721
  %v4723 = vsel %vm2471, %v4719, %v4722
  %v4724 = vrot.slane %v3978, 4
  %v4725 = vrot.slane %v3981, 5
  %v4726 = vor.u32 %v4724, %v4725
  %v4727 = vsel %vm2471, %v4722, %v4726
  %v4728 = vrot.slane %v3987, 4
  %v4729 = vrot.slane %v3990, 5
  %v4730 = vor.u32 %v4728, %v4729
  %v4731 = vsel %vm2471, %v4726, %v4730
  %v4732 = vrot.slane %v3996, 4
  %v4733 = vrot.slane %v3999, 5
  %v4734 = vor.u32 %v4732, %v4733
  %v4735 = vsel %vm2471, %v4730, %v4734
  %v4736 = vrot.slane %v4005, 4
  %v4737 = vrot.slane %v4008, 5
  %v4738 = vor.u32 %v4736, %v4737
  %v4739 = vsel %vm2471, %v4734, %v4738
  %v4740 = vrot.slane %v4014, 4
  %v4741 = vrot.slane %v4017, 5
  %v4742 = vor.u32 %v4740, %v4741
  %v4743 = vsel %vm2471, %v4738, %v4742
  %v4744 = vrot.slane %v4023, 4
  %v4745 = vrot.slane %v4026, 5
  %v4746 = vor.u32 %v4744, %v4745
  %v4747 = vsel %vm2471, %v4742, %v4746
  %v4748 = vrot.slane %v4032, 4
  %v4749 = vrot.slane %v4035, 5
  %v4750 = vor.u32 %v4748, %v4749
  %v4751 = vsel %vm2471, %v4746, %v4750
  %v4752 = vrot.slane %v4041, 4
  %v4753 = vrot.slane %v4044, 5
  %v4754 = vor.u32 %v4752, %v4753
  %v4755 = vsel %vm2471, %v4750, %v4754
  %v4756 = vrot.slane %v4050, 4
  %v4757 = vrot.slane %v4053, 5
  %v4758 = vor.u32 %v4756, %v4757
  %v4759 = vsel %vm2471, %v4754, %v4758
  %v4760 = vrot.slane %v4059, 4
  %v4761 = vrot.slane %v4062, 5
  %v4762 = vor.u32 %v4760, %v4761
  %v4763 = vsel %vm2471, %v4758, %v4762
  %v4764 = vrot.slane %v4068, 4
  %v4765 = vrot.slane %v4071, 5
  %v4766 = vor.u32 %v4764, %v4765
  %v4767 = vsel %vm2471, %v4762, %v4766
  %v4768 = vrot.slane %v4077, 4
  %v4769 = vrot.slane %v4080, 5
  %v4770 = vor.u32 %v4768, %v4769
  %v4771 = vsel %vm2471, %v4766, %v4770
  %v4772 = vrot.slane %v4086, 4
  %v4773 = vrot.slane %v4089, 5
  %v4774 = vor.u32 %v4772, %v4773
  %v4775 = vsel %vm2471, %v4770, %v4774
  %v4776 = vrot.slane %v4095, 4
  %v4777 = vrot.slane %v4098, 5
  %v4778 = vor.u32 %v4776, %v4777
  %v4779 = vsel %vm2471, %v4774, %v4778
  %v4781 = vshrl.u32 %v4694, 16
  %v4783 = vrot.slane %v4781, 4
  %v4784 = vshll.u32 %v4694, 16
  %v4786 = vrot.slane %v4784, 5
  %v4787 = vor.u32 %v4783, %v4786
  %v4788 = vsel %vm2471, %v4778, %v4787
  %v4821 = vunpack.c.l.b16 %v4696
  %v4822 = vunpack.c.l.b16 %v4697
  %v4823 = vunpack.c.l.b16 %v4698
  %v4824 = vunpack.c.l.b16 %v4699
  %v4825 = vunpack.c.l.b16 %v4700
  %v4826 = vunpack.c.l.b16 %v4701
  %v4827 = vunpack.c.l.b16 %v4702
  %v4828 = vunpack.c.l.b16 %v4703
  %v4829 = vunpack.c.l.b16 %v4704
  %v4830 = vunpack.c.l.b16 %v4705
  %v4831 = vunpack.c.l.b16 %v4706
  %v4832 = vunpack.c.l.b16 %v4707
  %v4833 = vunpack.c.l.b16 %v4708
  %v4834 = vunpack.c.l.b16 %v4709
  %v4835 = vunpack.c.l.b16 %v4710
  %v4836 = vunpack.c.l.b16 %v4711
  %v4837 = vpack.c.b16 %v4822, %v4821
  %v4838 = vpack.c.b16 %v4824, %v4823
  %v4839 = vpack.c.b16 %v4826, %v4825
  %v4840 = vpack.c.b16 %v4828, %v4827
  %v4841 = vpack.c.b16 %v4830, %v4829
  %v4842 = vpack.c.b16 %v4832, %v4831
  %v4843 = vpack.c.b16 %v4834, %v4833
  %v4844 = vpack.c.b16 %v4836, %v4835
  %4853 = vmatprep.subr.bf16.mxu0 0
  %4854 = vmatpush1.bf16.msra.mxu0 %v4837
  %4855 = vmatprep.subr.bf16.mxu0 0
  %4856 = vmatpush1.bf16.msra.mxu0 %v4838
  %4857 = vmatprep.subr.bf16.mxu0 0
  %4858 = vmatpush1.bf16.msra.mxu0 %v4839
  %4859 = vmatprep.subr.bf16.mxu0 0
  %4860 = vmatpush1.bf16.msra.mxu0 %v4840
  %4861 = vmatprep.subr.bf16.mxu0 0
  %4862 = vmatpush1.bf16.msra.mxu0 %v4841
  %4863 = vmatprep.subr.bf16.mxu0 0
  %4864 = vmatpush1.bf16.msra.mxu0 %v4842
  %4865 = vmatprep.subr.bf16.mxu0 0
  %4866 = vmatpush1.bf16.msra.mxu0 %v4843
  %4867 = vmatprep.subr.bf16.mxu0 0
  %4868 = vmatpush1.bf16.msra.mxu0 %v4844
  %4869 = vmatprep.subr.bf16.mxu0 0
  %4870 = vmatpush1.bf16.msra.mxu0 0
  %4871 = vmatprep.subr.bf16.mxu0 0
  %4872 = vmatpush1.bf16.msra.mxu0 0
  %4873 = vmatprep.subr.bf16.mxu0 0
  %4874 = vmatpush1.bf16.msra.mxu0 0
  %4875 = vmatprep.subr.bf16.mxu0 0
  %4876 = vmatpush1.bf16.msra.mxu0 0
  %4877 = vmatprep.subr.bf16.mxu0 0
  %4878 = vmatpush1.bf16.msra.mxu0 0
  %4879 = vmatprep.subr.bf16.mxu0 0
  %4880 = vmatpush1.bf16.msra.mxu0 0
  %4881 = vmatprep.subr.bf16.mxu0 0
  %4882 = vmatpush1.bf16.msra.mxu0 0
  %4883 = vmatprep.subr.bf16.mxu0 0
  %4884 = vmatpush1.bf16.msra.mxu0 0
  %4885 = vmatprep.mubr.bf16.mxu0 0
  %4886 = vmatmul.mubr.bf16.gmra.mrb[0].mxu0 %v4723
  %v4887 = vpop.f32.mrb[0].mxu0
  %v4888 = vadd.f32 0.0, %v4887
  %v4889 = vpop.f32.mrb[0].mxu0
  %v4890 = vpop.f32.mrb[0].mxu0
  %v4891 = vadd.f32 0.0, %v4890
  %v4892 = vpop.f32.mrb[0].mxu0
  %4893 = vmatprep.mubr.bf16.mxu0 0
  %4894 = vmatmul.mubr.bf16.gmra.mrb[0].mxu0 %v4727
  %v4895 = vpop.f32.mrb[0].mxu0
  %v4896 = vadd.f32 0.0, %v4895
  %v4897 = vpop.f32.mrb[0].mxu0
  %v4898 = vpop.f32.mrb[0].mxu0
  %v4899 = vadd.f32 0.0, %v4898
  %v4900 = vpop.f32.mrb[0].mxu0
  %4901 = vmatprep.mubr.bf16.mxu0 0
  %4902 = vmatmul.mubr.bf16.gmra.mrb[0].mxu0 %v4731
  %v4903 = vpop.f32.mrb[0].mxu0
  %v4904 = vadd.f32 0.0, %v4903
  %v4905 = vpop.f32.mrb[0].mxu0
  %v4906 = vpop.f32.mrb[0].mxu0
  %v4907 = vadd.f32 0.0, %v4906
  %v4908 = vpop.f32.mrb[0].mxu0
  %4909 = vmatprep.mubr.bf16.mxu0 0
  %4910 = vmatmul.mubr.bf16.gmra.mrb[0].mxu0 %v4735
  %v4911 = vpop.f32.mrb[0].mxu0
  %v4912 = vadd.f32 0.0, %v4911
  %v4913 = vpop.f32.mrb[0].mxu0
  %v4914 = vpop.f32.mrb[0].mxu0
  %v4915 = vadd.f32 0.0, %v4914
  %v4916 = vpop.f32.mrb[0].mxu0
  %4917 = vmatprep.mubr.bf16.mxu0 0
  %4918 = vmatmul.mubr.bf16.gmra.mrb[0].mxu0 %v4739
  %v4919 = vpop.f32.mrb[0].mxu0
  %v4920 = vadd.f32 0.0, %v4919
  %v4921 = vpop.f32.mrb[0].mxu0
  %v4922 = vpop.f32.mrb[0].mxu0
  %v4923 = vadd.f32 0.0, %v4922
  %v4924 = vpop.f32.mrb[0].mxu0
  %4925 = vmatprep.mubr.bf16.mxu0 0
  %4926 = vmatmul.mubr.bf16.gmra.mrb[0].mxu0 %v4743
  %v4927 = vpop.f32.mrb[0].mxu0
  %v4928 = vadd.f32 0.0, %v4927
  %v4929 = vpop.f32.mrb[0].mxu0
  %v4930 = vpop.f32.mrb[0].mxu0
  %v4931 = vadd.f32 0.0, %v4930
  %v4932 = vpop.f32.mrb[0].mxu0
  %4933 = vmatprep.mubr.bf16.mxu0 0
  %4934 = vmatmul.mubr.bf16.gmra.mrb[0].mxu0 %v4747
  %v4935 = vpop.f32.mrb[0].mxu0
  %v4936 = vadd.f32 0.0, %v4935
  %v4937 = vpop.f32.mrb[0].mxu0
  %v4938 = vpop.f32.mrb[0].mxu0
  %v4939 = vadd.f32 0.0, %v4938
  %v4940 = vpop.f32.mrb[0].mxu0
  %4941 = vmatprep.mubr.bf16.mxu0 0
  %4942 = vmatmul.mubr.bf16.gmra.mrb[0].mxu0 %v4751
  %v4943 = vpop.f32.mrb[0].mxu0
  %v4944 = vadd.f32 0.0, %v4943
  %v4945 = vpop.f32.mrb[0].mxu0
  %v4946 = vpop.f32.mrb[0].mxu0
  %v4947 = vadd.f32 0.0, %v4946
  %v4948 = vpop.f32.mrb[0].mxu0
  %4949 = vmatprep.mubr.bf16.mxu0 0
  %4950 = vmatmul.mubr.bf16.gmra.mrb[0].mxu0 %v4755
  %v4951 = vpop.f32.mrb[0].mxu0
  %v4952 = vadd.f32 0.0, %v4951
  %v4953 = vpop.f32.mrb[0].mxu0
  %v4954 = vpop.f32.mrb[0].mxu0
  %v4955 = vadd.f32 0.0, %v4954
  %v4956 = vpop.f32.mrb[0].mxu0
  %4957 = vmatprep.mubr.bf16.mxu0 0
  %4958 = vmatmul.mubr.bf16.gmra.mrb[0].mxu0 %v4759
  %v4959 = vpop.f32.mrb[0].mxu0
  %v4960 = vadd.f32 0.0, %v4959
  %v4961 = vpop.f32.mrb[0].mxu0
  %v4962 = vpop.f32.mrb[0].mxu0
  %v4963 = vadd.f32 0.0, %v4962
  %v4964 = vpop.f32.mrb[0].mxu0
  %4965 = vmatprep.mubr.bf16.mxu0 0
  %4966 = vmatmul.mubr.bf16.gmra.mrb[0].mxu0 %v4763
  %v4967 = vpop.f32.mrb[0].mxu0
  %v4968 = vadd.f32 0.0, %v4967
  %v4969 = vpop.f32.mrb[0].mxu0
  %v4970 = vpop.f32.mrb[0].mxu0
  %v4971 = vadd.f32 0.0, %v4970
  %v4972 = vpop.f32.mrb[0].mxu0
  %4973 = vmatprep.mubr.bf16.mxu0 0
  %4974 = vmatmul.mubr.bf16.gmra.mrb[0].mxu0 %v4767
  %v4975 = vpop.f32.mrb[0].mxu0
  %v4976 = vadd.f32 0.0, %v4975
  %v4977 = vpop.f32.mrb[0].mxu0
  %v4978 = vpop.f32.mrb[0].mxu0
  %v4979 = vadd.f32 0.0, %v4978
  %v4980 = vpop.f32.mrb[0].mxu0
  %4981 = vmatprep.mubr.bf16.mxu0 0
  %4982 = vmatmul.mubr.bf16.gmra.mrb[0].mxu0 %v4771
  %v4983 = vpop.f32.mrb[0].mxu0
  %v4984 = vadd.f32 0.0, %v4983
  %v4985 = vpop.f32.mrb[0].mxu0
  %v4986 = vpop.f32.mrb[0].mxu0
  %v4987 = vadd.f32 0.0, %v4986
  %v4988 = vpop.f32.mrb[0].mxu0
  %4989 = vmatprep.mubr.bf16.mxu0 0
  %4990 = vmatmul.mubr.bf16.gmra.mrb[0].mxu0 %v4775
  %v4991 = vpop.f32.mrb[0].mxu0
  %v4992 = vadd.f32 0.0, %v4991
  %v4993 = vpop.f32.mrb[0].mxu0
  %v4994 = vpop.f32.mrb[0].mxu0
  %v4995 = vadd.f32 0.0, %v4994
  %v4996 = vpop.f32.mrb[0].mxu0
  %4997 = vmatprep.mubr.bf16.mxu0 0
  %4998 = vmatmul.mubr.bf16.gmra.mrb[0].mxu0 %v4779
  %v4999 = vpop.f32.mrb[0].mxu0
  %v5000 = vadd.f32 0.0, %v4999
  %v5001 = vpop.f32.mrb[0].mxu0
  %v5002 = vpop.f32.mrb[0].mxu0
  %v5003 = vadd.f32 0.0, %v5002
  %v5004 = vpop.f32.mrb[0].mxu0
  %5005 = vmatprep.mubr.bf16.mxu0 0
  %5006 = vmatmul.mubr.bf16.gmra.mrb[0].mxu0 %v4788
  %v5007 = vpop.f32.mrb[0].mxu0
  %v5008 = vadd.f32 0.0, %v5007
  %v5009 = vpop.f32.mrb[0].mxu0
  %v5010 = vpop.f32.mrb[0].mxu0
  %v5011 = vadd.f32 0.0, %v5010
  %v5012 = vpop.f32.mrb[0].mxu0
  %5013 = vdwg.mxu0
  %v5014 = vadd.f32 %v4662, %v4888
  %v5015 = vadd.f32 %v4663, %v4891
  %v5016 = vadd.f32 %v4664, %v4896
  %v5017 = vadd.f32 %v4665, %v4899
  %v5018 = vadd.f32 %v4666, %v4904
  %v5019 = vadd.f32 %v4667, %v4907
  %v5020 = vadd.f32 %v4668, %v4912
  %v5021 = vadd.f32 %v4669, %v4915
  %v5022 = vadd.f32 %v4670, %v4920
  %v5023 = vadd.f32 %v4671, %v4923
  %v5024 = vadd.f32 %v4672, %v4928
  %v5025 = vadd.f32 %v4673, %v4931
  %v5026 = vadd.f32 %v4674, %v4936
  %v5027 = vadd.f32 %v4675, %v4939
  %v5028 = vadd.f32 %v4676, %v4944
  %v5029 = vadd.f32 %v4677, %v4947
  %v5030 = vadd.f32 %v4678, %v4952
  %v5031 = vadd.f32 %v4679, %v4955
  %v5032 = vadd.f32 %v4680, %v4960
  %v5033 = vadd.f32 %v4681, %v4963
  %v5034 = vadd.f32 %v4682, %v4968
  %v5035 = vadd.f32 %v4683, %v4971
  %v5036 = vadd.f32 %v4684, %v4976
  %v5037 = vadd.f32 %v4685, %v4979
  %v5038 = vadd.f32 %v4686, %v4984
  %v5039 = vadd.f32 %v4687, %v4987
  %v5040 = vadd.f32 %v4688, %v4992
  %v5041 = vadd.f32 %v4689, %v4995
  %v5042 = vadd.f32 %v4690, %v5000
  %v5043 = vadd.f32 %v4691, %v5003
  %v5044 = vadd.f32 %v4692, %v5008
  %v5045 = vadd.f32 %v4693, %v5011
  %v5046 = vtanh.pop %v5014
  %v5047 = vtanh.pop %v5015
  %v5048 = vtanh.pop %v5016
  %v5049 = vtanh.pop %v5017
  %v5050 = vtanh.pop %v5018
  %v5051 = vtanh.pop %v5019
  %v5052 = vtanh.pop %v5020
  %v5053 = vtanh.pop %v5021
  %v5054 = vtanh.pop %v5022
  %v5055 = vtanh.pop %v5023
  %v5056 = vtanh.pop %v5024
  %v5057 = vtanh.pop %v5025
  %v5058 = vtanh.pop %v5026
  %v5059 = vtanh.pop %v5027
  %v5060 = vtanh.pop %v5028
  %v5061 = vtanh.pop %v5029
  %v5062 = vtanh.pop %v5030
  %v5063 = vtanh.pop %v5031
  %v5064 = vtanh.pop %v5032
  %v5065 = vtanh.pop %v5033
  %v5066 = vtanh.pop %v5034
  %v5067 = vtanh.pop %v5035
  %v5068 = vtanh.pop %v5036
  %v5069 = vtanh.pop %v5037
  %v5070 = vtanh.pop %v5038
  %v5071 = vtanh.pop %v5039
  %v5072 = vtanh.pop %v5040
  %v5073 = vtanh.pop %v5041
  %v5074 = vtanh.pop %v5042
  %v5075 = vtanh.pop %v5043
  %v5076 = vtanh.pop %v5044
  %v5077 = vtanh.pop %v5045
  %5078 = vst [vmem:[#allocation4] sm:$0xff] %v5046
  %5079 = vst [vmem:[#allocation4 + $0x8] sm:$0xff] %v5047
  %5080 = vst [vmem:[#allocation4 + $0x10] sm:$0xff] %v5048
  %5081 = vst [vmem:[#allocation4 + $0x18] sm:$0xff] %v5049
  %5082 = vst [vmem:[#allocation4 + $0x20] sm:$0xff] %v5050
  %5083 = vst [vmem:[#allocation4 + $0x28] sm:$0xff] %v5051
  %5084 = vst [vmem:[#allocation4 + $0x30] sm:$0xff] %v5052
  %5085 = vst [vmem:[#allocation4 + $0x38] sm:$0xff] %v5053
  %5086 = vst [vmem:[#allocation4 + $0x40] sm:$0xff] %v5054
  %5087 = vst [vmem:[#allocation4 + $0x48] sm:$0xff] %v5055
  %5088 = vst [vmem:[#allocation4 + $0x50] sm:$0xff] %v5056
  %5089 = vst [vmem:[#allocation4 + $0x58] sm:$0xff] %v5057
  %5090 = vst [vmem:[#allocation4 + $0x60] sm:$0xff] %v5058
  %5091 = vst [vmem:[#allocation4 + $0x68] sm:$0xff] %v5059
  %5092 = vst [vmem:[#allocation4 + $0x70] sm:$0xff] %v5060
  %5093 = vst [vmem:[#allocation4 + $0x78] sm:$0xff] %v5061
  %5094 = vst [vmem:[#allocation4 + $0x80] sm:$0xff] %v5062
  %5095 = vst [vmem:[#allocation4 + $0x88] sm:$0xff] %v5063
  %5096 = vst [vmem:[#allocation4 + $0x90] sm:$0xff] %v5064
  %5097 = vst [vmem:[#allocation4 + $0x98] sm:$0xff] %v5065
  %5098 = vst [vmem:[#allocation4 + $0xa0] sm:$0xff] %v5066
  %5099 = vst [vmem:[#allocation4 + $0xa8] sm:$0xff] %v5067
  %5100 = vst [vmem:[#allocation4 + $0xb0] sm:$0xff] %v5068
  %5101 = vst [vmem:[#allocation4 + $0xb8] sm:$0xff] %v5069
  %5102 = vst [vmem:[#allocation4 + $0xc0] sm:$0xff] %v5070
  %5103 = vst [vmem:[#allocation4 + $0xc8] sm:$0xff] %v5071
  %5104 = vst [vmem:[#allocation4 + $0xd0] sm:$0xff] %v5072
  %5105 = vst [vmem:[#allocation4 + $0xd8] sm:$0xff] %v5073
  %5106 = vst [vmem:[#allocation4 + $0xe0] sm:$0xff] %v5074
  %5107 = vst [vmem:[#allocation4 + $0xe8] sm:$0xff] %v5075
  %5108 = vst [vmem:[#allocation4 + $0xf0] sm:$0xff] %v5076
  %5109 = vst [vmem:[#allocation4 + $0xf8] sm:$0xff] %v5077
  %v5110 = vld [vmem:[#allocation4] ss:$2 sm:$0xff]
  %s5111 = scalar_lea.vmem [#allocation4], 16
  %v5112 = vld [vmem:[%s5111] ss:$2 sm:$0xff]
  %s5113 = scalar_lea.vmem [#allocation4], 32
  %v5114 = vld [vmem:[%s5113] ss:$2 sm:$0xff]
  %s5115 = scalar_lea.vmem [#allocation4], 48
  %v5116 = vld [vmem:[%s5115] ss:$2 sm:$0xff]
  %s5117 = scalar_lea.vmem [#allocation4], 64
  %v5118 = vld [vmem:[%s5117] ss:$2 sm:$0xff]
  %s5119 = scalar_lea.vmem [#allocation4], 80
  %v5120 = vld [vmem:[%s5119] ss:$2 sm:$0xff]
  %s5121 = scalar_lea.vmem [#allocation4], 96
  %v5122 = vld [vmem:[%s5121] ss:$2 sm:$0xff]
  %s5123 = scalar_lea.vmem [#allocation4], 112
  %v5124 = vld [vmem:[%s5123] ss:$2 sm:$0xff]
  %s5125 = scalar_lea.vmem [#allocation4], 128
  %v5126 = vld [vmem:[%s5125] ss:$2 sm:$0xff]
  %s5127 = scalar_lea.vmem [#allocation4], 144
  %v5128 = vld [vmem:[%s5127] ss:$2 sm:$0xff]
  %s5129 = scalar_lea.vmem [#allocation4], 160
  %v5130 = vld [vmem:[%s5129] ss:$2 sm:$0xff]
  %s5131 = scalar_lea.vmem [#allocation4], 176
  %v5132 = vld [vmem:[%s5131] ss:$2 sm:$0xff]
  %s5133 = scalar_lea.vmem [#allocation4], 192
  %v5134 = vld [vmem:[%s5133] ss:$2 sm:$0xff]
  %s5135 = scalar_lea.vmem [#allocation4], 208
  %v5136 = vld [vmem:[%s5135] ss:$2 sm:$0xff]
  %s5137 = scalar_lea.vmem [#allocation4], 224
  %v5138 = vld [vmem:[%s5137] ss:$2 sm:$0xff]
  %s5139 = scalar_lea.vmem [#allocation4], 240
  %v5140 = vld [vmem:[%s5139] ss:$2 sm:$0xff]
  %v5141 = vld [vmem:[%s1312] ss:$2 sm:$0xff]
  %v5142 = vld [vmem:[%s1314] ss:$2 sm:$0xff]
  %v5143 = vld [vmem:[%s1316] ss:$2 sm:$0xff]
  %v5144 = vld [vmem:[%s1318] ss:$2 sm:$0xff]
  %v5145 = vld [vmem:[%s1320] ss:$2 sm:$0xff]
  %v5146 = vld [vmem:[%s1322] ss:$2 sm:$0xff]
  %v5147 = vld [vmem:[%s1324] ss:$2 sm:$0xff]
  %v5148 = vld [vmem:[%s1326] ss:$2 sm:$0xff]
  %v5149 = vld [vmem:[%s1328] ss:$2 sm:$0xff]
  %v5150 = vld [vmem:[%s1330] ss:$2 sm:$0xff]
  %v5151 = vld [vmem:[%s1332] ss:$2 sm:$0xff]
  %v5152 = vld [vmem:[%s1334] ss:$2 sm:$0xff]
  %v5153 = vld [vmem:[%s1336] ss:$2 sm:$0xff]
  %v5154 = vld [vmem:[%s1338] ss:$2 sm:$0xff]
  %v5155 = vld [vmem:[%s1340] ss:$2 sm:$0xff]
  %v5156 = vld [vmem:[%s1342] ss:$2 sm:$0xff]
  %v5157 = vmax.f32 %v5110, %v5141
  %v5158 = vmax.f32 %v5112, %v5142
  %v5159 = vmax.f32 %v5114, %v5143
  %v5160 = vmax.f32 %v5116, %v5144
  %v5161 = vmax.f32 %v5118, %v5145
  %v5162 = vmax.f32 %v5120, %v5146
  %v5163 = vmax.f32 %v5122, %v5147
  %v5164 = vmax.f32 %v5124, %v5148
  %v5165 = vmax.f32 %v5126, %v5149
  %v5166 = vmax.f32 %v5128, %v5150
  %v5167 = vmax.f32 %v5130, %v5151
  %v5168 = vmax.f32 %v5132, %v5152
  %v5169 = vmax.f32 %v5134, %v5153
  %v5170 = vmax.f32 %v5136, %v5154
  %v5171 = vmax.f32 %v5138, %v5155
  %v5172 = vmax.f32 %v5140, %v5156
  %5173 = vst [vmem:[#allocation5] sm:$0xff] %v5157
  %5174 = vst [vmem:[#allocation5 + $0x8] sm:$0xff] %v5158
  %5175 = vst [vmem:[#allocation5 + $0x10] sm:$0xff] %v5159
  %5176 = vst [vmem:[#allocation5 + $0x18] sm:$0xff] %v5160
  %5177 = vst [vmem:[#allocation5 + $0x20] sm:$0xff] %v5161
  %5178 = vst [vmem:[#allocation5 + $0x28] sm:$0xff] %v5162
  %5179 = vst [vmem:[#allocation5 + $0x30] sm:$0xff] %v5163
  %5180 = vst [vmem:[#allocation5 + $0x38] sm:$0xff] %v5164
  %5181 = vst [vmem:[#allocation5 + $0x40] sm:$0xff] %v5165
  %5182 = vst [vmem:[#allocation5 + $0x48] sm:$0xff] %v5166
  %5183 = vst [vmem:[#allocation5 + $0x50] sm:$0xff] %v5167
  %5184 = vst [vmem:[#allocation5 + $0x58] sm:$0xff] %v5168
  %5185 = vst [vmem:[#allocation5 + $0x60] sm:$0xff] %v5169
  %5186 = vst [vmem:[#allocation5 + $0x68] sm:$0xff] %v5170
  %5187 = vst [vmem:[#allocation5 + $0x70] sm:$0xff] %v5171
  %5188 = vst [vmem:[#allocation5 + $0x78] sm:$0xff] %v5172
  %v5189 = vld [vmem:[#allocation5] sm:$0x7f]
  %v5190 = vld [vmem:[#allocation5 + $0x8] sm:$0x7f]
  %v5191 = vmax.f32 %v5189, %v5190
  %v5192 = vpack.c.bf16 %v5191, %v5191
  %vm5193 = vmand %vm2162, %vm2471
  %v5194 = vld [vmem:[#allocation3 + $0x8] sm:$0xf]
  %v5195 = vsel %vm5193, %v5192, %v5194
  %5196 = vst [vmem:[#allocation3 + $0x8] sm:$0xf] %v5195
  %v5197 = vld [vmem:[#allocation5 + $0x10] sm:$0x7f]
  %v5198 = vld [vmem:[#allocation5 + $0x18] sm:$0x7f]
  %v5199 = vmax.f32 %v5197, %v5198
  %v5200 = vpack.c.bf16 %v5199, %v5199
  %v5202 = vrot.slane %v5200, 4
  %vm5204 = vcmask 1047556
  %vm5205 = vsmask.f32 7424
  %vm5206 = vmand %vm5204, %vm5205
  %v5207 = vld [vmem:[#allocation3 + $0x8] sm:$0xf0]
  %v5208 = vsel %vm5206, %v5202, %v5207
  %5209 = vst [vmem:[#allocation3 + $0x8] sm:$0xf0] %v5208
  %v5210 = vld [vmem:[#allocation5 + $0x20] sm:$0x7f]
  %v5211 = vld [vmem:[#allocation5 + $0x28] sm:$0x7f]
  %v5212 = vmax.f32 %v5210, %v5211
  %v5213 = vpack.c.bf16 %v5212, %v5212
  %v5214 = vld [vmem:[#allocation3 + $0x10] sm:$0xf]
  %v5215 = vsel %vm5193, %v5213, %v5214
  %5216 = vst [vmem:[#allocation3 + $0x10] sm:$0xf] %v5215
  %v5217 = vld [vmem:[#allocation5 + $0x30] sm:$0x7f]
  %v5218 = vld [vmem:[#allocation5 + $0x38] sm:$0x7f]
  %v5219 = vmax.f32 %v5217, %v5218
  %v5220 = vpack.c.bf16 %v5219, %v5219
  %v5222 = vrot.slane %v5220, 4
  %v5224 = vld [vmem:[#allocation3 + $0x10] sm:$0xf0]
  %v5225 = vsel %vm5206, %v5222, %v5224
  %5226 = vst [vmem:[#allocation3 + $0x10] sm:$0xf0] %v5225
  %v5227 = vld [vmem:[#allocation5 + $0x40] sm:$0x7f]
  %v5228 = vld [vmem:[#allocation5 + $0x48] sm:$0x7f]
  %v5229 = vmax.f32 %v5227, %v5228
  %v5230 = vpack.c.bf16 %v5229, %v5229
  %v5231 = vld [vmem:[#allocation3 + $0x18] sm:$0xf]
  %v5232 = vsel %vm5193, %v5230, %v5231
  %5233 = vst [vmem:[#allocation3 + $0x18] sm:$0xf] %v5232
  %v5234 = vld [vmem:[#allocation5 + $0x50] sm:$0x7f]
  %v5235 = vld [vmem:[#allocation5 + $0x58] sm:$0x7f]
  %v5236 = vmax.f32 %v5234, %v5235
  %v5237 = vpack.c.bf16 %v5236, %v5236
  %v5239 = vrot.slane %v5237, 4
  %v5241 = vld [vmem:[#allocation3 + $0x18] sm:$0xf0]
  %v5242 = vsel %vm5206, %v5239, %v5241
  %5243 = vst [vmem:[#allocation3 + $0x18] sm:$0xf0] %v5242
  %v5244 = vld [vmem:[#allocation5 + $0x60] sm:$0x7f]
  %v5245 = vld [vmem:[#allocation5 + $0x68] sm:$0x7f]
  %v5246 = vmax.f32 %v5244, %v5245
  %v5247 = vpack.c.bf16 %v5246, %v5246
  %v5248 = vld [vmem:[#allocation3 + $0x20] sm:$0xf]
  %v5249 = vsel %vm5193, %v5247, %v5248
  %5250 = vst [vmem:[#allocation3 + $0x20] sm:$0xf] %v5249
  %v5251 = vld [vmem:[%s6] sm:$0x1]
  %v5253 = vlaneseq
  %v5254 = vshrl.u32 %v5253, 7
  %v5255 = vsub.s32 0, %v5254
  %v5256 = vrot.slane %v5251, %v5255
  %v5258 = vadd.f32 %v5256, 0.0
  %v5259 = vld [vmem:[#allocation3] sm:$0xf8]
  %v5260 = vld [vmem:[#allocation3 + $0x8] sm:$0xff]
  %v5261 = vld [vmem:[#allocation3 + $0x10] sm:$0xff]
  %v5262 = vld [vmem:[#allocation3 + $0x18] sm:$0xff]
  %v5263 = vld [vmem:[#allocation3 + $0x20] sm:$0xf]
  %v5264 = vld [vmem:[%s5] sm:$0xf]
  %v5265 = vld [vmem:[%s5 + $0x4] sm:$0xf]
  %v5266 = vld [vmem:[%s5 + $0x8] sm:$0xf]
  %v5267 = vld [vmem:[%s5 + $0xc] sm:$0xf]
  %v5268 = vld [vmem:[%s5 + $0x10] sm:$0xf]
  %v5269 = vld [vmem:[%s5 + $0x14] sm:$0xf]
  %v5270 = vld [vmem:[%s5 + $0x18] sm:$0xf]
  %v5271 = vld [vmem:[%s5 + $0x1c] sm:$0xf]
  %v5272 = vld [vmem:[%s5 + $0x20] sm:$0xf]
  %v5273 = vld [vmem:[%s5 + $0x24] sm:$0xf]
  %v5274 = vld [vmem:[%s5 + $0x28] sm:$0xf]
  %v5275 = vld [vmem:[%s5 + $0x2c] sm:$0xf]
  %v5276 = vld [vmem:[%s5 + $0x30] sm:$0xf]
  %v5277 = vld [vmem:[%s5 + $0x34] sm:$0xf]
  %v5278 = vld [vmem:[%s5 + $0x38] sm:$0xf]
  %v5279 = vld [vmem:[%s5 + $0x3c] sm:$0xf]
  %v5281 = vshrl.u32 %v5259, 16
  %v5283 = vrot.slane %v5281, 3
  %v5284 = vshll.u32 %v5259, 16
  %v5286 = vrot.slane %v5284, 4
  %v5287 = vor.u32 %v5283, %v5286
  %v5289 = vshrl.u32 %v5260, 16
  %v5291 = vrot.slane %v5289, 3
  %v5292 = vshll.u32 %v5260, 16
  %v5294 = vrot.slane %v5292, 4
  %v5295 = vor.u32 %v5291, %v5294
  %v5296 = vsel %vm1717, %v5287, %v5295
  %v5298 = vshrl.u32 %v5261, 16
  %v5300 = vrot.slane %v5298, 3
  %v5301 = vshll.u32 %v5261, 16
  %v5303 = vrot.slane %v5301, 4
  %v5304 = vor.u32 %v5300, %v5303
  %v5305 = vsel %vm1717, %v5295, %v5304
  %v5307 = vshrl.u32 %v5262, 16
  %v5309 = vrot.slane %v5307, 3
  %v5310 = vshll.u32 %v5262, 16
  %v5312 = vrot.slane %v5310, 4
  %v5313 = vor.u32 %v5309, %v5312
  %v5314 = vsel %vm1717, %v5304, %v5313
  %v5316 = vshrl.u32 %v5263, 16
  %v5318 = vrot.slane %v5316, 3
  %v5319 = vshll.u32 %v5263, 16
  %v5321 = vrot.slane %v5319, 4
  %v5322 = vor.u32 %v5318, %v5321
  %v5323 = vsel %vm1717, %v5313, %v5322
  %v5344 = vunpack.c.l.b16 %v5264
  %v5345 = vunpack.c.l.b16 %v5265
  %v5346 = vunpack.c.l.b16 %v5266
  %v5347 = vunpack.c.l.b16 %v5267
  %v5348 = vunpack.c.l.b16 %v5268
  %v5349 = vunpack.c.l.b16 %v5269
  %v5350 = vunpack.c.l.b16 %v5270
  %v5351 = vunpack.c.l.b16 %v5271
  %v5352 = vunpack.c.l.b16 %v5272
  %v5353 = vunpack.c.l.b16 %v5273
  %v5354 = vunpack.c.l.b16 %v5274
  %v5355 = vunpack.c.l.b16 %v5275
  %v5356 = vunpack.c.l.b16 %v5276
  %v5357 = vunpack.c.l.b16 %v5277
  %v5358 = vunpack.c.l.b16 %v5278
  %v5359 = vunpack.c.l.b16 %v5279
  %v5360 = vpack.c.b16 %v5345, %v5344
  %v5361 = vpack.c.b16 %v5347, %v5346
  %v5362 = vpack.c.b16 %v5349, %v5348
  %v5363 = vpack.c.b16 %v5351, %v5350
  %v5364 = vpack.c.b16 %v5353, %v5352
  %v5365 = vpack.c.b16 %v5355, %v5354
  %v5366 = vpack.c.b16 %v5357, %v5356
  %v5367 = vpack.c.b16 %v5359, %v5358
  %5376 = vmatprep.subr.bf16.mxu0 0
  %5377 = vmatpush1.bf16.msra.mxu0 %v5360
  %5378 = vmatprep.subr.bf16.mxu0 0
  %5379 = vmatpush1.bf16.msra.mxu0 %v5361
  %5380 = vmatprep.subr.bf16.mxu0 0
  %5381 = vmatpush1.bf16.msra.mxu0 %v5362
  %5382 = vmatprep.subr.bf16.mxu0 0
  %5383 = vmatpush1.bf16.msra.mxu0 %v5363
  %5384 = vmatprep.subr.bf16.mxu0 0
  %5385 = vmatpush1.bf16.msra.mxu0 %v5364
  %5386 = vmatprep.subr.bf16.mxu0 0
  %5387 = vmatpush1.bf16.msra.mxu0 %v5365
  %5388 = vmatprep.subr.bf16.mxu0 0
  %5389 = vmatpush1.bf16.msra.mxu0 %v5366
  %5390 = vmatprep.subr.bf16.mxu0 0
  %5391 = vmatpush1.bf16.msra.mxu0 %v5367
  %5392 = vmatprep.subr.bf16.mxu0 0
  %5393 = vmatpush1.bf16.msra.mxu0 0
  %5394 = vmatprep.subr.bf16.mxu0 0
  %5395 = vmatpush1.bf16.msra.mxu0 0
  %5396 = vmatprep.subr.bf16.mxu0 0
  %5397 = vmatpush1.bf16.msra.mxu0 0
  %5398 = vmatprep.subr.bf16.mxu0 0
  %5399 = vmatpush1.bf16.msra.mxu0 0
  %5400 = vmatprep.subr.bf16.mxu0 0
  %5401 = vmatpush1.bf16.msra.mxu0 0
  %5402 = vmatprep.subr.bf16.mxu0 0
  %5403 = vmatpush1.bf16.msra.mxu0 0
  %5404 = vmatprep.subr.bf16.mxu0 0
  %5405 = vmatpush1.bf16.msra.mxu0 0
  %5406 = vmatprep.subr.bf16.mxu0 0
  %5407 = vmatpush1.bf16.msra.mxu0 0
  %5408 = vmatprep.mubr.bf16.mxu0 0
  %5409 = vmatmul.mubr.bf16.gmra.mrb[0].mxu0 %v5296
  %v5410 = vpop.f32.mrb[0].mxu0
  %v5411 = vadd.f32 0.0, %v5410
  %v5412 = vpop.f32.mrb[0].mxu0
  %v5413 = vpop.f32.mrb[0].mxu0
  %v5414 = vadd.f32 0.0, %v5413
  %v5415 = vpop.f32.mrb[0].mxu0
  %5416 = vmatprep.mubr.bf16.mxu0 0
  %5417 = vmatmul.mubr.bf16.gmra.mrb[0].mxu0 %v5305
  %v5418 = vpop.f32.mrb[0].mxu0
  %v5419 = vadd.f32 0.0, %v5418
  %v5420 = vpop.f32.mrb[0].mxu0
  %v5421 = vpop.f32.mrb[0].mxu0
  %v5422 = vadd.f32 0.0, %v5421
  %v5423 = vpop.f32.mrb[0].mxu0
  %5424 = vmatprep.mubr.bf16.mxu0 0
  %5425 = vmatmul.mubr.bf16.gmra.mrb[0].mxu0 %v5314
  %v5426 = vpop.f32.mrb[0].mxu0
  %v5427 = vadd.f32 0.0, %v5426
  %v5428 = vpop.f32.mrb[0].mxu0
  %v5429 = vpop.f32.mrb[0].mxu0
  %v5430 = vadd.f32 0.0, %v5429
  %v5431 = vpop.f32.mrb[0].mxu0
  %5432 = vmatprep.mubr.bf16.mxu0 0
  %5433 = vmatmul.mubr.bf16.gmra.mrb[0].mxu0 %v5323
  %v5434 = vpop.f32.mrb[0].mxu0
  %v5435 = vadd.f32 0.0, %v5434
  %v5436 = vpop.f32.mrb[0].mxu0
  %v5437 = vpop.f32.mrb[0].mxu0
  %v5438 = vadd.f32 0.0, %v5437
  %v5439 = vpop.f32.mrb[0].mxu0
  %5440 = vdwg.mxu0
  %v5441 = vadd.f32 %v5258, %v5411
  %v5442 = vadd.f32 %v5258, %v5414
  %v5443 = vadd.f32 %v5258, %v5419
  %v5444 = vadd.f32 %v5258, %v5422
  %v5445 = vadd.f32 %v5258, %v5427
  %v5446 = vadd.f32 %v5258, %v5430
  %v5447 = vadd.f32 %v5258, %v5435
  %v5448 = vadd.f32 %v5258, %v5438
  %v5449 = vld [vmem:[#allocation3] sm:$0xf0]
  %s5450 = scalar_lea.vmem %s5, 64
  %v5451 = vld [vmem:[%s5450] sm:$0xf]
  %v5452 = vld [vmem:[%s5450 + $0x4] sm:$0xf]
  %v5453 = vld [vmem:[%s5450 + $0x8] sm:$0xf]
  %v5454 = vld [vmem:[%s5450 + $0xc] sm:$0xf]
  %v5455 = vld [vmem:[%s5450 + $0x10] sm:$0xf]
  %v5456 = vld [vmem:[%s5450 + $0x14] sm:$0xf]
  %v5457 = vld [vmem:[%s5450 + $0x18] sm:$0xf]
  %v5458 = vld [vmem:[%s5450 + $0x1c] sm:$0xf]
  %v5459 = vld [vmem:[%s5450 + $0x20] sm:$0xf]
  %v5460 = vld [vmem:[%s5450 + $0x24] sm:$0xf]
  %v5461 = vld [vmem:[%s5450 + $0x28] sm:$0xf]
  %v5462 = vld [vmem:[%s5450 + $0x2c] sm:$0xf]
  %v5463 = vld [vmem:[%s5450 + $0x30] sm:$0xf]
  %v5464 = vld [vmem:[%s5450 + $0x34] sm:$0xf]
  %v5465 = vld [vmem:[%s5450 + $0x38] sm:$0xf]
  %v5466 = vld [vmem:[%s5450 + $0x3c] sm:$0xf]
  %v5472 = vrot.slane %v5449, 4
  %v5473 = vrot.slane %v5260, 4
  %v5474 = vsel %vm2162, %v5472, %v5473
  %v5475 = vrot.slane %v5261, 4
  %v5476 = vsel %vm2162, %v5473, %v5475
  %v5477 = vrot.slane %v5262, 4
  %v5478 = vsel %vm2162, %v5475, %v5477
  %v5479 = vrot.slane %v5263, 4
  %v5480 = vsel %vm2162, %v5477, %v5479
  %v5501 = vunpack.c.l.b16 %v5451
  %v5502 = vunpack.c.l.b16 %v5452
  %v5503 = vunpack.c.l.b16 %v5453
  %v5504 = vunpack.c.l.b16 %v5454
  %v5505 = vunpack.c.l.b16 %v5455
  %v5506 = vunpack.c.l.b16 %v5456
  %v5507 = vunpack.c.l.b16 %v5457
  %v5508 = vunpack.c.l.b16 %v5458
  %v5509 = vunpack.c.l.b16 %v5459
  %v5510 = vunpack.c.l.b16 %v5460
  %v5511 = vunpack.c.l.b16 %v5461
  %v5512 = vunpack.c.l.b16 %v5462
  %v5513 = vunpack.c.l.b16 %v5463
  %v5514 = vunpack.c.l.b16 %v5464
  %v5515 = vunpack.c.l.b16 %v5465
  %v5516 = vunpack.c.l.b16 %v5466
  %v5517 = vpack.c.b16 %v5502, %v5501
  %v5518 = vpack.c.b16 %v5504, %v5503
  %v5519 = vpack.c.b16 %v5506, %v5505
  %v5520 = vpack.c.b16 %v5508, %v5507
  %v5521 = vpack.c.b16 %v5510, %v5509
  %v5522 = vpack.c.b16 %v5512, %v5511
  %v5523 = vpack.c.b16 %v5514, %v5513
  %v5524 = vpack.c.b16 %v5516, %v5515
  %5533 = vmatprep.subr.bf16.mxu0 0
  %5534 = vmatpush1.bf16.msra.mxu0 %v5517
  %5535 = vmatprep.subr.bf16.mxu0 0
  %5536 = vmatpush1.bf16.msra.mxu0 %v5518
  %5537 = vmatprep.subr.bf16.mxu0 0
  %5538 = vmatpush1.bf16.msra.mxu0 %v5519
  %5539 = vmatprep.subr.bf16.mxu0 0
  %5540 = vmatpush1.bf16.msra.mxu0 %v5520
  %5541 = vmatprep.subr.bf16.mxu0 0
  %5542 = vmatpush1.bf16.msra.mxu0 %v5521
  %5543 = vmatprep.subr.bf16.mxu0 0
  %5544 = vmatpush1.bf16.msra.mxu0 %v5522
  %5545 = vmatprep.subr.bf16.mxu0 0
  %5546 = vmatpush1.bf16.msra.mxu0 %v5523
  %5547 = vmatprep.subr.bf16.mxu0 0
  %5548 = vmatpush1.bf16.msra.mxu0 %v5524
  %5549 = vmatprep.subr.bf16.mxu0 0
  %5550 = vmatpush1.bf16.msra.mxu0 0
  %5551 = vmatprep.subr.bf16.mxu0 0
  %5552 = vmatpush1.bf16.msra.mxu0 0
  %5553 = vmatprep.subr.bf16.mxu0 0
  %5554 = vmatpush1.bf16.msra.mxu0 0
  %5555 = vmatprep.subr.bf16.mxu0 0
  %5556 = vmatpush1.bf16.msra.mxu0 0
  %5557 = vmatprep.subr.bf16.mxu0 0
  %5558 = vmatpush1.bf16.msra.mxu0 0
  %5559 = vmatprep.subr.bf16.mxu0 0
  %5560 = vmatpush1.bf16.msra.mxu0 0
  %5561 = vmatprep.subr.bf16.mxu0 0
  %5562 = vmatpush1.bf16.msra.mxu0 0
  %5563 = vmatprep.subr.bf16.mxu0 0
  %5564 = vmatpush1.bf16.msra.mxu0 0
  %5565 = vmatprep.mubr.bf16.mxu0 0
  %5566 = vmatmul.mubr.bf16.gmra.mrb[0].mxu0 %v5474
  %v5567 = vpop.f32.mrb[0].mxu0
  %v5568 = vadd.f32 0.0, %v5567
  %v5569 = vpop.f32.mrb[0].mxu0
  %v5570 = vpop.f32.mrb[0].mxu0
  %v5571 = vadd.f32 0.0, %v5570
  %v5572 = vpop.f32.mrb[0].mxu0
  %5573 = vmatprep.mubr.bf16.mxu0 0
  %5574 = vmatmul.mubr.bf16.gmra.mrb[0].mxu0 %v5476
  %v5575 = vpop.f32.mrb[0].mxu0
  %v5576 = vadd.f32 0.0, %v5575
  %v5577 = vpop.f32.mrb[0].mxu0
  %v5578 = vpop.f32.mrb[0].mxu0
  %v5579 = vadd.f32 0.0, %v5578
  %v5580 = vpop.f32.mrb[0].mxu0
  %5581 = vmatprep.mubr.bf16.mxu0 0
  %5582 = vmatmul.mubr.bf16.gmra.mrb[0].mxu0 %v5478
  %v5583 = vpop.f32.mrb[0].mxu0
  %v5584 = vadd.f32 0.0, %v5583
  %v5585 = vpop.f32.mrb[0].mxu0
  %v5586 = vpop.f32.mrb[0].mxu0
  %v5587 = vadd.f32 0.0, %v5586
  %v5588 = vpop.f32.mrb[0].mxu0
  %5589 = vmatprep.mubr.bf16.mxu0 0
  %5590 = vmatmul.mubr.bf16.gmra.mrb[0].mxu0 %v5480
  %v5591 = vpop.f32.mrb[0].mxu0
  %v5592 = vadd.f32 0.0, %v5591
  %v5593 = vpop.f32.mrb[0].mxu0
  %v5594 = vpop.f32.mrb[0].mxu0
  %v5595 = vadd.f32 0.0, %v5594
  %v5596 = vpop.f32.mrb[0].mxu0
  %5597 = vdwg.mxu0
  %v5598 = vadd.f32 %v5441, %v5568
  %v5599 = vadd.f32 %v5442, %v5571
  %v5600 = vadd.f32 %v5443, %v5576
  %v5601 = vadd.f32 %v5444, %v5579
  %v5602 = vadd.f32 %v5445, %v5584
  %v5603 = vadd.f32 %v5446, %v5587
  %v5604 = vadd.f32 %v5447, %v5592
  %v5605 = vadd.f32 %v5448, %v5595
  %v5606 = vld [vmem:[#allocation3 + $0x20] sm:$0x1f]
  %s5607 = scalar_lea.vmem %s5, 128
  %v5608 = vld [vmem:[%s5607] sm:$0xf]
  %v5609 = vld [vmem:[%s5607 + $0x4] sm:$0xf]
  %v5610 = vld [vmem:[%s5607 + $0x8] sm:$0xf]
  %v5611 = vld [vmem:[%s5607 + $0xc] sm:$0xf]
  %v5612 = vld [vmem:[%s5607 + $0x10] sm:$0xf]
  %v5613 = vld [vmem:[%s5607 + $0x14] sm:$0xf]
  %v5614 = vld [vmem:[%s5607 + $0x18] sm:$0xf]
  %v5615 = vld [vmem:[%s5607 + $0x1c] sm:$0xf]
  %v5616 = vld [vmem:[%s5607 + $0x20] sm:$0xf]
  %v5617 = vld [vmem:[%s5607 + $0x24] sm:$0xf]
  %v5618 = vld [vmem:[%s5607 + $0x28] sm:$0xf]
  %v5619 = vld [vmem:[%s5607 + $0x2c] sm:$0xf]
  %v5620 = vld [vmem:[%s5607 + $0x30] sm:$0xf]
  %v5621 = vld [vmem:[%s5607 + $0x34] sm:$0xf]
  %v5622 = vld [vmem:[%s5607 + $0x38] sm:$0xf]
  %v5623 = vld [vmem:[%s5607 + $0x3c] sm:$0xf]
  %v5625 = vshrl.u32 %v5449, 16
  %v5627 = vrot.slane %v5625, 4
  %v5628 = vshll.u32 %v5449, 16
  %v5630 = vrot.slane %v5628, 5
  %v5631 = vor.u32 %v5627, %v5630
  %v5632 = vrot.slane %v5289, 4
  %v5633 = vrot.slane %v5292, 5
  %v5634 = vor.u32 %v5632, %v5633
  %v5635 = vsel %vm2471, %v5631, %v5634
  %v5636 = vrot.slane %v5298, 4
  %v5637 = vrot.slane %v5301, 5
  %v5638 = vor.u32 %v5636, %v5637
  %v5639 = vsel %vm2471, %v5634, %v5638
  %v5640 = vrot.slane %v5307, 4
  %v5641 = vrot.slane %v5310, 5
  %v5642 = vor.u32 %v5640, %v5641
  %v5643 = vsel %vm2471, %v5638, %v5642
  %v5645 = vshrl.u32 %v5606, 16
  %v5647 = vrot.slane %v5645, 4
  %v5648 = vshll.u32 %v5606, 16
  %v5650 = vrot.slane %v5648, 5
  %v5651 = vor.u32 %v5647, %v5650
  %v5652 = vsel %vm2471, %v5642, %v5651
  %v5673 = vunpack.c.l.b16 %v5608
  %v5674 = vunpack.c.l.b16 %v5609
  %v5675 = vunpack.c.l.b16 %v5610
  %v5676 = vunpack.c.l.b16 %v5611
  %v5677 = vunpack.c.l.b16 %v5612
  %v5678 = vunpack.c.l.b16 %v5613
  %v5679 = vunpack.c.l.b16 %v5614
  %v5680 = vunpack.c.l.b16 %v5615
  %v5681 = vunpack.c.l.b16 %v5616
  %v5682 = vunpack.c.l.b16 %v5617
  %v5683 = vunpack.c.l.b16 %v5618
  %v5684 = vunpack.c.l.b16 %v5619
  %v5685 = vunpack.c.l.b16 %v5620
  %v5686 = vunpack.c.l.b16 %v5621
  %v5687 = vunpack.c.l.b16 %v5622
  %v5688 = vunpack.c.l.b16 %v5623
  %v5689 = vpack.c.b16 %v5674, %v5673
  %v5690 = vpack.c.b16 %v5676, %v5675
  %v5691 = vpack.c.b16 %v5678, %v5677
  %v5692 = vpack.c.b16 %v5680, %v5679
  %v5693 = vpack.c.b16 %v5682, %v5681
  %v5694 = vpack.c.b16 %v5684, %v5683
  %v5695 = vpack.c.b16 %v5686, %v5685
  %v5696 = vpack.c.b16 %v5688, %v5687
  %5705 = vmatprep.subr.bf16.mxu0 0
  %5706 = vmatpush1.bf16.msra.mxu0 %v5689
  %5707 = vmatprep.subr.bf16.mxu0 0
  %5708 = vmatpush1.bf16.msra.mxu0 %v5690
  %5709 = vmatprep.subr.bf16.mxu0 0
  %5710 = vmatpush1.bf16.msra.mxu0 %v5691
  %5711 = vmatprep.subr.bf16.mxu0 0
  %5712 = vmatpush1.bf16.msra.mxu0 %v5692
  %5713 = vmatprep.subr.bf16.mxu0 0
  %5714 = vmatpush1.bf16.msra.mxu0 %v5693
  %5715 = vmatprep.subr.bf16.mxu0 0
  %5716 = vmatpush1.bf16.msra.mxu0 %v5694
  %5717 = vmatprep.subr.bf16.mxu0 0
  %5718 = vmatpush1.bf16.msra.mxu0 %v5695
  %5719 = vmatprep.subr.bf16.mxu0 0
  %5720 = vmatpush1.bf16.msra.mxu0 %v5696
  %5721 = vmatprep.subr.bf16.mxu0 0
  %5722 = vmatpush1.bf16.msra.mxu0 0
  %5723 = vmatprep.subr.bf16.mxu0 0
  %5724 = vmatpush1.bf16.msra.mxu0 0
  %5725 = vmatprep.subr.bf16.mxu0 0
  %5726 = vmatpush1.bf16.msra.mxu0 0
  %5727 = vmatprep.subr.bf16.mxu0 0
  %5728 = vmatpush1.bf16.msra.mxu0 0
  %5729 = vmatprep.subr.bf16.mxu0 0
  %5730 = vmatpush1.bf16.msra.mxu0 0
  %5731 = vmatprep.subr.bf16.mxu0 0
  %5732 = vmatpush1.bf16.msra.mxu0 0
  %5733 = vmatprep.subr.bf16.mxu0 0
  %5734 = vmatpush1.bf16.msra.mxu0 0
  %5735 = vmatprep.subr.bf16.mxu0 0
  %5736 = vmatpush1.bf16.msra.mxu0 0
  %5737 = vmatprep.mubr.bf16.mxu0 0
  %5738 = vmatmul.mubr.bf16.gmra.mrb[0].mxu0 %v5635
  %v5739 = vpop.f32.mrb[0].mxu0
  %v5740 = vadd.f32 0.0, %v5739
  %v5741 = vpop.f32.mrb[0].mxu0
  %v5742 = vpop.f32.mrb[0].mxu0
  %v5743 = vadd.f32 0.0, %v5742
  %v5744 = vpop.f32.mrb[0].mxu0
  %5745 = vmatprep.mubr.bf16.mxu0 0
  %5746 = vmatmul.mubr.bf16.gmra.mrb[0].mxu0 %v5639
  %v5747 = vpop.f32.mrb[0].mxu0
  %v5748 = vadd.f32 0.0, %v5747
  %v5749 = vpop.f32.mrb[0].mxu0
  %v5750 = vpop.f32.mrb[0].mxu0
  %v5751 = vadd.f32 0.0, %v5750
  %v5752 = vpop.f32.mrb[0].mxu0
  %5753 = vmatprep.mubr.bf16.mxu0 0
  %5754 = vmatmul.mubr.bf16.gmra.mrb[0].mxu0 %v5643
  %v5755 = vpop.f32.mrb[0].mxu0
  %v5756 = vadd.f32 0.0, %v5755
  %v5757 = vpop.f32.mrb[0].mxu0
  %v5758 = vpop.f32.mrb[0].mxu0
  %v5759 = vadd.f32 0.0, %v5758
  %v5760 = vpop.f32.mrb[0].mxu0
  %5761 = vmatprep.mubr.bf16.mxu0 0
  %5762 = vmatmul.mubr.bf16.gmra.mrb[0].mxu0 %v5652
  %v5763 = vpop.f32.mrb[0].mxu0
  %v5764 = vadd.f32 0.0, %v5763
  %v5765 = vpop.f32.mrb[0].mxu0
  %v5766 = vpop.f32.mrb[0].mxu0
  %v5767 = vadd.f32 0.0, %v5766
  %v5768 = vpop.f32.mrb[0].mxu0
  %5769 = vdwg.mxu0
  %v5770 = vadd.f32 %v5598, %v5740
  %v5771 = vadd.f32 %v5599, %v5743
  %v5772 = vadd.f32 %v5600, %v5748
  %v5773 = vadd.f32 %v5601, %v5751
  %v5774 = vadd.f32 %v5602, %v5756
  %v5775 = vadd.f32 %v5603, %v5759
  %v5776 = vadd.f32 %v5604, %v5764
  %v5777 = vadd.f32 %v5605, %v5767
  %v5778 = vld [vmem:[#allocation3] sm:$0x80]
  %v5779 = vld [vmem:[#allocation3 + $0x20] sm:$0xff]
  %s5780 = scalar_lea.vmem %s5, 192
  %v5781 = vld [vmem:[%s5780] sm:$0xf]
  %v5782 = vld [vmem:[%s5780 + $0x4] sm:$0xf]
  %v5783 = vld [vmem:[%s5780 + $0x8] sm:$0xf]
  %v5784 = vld [vmem:[%s5780 + $0xc] sm:$0xf]
  %v5785 = vld [vmem:[%s5780 + $0x10] sm:$0xf]
  %v5786 = vld [vmem:[%s5780 + $0x14] sm:$0xf]
  %v5787 = vld [vmem:[%s5780 + $0x18] sm:$0xf]
  %v5788 = vld [vmem:[%s5780 + $0x1c] sm:$0xf]
  %v5789 = vld [vmem:[%s5780 + $0x20] sm:$0xf]
  %v5790 = vld [vmem:[%s5780 + $0x24] sm:$0xf]
  %v5791 = vld [vmem:[%s5780 + $0x28] sm:$0xf]
  %v5792 = vld [vmem:[%s5780 + $0x2c] sm:$0xf]
  %v5793 = vld [vmem:[%s5780 + $0x30] sm:$0xf]
  %v5794 = vld [vmem:[%s5780 + $0x34] sm:$0xf]
  %v5795 = vld [vmem:[%s5780 + $0x38] sm:$0xf]
  %v5796 = vld [vmem:[%s5780 + $0x3c] sm:$0xf]
  %vm5797 = vsmask.f32 256
  %v5799 = vshrl.u32 %v5778, 16
  %v5801 = vrot.slane %v5799, 7
  %v5802 = vrot.slane %v5289, 7
  %v5803 = vor.u32 %v5802, %v5292
  %v5804 = vsel %vm5797, %v5801, %v5803
  %v5805 = vrot.slane %v5298, 7
  %v5806 = vor.u32 %v5805, %v5301
  %v5807 = vsel %vm5797, %v5802, %v5806
  %v5808 = vrot.slane %v5307, 7
  %v5809 = vor.u32 %v5808, %v5310
  %v5810 = vsel %vm5797, %v5805, %v5809
  %v5812 = vshrl.u32 %v5779, 16
  %v5814 = vrot.slane %v5812, 7
  %v5815 = vshll.u32 %v5779, 16
  %v5817 = vor.u32 %v5814, %v5815
  %v5818 = vsel %vm5797, %v5808, %v5817
  %v5839 = vunpack.c.l.b16 %v5781
  %v5840 = vunpack.c.l.b16 %v5782
  %v5841 = vunpack.c.l.b16 %v5783
  %v5842 = vunpack.c.l.b16 %v5784
  %v5843 = vunpack.c.l.b16 %v5785
  %v5844 = vunpack.c.l.b16 %v5786
  %v5845 = vunpack.c.l.b16 %v5787
  %v5846 = vunpack.c.l.b16 %v5788
  %v5847 = vunpack.c.l.b16 %v5789
  %v5848 = vunpack.c.l.b16 %v5790
  %v5849 = vunpack.c.l.b16 %v5791
  %v5850 = vunpack.c.l.b16 %v5792
  %v5851 = vunpack.c.l.b16 %v5793
  %v5852 = vunpack.c.l.b16 %v5794
  %v5853 = vunpack.c.l.b16 %v5795
  %v5854 = vunpack.c.l.b16 %v5796
  %v5855 = vpack.c.b16 %v5840, %v5839
  %v5856 = vpack.c.b16 %v5842, %v5841
  %v5857 = vpack.c.b16 %v5844, %v5843
  %v5858 = vpack.c.b16 %v5846, %v5845
  %v5859 = vpack.c.b16 %v5848, %v5847
  %v5860 = vpack.c.b16 %v5850, %v5849
  %v5861 = vpack.c.b16 %v5852, %v5851
  %v5862 = vpack.c.b16 %v5854, %v5853
  %5871 = vmatprep.subr.bf16.mxu0 0
  %5872 = vmatpush1.bf16.msra.mxu0 %v5855
  %5873 = vmatprep.subr.bf16.mxu0 0
  %5874 = vmatpush1.bf16.msra.mxu0 %v5856
  %5875 = vmatprep.subr.bf16.mxu0 0
  %5876 = vmatpush1.bf16.msra.mxu0 %v5857
  %5877 = vmatprep.subr.bf16.mxu0 0
  %5878 = vmatpush1.bf16.msra.mxu0 %v5858
  %5879 = vmatprep.subr.bf16.mxu0 0
  %5880 = vmatpush1.bf16.msra.mxu0 %v5859
  %5881 = vmatprep.subr.bf16.mxu0 0
  %5882 = vmatpush1.bf16.msra.mxu0 %v5860
  %5883 = vmatprep.subr.bf16.mxu0 0
  %5884 = vmatpush1.bf16.msra.mxu0 %v5861
  %5885 = vmatprep.subr.bf16.mxu0 0
  %5886 = vmatpush1.bf16.msra.mxu0 %v5862
  %5887 = vmatprep.subr.bf16.mxu0 0
  %5888 = vmatpush1.bf16.msra.mxu0 0
  %5889 = vmatprep.subr.bf16.mxu0 0
  %5890 = vmatpush1.bf16.msra.mxu0 0
  %5891 = vmatprep.subr.bf16.mxu0 0
  %5892 = vmatpush1.bf16.msra.mxu0 0
  %5893 = vmatprep.subr.bf16.mxu0 0
  %5894 = vmatpush1.bf16.msra.mxu0 0
  %5895 = vmatprep.subr.bf16.mxu0 0
  %5896 = vmatpush1.bf16.msra.mxu0 0
  %5897 = vmatprep.subr.bf16.mxu0 0
  %5898 = vmatpush1.bf16.msra.mxu0 0
  %5899 = vmatprep.subr.bf16.mxu0 0
  %5900 = vmatpush1.bf16.msra.mxu0 0
  %5901 = vmatprep.subr.bf16.mxu0 0
  %5902 = vmatpush1.bf16.msra.mxu0 0
  %5903 = vmatprep.mubr.bf16.mxu0 0
  %5904 = vmatmul.mubr.bf16.gmra.mrb[0].mxu0 %v5804
  %v5905 = vpop.f32.mrb[0].mxu0
  %v5906 = vadd.f32 0.0, %v5905
  %v5907 = vpop.f32.mrb[0].mxu0
  %v5908 = vpop.f32.mrb[0].mxu0
  %v5909 = vadd.f32 0.0, %v5908
  %v5910 = vpop.f32.mrb[0].mxu0
  %5911 = vmatprep.mubr.bf16.mxu0 0
  %5912 = vmatmul.mubr.bf16.gmra.mrb[0].mxu0 %v5807
  %v5913 = vpop.f32.mrb[0].mxu0
  %v5914 = vadd.f32 0.0, %v5913
  %v5915 = vpop.f32.mrb[0].mxu0
  %v5916 = vpop.f32.mrb[0].mxu0
  %v5917 = vadd.f32 0.0, %v5916
  %v5918 = vpop.f32.mrb[0].mxu0
  %5919 = vmatprep.mubr.bf16.mxu0 0
  %5920 = vmatmul.mubr.bf16.gmra.mrb[0].mxu0 %v5810
  %v5921 = vpop.f32.mrb[0].mxu0
  %v5922 = vadd.f32 0.0, %v5921
  %v5923 = vpop.f32.mrb[0].mxu0
  %v5924 = vpop.f32.mrb[0].mxu0
  %v5925 = vadd.f32 0.0, %v5924
  %v5926 = vpop.f32.mrb[0].mxu0
  %5927 = vmatprep.mubr.bf16.mxu0 0
  %5928 = vmatmul.mubr.bf16.gmra.mrb[0].mxu0 %v5818
  %v5929 = vpop.f32.mrb[0].mxu0
  %v5930 = vadd.f32 0.0, %v5929
  %v5931 = vpop.f32.mrb[0].mxu0
  %v5932 = vpop.f32.mrb[0].mxu0
  %v5933 = vadd.f32 0.0, %v5932
  %v5934 = vpop.f32.mrb[0].mxu0
  %5935 = vdwg.mxu0
  %v5936 = vadd.f32 %v5770, %v5906
  %v5937 = vadd.f32 %v5771, %v5909
  %v5938 = vadd.f32 %v5772, %v5914
  %v5939 = vadd.f32 %v5773, %v5917
  %v5940 = vadd.f32 %v5774, %v5922
  %v5941 = vadd.f32 %v5775, %v5925
  %v5942 = vadd.f32 %v5776, %v5930
  %v5943 = vadd.f32 %v5777, %v5933
  %s5944 = scalar_lea.vmem %s5, 256
  %v5945 = vld [vmem:[%s5944] sm:$0xf]
  %v5946 = vld [vmem:[%s5944 + $0x4] sm:$0xf]
  %v5947 = vld [vmem:[%s5944 + $0x8] sm:$0xf]
  %v5948 = vld [vmem:[%s5944 + $0xc] sm:$0xf]
  %v5949 = vld [vmem:[%s5944 + $0x10] sm:$0xf]
  %v5950 = vld [vmem:[%s5944 + $0x14] sm:$0xf]
  %v5951 = vld [vmem:[%s5944 + $0x18] sm:$0xf]
  %v5952 = vld [vmem:[%s5944 + $0x1c] sm:$0xf]
  %v5953 = vld [vmem:[%s5944 + $0x20] sm:$0xf]
  %v5954 = vld [vmem:[%s5944 + $0x24] sm:$0xf]
  %v5955 = vld [vmem:[%s5944 + $0x28] sm:$0xf]
  %v5956 = vld [vmem:[%s5944 + $0x2c] sm:$0xf]
  %v5957 = vld [vmem:[%s5944 + $0x30] sm:$0xf]
  %v5958 = vld [vmem:[%s5944 + $0x34] sm:$0xf]
  %v5959 = vld [vmem:[%s5944 + $0x38] sm:$0xf]
  %v5960 = vld [vmem:[%s5944 + $0x3c] sm:$0xf]
  %v5977 = vunpack.c.l.b16 %v5945
  %v5978 = vunpack.c.l.b16 %v5946
  %v5979 = vunpack.c.l.b16 %v5947
  %v5980 = vunpack.c.l.b16 %v5948
  %v5981 = vunpack.c.l.b16 %v5949
  %v5982 = vunpack.c.l.b16 %v5950
  %v5983 = vunpack.c.l.b16 %v5951
  %v5984 = vunpack.c.l.b16 %v5952
  %v5985 = vunpack.c.l.b16 %v5953
  %v5986 = vunpack.c.l.b16 %v5954
  %v5987 = vunpack.c.l.b16 %v5955
  %v5988 = vunpack.c.l.b16 %v5956
  %v5989 = vunpack.c.l.b16 %v5957
  %v5990 = vunpack.c.l.b16 %v5958
  %v5991 = vunpack.c.l.b16 %v5959
  %v5992 = vunpack.c.l.b16 %v5960
  %v5993 = vpack.c.b16 %v5978, %v5977
  %v5994 = vpack.c.b16 %v5980, %v5979
  %v5995 = vpack.c.b16 %v5982, %v5981
  %v5996 = vpack.c.b16 %v5984, %v5983
  %v5997 = vpack.c.b16 %v5986, %v5985
  %v5998 = vpack.c.b16 %v5988, %v5987
  %v5999 = vpack.c.b16 %v5990, %v5989
  %v6000 = vpack.c.b16 %v5992, %v5991
  %6009 = vmatprep.subr.bf16.mxu0 0
  %6010 = vmatpush1.bf16.msra.mxu0 %v5993
  %6011 = vmatprep.subr.bf16.mxu0 0
  %6012 = vmatpush1.bf16.msra.mxu0 %v5994
  %6013 = vmatprep.subr.bf16.mxu0 0
  %6014 = vmatpush1.bf16.msra.mxu0 %v5995
  %6015 = vmatprep.subr.bf16.mxu0 0
  %6016 = vmatpush1.bf16.msra.mxu0 %v5996
  %6017 = vmatprep.subr.bf16.mxu0 0
  %6018 = vmatpush1.bf16.msra.mxu0 %v5997
  %6019 = vmatprep.subr.bf16.mxu0 0
  %6020 = vmatpush1.bf16.msra.mxu0 %v5998
  %6021 = vmatprep.subr.bf16.mxu0 0
  %6022 = vmatpush1.bf16.msra.mxu0 %v5999
  %6023 = vmatprep.subr.bf16.mxu0 0
  %6024 = vmatpush1.bf16.msra.mxu0 %v6000
  %6025 = vmatprep.subr.bf16.mxu0 0
  %6026 = vmatpush1.bf16.msra.mxu0 0
  %6027 = vmatprep.subr.bf16.mxu0 0
  %6028 = vmatpush1.bf16.msra.mxu0 0
  %6029 = vmatprep.subr.bf16.mxu0 0
  %6030 = vmatpush1.bf16.msra.mxu0 0
  %6031 = vmatprep.subr.bf16.mxu0 0
  %6032 = vmatpush1.bf16.msra.mxu0 0
  %6033 = vmatprep.subr.bf16.mxu0 0
  %6034 = vmatpush1.bf16.msra.mxu0 0
  %6035 = vmatprep.subr.bf16.mxu0 0
  %6036 = vmatpush1.bf16.msra.mxu0 0
  %6037 = vmatprep.subr.bf16.mxu0 0
  %6038 = vmatpush1.bf16.msra.mxu0 0
  %6039 = vmatprep.subr.bf16.mxu0 0
  %6040 = vmatpush1.bf16.msra.mxu0 0
  %6041 = vmatprep.mubr.bf16.mxu0 0
  %6042 = vmatmul.mubr.bf16.gmra.mrb[0].mxu0 %v5260
  %v6043 = vpop.f32.mrb[0].mxu0
  %v6044 = vadd.f32 0.0, %v6043
  %v6045 = vpop.f32.mrb[0].mxu0
  %v6046 = vpop.f32.mrb[0].mxu0
  %v6047 = vadd.f32 0.0, %v6046
  %v6048 = vpop.f32.mrb[0].mxu0
  %6049 = vmatprep.mubr.bf16.mxu0 0
  %6050 = vmatmul.mubr.bf16.gmra.mrb[0].mxu0 %v5261
  %v6051 = vpop.f32.mrb[0].mxu0
  %v6052 = vadd.f32 0.0, %v6051
  %v6053 = vpop.f32.mrb[0].mxu0
  %v6054 = vpop.f32.mrb[0].mxu0
  %v6055 = vadd.f32 0.0, %v6054
  %v6056 = vpop.f32.mrb[0].mxu0
  %6057 = vmatprep.mubr.bf16.mxu0 0
  %6058 = vmatmul.mubr.bf16.gmra.mrb[0].mxu0 %v5262
  %v6059 = vpop.f32.mrb[0].mxu0
  %v6060 = vadd.f32 0.0, %v6059
  %v6061 = vpop.f32.mrb[0].mxu0
  %v6062 = vpop.f32.mrb[0].mxu0
  %v6063 = vadd.f32 0.0, %v6062
  %v6064 = vpop.f32.mrb[0].mxu0
  %6065 = vmatprep.mubr.bf16.mxu0 0
  %6066 = vmatmul.mubr.bf16.gmra.mrb[0].mxu0 %v5779
  %v6067 = vpop.f32.mrb[0].mxu0
  %v6068 = vadd.f32 0.0, %v6067
  %v6069 = vpop.f32.mrb[0].mxu0
  %v6070 = vpop.f32.mrb[0].mxu0
  %v6071 = vadd.f32 0.0, %v6070
  %v6072 = vpop.f32.mrb[0].mxu0
  %6073 = vdwg.mxu0
  %v6074 = vadd.f32 %v5936, %v6044
  %v6075 = vadd.f32 %v5937, %v6047
  %v6076 = vadd.f32 %v5938, %v6052
  %v6077 = vadd.f32 %v5939, %v6055
  %v6078 = vadd.f32 %v5940, %v6060
  %v6079 = vadd.f32 %v5941, %v6063
  %v6080 = vadd.f32 %v5942, %v6068
  %v6081 = vadd.f32 %v5943, %v6071
  %v6082 = vld [vmem:[#allocation3 + $0x8] sm:$0xff]
  %v6083 = vld [vmem:[#allocation3 + $0x10] sm:$0xff]
  %v6084 = vld [vmem:[#allocation3 + $0x18] sm:$0xff]
  %v6085 = vld [vmem:[#allocation3 + $0x20] sm:$0xff]
  %v6086 = vld [vmem:[#allocation3 + $0x28] sm:$0x1]
  %s6087 = scalar_lea.vmem %s5, 320
  %v6088 = vld [vmem:[%s6087] sm:$0xf]
  %v6089 = vld [vmem:[%s6087 + $0x4] sm:$0xf]
  %v6090 = vld [vmem:[%s6087 + $0x8] sm:$0xf]
  %v6091 = vld [vmem:[%s6087 + $0xc] sm:$0xf]
  %v6092 = vld [vmem:[%s6087 + $0x10] sm:$0xf]
  %v6093 = vld [vmem:[%s6087 + $0x14] sm:$0xf]
  %v6094 = vld [vmem:[%s6087 + $0x18] sm:$0xf]
  %v6095 = vld [vmem:[%s6087 + $0x1c] sm:$0xf]
  %v6096 = vld [vmem:[%s6087 + $0x20] sm:$0xf]
  %v6097 = vld [vmem:[%s6087 + $0x24] sm:$0xf]
  %v6098 = vld [vmem:[%s6087 + $0x28] sm:$0xf]
  %v6099 = vld [vmem:[%s6087 + $0x2c] sm:$0xf]
  %v6100 = vld [vmem:[%s6087 + $0x30] sm:$0xf]
  %v6101 = vld [vmem:[%s6087 + $0x34] sm:$0xf]
  %v6102 = vld [vmem:[%s6087 + $0x38] sm:$0xf]
  %v6103 = vld [vmem:[%s6087 + $0x3c] sm:$0xf]
  %v6105 = vshrl.u32 %v6082, 16
  %v6107 = vshll.u32 %v6082, 16
  %v6109 = vrot.slane %v6107, 1
  %v6110 = vor.u32 %v6105, %v6109
  %v6112 = vshll.u32 %v6083, 16
  %v6114 = vrot.slane %v6112, 1
  %v6115 = vsel %vm5205, %v6110, %v6114
  %v6116 = vshrl.u32 %v6083, 16
  %v6118 = vor.u32 %v6116, %v6114
  %v6120 = vshll.u32 %v6084, 16
  %v6122 = vrot.slane %v6120, 1
  %v6123 = vsel %vm5205, %v6118, %v6122
  %v6124 = vshrl.u32 %v6084, 16
  %v6126 = vor.u32 %v6124, %v6122
  %v6128 = vshll.u32 %v6085, 16
  %v6130 = vrot.slane %v6128, 1
  %v6131 = vsel %vm5205, %v6126, %v6130
  %v6132 = vshrl.u32 %v6085, 16
  %v6134 = vor.u32 %v6132, %v6130
  %v6136 = vshll.u32 %v6086, 16
  %v6138 = vrot.slane %v6136, 1
  %v6139 = vsel %vm5205, %v6134, %v6138
  %v6160 = vunpack.c.l.b16 %v6088
  %v6161 = vunpack.c.l.b16 %v6089
  %v6162 = vunpack.c.l.b16 %v6090
  %v6163 = vunpack.c.l.b16 %v6091
  %v6164 = vunpack.c.l.b16 %v6092
  %v6165 = vunpack.c.l.b16 %v6093
  %v6166 = vunpack.c.l.b16 %v6094
  %v6167 = vunpack.c.l.b16 %v6095
  %v6168 = vunpack.c.l.b16 %v6096
  %v6169 = vunpack.c.l.b16 %v6097
  %v6170 = vunpack.c.l.b16 %v6098
  %v6171 = vunpack.c.l.b16 %v6099
  %v6172 = vunpack.c.l.b16 %v6100
  %v6173 = vunpack.c.l.b16 %v6101
  %v6174 = vunpack.c.l.b16 %v6102
  %v6175 = vunpack.c.l.b16 %v6103
  %v6176 = vpack.c.b16 %v6161, %v6160
  %v6177 = vpack.c.b16 %v6163, %v6162
  %v6178 = vpack.c.b16 %v6165, %v6164
  %v6179 = vpack.c.b16 %v6167, %v6166
  %v6180 = vpack.c.b16 %v6169, %v6168
  %v6181 = vpack.c.b16 %v6171, %v6170
  %v6182 = vpack.c.b16 %v6173, %v6172
  %v6183 = vpack.c.b16 %v6175, %v6174
  %6192 = vmatprep.subr.bf16.mxu0 0
  %6193 = vmatpush1.bf16.msra.mxu0 %v6176
  %6194 = vmatprep.subr.bf16.mxu0 0
  %6195 = vmatpush1.bf16.msra.mxu0 %v6177
  %6196 = vmatprep.subr.bf16.mxu0 0
  %6197 = vmatpush1.bf16.msra.mxu0 %v6178
  %6198 = vmatprep.subr.bf16.mxu0 0
  %6199 = vmatpush1.bf16.msra.mxu0 %v6179
  %6200 = vmatprep.subr.bf16.mxu0 0
  %6201 = vmatpush1.bf16.msra.mxu0 %v6180
  %6202 = vmatprep.subr.bf16.mxu0 0
  %6203 = vmatpush1.bf16.msra.mxu0 %v6181
  %6204 = vmatprep.subr.bf16.mxu0 0
  %6205 = vmatpush1.bf16.msra.mxu0 %v6182
  %6206 = vmatprep.subr.bf16.mxu0 0
  %6207 = vmatpush1.bf16.msra.mxu0 %v6183
  %6208 = vmatprep.subr.bf16.mxu0 0
  %6209 = vmatpush1.bf16.msra.mxu0 0
  %6210 = vmatprep.subr.bf16.mxu0 0
  %6211 = vmatpush1.bf16.msra.mxu0 0
  %6212 = vmatprep.subr.bf16.mxu0 0
  %6213 = vmatpush1.bf16.msra.mxu0 0
  %6214 = vmatprep.subr.bf16.mxu0 0
  %6215 = vmatpush1.bf16.msra.mxu0 0
  %6216 = vmatprep.subr.bf16.mxu0 0
  %6217 = vmatpush1.bf16.msra.mxu0 0
  %6218 = vmatprep.subr.bf16.mxu0 0
  %6219 = vmatpush1.bf16.msra.mxu0 0
  %6220 = vmatprep.subr.bf16.mxu0 0
  %6221 = vmatpush1.bf16.msra.mxu0 0
  %6222 = vmatprep.subr.bf16.mxu0 0
  %6223 = vmatpush1.bf16.msra.mxu0 0
  %6224 = vmatprep.mubr.bf16.mxu0 0
  %6225 = vmatmul.mubr.bf16.gmra.mrb[0].mxu0 %v6115
  %v6226 = vpop.f32.mrb[0].mxu0
  %v6227 = vadd.f32 0.0, %v6226
  %v6228 = vpop.f32.mrb[0].mxu0
  %v6229 = vpop.f32.mrb[0].mxu0
  %v6230 = vadd.f32 0.0, %v6229
  %v6231 = vpop.f32.mrb[0].mxu0
  %6232 = vmatprep.mubr.bf16.mxu0 0
  %6233 = vmatmul.mubr.bf16.gmra.mrb[0].mxu0 %v6123
  %v6234 = vpop.f32.mrb[0].mxu0
  %v6235 = vadd.f32 0.0, %v6234
  %v6236 = vpop.f32.mrb[0].mxu0
  %v6237 = vpop.f32.mrb[0].mxu0
  %v6238 = vadd.f32 0.0, %v6237
  %v6239 = vpop.f32.mrb[0].mxu0
  %6240 = vmatprep.mubr.bf16.mxu0 0
  %6241 = vmatmul.mubr.bf16.gmra.mrb[0].mxu0 %v6131
  %v6242 = vpop.f32.mrb[0].mxu0
  %v6243 = vadd.f32 0.0, %v6242
  %v6244 = vpop.f32.mrb[0].mxu0
  %v6245 = vpop.f32.mrb[0].mxu0
  %v6246 = vadd.f32 0.0, %v6245
  %v6247 = vpop.f32.mrb[0].mxu0
  %6248 = vmatprep.mubr.bf16.mxu0 0
  %6249 = vmatmul.mubr.bf16.gmra.mrb[0].mxu0 %v6139
  %v6250 = vpop.f32.mrb[0].mxu0
  %v6251 = vadd.f32 0.0, %v6250
  %v6252 = vpop.f32.mrb[0].mxu0
  %v6253 = vpop.f32.mrb[0].mxu0
  %v6254 = vadd.f32 0.0, %v6253
  %v6255 = vpop.f32.mrb[0].mxu0
  %6256 = vdwg.mxu0
  %v6257 = vadd.f32 %v6074, %v6227
  %v6258 = vadd.f32 %v6075, %v6230
  %v6259 = vadd.f32 %v6076, %v6235
  %v6260 = vadd.f32 %v6077, %v6238
  %v6261 = vadd.f32 %v6078, %v6243
  %v6262 = vadd.f32 %v6079, %v6246
  %v6263 = vadd.f32 %v6080, %v6251
  %v6264 = vadd.f32 %v6081, %v6254
  %v6265 = vld [vmem:[#allocation3 + $0x8] sm:$0xf8]
  %v6266 = vld [vmem:[#allocation3 + $0x28] sm:$0xf]
  %s6267 = scalar_lea.vmem %s5, 384
  %v6268 = vld [vmem:[%s6267] sm:$0xf]
  %v6269 = vld [vmem:[%s6267 + $0x4] sm:$0xf]
  %v6270 = vld [vmem:[%s6267 + $0x8] sm:$0xf]
  %v6271 = vld [vmem:[%s6267 + $0xc] sm:$0xf]
  %v6272 = vld [vmem:[%s6267 + $0x10] sm:$0xf]
  %v6273 = vld [vmem:[%s6267 + $0x14] sm:$0xf]
  %v6274 = vld [vmem:[%s6267 + $0x18] sm:$0xf]
  %v6275 = vld [vmem:[%s6267 + $0x1c] sm:$0xf]
  %v6276 = vld [vmem:[%s6267 + $0x20] sm:$0xf]
  %v6277 = vld [vmem:[%s6267 + $0x24] sm:$0xf]
  %v6278 = vld [vmem:[%s6267 + $0x28] sm:$0xf]
  %v6279 = vld [vmem:[%s6267 + $0x2c] sm:$0xf]
  %v6280 = vld [vmem:[%s6267 + $0x30] sm:$0xf]
  %v6281 = vld [vmem:[%s6267 + $0x34] sm:$0xf]
  %v6282 = vld [vmem:[%s6267 + $0x38] sm:$0xf]
  %v6283 = vld [vmem:[%s6267 + $0x3c] sm:$0xf]
  %v6285 = vshrl.u32 %v6265, 16
  %v6287 = vrot.slane %v6285, 3
  %v6288 = vshll.u32 %v6265, 16
  %v6290 = vrot.slane %v6288, 4
  %v6291 = vor.u32 %v6287, %v6290
  %v6292 = vrot.slane %v6116, 3
  %v6293 = vrot.slane %v6112, 4
  %v6294 = vor.u32 %v6292, %v6293
  %v6295 = vsel %vm1717, %v6291, %v6294
  %v6296 = vrot.slane %v6124, 3
  %v6297 = vrot.slane %v6120, 4
  %v6298 = vor.u32 %v6296, %v6297
  %v6299 = vsel %vm1717, %v6294, %v6298
  %v6300 = vrot.slane %v6132, 3
  %v6301 = vrot.slane %v6128, 4
  %v6302 = vor.u32 %v6300, %v6301
  %v6303 = vsel %vm1717, %v6298, %v6302
  %v6305 = vshrl.u32 %v6266, 16
  %v6307 = vrot.slane %v6305, 3
  %v6308 = vshll.u32 %v6266, 16
  %v6310 = vrot.slane %v6308, 4
  %v6311 = vor.u32 %v6307, %v6310
  %v6312 = vsel %vm1717, %v6302, %v6311
  %v6333 = vunpack.c.l.b16 %v6268
  %v6334 = vunpack.c.l.b16 %v6269
  %v6335 = vunpack.c.l.b16 %v6270
  %v6336 = vunpack.c.l.b16 %v6271
  %v6337 = vunpack.c.l.b16 %v6272
  %v6338 = vunpack.c.l.b16 %v6273
  %v6339 = vunpack.c.l.b16 %v6274
  %v6340 = vunpack.c.l.b16 %v6275
  %v6341 = vunpack.c.l.b16 %v6276
  %v6342 = vunpack.c.l.b16 %v6277
  %v6343 = vunpack.c.l.b16 %v6278
  %v6344 = vunpack.c.l.b16 %v6279
  %v6345 = vunpack.c.l.b16 %v6280
  %v6346 = vunpack.c.l.b16 %v6281
  %v6347 = vunpack.c.l.b16 %v6282
  %v6348 = vunpack.c.l.b16 %v6283
  %v6349 = vpack.c.b16 %v6334, %v6333
  %v6350 = vpack.c.b16 %v6336, %v6335
  %v6351 = vpack.c.b16 %v6338, %v6337
  %v6352 = vpack.c.b16 %v6340, %v6339
  %v6353 = vpack.c.b16 %v6342, %v6341
  %v6354 = vpack.c.b16 %v6344, %v6343
  %v6355 = vpack.c.b16 %v6346, %v6345
  %v6356 = vpack.c.b16 %v6348, %v6347
  %6365 = vmatprep.subr.bf16.mxu0 0
  %6366 = vmatpush1.bf16.msra.mxu0 %v6349
  %6367 = vmatprep.subr.bf16.mxu0 0
  %6368 = vmatpush1.bf16.msra.mxu0 %v6350
  %6369 = vmatprep.subr.bf16.mxu0 0
  %6370 = vmatpush1.bf16.msra.mxu0 %v6351
  %6371 = vmatprep.subr.bf16.mxu0 0
  %6372 = vmatpush1.bf16.msra.mxu0 %v6352
  %6373 = vmatprep.subr.bf16.mxu0 0
  %6374 = vmatpush1.bf16.msra.mxu0 %v6353
  %6375 = vmatprep.subr.bf16.mxu0 0
  %6376 = vmatpush1.bf16.msra.mxu0 %v6354
  %6377 = vmatprep.subr.bf16.mxu0 0
  %6378 = vmatpush1.bf16.msra.mxu0 %v6355
  %6379 = vmatprep.subr.bf16.mxu0 0
  %6380 = vmatpush1.bf16.msra.mxu0 %v6356
  %6381 = vmatprep.subr.bf16.mxu0 0
  %6382 = vmatpush1.bf16.msra.mxu0 0
  %6383 = vmatprep.subr.bf16.mxu0 0
  %6384 = vmatpush1.bf16.msra.mxu0 0
  %6385 = vmatprep.subr.bf16.mxu0 0
  %6386 = vmatpush1.bf16.msra.mxu0 0
  %6387 = vmatprep.subr.bf16.mxu0 0
  %6388 = vmatpush1.bf16.msra.mxu0 0
  %6389 = vmatprep.subr.bf16.mxu0 0
  %6390 = vmatpush1.bf16.msra.mxu0 0
  %6391 = vmatprep.subr.bf16.mxu0 0
  %6392 = vmatpush1.bf16.msra.mxu0 0
  %6393 = vmatprep.subr.bf16.mxu0 0
  %6394 = vmatpush1.bf16.msra.mxu0 0
  %6395 = vmatprep.subr.bf16.mxu0 0
  %6396 = vmatpush1.bf16.msra.mxu0 0
  %6397 = vmatprep.mubr.bf16.mxu0 0
  %6398 = vmatmul.mubr.bf16.gmra.mrb[0].mxu0 %v6295
  %v6399 = vpop.f32.mrb[0].mxu0
  %v6400 = vadd.f32 0.0, %v6399
  %v6401 = vpop.f32.mrb[0].mxu0
  %v6402 = vpop.f32.mrb[0].mxu0
  %v6403 = vadd.f32 0.0, %v6402
  %v6404 = vpop.f32.mrb[0].mxu0
  %6405 = vmatprep.mubr.bf16.mxu0 0
  %6406 = vmatmul.mubr.bf16.gmra.mrb[0].mxu0 %v6299
  %v6407 = vpop.f32.mrb[0].mxu0
  %v6408 = vadd.f32 0.0, %v6407
  %v6409 = vpop.f32.mrb[0].mxu0
  %v6410 = vpop.f32.mrb[0].mxu0
  %v6411 = vadd.f32 0.0, %v6410
  %v6412 = vpop.f32.mrb[0].mxu0
  %6413 = vmatprep.mubr.bf16.mxu0 0
  %6414 = vmatmul.mubr.bf16.gmra.mrb[0].mxu0 %v6303
  %v6415 = vpop.f32.mrb[0].mxu0
  %v6416 = vadd.f32 0.0, %v6415
  %v6417 = vpop.f32.mrb[0].mxu0
  %v6418 = vpop.f32.mrb[0].mxu0
  %v6419 = vadd.f32 0.0, %v6418
  %v6420 = vpop.f32.mrb[0].mxu0
  %6421 = vmatprep.mubr.bf16.mxu0 0
  %6422 = vmatmul.mubr.bf16.gmra.mrb[0].mxu0 %v6312
  %v6423 = vpop.f32.mrb[0].mxu0
  %v6424 = vadd.f32 0.0, %v6423
  %v6425 = vpop.f32.mrb[0].mxu0
  %v6426 = vpop.f32.mrb[0].mxu0
  %v6427 = vadd.f32 0.0, %v6426
  %v6428 = vpop.f32.mrb[0].mxu0
  %6429 = vdwg.mxu0
  %v6430 = vadd.f32 %v6257, %v6400
  %v6431 = vadd.f32 %v6258, %v6403
  %v6432 = vadd.f32 %v6259, %v6408
  %v6433 = vadd.f32 %v6260, %v6411
  %v6434 = vadd.f32 %v6261, %v6416
  %v6435 = vadd.f32 %v6262, %v6419
  %v6436 = vadd.f32 %v6263, %v6424
  %v6437 = vadd.f32 %v6264, %v6427
  %v6438 = vld [vmem:[#allocation3 + $0x8] sm:$0xf0]
  %s6439 = scalar_lea.vmem %s5, 448
  %v6440 = vld [vmem:[%s6439] sm:$0xf]
  %v6441 = vld [vmem:[%s6439 + $0x4] sm:$0xf]
  %v6442 = vld [vmem:[%s6439 + $0x8] sm:$0xf]
  %v6443 = vld [vmem:[%s6439 + $0xc] sm:$0xf]
  %v6444 = vld [vmem:[%s6439 + $0x10] sm:$0xf]
  %v6445 = vld [vmem:[%s6439 + $0x14] sm:$0xf]
  %v6446 = vld [vmem:[%s6439 + $0x18] sm:$0xf]
  %v6447 = vld [vmem:[%s6439 + $0x1c] sm:$0xf]
  %v6448 = vld [vmem:[%s6439 + $0x20] sm:$0xf]
  %v6449 = vld [vmem:[%s6439 + $0x24] sm:$0xf]
  %v6450 = vld [vmem:[%s6439 + $0x28] sm:$0xf]
  %v6451 = vld [vmem:[%s6439 + $0x2c] sm:$0xf]
  %v6452 = vld [vmem:[%s6439 + $0x30] sm:$0xf]
  %v6453 = vld [vmem:[%s6439 + $0x34] sm:$0xf]
  %v6454 = vld [vmem:[%s6439 + $0x38] sm:$0xf]
  %v6455 = vld [vmem:[%s6439 + $0x3c] sm:$0xf]
  %v6461 = vrot.slane %v6438, 4
  %v6462 = vrot.slane %v6083, 4
  %v6463 = vsel %vm2162, %v6461, %v6462
  %v6464 = vrot.slane %v6084, 4
  %v6465 = vsel %vm2162, %v6462, %v6464
  %v6466 = vrot.slane %v6085, 4
  %v6467 = vsel %vm2162, %v6464, %v6466
  %v6468 = vrot.slane %v6266, 4
  %v6469 = vsel %vm2162, %v6466, %v6468
  %v6490 = vunpack.c.l.b16 %v6440
  %v6491 = vunpack.c.l.b16 %v6441
  %v6492 = vunpack.c.l.b16 %v6442
  %v6493 = vunpack.c.l.b16 %v6443
  %v6494 = vunpack.c.l.b16 %v6444
  %v6495 = vunpack.c.l.b16 %v6445
  %v6496 = vunpack.c.l.b16 %v6446
  %v6497 = vunpack.c.l.b16 %v6447
  %v6498 = vunpack.c.l.b16 %v6448
  %v6499 = vunpack.c.l.b16 %v6449
  %v6500 = vunpack.c.l.b16 %v6450
  %v6501 = vunpack.c.l.b16 %v6451
  %v6502 = vunpack.c.l.b16 %v6452
  %v6503 = vunpack.c.l.b16 %v6453
  %v6504 = vunpack.c.l.b16 %v6454
  %v6505 = vunpack.c.l.b16 %v6455
  %v6506 = vpack.c.b16 %v6491, %v6490
  %v6507 = vpack.c.b16 %v6493, %v6492
  %v6508 = vpack.c.b16 %v6495, %v6494
  %v6509 = vpack.c.b16 %v6497, %v6496
  %v6510 = vpack.c.b16 %v6499, %v6498
  %v6511 = vpack.c.b16 %v6501, %v6500
  %v6512 = vpack.c.b16 %v6503, %v6502
  %v6513 = vpack.c.b16 %v6505, %v6504
  %6522 = vmatprep.subr.bf16.mxu0 0
  %6523 = vmatpush1.bf16.msra.mxu0 %v6506
  %6524 = vmatprep.subr.bf16.mxu0 0
  %6525 = vmatpush1.bf16.msra.mxu0 %v6507
  %6526 = vmatprep.subr.bf16.mxu0 0
  %6527 = vmatpush1.bf16.msra.mxu0 %v6508
  %6528 = vmatprep.subr.bf16.mxu0 0
  %6529 = vmatpush1.bf16.msra.mxu0 %v6509
  %6530 = vmatprep.subr.bf16.mxu0 0
  %6531 = vmatpush1.bf16.msra.mxu0 %v6510
  %6532 = vmatprep.subr.bf16.mxu0 0
  %6533 = vmatpush1.bf16.msra.mxu0 %v6511
  %6534 = vmatprep.subr.bf16.mxu0 0
  %6535 = vmatpush1.bf16.msra.mxu0 %v6512
  %6536 = vmatprep.subr.bf16.mxu0 0
  %6537 = vmatpush1.bf16.msra.mxu0 %v6513
  %6538 = vmatprep.subr.bf16.mxu0 0
  %6539 = vmatpush1.bf16.msra.mxu0 0
  %6540 = vmatprep.subr.bf16.mxu0 0
  %6541 = vmatpush1.bf16.msra.mxu0 0
  %6542 = vmatprep.subr.bf16.mxu0 0
  %6543 = vmatpush1.bf16.msra.mxu0 0
  %6544 = vmatprep.subr.bf16.mxu0 0
  %6545 = vmatpush1.bf16.msra.mxu0 0
  %6546 = vmatprep.subr.bf16.mxu0 0
  %6547 = vmatpush1.bf16.msra.mxu0 0
  %6548 = vmatprep.subr.bf16.mxu0 0
  %6549 = vmatpush1.bf16.msra.mxu0 0
  %6550 = vmatprep.subr.bf16.mxu0 0
  %6551 = vmatpush1.bf16.msra.mxu0 0
  %6552 = vmatprep.subr.bf16.mxu0 0
  %6553 = vmatpush1.bf16.msra.mxu0 0
  %6554 = vmatprep.mubr.bf16.mxu0 0
  %6555 = vmatmul.mubr.bf16.gmra.mrb[0].mxu0 %v6463
  %v6556 = vpop.f32.mrb[0].mxu0
  %v6557 = vadd.f32 0.0, %v6556
  %v6558 = vpop.f32.mrb[0].mxu0
  %v6559 = vpop.f32.mrb[0].mxu0
  %v6560 = vadd.f32 0.0, %v6559
  %v6561 = vpop.f32.mrb[0].mxu0
  %6562 = vmatprep.mubr.bf16.mxu0 0
  %6563 = vmatmul.mubr.bf16.gmra.mrb[0].mxu0 %v6465
  %v6564 = vpop.f32.mrb[0].mxu0
  %v6565 = vadd.f32 0.0, %v6564
  %v6566 = vpop.f32.mrb[0].mxu0
  %v6567 = vpop.f32.mrb[0].mxu0
  %v6568 = vadd.f32 0.0, %v6567
  %v6569 = vpop.f32.mrb[0].mxu0
  %6570 = vmatprep.mubr.bf16.mxu0 0
  %6571 = vmatmul.mubr.bf16.gmra.mrb[0].mxu0 %v6467
  %v6572 = vpop.f32.mrb[0].mxu0
  %v6573 = vadd.f32 0.0, %v6572
  %v6574 = vpop.f32.mrb[0].mxu0
  %v6575 = vpop.f32.mrb[0].mxu0
  %v6576 = vadd.f32 0.0, %v6575
  %v6577 = vpop.f32.mrb[0].mxu0
  %6578 = vmatprep.mubr.bf16.mxu0 0
  %6579 = vmatmul.mubr.bf16.gmra.mrb[0].mxu0 %v6469
  %v6580 = vpop.f32.mrb[0].mxu0
  %v6581 = vadd.f32 0.0, %v6580
  %v6582 = vpop.f32.mrb[0].mxu0
  %v6583 = vpop.f32.mrb[0].mxu0
  %v6584 = vadd.f32 0.0, %v6583
  %v6585 = vpop.f32.mrb[0].mxu0
  %6586 = vdwg.mxu0
  %v6587 = vadd.f32 %v6430, %v6557
  %v6588 = vadd.f32 %v6431, %v6560
  %v6589 = vadd.f32 %v6432, %v6565
  %v6590 = vadd.f32 %v6433, %v6568
  %v6591 = vadd.f32 %v6434, %v6573
  %v6592 = vadd.f32 %v6435, %v6576
  %v6593 = vadd.f32 %v6436, %v6581
  %v6594 = vadd.f32 %v6437, %v6584
  %v6595 = vld [vmem:[#allocation3 + $0x28] sm:$0x1f]
  %s6596 = scalar_lea.vmem %s5, 512
  %v6597 = vld [vmem:[%s6596] sm:$0xf]
  %v6598 = vld [vmem:[%s6596 + $0x4] sm:$0xf]
  %v6599 = vld [vmem:[%s6596 + $0x8] sm:$0xf]
  %v6600 = vld [vmem:[%s6596 + $0xc] sm:$0xf]
  %v6601 = vld [vmem:[%s6596 + $0x10] sm:$0xf]
  %v6602 = vld [vmem:[%s6596 + $0x14] sm:$0xf]
  %v6603 = vld [vmem:[%s6596 + $0x18] sm:$0xf]
  %v6604 = vld [vmem:[%s6596 + $0x1c] sm:$0xf]
  %v6605 = vld [vmem:[%s6596 + $0x20] sm:$0xf]
  %v6606 = vld [vmem:[%s6596 + $0x24] sm:$0xf]
  %v6607 = vld [vmem:[%s6596 + $0x28] sm:$0xf]
  %v6608 = vld [vmem:[%s6596 + $0x2c] sm:$0xf]
  %v6609 = vld [vmem:[%s6596 + $0x30] sm:$0xf]
  %v6610 = vld [vmem:[%s6596 + $0x34] sm:$0xf]
  %v6611 = vld [vmem:[%s6596 + $0x38] sm:$0xf]
  %v6612 = vld [vmem:[%s6596 + $0x3c] sm:$0xf]
  %v6614 = vshrl.u32 %v6438, 16
  %v6616 = vrot.slane %v6614, 4
  %v6617 = vshll.u32 %v6438, 16
  %v6619 = vrot.slane %v6617, 5
  %v6620 = vor.u32 %v6616, %v6619
  %v6621 = vrot.slane %v6116, 4
  %v6622 = vrot.slane %v6112, 5
  %v6623 = vor.u32 %v6621, %v6622
  %v6624 = vsel %vm2471, %v6620, %v6623
  %v6625 = vrot.slane %v6124, 4
  %v6626 = vrot.slane %v6120, 5
  %v6627 = vor.u32 %v6625, %v6626
  %v6628 = vsel %vm2471, %v6623, %v6627
  %v6629 = vrot.slane %v6132, 4
  %v6630 = vrot.slane %v6128, 5
  %v6631 = vor.u32 %v6629, %v6630
  %v6632 = vsel %vm2471, %v6627, %v6631
  %v6634 = vshrl.u32 %v6595, 16
  %v6636 = vrot.slane %v6634, 4
  %v6637 = vshll.u32 %v6595, 16
  %v6639 = vrot.slane %v6637, 5
  %v6640 = vor.u32 %v6636, %v6639
  %v6641 = vsel %vm2471, %v6631, %v6640
  %v6662 = vunpack.c.l.b16 %v6597
  %v6663 = vunpack.c.l.b16 %v6598
  %v6664 = vunpack.c.l.b16 %v6599
  %v6665 = vunpack.c.l.b16 %v6600
  %v6666 = vunpack.c.l.b16 %v6601
  %v6667 = vunpack.c.l.b16 %v6602
  %v6668 = vunpack.c.l.b16 %v6603
  %v6669 = vunpack.c.l.b16 %v6604
  %v6670 = vunpack.c.l.b16 %v6605
  %v6671 = vunpack.c.l.b16 %v6606
  %v6672 = vunpack.c.l.b16 %v6607
  %v6673 = vunpack.c.l.b16 %v6608
  %v6674 = vunpack.c.l.b16 %v6609
  %v6675 = vunpack.c.l.b16 %v6610
  %v6676 = vunpack.c.l.b16 %v6611
  %v6677 = vunpack.c.l.b16 %v6612
  %v6678 = vpack.c.b16 %v6663, %v6662
  %v6679 = vpack.c.b16 %v6665, %v6664
  %v6680 = vpack.c.b16 %v6667, %v6666
  %v6681 = vpack.c.b16 %v6669, %v6668
  %v6682 = vpack.c.b16 %v6671, %v6670
  %v6683 = vpack.c.b16 %v6673, %v6672
  %v6684 = vpack.c.b16 %v6675, %v6674
  %v6685 = vpack.c.b16 %v6677, %v6676
  %6694 = vmatprep.subr.bf16.mxu0 0
  %6695 = vmatpush1.bf16.msra.mxu0 %v6678
  %6696 = vmatprep.subr.bf16.mxu0 0
  %6697 = vmatpush1.bf16.msra.mxu0 %v6679
  %6698 = vmatprep.subr.bf16.mxu0 0
  %6699 = vmatpush1.bf16.msra.mxu0 %v6680
  %6700 = vmatprep.subr.bf16.mxu0 0
  %6701 = vmatpush1.bf16.msra.mxu0 %v6681
  %6702 = vmatprep.subr.bf16.mxu0 0
  %6703 = vmatpush1.bf16.msra.mxu0 %v6682
  %6704 = vmatprep.subr.bf16.mxu0 0
  %6705 = vmatpush1.bf16.msra.mxu0 %v6683
  %6706 = vmatprep.subr.bf16.mxu0 0
  %6707 = vmatpush1.bf16.msra.mxu0 %v6684
  %6708 = vmatprep.subr.bf16.mxu0 0
  %6709 = vmatpush1.bf16.msra.mxu0 %v6685
  %6710 = vmatprep.subr.bf16.mxu0 0
  %6711 = vmatpush1.bf16.msra.mxu0 0
  %6712 = vmatprep.subr.bf16.mxu0 0
  %6713 = vmatpush1.bf16.msra.mxu0 0
  %6714 = vmatprep.subr.bf16.mxu0 0
  %6715 = vmatpush1.bf16.msra.mxu0 0
  %6716 = vmatprep.subr.bf16.mxu0 0
  %6717 = vmatpush1.bf16.msra.mxu0 0
  %6718 = vmatprep.subr.bf16.mxu0 0
  %6719 = vmatpush1.bf16.msra.mxu0 0
  %6720 = vmatprep.subr.bf16.mxu0 0
  %6721 = vmatpush1.bf16.msra.mxu0 0
  %6722 = vmatprep.subr.bf16.mxu0 0
  %6723 = vmatpush1.bf16.msra.mxu0 0
  %6724 = vmatprep.subr.bf16.mxu0 0
  %6725 = vmatpush1.bf16.msra.mxu0 0
  %6726 = vmatprep.mubr.bf16.mxu0 0
  %6727 = vmatmul.mubr.bf16.gmra.mrb[0].mxu0 %v6624
  %v6728 = vpop.f32.mrb[0].mxu0
  %v6729 = vadd.f32 0.0, %v6728
  %v6730 = vpop.f32.mrb[0].mxu0
  %v6731 = vpop.f32.mrb[0].mxu0
  %v6732 = vadd.f32 0.0, %v6731
  %v6733 = vpop.f32.mrb[0].mxu0
  %6734 = vmatprep.mubr.bf16.mxu0 0
  %6735 = vmatmul.mubr.bf16.gmra.mrb[0].mxu0 %v6628
  %v6736 = vpop.f32.mrb[0].mxu0
  %v6737 = vadd.f32 0.0, %v6736
  %v6738 = vpop.f32.mrb[0].mxu0
  %v6739 = vpop.f32.mrb[0].mxu0
  %v6740 = vadd.f32 0.0, %v6739
  %v6741 = vpop.f32.mrb[0].mxu0
  %6742 = vmatprep.mubr.bf16.mxu0 0
  %6743 = vmatmul.mubr.bf16.gmra.mrb[0].mxu0 %v6632
  %v6744 = vpop.f32.mrb[0].mxu0
  %v6745 = vadd.f32 0.0, %v6744
  %v6746 = vpop.f32.mrb[0].mxu0
  %v6747 = vpop.f32.mrb[0].mxu0
  %v6748 = vadd.f32 0.0, %v6747
  %v6749 = vpop.f32.mrb[0].mxu0
  %6750 = vmatprep.mubr.bf16.mxu0 0
  %6751 = vmatmul.mubr.bf16.gmra.mrb[0].mxu0 %v6641
  %v6752 = vpop.f32.mrb[0].mxu0
  %v6753 = vadd.f32 0.0, %v6752
  %v6754 = vpop.f32.mrb[0].mxu0
  %v6755 = vpop.f32.mrb[0].mxu0
  %v6756 = vadd.f32 0.0, %v6755
  %v6757 = vpop.f32.mrb[0].mxu0
  %6758 = vdwg.mxu0
  %v6759 = vadd.f32 %v6587, %v6729
  %v6760 = vadd.f32 %v6588, %v6732
  %v6761 = vadd.f32 %v6589, %v6737
  %v6762 = vadd.f32 %v6590, %v6740
  %v6763 = vadd.f32 %v6591, %v6745
  %v6764 = vadd.f32 %v6592, %v6748
  %v6765 = vadd.f32 %v6593, %v6753
  %v6766 = vadd.f32 %v6594, %v6756
  %v6767 = vtanh.pop %v6759
  %v6768 = vtanh.pop %v6760
  %v6769 = vtanh.pop %v6761
  %v6770 = vtanh.pop %v6762
  %v6771 = vtanh.pop %v6763
  %v6772 = vtanh.pop %v6764
  %v6773 = vtanh.pop %v6765
  %v6774 = vtanh.pop %v6766
  %6775 = vst [vmem:[#allocation4] sm:$0xff] %v6767
  %6776 = vst [vmem:[#allocation4 + $0x8] sm:$0xff] %v6768
  %6777 = vst [vmem:[#allocation4 + $0x10] sm:$0xff] %v6769
  %6778 = vst [vmem:[#allocation4 + $0x18] sm:$0xff] %v6770
  %6779 = vst [vmem:[#allocation4 + $0x20] sm:$0xff] %v6771
  %6780 = vst [vmem:[#allocation4 + $0x28] sm:$0xff] %v6772
  %6781 = vst [vmem:[#allocation4 + $0x30] sm:$0xff] %v6773
  %6782 = vst [vmem:[#allocation4 + $0x38] sm:$0xff] %v6774
  %v6783 = vld [vmem:[#allocation4] ss:$2 sm:$0xff]
  %v6784 = vld [vmem:[%s5111] ss:$2 sm:$0xff]
  %v6785 = vld [vmem:[%s5113] ss:$2 sm:$0xff]
  %v6786 = vld [vmem:[%s5115] ss:$2 sm:$0xff]
  %v6787 = vld [vmem:[%s1312] ss:$2 sm:$0xff]
  %v6788 = vld [vmem:[%s1314] ss:$2 sm:$0xff]
  %v6789 = vld [vmem:[%s1316] ss:$2 sm:$0xff]
  %v6790 = vld [vmem:[%s1318] ss:$2 sm:$0xff]
  %v6791 = vmax.f32 %v6783, %v6787
  %v6792 = vmax.f32 %v6784, %v6788
  %v6793 = vmax.f32 %v6785, %v6789
  %v6794 = vmax.f32 %v6786, %v6790
  %6795 = vst [vmem:[#allocation5] sm:$0xff] %v6791
  %6796 = vst [vmem:[#allocation5 + $0x8] sm:$0xff] %v6792
  %6797 = vst [vmem:[#allocation5 + $0x10] sm:$0xff] %v6793
  %6798 = vst [vmem:[#allocation5 + $0x18] sm:$0xff] %v6794
  %v6799 = vld [vmem:[#allocation5] sm:$0x7]
  %v6800 = vld [vmem:[#allocation5 + $0x4] sm:$0x7]
  %v6801 = vmax.f32 %v6799, %v6800
  %6802 = vst [vmem:[#allocation6] sm:$0x7] %v6801
  %v6803 = vld [vmem:[#allocation5 + $0x8] sm:$0x7]
  %v6804 = vld [vmem:[#allocation5 + $0xc] sm:$0x7]
  %v6805 = vmax.f32 %v6803, %v6804
  %6806 = vst [vmem:[#allocation6 + $0x3] sm:$0x7] %v6805
  %v6807 = vld [vmem:[#allocation5 + $0x10] sm:$0x7]
  %v6808 = vld [vmem:[#allocation5 + $0x14] sm:$0x7]
  %v6809 = vmax.f32 %v6807, %v6808
  %6810 = vst [vmem:[#allocation6 + $0x6] sm:$0x7] %v6809
  %v6811 = vld [vmem:[%s8] sm:$0x1]
  %v6812 = vadd.f32 %v6811, 0.0
  %v6813 = vld [vmem:[#allocation6] ss:$9 sm:$0x1]
  %v6814 = vpack.c.bf16 %v6813, %v6813
  %v6815 = vld [vmem:[%s7] sm:$0xf]
  %v6816 = vld [vmem:[%s7 + $0x4] sm:$0xf]
  %v6817 = vld [vmem:[%s7 + $0x8] sm:$0xf]
  %v6818 = vld [vmem:[%s7 + $0xc] sm:$0xf]
  %v6819 = vld [vmem:[%s7 + $0x10] sm:$0xf]
  %v6820 = vld [vmem:[%s7 + $0x14] sm:$0xf]
  %v6821 = vld [vmem:[%s7 + $0x18] sm:$0xf]
  %v6822 = vld [vmem:[%s7 + $0x1c] sm:$0xf]
  %v6823 = vld [vmem:[%s7 + $0x20] sm:$0xf]
  %v6824 = vld [vmem:[%s7 + $0x24] sm:$0xf]
  %v6825 = vld [vmem:[%s7 + $0x28] sm:$0xf]
  %v6826 = vld [vmem:[%s7 + $0x2c] sm:$0xf]
  %v6827 = vld [vmem:[%s7 + $0x30] sm:$0xf]
  %v6828 = vld [vmem:[%s7 + $0x34] sm:$0xf]
  %v6829 = vld [vmem:[%s7 + $0x38] sm:$0xf]
  %v6830 = vld [vmem:[%s7 + $0x3c] sm:$0xf]
  %v6847 = vunpack.c.l.b16 %v6815
  %v6848 = vunpack.c.l.b16 %v6816
  %v6849 = vunpack.c.l.b16 %v6817
  %v6850 = vunpack.c.l.b16 %v6818
  %v6851 = vunpack.c.l.b16 %v6819
  %v6852 = vunpack.c.l.b16 %v6820
  %v6853 = vunpack.c.l.b16 %v6821
  %v6854 = vunpack.c.l.b16 %v6822
  %v6855 = vunpack.c.l.b16 %v6823
  %v6856 = vunpack.c.l.b16 %v6824
  %v6857 = vunpack.c.l.b16 %v6825
  %v6858 = vunpack.c.l.b16 %v6826
  %v6859 = vunpack.c.l.b16 %v6827
  %v6860 = vunpack.c.l.b16 %v6828
  %v6861 = vunpack.c.l.b16 %v6829
  %v6862 = vunpack.c.l.b16 %v6830
  %v6863 = vpack.c.b16 %v6848, %v6847
  %v6864 = vpack.c.b16 %v6850, %v6849
  %v6865 = vpack.c.b16 %v6852, %v6851
  %v6866 = vpack.c.b16 %v6854, %v6853
  %v6867 = vpack.c.b16 %v6856, %v6855
  %v6868 = vpack.c.b16 %v6858, %v6857
  %v6869 = vpack.c.b16 %v6860, %v6859
  %v6870 = vpack.c.b16 %v6862, %v6861
  %6879 = vmatprep.subr.bf16.mxu0 0
  %6880 = vmatpush1.bf16.msra.mxu0 %v6863
  %6881 = vmatprep.subr.bf16.mxu0 0
  %6882 = vmatpush1.bf16.msra.mxu0 %v6864
  %6883 = vmatprep.subr.bf16.mxu0 0
  %6884 = vmatpush1.bf16.msra.mxu0 %v6865
  %6885 = vmatprep.subr.bf16.mxu0 0
  %6886 = vmatpush1.bf16.msra.mxu0 %v6866
  %6887 = vmatprep.subr.bf16.mxu0 0
  %6888 = vmatpush1.bf16.msra.mxu0 %v6867
  %6889 = vmatprep.subr.bf16.mxu0 0
  %6890 = vmatpush1.bf16.msra.mxu0 %v6868
  %6891 = vmatprep.subr.bf16.mxu0 0
  %6892 = vmatpush1.bf16.msra.mxu0 %v6869
  %6893 = vmatprep.subr.bf16.mxu0 0
  %6894 = vmatpush1.bf16.msra.mxu0 %v6870
  %6895 = vmatprep.subr.bf16.mxu0 0
  %6896 = vmatpush1.bf16.msra.mxu0 0
  %6897 = vmatprep.subr.bf16.mxu0 0
  %6898 = vmatpush1.bf16.msra.mxu0 0
  %6899 = vmatprep.subr.bf16.mxu0 0
  %6900 = vmatpush1.bf16.msra.mxu0 0
  %6901 = vmatprep.subr.bf16.mxu0 0
  %6902 = vmatpush1.bf16.msra.mxu0 0
  %6903 = vmatprep.subr.bf16.mxu0 0
  %6904 = vmatpush1.bf16.msra.mxu0 0
  %6905 = vmatprep.subr.bf16.mxu0 0
  %6906 = vmatpush1.bf16.msra.mxu0 0
  %6907 = vmatprep.subr.bf16.mxu0 0
  %6908 = vmatpush1.bf16.msra.mxu0 0
  %6909 = vmatprep.subr.bf16.mxu0 0
  %6910 = vmatpush1.bf16.msra.mxu0 0
  %6911 = vmatprep.mubr.bf16.mxu0 0
  %6912 = vmatmul.mubr.bf16.gmra.mrb[0].mxu0 %v6814
  %v6913 = vpop.f32.mrb[0].mxu0
  %v6914 = vadd.f32 0.0, %v6913
  %v6915 = vpop.f32.mrb[0].mxu0
  %v6916 = vpop.f32.mrb[0].mxu0
  %v6917 = vpop.f32.mrb[0].mxu0
  %6918 = vdwg.mxu0
  %v6919 = vadd.f32 %v6812, %v6914
  %s6920 = scalar_lea.vmem %s7, 576
  %v6921 = vld [vmem:[%s6920] sm:$0xf]
  %v6922 = vld [vmem:[%s6920 + $0x4] sm:$0xf]
  %v6923 = vld [vmem:[%s6920 + $0x8] sm:$0xf]
  %v6924 = vld [vmem:[%s6920 + $0xc] sm:$0xf]
  %v6925 = vld [vmem:[%s6920 + $0x10] sm:$0xf]
  %v6926 = vld [vmem:[%s6920 + $0x14] sm:$0xf]
  %v6927 = vld [vmem:[%s6920 + $0x18] sm:$0xf]
  %v6928 = vld [vmem:[%s6920 + $0x1c] sm:$0xf]
  %v6929 = vld [vmem:[%s6920 + $0x20] sm:$0xf]
  %v6930 = vld [vmem:[%s6920 + $0x24] sm:$0xf]
  %v6931 = vld [vmem:[%s6920 + $0x28] sm:$0xf]
  %v6932 = vld [vmem:[%s6920 + $0x2c] sm:$0xf]
  %v6933 = vld [vmem:[%s6920 + $0x30] sm:$0xf]
  %v6934 = vld [vmem:[%s6920 + $0x34] sm:$0xf]
  %v6935 = vld [vmem:[%s6920 + $0x38] sm:$0xf]
  %v6936 = vld [vmem:[%s6920 + $0x3c] sm:$0xf]
  %v6953 = vunpack.c.l.b16 %v6921
  %v6954 = vunpack.c.l.b16 %v6922
  %v6955 = vunpack.c.l.b16 %v6923
  %v6956 = vunpack.c.l.b16 %v6924
  %v6957 = vunpack.c.l.b16 %v6925
  %v6958 = vunpack.c.l.b16 %v6926
  %v6959 = vunpack.c.l.b16 %v6927
  %v6960 = vunpack.c.l.b16 %v6928
  %v6961 = vunpack.c.l.b16 %v6929
  %v6962 = vunpack.c.l.b16 %v6930
  %v6963 = vunpack.c.l.b16 %v6931
  %v6964 = vunpack.c.l.b16 %v6932
  %v6965 = vunpack.c.l.b16 %v6933
  %v6966 = vunpack.c.l.b16 %v6934
  %v6967 = vunpack.c.l.b16 %v6935
  %v6968 = vunpack.c.l.b16 %v6936
  %v6969 = vpack.c.b16 %v6954, %v6953
  %v6970 = vpack.c.b16 %v6956, %v6955
  %v6971 = vpack.c.b16 %v6958, %v6957
  %v6972 = vpack.c.b16 %v6960, %v6959
  %v6973 = vpack.c.b16 %v6962, %v6961
  %v6974 = vpack.c.b16 %v6964, %v6963
  %v6975 = vpack.c.b16 %v6966, %v6965
  %v6976 = vpack.c.b16 %v6968, %v6967
  %6985 = vmatprep.subr.bf16.mxu0 0
  %6986 = vmatpush1.bf16.msra.mxu0 %v6969
  %6987 = vmatprep.subr.bf16.mxu0 0
  %6988 = vmatpush1.bf16.msra.mxu0 %v6970
  %6989 = vmatprep.subr.bf16.mxu0 0
  %6990 = vmatpush1.bf16.msra.mxu0 %v6971
  %6991 = vmatprep.subr.bf16.mxu0 0
  %6992 = vmatpush1.bf16.msra.mxu0 %v6972
  %6993 = vmatprep.subr.bf16.mxu0 0
  %6994 = vmatpush1.bf16.msra.mxu0 %v6973
  %6995 = vmatprep.subr.bf16.mxu0 0
  %6996 = vmatpush1.bf16.msra.mxu0 %v6974
  %6997 = vmatprep.subr.bf16.mxu0 0
  %6998 = vmatpush1.bf16.msra.mxu0 %v6975
  %6999 = vmatprep.subr.bf16.mxu0 0
  %7000 = vmatpush1.bf16.msra.mxu0 %v6976
  %7001 = vmatprep.subr.bf16.mxu0 0
  %7002 = vmatpush1.bf16.msra.mxu0 0
  %7003 = vmatprep.subr.bf16.mxu0 0
  %7004 = vmatpush1.bf16.msra.mxu0 0
  %7005 = vmatprep.subr.bf16.mxu0 0
  %7006 = vmatpush1.bf16.msra.mxu0 0
  %7007 = vmatprep.subr.bf16.mxu0 0
  %7008 = vmatpush1.bf16.msra.mxu0 0
  %7009 = vmatprep.subr.bf16.mxu0 0
  %7010 = vmatpush1.bf16.msra.mxu0 0
  %7011 = vmatprep.subr.bf16.mxu0 0
  %7012 = vmatpush1.bf16.msra.mxu0 0
  %7013 = vmatprep.subr.bf16.mxu0 0
  %7014 = vmatpush1.bf16.msra.mxu0 0
  %7015 = vmatprep.subr.bf16.mxu0 0
  %7016 = vmatpush1.bf16.msra.mxu0 0
  %7017 = vmatprep.mubr.bf16.mxu0 0
  %7018 = vmatmul.mubr.bf16.gmra.mrb[0].mxu0 %v6814
  %v7019 = vpop.f32.mrb[0].mxu0
  %v7020 = vadd.f32 0.0, %v7019
  %v7021 = vpop.f32.mrb[0].mxu0
  %v7022 = vpop.f32.mrb[0].mxu0
  %v7023 = vpop.f32.mrb[0].mxu0
  %7024 = vdwg.mxu0
  %v7025 = vadd.f32 %v6812, %v7020
  %s7026 = scalar_lea.vmem %s7, 1152
  %v7027 = vld [vmem:[%s7026] sm:$0xf]
  %v7028 = vld [vmem:[%s7026 + $0x4] sm:$0xf]
  %v7029 = vld [vmem:[%s7026 + $0x8] sm:$0xf]
  %v7030 = vld [vmem:[%s7026 + $0xc] sm:$0xf]
  %v7031 = vld [vmem:[%s7026 + $0x10] sm:$0xf]
  %v7032 = vld [vmem:[%s7026 + $0x14] sm:$0xf]
  %v7033 = vld [vmem:[%s7026 + $0x18] sm:$0xf]
  %v7034 = vld [vmem:[%s7026 + $0x1c] sm:$0xf]
  %v7035 = vld [vmem:[%s7026 + $0x20] sm:$0xf]
  %v7036 = vld [vmem:[%s7026 + $0x24] sm:$0xf]
  %v7037 = vld [vmem:[%s7026 + $0x28] sm:$0xf]
  %v7038 = vld [vmem:[%s7026 + $0x2c] sm:$0xf]
  %v7039 = vld [vmem:[%s7026 + $0x30] sm:$0xf]
  %v7040 = vld [vmem:[%s7026 + $0x34] sm:$0xf]
  %v7041 = vld [vmem:[%s7026 + $0x38] sm:$0xf]
  %v7042 = vld [vmem:[%s7026 + $0x3c] sm:$0xf]
  %v7059 = vunpack.c.l.b16 %v7027
  %v7060 = vunpack.c.l.b16 %v7028
  %v7061 = vunpack.c.l.b16 %v7029
  %v7062 = vunpack.c.l.b16 %v7030
  %v7063 = vunpack.c.l.b16 %v7031
  %v7064 = vunpack.c.l.b16 %v7032
  %v7065 = vunpack.c.l.b16 %v7033
  %v7066 = vunpack.c.l.b16 %v7034
  %v7067 = vunpack.c.l.b16 %v7035
  %v7068 = vunpack.c.l.b16 %v7036
  %v7069 = vunpack.c.l.b16 %v7037
  %v7070 = vunpack.c.l.b16 %v7038
  %v7071 = vunpack.c.l.b16 %v7039
  %v7072 = vunpack.c.l.b16 %v7040
  %v7073 = vunpack.c.l.b16 %v7041
  %v7074 = vunpack.c.l.b16 %v7042
  %v7075 = vpack.c.b16 %v7060, %v7059
  %v7076 = vpack.c.b16 %v7062, %v7061
  %v7077 = vpack.c.b16 %v7064, %v7063
  %v7078 = vpack.c.b16 %v7066, %v7065
  %v7079 = vpack.c.b16 %v7068, %v7067
  %v7080 = vpack.c.b16 %v7070, %v7069
  %v7081 = vpack.c.b16 %v7072, %v7071
  %v7082 = vpack.c.b16 %v7074, %v7073
  %7091 = vmatprep.subr.bf16.mxu0 0
  %7092 = vmatpush1.bf16.msra.mxu0 %v7075
  %7093 = vmatprep.subr.bf16.mxu0 0
  %7094 = vmatpush1.bf16.msra.mxu0 %v7076
  %7095 = vmatprep.subr.bf16.mxu0 0
  %7096 = vmatpush1.bf16.msra.mxu0 %v7077
  %7097 = vmatprep.subr.bf16.mxu0 0
  %7098 = vmatpush1.bf16.msra.mxu0 %v7078
  %7099 = vmatprep.subr.bf16.mxu0 0
  %7100 = vmatpush1.bf16.msra.mxu0 %v7079
  %7101 = vmatprep.subr.bf16.mxu0 0
  %7102 = vmatpush1.bf16.msra.mxu0 %v7080
  %7103 = vmatprep.subr.bf16.mxu0 0
  %7104 = vmatpush1.bf16.msra.mxu0 %v7081
  %7105 = vmatprep.subr.bf16.mxu0 0
  %7106 = vmatpush1.bf16.msra.mxu0 %v7082
  %7107 = vmatprep.subr.bf16.mxu0 0
  %7108 = vmatpush1.bf16.msra.mxu0 0
  %7109 = vmatprep.subr.bf16.mxu0 0
  %7110 = vmatpush1.bf16.msra.mxu0 0
  %7111 = vmatprep.subr.bf16.mxu0 0
  %7112 = vmatpush1.bf16.msra.mxu0 0
  %7113 = vmatprep.subr.bf16.mxu0 0
  %7114 = vmatpush1.bf16.msra.mxu0 0
  %7115 = vmatprep.subr.bf16.mxu0 0
  %7116 = vmatpush1.bf16.msra.mxu0 0
  %7117 = vmatprep.subr.bf16.mxu0 0
  %7118 = vmatpush1.bf16.msra.mxu0 0
  %7119 = vmatprep.subr.bf16.mxu0 0
  %7120 = vmatpush1.bf16.msra.mxu0 0
  %7121 = vmatprep.subr.bf16.mxu0 0
  %7122 = vmatpush1.bf16.msra.mxu0 0
  %7123 = vmatprep.mubr.bf16.mxu0 0
  %7124 = vmatmul.mubr.bf16.gmra.mrb[0].mxu0 %v6814
  %v7125 = vpop.f32.mrb[0].mxu0
  %v7126 = vadd.f32 0.0, %v7125
  %v7127 = vpop.f32.mrb[0].mxu0
  %v7128 = vpop.f32.mrb[0].mxu0
  %v7129 = vpop.f32.mrb[0].mxu0
  %7130 = vdwg.mxu0
  %v7131 = vadd.f32 %v6812, %v7126
  %s7132 = scalar_lea.vmem %s7, 1728
  %v7133 = vld [vmem:[%s7132] sm:$0xf]
  %v7134 = vld [vmem:[%s7132 + $0x4] sm:$0xf]
  %v7135 = vld [vmem:[%s7132 + $0x8] sm:$0xf]
  %v7136 = vld [vmem:[%s7132 + $0xc] sm:$0xf]
  %v7137 = vld [vmem:[%s7132 + $0x10] sm:$0xf]
  %v7138 = vld [vmem:[%s7132 + $0x14] sm:$0xf]
  %v7139 = vld [vmem:[%s7132 + $0x18] sm:$0xf]
  %v7140 = vld [vmem:[%s7132 + $0x1c] sm:$0xf]
  %v7141 = vld [vmem:[%s7132 + $0x20] sm:$0xf]
  %v7142 = vld [vmem:[%s7132 + $0x24] sm:$0xf]
  %v7143 = vld [vmem:[%s7132 + $0x28] sm:$0xf]
  %v7144 = vld [vmem:[%s7132 + $0x2c] sm:$0xf]
  %v7145 = vld [vmem:[%s7132 + $0x30] sm:$0xf]
  %v7146 = vld [vmem:[%s7132 + $0x34] sm:$0xf]
  %v7147 = vld [vmem:[%s7132 + $0x38] sm:$0xf]
  %v7148 = vld [vmem:[%s7132 + $0x3c] sm:$0xf]
  %v7165 = vunpack.c.l.b16 %v7133
  %v7166 = vunpack.c.l.b16 %v7134
  %v7167 = vunpack.c.l.b16 %v7135
  %v7168 = vunpack.c.l.b16 %v7136
  %v7169 = vunpack.c.l.b16 %v7137
  %v7170 = vunpack.c.l.b16 %v7138
  %v7171 = vunpack.c.l.b16 %v7139
  %v7172 = vunpack.c.l.b16 %v7140
  %v7173 = vunpack.c.l.b16 %v7141
  %v7174 = vunpack.c.l.b16 %v7142
  %v7175 = vunpack.c.l.b16 %v7143
  %v7176 = vunpack.c.l.b16 %v7144
  %v7177 = vunpack.c.l.b16 %v7145
  %v7178 = vunpack.c.l.b16 %v7146
  %v7179 = vunpack.c.l.b16 %v7147
  %v7180 = vunpack.c.l.b16 %v7148
  %v7181 = vpack.c.b16 %v7166, %v7165
  %v7182 = vpack.c.b16 %v7168, %v7167
  %v7183 = vpack.c.b16 %v7170, %v7169
  %v7184 = vpack.c.b16 %v7172, %v7171
  %v7185 = vpack.c.b16 %v7174, %v7173
  %v7186 = vpack.c.b16 %v7176, %v7175
  %v7187 = vpack.c.b16 %v7178, %v7177
  %v7188 = vpack.c.b16 %v7180, %v7179
  %7197 = vmatprep.subr.bf16.mxu0 0
  %7198 = vmatpush1.bf16.msra.mxu0 %v7181
  %7199 = vmatprep.subr.bf16.mxu0 0
  %7200 = vmatpush1.bf16.msra.mxu0 %v7182
  %7201 = vmatprep.subr.bf16.mxu0 0
  %7202 = vmatpush1.bf16.msra.mxu0 %v7183
  %7203 = vmatprep.subr.bf16.mxu0 0
  %7204 = vmatpush1.bf16.msra.mxu0 %v7184
  %7205 = vmatprep.subr.bf16.mxu0 0
  %7206 = vmatpush1.bf16.msra.mxu0 %v7185
  %7207 = vmatprep.subr.bf16.mxu0 0
  %7208 = vmatpush1.bf16.msra.mxu0 %v7186
  %7209 = vmatprep.subr.bf16.mxu0 0
  %7210 = vmatpush1.bf16.msra.mxu0 %v7187
  %7211 = vmatprep.subr.bf16.mxu0 0
  %7212 = vmatpush1.bf16.msra.mxu0 %v7188
  %7213 = vmatprep.subr.bf16.mxu0 0
  %7214 = vmatpush1.bf16.msra.mxu0 0
  %7215 = vmatprep.subr.bf16.mxu0 0
  %7216 = vmatpush1.bf16.msra.mxu0 0
  %7217 = vmatprep.subr.bf16.mxu0 0
  %7218 = vmatpush1.bf16.msra.mxu0 0
  %7219 = vmatprep.subr.bf16.mxu0 0
  %7220 = vmatpush1.bf16.msra.mxu0 0
  %7221 = vmatprep.subr.bf16.mxu0 0
  %7222 = vmatpush1.bf16.msra.mxu0 0
  %7223 = vmatprep.subr.bf16.mxu0 0
  %7224 = vmatpush1.bf16.msra.mxu0 0
  %7225 = vmatprep.subr.bf16.mxu0 0
  %7226 = vmatpush1.bf16.msra.mxu0 0
  %7227 = vmatprep.subr.bf16.mxu0 0
  %7228 = vmatpush1.bf16.msra.mxu0 0
  %7229 = vmatprep.mubr.bf16.mxu0 0
  %7230 = vmatmul.mubr.bf16.gmra.mrb[0].mxu0 %v6814
  %v7231 = vpop.f32.mrb[0].mxu0
  %v7232 = vadd.f32 0.0, %v7231
  %v7233 = vpop.f32.mrb[0].mxu0
  %v7234 = vpop.f32.mrb[0].mxu0
  %v7235 = vpop.f32.mrb[0].mxu0
  %7236 = vdwg.mxu0
  %v7237 = vadd.f32 %v6812, %v7232
  %s7238 = scalar_lea.vmem [#allocation6], 1
  %v7239 = vld [vmem:[%s7238] ss:$9 sm:$0x1]
  %v7240 = vpack.c.bf16 %v7239, %v7239
  %s7241 = scalar_lea.vmem %s7, 64
  %v7242 = vld [vmem:[%s7241] sm:$0xf]
  %v7243 = vld [vmem:[%s7241 + $0x4] sm:$0xf]
  %v7244 = vld [vmem:[%s7241 + $0x8] sm:$0xf]
  %v7245 = vld [vmem:[%s7241 + $0xc] sm:$0xf]
  %v7246 = vld [vmem:[%s7241 + $0x10] sm:$0xf]
  %v7247 = vld [vmem:[%s7241 + $0x14] sm:$0xf]
  %v7248 = vld [vmem:[%s7241 + $0x18] sm:$0xf]
  %v7249 = vld [vmem:[%s7241 + $0x1c] sm:$0xf]
  %v7250 = vld [vmem:[%s7241 + $0x20] sm:$0xf]
  %v7251 = vld [vmem:[%s7241 + $0x24] sm:$0xf]
  %v7252 = vld [vmem:[%s7241 + $0x28] sm:$0xf]
  %v7253 = vld [vmem:[%s7241 + $0x2c] sm:$0xf]
  %v7254 = vld [vmem:[%s7241 + $0x30] sm:$0xf]
  %v7255 = vld [vmem:[%s7241 + $0x34] sm:$0xf]
  %v7256 = vld [vmem:[%s7241 + $0x38] sm:$0xf]
  %v7257 = vld [vmem:[%s7241 + $0x3c] sm:$0xf]
  %v7274 = vunpack.c.l.b16 %v7242
  %v7275 = vunpack.c.l.b16 %v7243
  %v7276 = vunpack.c.l.b16 %v7244
  %v7277 = vunpack.c.l.b16 %v7245
  %v7278 = vunpack.c.l.b16 %v7246
  %v7279 = vunpack.c.l.b16 %v7247
  %v7280 = vunpack.c.l.b16 %v7248
  %v7281 = vunpack.c.l.b16 %v7249
  %v7282 = vunpack.c.l.b16 %v7250
  %v7283 = vunpack.c.l.b16 %v7251
  %v7284 = vunpack.c.l.b16 %v7252
  %v7285 = vunpack.c.l.b16 %v7253
  %v7286 = vunpack.c.l.b16 %v7254
  %v7287 = vunpack.c.l.b16 %v7255
  %v7288 = vunpack.c.l.b16 %v7256
  %v7289 = vunpack.c.l.b16 %v7257
  %v7290 = vpack.c.b16 %v7275, %v7274
  %v7291 = vpack.c.b16 %v7277, %v7276
  %v7292 = vpack.c.b16 %v7279, %v7278
  %v7293 = vpack.c.b16 %v7281, %v7280
  %v7294 = vpack.c.b16 %v7283, %v7282
  %v7295 = vpack.c.b16 %v7285, %v7284
  %v7296 = vpack.c.b16 %v7287, %v7286
  %v7297 = vpack.c.b16 %v7289, %v7288
  %7306 = vmatprep.subr.bf16.mxu0 0
  %7307 = vmatpush1.bf16.msra.mxu0 %v7290
  %7308 = vmatprep.subr.bf16.mxu0 0
  %7309 = vmatpush1.bf16.msra.mxu0 %v7291
  %7310 = vmatprep.subr.bf16.mxu0 0
  %7311 = vmatpush1.bf16.msra.mxu0 %v7292
  %7312 = vmatprep.subr.bf16.mxu0 0
  %7313 = vmatpush1.bf16.msra.mxu0 %v7293
  %7314 = vmatprep.subr.bf16.mxu0 0
  %7315 = vmatpush1.bf16.msra.mxu0 %v7294
  %7316 = vmatprep.subr.bf16.mxu0 0
  %7317 = vmatpush1.bf16.msra.mxu0 %v7295
  %7318 = vmatprep.subr.bf16.mxu0 0
  %7319 = vmatpush1.bf16.msra.mxu0 %v7296
  %7320 = vmatprep.subr.bf16.mxu0 0
  %7321 = vmatpush1.bf16.msra.mxu0 %v7297
  %7322 = vmatprep.subr.bf16.mxu0 0
  %7323 = vmatpush1.bf16.msra.mxu0 0
  %7324 = vmatprep.subr.bf16.mxu0 0
  %7325 = vmatpush1.bf16.msra.mxu0 0
  %7326 = vmatprep.subr.bf16.mxu0 0
  %7327 = vmatpush1.bf16.msra.mxu0 0
  %7328 = vmatprep.subr.bf16.mxu0 0
  %7329 = vmatpush1.bf16.msra.mxu0 0
  %7330 = vmatprep.subr.bf16.mxu0 0
  %7331 = vmatpush1.bf16.msra.mxu0 0
  %7332 = vmatprep.subr.bf16.mxu0 0
  %7333 = vmatpush1.bf16.msra.mxu0 0
  %7334 = vmatprep.subr.bf16.mxu0 0
  %7335 = vmatpush1.bf16.msra.mxu0 0
  %7336 = vmatprep.subr.bf16.mxu0 0
  %7337 = vmatpush1.bf16.msra.mxu0 0
  %7338 = vmatprep.mubr.bf16.mxu0 0
  %7339 = vmatmul.mubr.bf16.gmra.mrb[0].mxu0 %v7240
  %v7340 = vpop.f32.mrb[0].mxu0
  %v7341 = vadd.f32 0.0, %v7340
  %v7342 = vpop.f32.mrb[0].mxu0
  %v7343 = vpop.f32.mrb[0].mxu0
  %v7344 = vpop.f32.mrb[0].mxu0
  %7345 = vdwg.mxu0
  %v7346 = vadd.f32 %v6919, %v7341
  %s7347 = scalar_lea.vmem %s7, 640
  %v7348 = vld [vmem:[%s7347] sm:$0xf]
  %v7349 = vld [vmem:[%s7347 + $0x4] sm:$0xf]
  %v7350 = vld [vmem:[%s7347 + $0x8] sm:$0xf]
  %v7351 = vld [vmem:[%s7347 + $0xc] sm:$0xf]
  %v7352 = vld [vmem:[%s7347 + $0x10] sm:$0xf]
  %v7353 = vld [vmem:[%s7347 + $0x14] sm:$0xf]
  %v7354 = vld [vmem:[%s7347 + $0x18] sm:$0xf]
  %v7355 = vld [vmem:[%s7347 + $0x1c] sm:$0xf]
  %v7356 = vld [vmem:[%s7347 + $0x20] sm:$0xf]
  %v7357 = vld [vmem:[%s7347 + $0x24] sm:$0xf]
  %v7358 = vld [vmem:[%s7347 + $0x28] sm:$0xf]
  %v7359 = vld [vmem:[%s7347 + $0x2c] sm:$0xf]
  %v7360 = vld [vmem:[%s7347 + $0x30] sm:$0xf]
  %v7361 = vld [vmem:[%s7347 + $0x34] sm:$0xf]
  %v7362 = vld [vmem:[%s7347 + $0x38] sm:$0xf]
  %v7363 = vld [vmem:[%s7347 + $0x3c] sm:$0xf]
  %v7380 = vunpack.c.l.b16 %v7348
  %v7381 = vunpack.c.l.b16 %v7349
  %v7382 = vunpack.c.l.b16 %v7350
  %v7383 = vunpack.c.l.b16 %v7351
  %v7384 = vunpack.c.l.b16 %v7352
  %v7385 = vunpack.c.l.b16 %v7353
  %v7386 = vunpack.c.l.b16 %v7354
  %v7387 = vunpack.c.l.b16 %v7355
  %v7388 = vunpack.c.l.b16 %v7356
  %v7389 = vunpack.c.l.b16 %v7357
  %v7390 = vunpack.c.l.b16 %v7358
  %v7391 = vunpack.c.l.b16 %v7359
  %v7392 = vunpack.c.l.b16 %v7360
  %v7393 = vunpack.c.l.b16 %v7361
  %v7394 = vunpack.c.l.b16 %v7362
  %v7395 = vunpack.c.l.b16 %v7363
  %v7396 = vpack.c.b16 %v7381, %v7380
  %v7397 = vpack.c.b16 %v7383, %v7382
  %v7398 = vpack.c.b16 %v7385, %v7384
  %v7399 = vpack.c.b16 %v7387, %v7386
  %v7400 = vpack.c.b16 %v7389, %v7388
  %v7401 = vpack.c.b16 %v7391, %v7390
  %v7402 = vpack.c.b16 %v7393, %v7392
  %v7403 = vpack.c.b16 %v7395, %v7394
  %7412 = vmatprep.subr.bf16.mxu0 0
  %7413 = vmatpush1.bf16.msra.mxu0 %v7396
  %7414 = vmatprep.subr.bf16.mxu0 0
  %7415 = vmatpush1.bf16.msra.mxu0 %v7397
  %7416 = vmatprep.subr.bf16.mxu0 0
  %7417 = vmatpush1.bf16.msra.mxu0 %v7398
  %7418 = vmatprep.subr.bf16.mxu0 0
  %7419 = vmatpush1.bf16.msra.mxu0 %v7399
  %7420 = vmatprep.subr.bf16.mxu0 0
  %7421 = vmatpush1.bf16.msra.mxu0 %v7400
  %7422 = vmatprep.subr.bf16.mxu0 0
  %7423 = vmatpush1.bf16.msra.mxu0 %v7401
  %7424 = vmatprep.subr.bf16.mxu0 0
  %7425 = vmatpush1.bf16.msra.mxu0 %v7402
  %7426 = vmatprep.subr.bf16.mxu0 0
  %7427 = vmatpush1.bf16.msra.mxu0 %v7403
  %7428 = vmatprep.subr.bf16.mxu0 0
  %7429 = vmatpush1.bf16.msra.mxu0 0
  %7430 = vmatprep.subr.bf16.mxu0 0
  %7431 = vmatpush1.bf16.msra.mxu0 0
  %7432 = vmatprep.subr.bf16.mxu0 0
  %7433 = vmatpush1.bf16.msra.mxu0 0
  %7434 = vmatprep.subr.bf16.mxu0 0
  %7435 = vmatpush1.bf16.msra.mxu0 0
  %7436 = vmatprep.subr.bf16.mxu0 0
  %7437 = vmatpush1.bf16.msra.mxu0 0
  %7438 = vmatprep.subr.bf16.mxu0 0
  %7439 = vmatpush1.bf16.msra.mxu0 0
  %7440 = vmatprep.subr.bf16.mxu0 0
  %7441 = vmatpush1.bf16.msra.mxu0 0
  %7442 = vmatprep.subr.bf16.mxu0 0
  %7443 = vmatpush1.bf16.msra.mxu0 0
  %7444 = vmatprep.mubr.bf16.mxu0 0
  %7445 = vmatmul.mubr.bf16.gmra.mrb[0].mxu0 %v7240
  %v7446 = vpop.f32.mrb[0].mxu0
  %v7447 = vadd.f32 0.0, %v7446
  %v7448 = vpop.f32.mrb[0].mxu0
  %v7449 = vpop.f32.mrb[0].mxu0
  %v7450 = vpop.f32.mrb[0].mxu0
  %7451 = vdwg.mxu0
  %v7452 = vadd.f32 %v7025, %v7447
  %s7453 = scalar_lea.vmem %s7, 1216
  %v7454 = vld [vmem:[%s7453] sm:$0xf]
  %v7455 = vld [vmem:[%s7453 + $0x4] sm:$0xf]
  %v7456 = vld [vmem:[%s7453 + $0x8] sm:$0xf]
  %v7457 = vld [vmem:[%s7453 + $0xc] sm:$0xf]
  %v7458 = vld [vmem:[%s7453 + $0x10] sm:$0xf]
  %v7459 = vld [vmem:[%s7453 + $0x14] sm:$0xf]
  %v7460 = vld [vmem:[%s7453 + $0x18] sm:$0xf]
  %v7461 = vld [vmem:[%s7453 + $0x1c] sm:$0xf]
  %v7462 = vld [vmem:[%s7453 + $0x20] sm:$0xf]
  %v7463 = vld [vmem:[%s7453 + $0x24] sm:$0xf]
  %v7464 = vld [vmem:[%s7453 + $0x28] sm:$0xf]
  %v7465 = vld [vmem:[%s7453 + $0x2c] sm:$0xf]
  %v7466 = vld [vmem:[%s7453 + $0x30] sm:$0xf]
  %v7467 = vld [vmem:[%s7453 + $0x34] sm:$0xf]
  %v7468 = vld [vmem:[%s7453 + $0x38] sm:$0xf]
  %v7469 = vld [vmem:[%s7453 + $0x3c] sm:$0xf]
  %v7486 = vunpack.c.l.b16 %v7454
  %v7487 = vunpack.c.l.b16 %v7455
  %v7488 = vunpack.c.l.b16 %v7456
  %v7489 = vunpack.c.l.b16 %v7457
  %v7490 = vunpack.c.l.b16 %v7458
  %v7491 = vunpack.c.l.b16 %v7459
  %v7492 = vunpack.c.l.b16 %v7460
  %v7493 = vunpack.c.l.b16 %v7461
  %v7494 = vunpack.c.l.b16 %v7462
  %v7495 = vunpack.c.l.b16 %v7463
  %v7496 = vunpack.c.l.b16 %v7464
  %v7497 = vunpack.c.l.b16 %v7465
  %v7498 = vunpack.c.l.b16 %v7466
  %v7499 = vunpack.c.l.b16 %v7467
  %v7500 = vunpack.c.l.b16 %v7468
  %v7501 = vunpack.c.l.b16 %v7469
  %v7502 = vpack.c.b16 %v7487, %v7486
  %v7503 = vpack.c.b16 %v7489, %v7488
  %v7504 = vpack.c.b16 %v7491, %v7490
  %v7505 = vpack.c.b16 %v7493, %v7492
  %v7506 = vpack.c.b16 %v7495, %v7494
  %v7507 = vpack.c.b16 %v7497, %v7496
  %v7508 = vpack.c.b16 %v7499, %v7498
  %v7509 = vpack.c.b16 %v7501, %v7500
  %7518 = vmatprep.subr.bf16.mxu0 0
  %7519 = vmatpush1.bf16.msra.mxu0 %v7502
  %7520 = vmatprep.subr.bf16.mxu0 0
  %7521 = vmatpush1.bf16.msra.mxu0 %v7503
  %7522 = vmatprep.subr.bf16.mxu0 0
  %7523 = vmatpush1.bf16.msra.mxu0 %v7504
  %7524 = vmatprep.subr.bf16.mxu0 0
  %7525 = vmatpush1.bf16.msra.mxu0 %v7505
  %7526 = vmatprep.subr.bf16.mxu0 0
  %7527 = vmatpush1.bf16.msra.mxu0 %v7506
  %7528 = vmatprep.subr.bf16.mxu0 0
  %7529 = vmatpush1.bf16.msra.mxu0 %v7507
  %7530 = vmatprep.subr.bf16.mxu0 0
  %7531 = vmatpush1.bf16.msra.mxu0 %v7508
  %7532 = vmatprep.subr.bf16.mxu0 0
  %7533 = vmatpush1.bf16.msra.mxu0 %v7509
  %7534 = vmatprep.subr.bf16.mxu0 0
  %7535 = vmatpush1.bf16.msra.mxu0 0
  %7536 = vmatprep.subr.bf16.mxu0 0
  %7537 = vmatpush1.bf16.msra.mxu0 0
  %7538 = vmatprep.subr.bf16.mxu0 0
  %7539 = vmatpush1.bf16.msra.mxu0 0
  %7540 = vmatprep.subr.bf16.mxu0 0
  %7541 = vmatpush1.bf16.msra.mxu0 0
  %7542 = vmatprep.subr.bf16.mxu0 0
  %7543 = vmatpush1.bf16.msra.mxu0 0
  %7544 = vmatprep.subr.bf16.mxu0 0
  %7545 = vmatpush1.bf16.msra.mxu0 0
  %7546 = vmatprep.subr.bf16.mxu0 0
  %7547 = vmatpush1.bf16.msra.mxu0 0
  %7548 = vmatprep.subr.bf16.mxu0 0
  %7549 = vmatpush1.bf16.msra.mxu0 0
  %7550 = vmatprep.mubr.bf16.mxu0 0
  %7551 = vmatmul.mubr.bf16.gmra.mrb[0].mxu0 %v7240
  %v7552 = vpop.f32.mrb[0].mxu0
  %v7553 = vadd.f32 0.0, %v7552
  %v7554 = vpop.f32.mrb[0].mxu0
  %v7555 = vpop.f32.mrb[0].mxu0
  %v7556 = vpop.f32.mrb[0].mxu0
  %7557 = vdwg.mxu0
  %v7558 = vadd.f32 %v7131, %v7553
  %s7559 = scalar_lea.vmem %s7, 1792
  %v7560 = vld [vmem:[%s7559] sm:$0xf]
  %v7561 = vld [vmem:[%s7559 + $0x4] sm:$0xf]
  %v7562 = vld [vmem:[%s7559 + $0x8] sm:$0xf]
  %v7563 = vld [vmem:[%s7559 + $0xc] sm:$0xf]
  %v7564 = vld [vmem:[%s7559 + $0x10] sm:$0xf]
  %v7565 = vld [vmem:[%s7559 + $0x14] sm:$0xf]
  %v7566 = vld [vmem:[%s7559 + $0x18] sm:$0xf]
  %v7567 = vld [vmem:[%s7559 + $0x1c] sm:$0xf]
  %v7568 = vld [vmem:[%s7559 + $0x20] sm:$0xf]
  %v7569 = vld [vmem:[%s7559 + $0x24] sm:$0xf]
  %v7570 = vld [vmem:[%s7559 + $0x28] sm:$0xf]
  %v7571 = vld [vmem:[%s7559 + $0x2c] sm:$0xf]
  %v7572 = vld [vmem:[%s7559 + $0x30] sm:$0xf]
  %v7573 = vld [vmem:[%s7559 + $0x34] sm:$0xf]
  %v7574 = vld [vmem:[%s7559 + $0x38] sm:$0xf]
  %v7575 = vld [vmem:[%s7559 + $0x3c] sm:$0xf]
  %v7592 = vunpack.c.l.b16 %v7560
  %v7593 = vunpack.c.l.b16 %v7561
  %v7594 = vunpack.c.l.b16 %v7562
  %v7595 = vunpack.c.l.b16 %v7563
  %v7596 = vunpack.c.l.b16 %v7564
  %v7597 = vunpack.c.l.b16 %v7565
  %v7598 = vunpack.c.l.b16 %v7566
  %v7599 = vunpack.c.l.b16 %v7567
  %v7600 = vunpack.c.l.b16 %v7568
  %v7601 = vunpack.c.l.b16 %v7569
  %v7602 = vunpack.c.l.b16 %v7570
  %v7603 = vunpack.c.l.b16 %v7571
  %v7604 = vunpack.c.l.b16 %v7572
  %v7605 = vunpack.c.l.b16 %v7573
  %v7606 = vunpack.c.l.b16 %v7574
  %v7607 = vunpack.c.l.b16 %v7575
  %v7608 = vpack.c.b16 %v7593, %v7592
  %v7609 = vpack.c.b16 %v7595, %v7594
  %v7610 = vpack.c.b16 %v7597, %v7596
  %v7611 = vpack.c.b16 %v7599, %v7598
  %v7612 = vpack.c.b16 %v7601, %v7600
  %v7613 = vpack.c.b16 %v7603, %v7602
  %v7614 = vpack.c.b16 %v7605, %v7604
  %v7615 = vpack.c.b16 %v7607, %v7606
  %7624 = vmatprep.subr.bf16.mxu0 0
  %7625 = vmatpush1.bf16.msra.mxu0 %v7608
  %7626 = vmatprep.subr.bf16.mxu0 0
  %7627 = vmatpush1.bf16.msra.mxu0 %v7609
  %7628 = vmatprep.subr.bf16.mxu0 0
  %7629 = vmatpush1.bf16.msra.mxu0 %v7610
  %7630 = vmatprep.subr.bf16.mxu0 0
  %7631 = vmatpush1.bf16.msra.mxu0 %v7611
  %7632 = vmatprep.subr.bf16.mxu0 0
  %7633 = vmatpush1.bf16.msra.mxu0 %v7612
  %7634 = vmatprep.subr.bf16.mxu0 0
  %7635 = vmatpush1.bf16.msra.mxu0 %v7613
  %7636 = vmatprep.subr.bf16.mxu0 0
  %7637 = vmatpush1.bf16.msra.mxu0 %v7614
  %7638 = vmatprep.subr.bf16.mxu0 0
  %7639 = vmatpush1.bf16.msra.mxu0 %v7615
  %7640 = vmatprep.subr.bf16.mxu0 0
  %7641 = vmatpush1.bf16.msra.mxu0 0
  %7642 = vmatprep.subr.bf16.mxu0 0
  %7643 = vmatpush1.bf16.msra.mxu0 0
  %7644 = vmatprep.subr.bf16.mxu0 0
  %7645 = vmatpush1.bf16.msra.mxu0 0
  %7646 = vmatprep.subr.bf16.mxu0 0
  %7647 = vmatpush1.bf16.msra.mxu0 0
  %7648 = vmatprep.subr.bf16.mxu0 0
  %7649 = vmatpush1.bf16.msra.mxu0 0
  %7650 = vmatprep.subr.bf16.mxu0 0
  %7651 = vmatpush1.bf16.msra.mxu0 0
  %7652 = vmatprep.subr.bf16.mxu0 0
  %7653 = vmatpush1.bf16.msra.mxu0 0
  %7654 = vmatprep.subr.bf16.mxu0 0
  %7655 = vmatpush1.bf16.msra.mxu0 0
  %7656 = vmatprep.mubr.bf16.mxu0 0
  %7657 = vmatmul.mubr.bf16.gmra.mrb[0].mxu0 %v7240
  %v7658 = vpop.f32.mrb[0].mxu0
  %v7659 = vadd.f32 0.0, %v7658
  %v7660 = vpop.f32.mrb[0].mxu0
  %v7661 = vpop.f32.mrb[0].mxu0
  %v7662 = vpop.f32.mrb[0].mxu0
  %7663 = vdwg.mxu0
  %v7664 = vadd.f32 %v7237, %v7659
  %s7665 = scalar_lea.vmem [#allocation6], 2
  %v7666 = vld [vmem:[%s7665] ss:$9 sm:$0x1]
  %v7667 = vpack.c.bf16 %v7666, %v7666
  %s7668 = scalar_lea.vmem %s7, 128
  %v7669 = vld [vmem:[%s7668] sm:$0xf]
  %v7670 = vld [vmem:[%s7668 + $0x4] sm:$0xf]
  %v7671 = vld [vmem:[%s7668 + $0x8] sm:$0xf]
  %v7672 = vld [vmem:[%s7668 + $0xc] sm:$0xf]
  %v7673 = vld [vmem:[%s7668 + $0x10] sm:$0xf]
  %v7674 = vld [vmem:[%s7668 + $0x14] sm:$0xf]
  %v7675 = vld [vmem:[%s7668 + $0x18] sm:$0xf]
  %v7676 = vld [vmem:[%s7668 + $0x1c] sm:$0xf]
  %v7677 = vld [vmem:[%s7668 + $0x20] sm:$0xf]
  %v7678 = vld [vmem:[%s7668 + $0x24] sm:$0xf]
  %v7679 = vld [vmem:[%s7668 + $0x28] sm:$0xf]
  %v7680 = vld [vmem:[%s7668 + $0x2c] sm:$0xf]
  %v7681 = vld [vmem:[%s7668 + $0x30] sm:$0xf]
  %v7682 = vld [vmem:[%s7668 + $0x34] sm:$0xf]
  %v7683 = vld [vmem:[%s7668 + $0x38] sm:$0xf]
  %v7684 = vld [vmem:[%s7668 + $0x3c] sm:$0xf]
  %v7701 = vunpack.c.l.b16 %v7669
  %v7702 = vunpack.c.l.b16 %v7670
  %v7703 = vunpack.c.l.b16 %v7671
  %v7704 = vunpack.c.l.b16 %v7672
  %v7705 = vunpack.c.l.b16 %v7673
  %v7706 = vunpack.c.l.b16 %v7674
  %v7707 = vunpack.c.l.b16 %v7675
  %v7708 = vunpack.c.l.b16 %v7676
  %v7709 = vunpack.c.l.b16 %v7677
  %v7710 = vunpack.c.l.b16 %v7678
  %v7711 = vunpack.c.l.b16 %v7679
  %v7712 = vunpack.c.l.b16 %v7680
  %v7713 = vunpack.c.l.b16 %v7681
  %v7714 = vunpack.c.l.b16 %v7682
  %v7715 = vunpack.c.l.b16 %v7683
  %v7716 = vunpack.c.l.b16 %v7684
  %v7717 = vpack.c.b16 %v7702, %v7701
  %v7718 = vpack.c.b16 %v7704, %v7703
  %v7719 = vpack.c.b16 %v7706, %v7705
  %v7720 = vpack.c.b16 %v7708, %v7707
  %v7721 = vpack.c.b16 %v7710, %v7709
  %v7722 = vpack.c.b16 %v7712, %v7711
  %v7723 = vpack.c.b16 %v7714, %v7713
  %v7724 = vpack.c.b16 %v7716, %v7715
  %7733 = vmatprep.subr.bf16.mxu0 0
  %7734 = vmatpush1.bf16.msra.mxu0 %v7717
  %7735 = vmatprep.subr.bf16.mxu0 0
  %7736 = vmatpush1.bf16.msra.mxu0 %v7718
  %7737 = vmatprep.subr.bf16.mxu0 0
  %7738 = vmatpush1.bf16.msra.mxu0 %v7719
  %7739 = vmatprep.subr.bf16.mxu0 0
  %7740 = vmatpush1.bf16.msra.mxu0 %v7720
  %7741 = vmatprep.subr.bf16.mxu0 0
  %7742 = vmatpush1.bf16.msra.mxu0 %v7721
  %7743 = vmatprep.subr.bf16.mxu0 0
  %7744 = vmatpush1.bf16.msra.mxu0 %v7722
  %7745 = vmatprep.subr.bf16.mxu0 0
  %7746 = vmatpush1.bf16.msra.mxu0 %v7723
  %7747 = vmatprep.subr.bf16.mxu0 0
  %7748 = vmatpush1.bf16.msra.mxu0 %v7724
  %7749 = vmatprep.subr.bf16.mxu0 0
  %7750 = vmatpush1.bf16.msra.mxu0 0
  %7751 = vmatprep.subr.bf16.mxu0 0
  %7752 = vmatpush1.bf16.msra.mxu0 0
  %7753 = vmatprep.subr.bf16.mxu0 0
  %7754 = vmatpush1.bf16.msra.mxu0 0
  %7755 = vmatprep.subr.bf16.mxu0 0
  %7756 = vmatpush1.bf16.msra.mxu0 0
  %7757 = vmatprep.subr.bf16.mxu0 0
  %7758 = vmatpush1.bf16.msra.mxu0 0
  %7759 = vmatprep.subr.bf16.mxu0 0
  %7760 = vmatpush1.bf16.msra.mxu0 0
  %7761 = vmatprep.subr.bf16.mxu0 0
  %7762 = vmatpush1.bf16.msra.mxu0 0
  %7763 = vmatprep.subr.bf16.mxu0 0
  %7764 = vmatpush1.bf16.msra.mxu0 0
  %7765 = vmatprep.mubr.bf16.mxu0 0
  %7766 = vmatmul.mubr.bf16.gmra.mrb[0].mxu0 %v7667
  %v7767 = vpop.f32.mrb[0].mxu0
  %v7768 = vadd.f32 0.0, %v7767
  %v7769 = vpop.f32.mrb[0].mxu0
  %v7770 = vpop.f32.mrb[0].mxu0
  %v7771 = vpop.f32.mrb[0].mxu0
  %7772 = vdwg.mxu0
  %v7773 = vadd.f32 %v7346, %v7768
  %s7774 = scalar_lea.vmem %s7, 704
  %v7775 = vld [vmem:[%s7774] sm:$0xf]
  %v7776 = vld [vmem:[%s7774 + $0x4] sm:$0xf]
  %v7777 = vld [vmem:[%s7774 + $0x8] sm:$0xf]
  %v7778 = vld [vmem:[%s7774 + $0xc] sm:$0xf]
  %v7779 = vld [vmem:[%s7774 + $0x10] sm:$0xf]
  %v7780 = vld [vmem:[%s7774 + $0x14] sm:$0xf]
  %v7781 = vld [vmem:[%s7774 + $0x18] sm:$0xf]
  %v7782 = vld [vmem:[%s7774 + $0x1c] sm:$0xf]
  %v7783 = vld [vmem:[%s7774 + $0x20] sm:$0xf]
  %v7784 = vld [vmem:[%s7774 + $0x24] sm:$0xf]
  %v7785 = vld [vmem:[%s7774 + $0x28] sm:$0xf]
  %v7786 = vld [vmem:[%s7774 + $0x2c] sm:$0xf]
  %v7787 = vld [vmem:[%s7774 + $0x30] sm:$0xf]
  %v7788 = vld [vmem:[%s7774 + $0x34] sm:$0xf]
  %v7789 = vld [vmem:[%s7774 + $0x38] sm:$0xf]
  %v7790 = vld [vmem:[%s7774 + $0x3c] sm:$0xf]
  %v7807 = vunpack.c.l.b16 %v7775
  %v7808 = vunpack.c.l.b16 %v7776
  %v7809 = vunpack.c.l.b16 %v7777
  %v7810 = vunpack.c.l.b16 %v7778
  %v7811 = vunpack.c.l.b16 %v7779
  %v7812 = vunpack.c.l.b16 %v7780
  %v7813 = vunpack.c.l.b16 %v7781
  %v7814 = vunpack.c.l.b16 %v7782
  %v7815 = vunpack.c.l.b16 %v7783
  %v7816 = vunpack.c.l.b16 %v7784
  %v7817 = vunpack.c.l.b16 %v7785
  %v7818 = vunpack.c.l.b16 %v7786
  %v7819 = vunpack.c.l.b16 %v7787
  %v7820 = vunpack.c.l.b16 %v7788
  %v7821 = vunpack.c.l.b16 %v7789
  %v7822 = vunpack.c.l.b16 %v7790
  %v7823 = vpack.c.b16 %v7808, %v7807
  %v7824 = vpack.c.b16 %v7810, %v7809
  %v7825 = vpack.c.b16 %v7812, %v7811
  %v7826 = vpack.c.b16 %v7814, %v7813
  %v7827 = vpack.c.b16 %v7816, %v7815
  %v7828 = vpack.c.b16 %v7818, %v7817
  %v7829 = vpack.c.b16 %v7820, %v7819
  %v7830 = vpack.c.b16 %v7822, %v7821
  %7839 = vmatprep.subr.bf16.mxu0 0
  %7840 = vmatpush1.bf16.msra.mxu0 %v7823
  %7841 = vmatprep.subr.bf16.mxu0 0
  %7842 = vmatpush1.bf16.msra.mxu0 %v7824
  %7843 = vmatprep.subr.bf16.mxu0 0
  %7844 = vmatpush1.bf16.msra.mxu0 %v7825
  %7845 = vmatprep.subr.bf16.mxu0 0
  %7846 = vmatpush1.bf16.msra.mxu0 %v7826
  %7847 = vmatprep.subr.bf16.mxu0 0
  %7848 = vmatpush1.bf16.msra.mxu0 %v7827
  %7849 = vmatprep.subr.bf16.mxu0 0
  %7850 = vmatpush1.bf16.msra.mxu0 %v7828
  %7851 = vmatprep.subr.bf16.mxu0 0
  %7852 = vmatpush1.bf16.msra.mxu0 %v7829
  %7853 = vmatprep.subr.bf16.mxu0 0
  %7854 = vmatpush1.bf16.msra.mxu0 %v7830
  %7855 = vmatprep.subr.bf16.mxu0 0
  %7856 = vmatpush1.bf16.msra.mxu0 0
  %7857 = vmatprep.subr.bf16.mxu0 0
  %7858 = vmatpush1.bf16.msra.mxu0 0
  %7859 = vmatprep.subr.bf16.mxu0 0
  %7860 = vmatpush1.bf16.msra.mxu0 0
  %7861 = vmatprep.subr.bf16.mxu0 0
  %7862 = vmatpush1.bf16.msra.mxu0 0
  %7863 = vmatprep.subr.bf16.mxu0 0
  %7864 = vmatpush1.bf16.msra.mxu0 0
  %7865 = vmatprep.subr.bf16.mxu0 0
  %7866 = vmatpush1.bf16.msra.mxu0 0
  %7867 = vmatprep.subr.bf16.mxu0 0
  %7868 = vmatpush1.bf16.msra.mxu0 0
  %7869 = vmatprep.subr.bf16.mxu0 0
  %7870 = vmatpush1.bf16.msra.mxu0 0
  %7871 = vmatprep.mubr.bf16.mxu0 0
  %7872 = vmatmul.mubr.bf16.gmra.mrb[0].mxu0 %v7667
  %v7873 = vpop.f32.mrb[0].mxu0
  %v7874 = vadd.f32 0.0, %v7873
  %v7875 = vpop.f32.mrb[0].mxu0
  %v7876 = vpop.f32.mrb[0].mxu0
  %v7877 = vpop.f32.mrb[0].mxu0
  %7878 = vdwg.mxu0
  %v7879 = vadd.f32 %v7452, %v7874
  %s7880 = scalar_lea.vmem %s7, 1280
  %v7881 = vld [vmem:[%s7880] sm:$0xf]
  %v7882 = vld [vmem:[%s7880 + $0x4] sm:$0xf]
  %v7883 = vld [vmem:[%s7880 + $0x8] sm:$0xf]
  %v7884 = vld [vmem:[%s7880 + $0xc] sm:$0xf]
  %v7885 = vld [vmem:[%s7880 + $0x10] sm:$0xf]
  %v7886 = vld [vmem:[%s7880 + $0x14] sm:$0xf]
  %v7887 = vld [vmem:[%s7880 + $0x18] sm:$0xf]
  %v7888 = vld [vmem:[%s7880 + $0x1c] sm:$0xf]
  %v7889 = vld [vmem:[%s7880 + $0x20] sm:$0xf]
  %v7890 = vld [vmem:[%s7880 + $0x24] sm:$0xf]
  %v7891 = vld [vmem:[%s7880 + $0x28] sm:$0xf]
  %v7892 = vld [vmem:[%s7880 + $0x2c] sm:$0xf]
  %v7893 = vld [vmem:[%s7880 + $0x30] sm:$0xf]
  %v7894 = vld [vmem:[%s7880 + $0x34] sm:$0xf]
  %v7895 = vld [vmem:[%s7880 + $0x38] sm:$0xf]
  %v7896 = vld [vmem:[%s7880 + $0x3c] sm:$0xf]
  %v7913 = vunpack.c.l.b16 %v7881
  %v7914 = vunpack.c.l.b16 %v7882
  %v7915 = vunpack.c.l.b16 %v7883
  %v7916 = vunpack.c.l.b16 %v7884
  %v7917 = vunpack.c.l.b16 %v7885
  %v7918 = vunpack.c.l.b16 %v7886
  %v7919 = vunpack.c.l.b16 %v7887
  %v7920 = vunpack.c.l.b16 %v7888
  %v7921 = vunpack.c.l.b16 %v7889
  %v7922 = vunpack.c.l.b16 %v7890
  %v7923 = vunpack.c.l.b16 %v7891
  %v7924 = vunpack.c.l.b16 %v7892
  %v7925 = vunpack.c.l.b16 %v7893
  %v7926 = vunpack.c.l.b16 %v7894
  %v7927 = vunpack.c.l.b16 %v7895
  %v7928 = vunpack.c.l.b16 %v7896
  %v7929 = vpack.c.b16 %v7914, %v7913
  %v7930 = vpack.c.b16 %v7916, %v7915
  %v7931 = vpack.c.b16 %v7918, %v7917
  %v7932 = vpack.c.b16 %v7920, %v7919
  %v7933 = vpack.c.b16 %v7922, %v7921
  %v7934 = vpack.c.b16 %v7924, %v7923
  %v7935 = vpack.c.b16 %v7926, %v7925
  %v7936 = vpack.c.b16 %v7928, %v7927
  %7945 = vmatprep.subr.bf16.mxu0 0
  %7946 = vmatpush1.bf16.msra.mxu0 %v7929
  %7947 = vmatprep.subr.bf16.mxu0 0
  %7948 = vmatpush1.bf16.msra.mxu0 %v7930
  %7949 = vmatprep.subr.bf16.mxu0 0
  %7950 = vmatpush1.bf16.msra.mxu0 %v7931
  %7951 = vmatprep.subr.bf16.mxu0 0
  %7952 = vmatpush1.bf16.msra.mxu0 %v7932
  %7953 = vmatprep.subr.bf16.mxu0 0
  %7954 = vmatpush1.bf16.msra.mxu0 %v7933
  %7955 = vmatprep.subr.bf16.mxu0 0
  %7956 = vmatpush1.bf16.msra.mxu0 %v7934
  %7957 = vmatprep.subr.bf16.mxu0 0
  %7958 = vmatpush1.bf16.msra.mxu0 %v7935
  %7959 = vmatprep.subr.bf16.mxu0 0
  %7960 = vmatpush1.bf16.msra.mxu0 %v7936
  %7961 = vmatprep.subr.bf16.mxu0 0
  %7962 = vmatpush1.bf16.msra.mxu0 0
  %7963 = vmatprep.subr.bf16.mxu0 0
  %7964 = vmatpush1.bf16.msra.mxu0 0
  %7965 = vmatprep.subr.bf16.mxu0 0
  %7966 = vmatpush1.bf16.msra.mxu0 0
  %7967 = vmatprep.subr.bf16.mxu0 0
  %7968 = vmatpush1.bf16.msra.mxu0 0
  %7969 = vmatprep.subr.bf16.mxu0 0
  %7970 = vmatpush1.bf16.msra.mxu0 0
  %7971 = vmatprep.subr.bf16.mxu0 0
  %7972 = vmatpush1.bf16.msra.mxu0 0
  %7973 = vmatprep.subr.bf16.mxu0 0
  %7974 = vmatpush1.bf16.msra.mxu0 0
  %7975 = vmatprep.subr.bf16.mxu0 0
  %7976 = vmatpush1.bf16.msra.mxu0 0
  %7977 = vmatprep.mubr.bf16.mxu0 0
  %7978 = vmatmul.mubr.bf16.gmra.mrb[0].mxu0 %v7667
  %v7979 = vpop.f32.mrb[0].mxu0
  %v7980 = vadd.f32 0.0, %v7979
  %v7981 = vpop.f32.mrb[0].mxu0
  %v7982 = vpop.f32.mrb[0].mxu0
  %v7983 = vpop.f32.mrb[0].mxu0
  %7984 = vdwg.mxu0
  %v7985 = vadd.f32 %v7558, %v7980
  %s7986 = scalar_lea.vmem %s7, 1856
  %v7987 = vld [vmem:[%s7986] sm:$0xf]
  %v7988 = vld [vmem:[%s7986 + $0x4] sm:$0xf]
  %v7989 = vld [vmem:[%s7986 + $0x8] sm:$0xf]
  %v7990 = vld [vmem:[%s7986 + $0xc] sm:$0xf]
  %v7991 = vld [vmem:[%s7986 + $0x10] sm:$0xf]
  %v7992 = vld [vmem:[%s7986 + $0x14] sm:$0xf]
  %v7993 = vld [vmem:[%s7986 + $0x18] sm:$0xf]
  %v7994 = vld [vmem:[%s7986 + $0x1c] sm:$0xf]
  %v7995 = vld [vmem:[%s7986 + $0x20] sm:$0xf]
  %v7996 = vld [vmem:[%s7986 + $0x24] sm:$0xf]
  %v7997 = vld [vmem:[%s7986 + $0x28] sm:$0xf]
  %v7998 = vld [vmem:[%s7986 + $0x2c] sm:$0xf]
  %v7999 = vld [vmem:[%s7986 + $0x30] sm:$0xf]
  %v8000 = vld [vmem:[%s7986 + $0x34] sm:$0xf]
  %v8001 = vld [vmem:[%s7986 + $0x38] sm:$0xf]
  %v8002 = vld [vmem:[%s7986 + $0x3c] sm:$0xf]
  %v8019 = vunpack.c.l.b16 %v7987
  %v8020 = vunpack.c.l.b16 %v7988
  %v8021 = vunpack.c.l.b16 %v7989
  %v8022 = vunpack.c.l.b16 %v7990
  %v8023 = vunpack.c.l.b16 %v7991
  %v8024 = vunpack.c.l.b16 %v7992
  %v8025 = vunpack.c.l.b16 %v7993
  %v8026 = vunpack.c.l.b16 %v7994
  %v8027 = vunpack.c.l.b16 %v7995
  %v8028 = vunpack.c.l.b16 %v7996
  %v8029 = vunpack.c.l.b16 %v7997
  %v8030 = vunpack.c.l.b16 %v7998
  %v8031 = vunpack.c.l.b16 %v7999
  %v8032 = vunpack.c.l.b16 %v8000
  %v8033 = vunpack.c.l.b16 %v8001
  %v8034 = vunpack.c.l.b16 %v8002
  %v8035 = vpack.c.b16 %v8020, %v8019
  %v8036 = vpack.c.b16 %v8022, %v8021
  %v8037 = vpack.c.b16 %v8024, %v8023
  %v8038 = vpack.c.b16 %v8026, %v8025
  %v8039 = vpack.c.b16 %v8028, %v8027
  %v8040 = vpack.c.b16 %v8030, %v8029
  %v8041 = vpack.c.b16 %v8032, %v8031
  %v8042 = vpack.c.b16 %v8034, %v8033
  %8051 = vmatprep.subr.bf16.mxu0 0
  %8052 = vmatpush1.bf16.msra.mxu0 %v8035
  %8053 = vmatprep.subr.bf16.mxu0 0
  %8054 = vmatpush1.bf16.msra.mxu0 %v8036
  %8055 = vmatprep.subr.bf16.mxu0 0
  %8056 = vmatpush1.bf16.msra.mxu0 %v8037
  %8057 = vmatprep.subr.bf16.mxu0 0
  %8058 = vmatpush1.bf16.msra.mxu0 %v8038
  %8059 = vmatprep.subr.bf16.mxu0 0
  %8060 = vmatpush1.bf16.msra.mxu0 %v8039
  %8061 = vmatprep.subr.bf16.mxu0 0
  %8062 = vmatpush1.bf16.msra.mxu0 %v8040
  %8063 = vmatprep.subr.bf16.mxu0 0
  %8064 = vmatpush1.bf16.msra.mxu0 %v8041
  %8065 = vmatprep.subr.bf16.mxu0 0
  %8066 = vmatpush1.bf16.msra.mxu0 %v8042
  %8067 = vmatprep.subr.bf16.mxu0 0
  %8068 = vmatpush1.bf16.msra.mxu0 0
  %8069 = vmatprep.subr.bf16.mxu0 0
  %8070 = vmatpush1.bf16.msra.mxu0 0
  %8071 = vmatprep.subr.bf16.mxu0 0
  %8072 = vmatpush1.bf16.msra.mxu0 0
  %8073 = vmatprep.subr.bf16.mxu0 0
  %8074 = vmatpush1.bf16.msra.mxu0 0
  %8075 = vmatprep.subr.bf16.mxu0 0
  %8076 = vmatpush1.bf16.msra.mxu0 0
  %8077 = vmatprep.subr.bf16.mxu0 0
  %8078 = vmatpush1.bf16.msra.mxu0 0
  %8079 = vmatprep.subr.bf16.mxu0 0
  %8080 = vmatpush1.bf16.msra.mxu0 0
  %8081 = vmatprep.subr.bf16.mxu0 0
  %8082 = vmatpush1.bf16.msra.mxu0 0
  %8083 = vmatprep.mubr.bf16.mxu0 0
  %8084 = vmatmul.mubr.bf16.gmra.mrb[0].mxu0 %v7667
  %v8085 = vpop.f32.mrb[0].mxu0
  %v8086 = vadd.f32 0.0, %v8085
  %v8087 = vpop.f32.mrb[0].mxu0
  %v8088 = vpop.f32.mrb[0].mxu0
  %v8089 = vpop.f32.mrb[0].mxu0
  %8090 = vdwg.mxu0
  %v8091 = vadd.f32 %v7664, %v8086
  %s8092 = scalar_lea.vmem [#allocation6], 3
  %v8093 = vld [vmem:[%s8092] ss:$9 sm:$0x1]
  %v8094 = vpack.c.bf16 %v8093, %v8093
  %s8095 = scalar_lea.vmem %s7, 192
  %v8096 = vld [vmem:[%s8095] sm:$0xf]
  %v8097 = vld [vmem:[%s8095 + $0x4] sm:$0xf]
  %v8098 = vld [vmem:[%s8095 + $0x8] sm:$0xf]
  %v8099 = vld [vmem:[%s8095 + $0xc] sm:$0xf]
  %v8100 = vld [vmem:[%s8095 + $0x10] sm:$0xf]
  %v8101 = vld [vmem:[%s8095 + $0x14] sm:$0xf]
  %v8102 = vld [vmem:[%s8095 + $0x18] sm:$0xf]
  %v8103 = vld [vmem:[%s8095 + $0x1c] sm:$0xf]
  %v8104 = vld [vmem:[%s8095 + $0x20] sm:$0xf]
  %v8105 = vld [vmem:[%s8095 + $0x24] sm:$0xf]
  %v8106 = vld [vmem:[%s8095 + $0x28] sm:$0xf]
  %v8107 = vld [vmem:[%s8095 + $0x2c] sm:$0xf]
  %v8108 = vld [vmem:[%s8095 + $0x30] sm:$0xf]
  %v8109 = vld [vmem:[%s8095 + $0x34] sm:$0xf]
  %v8110 = vld [vmem:[%s8095 + $0x38] sm:$0xf]
  %v8111 = vld [vmem:[%s8095 + $0x3c] sm:$0xf]
  %v8128 = vunpack.c.l.b16 %v8096
  %v8129 = vunpack.c.l.b16 %v8097
  %v8130 = vunpack.c.l.b16 %v8098
  %v8131 = vunpack.c.l.b16 %v8099
  %v8132 = vunpack.c.l.b16 %v8100
  %v8133 = vunpack.c.l.b16 %v8101
  %v8134 = vunpack.c.l.b16 %v8102
  %v8135 = vunpack.c.l.b16 %v8103
  %v8136 = vunpack.c.l.b16 %v8104
  %v8137 = vunpack.c.l.b16 %v8105
  %v8138 = vunpack.c.l.b16 %v8106
  %v8139 = vunpack.c.l.b16 %v8107
  %v8140 = vunpack.c.l.b16 %v8108
  %v8141 = vunpack.c.l.b16 %v8109
  %v8142 = vunpack.c.l.b16 %v8110
  %v8143 = vunpack.c.l.b16 %v8111
  %v8144 = vpack.c.b16 %v8129, %v8128
  %v8145 = vpack.c.b16 %v8131, %v8130
  %v8146 = vpack.c.b16 %v8133, %v8132
  %v8147 = vpack.c.b16 %v8135, %v8134
  %v8148 = vpack.c.b16 %v8137, %v8136
  %v8149 = vpack.c.b16 %v8139, %v8138
  %v8150 = vpack.c.b16 %v8141, %v8140
  %v8151 = vpack.c.b16 %v8143, %v8142
  %8160 = vmatprep.subr.bf16.mxu0 0
  %8161 = vmatpush1.bf16.msra.mxu0 %v8144
  %8162 = vmatprep.subr.bf16.mxu0 0
  %8163 = vmatpush1.bf16.msra.mxu0 %v8145
  %8164 = vmatprep.subr.bf16.mxu0 0
  %8165 = vmatpush1.bf16.msra.mxu0 %v8146
  %8166 = vmatprep.subr.bf16.mxu0 0
  %8167 = vmatpush1.bf16.msra.mxu0 %v8147
  %8168 = vmatprep.subr.bf16.mxu0 0
  %8169 = vmatpush1.bf16.msra.mxu0 %v8148
  %8170 = vmatprep.subr.bf16.mxu0 0
  %8171 = vmatpush1.bf16.msra.mxu0 %v8149
  %8172 = vmatprep.subr.bf16.mxu0 0
  %8173 = vmatpush1.bf16.msra.mxu0 %v8150
  %8174 = vmatprep.subr.bf16.mxu0 0
  %8175 = vmatpush1.bf16.msra.mxu0 %v8151
  %8176 = vmatprep.subr.bf16.mxu0 0
  %8177 = vmatpush1.bf16.msra.mxu0 0
  %8178 = vmatprep.subr.bf16.mxu0 0
  %8179 = vmatpush1.bf16.msra.mxu0 0
  %8180 = vmatprep.subr.bf16.mxu0 0
  %8181 = vmatpush1.bf16.msra.mxu0 0
  %8182 = vmatprep.subr.bf16.mxu0 0
  %8183 = vmatpush1.bf16.msra.mxu0 0
  %8184 = vmatprep.subr.bf16.mxu0 0
  %8185 = vmatpush1.bf16.msra.mxu0 0
  %8186 = vmatprep.subr.bf16.mxu0 0
  %8187 = vmatpush1.bf16.msra.mxu0 0
  %8188 = vmatprep.subr.bf16.mxu0 0
  %8189 = vmatpush1.bf16.msra.mxu0 0
  %8190 = vmatprep.subr.bf16.mxu0 0
  %8191 = vmatpush1.bf16.msra.mxu0 0
  %8192 = vmatprep.mubr.bf16.mxu0 0
  %8193 = vmatmul.mubr.bf16.gmra.mrb[0].mxu0 %v8094
  %v8194 = vpop.f32.mrb[0].mxu0
  %v8195 = vadd.f32 0.0, %v8194
  %v8196 = vpop.f32.mrb[0].mxu0
  %v8197 = vpop.f32.mrb[0].mxu0
  %v8198 = vpop.f32.mrb[0].mxu0
  %8199 = vdwg.mxu0
  %v8200 = vadd.f32 %v7773, %v8195
  %s8201 = scalar_lea.vmem %s7, 768
  %v8202 = vld [vmem:[%s8201] sm:$0xf]
  %v8203 = vld [vmem:[%s8201 + $0x4] sm:$0xf]
  %v8204 = vld [vmem:[%s8201 + $0x8] sm:$0xf]
  %v8205 = vld [vmem:[%s8201 + $0xc] sm:$0xf]
  %v8206 = vld [vmem:[%s8201 + $0x10] sm:$0xf]
  %v8207 = vld [vmem:[%s8201 + $0x14] sm:$0xf]
  %v8208 = vld [vmem:[%s8201 + $0x18] sm:$0xf]
  %v8209 = vld [vmem:[%s8201 + $0x1c] sm:$0xf]
  %v8210 = vld [vmem:[%s8201 + $0x20] sm:$0xf]
  %v8211 = vld [vmem:[%s8201 + $0x24] sm:$0xf]
  %v8212 = vld [vmem:[%s8201 + $0x28] sm:$0xf]
  %v8213 = vld [vmem:[%s8201 + $0x2c] sm:$0xf]
  %v8214 = vld [vmem:[%s8201 + $0x30] sm:$0xf]
  %v8215 = vld [vmem:[%s8201 + $0x34] sm:$0xf]
  %v8216 = vld [vmem:[%s8201 + $0x38] sm:$0xf]
  %v8217 = vld [vmem:[%s8201 + $0x3c] sm:$0xf]
  %v8234 = vunpack.c.l.b16 %v8202
  %v8235 = vunpack.c.l.b16 %v8203
  %v8236 = vunpack.c.l.b16 %v8204
  %v8237 = vunpack.c.l.b16 %v8205
  %v8238 = vunpack.c.l.b16 %v8206
  %v8239 = vunpack.c.l.b16 %v8207
  %v8240 = vunpack.c.l.b16 %v8208
  %v8241 = vunpack.c.l.b16 %v8209
  %v8242 = vunpack.c.l.b16 %v8210
  %v8243 = vunpack.c.l.b16 %v8211
  %v8244 = vunpack.c.l.b16 %v8212
  %v8245 = vunpack.c.l.b16 %v8213
  %v8246 = vunpack.c.l.b16 %v8214
  %v8247 = vunpack.c.l.b16 %v8215
  %v8248 = vunpack.c.l.b16 %v8216
  %v8249 = vunpack.c.l.b16 %v8217
  %v8250 = vpack.c.b16 %v8235, %v8234
  %v8251 = vpack.c.b16 %v8237, %v8236
  %v8252 = vpack.c.b16 %v8239, %v8238
  %v8253 = vpack.c.b16 %v8241, %v8240
  %v8254 = vpack.c.b16 %v8243, %v8242
  %v8255 = vpack.c.b16 %v8245, %v8244
  %v8256 = vpack.c.b16 %v8247, %v8246
  %v8257 = vpack.c.b16 %v8249, %v8248
  %8266 = vmatprep.subr.bf16.mxu0 0
  %8267 = vmatpush1.bf16.msra.mxu0 %v8250
  %8268 = vmatprep.subr.bf16.mxu0 0
  %8269 = vmatpush1.bf16.msra.mxu0 %v8251
  %8270 = vmatprep.subr.bf16.mxu0 0
  %8271 = vmatpush1.bf16.msra.mxu0 %v8252
  %8272 = vmatprep.subr.bf16.mxu0 0
  %8273 = vmatpush1.bf16.msra.mxu0 %v8253
  %8274 = vmatprep.subr.bf16.mxu0 0
  %8275 = vmatpush1.bf16.msra.mxu0 %v8254
  %8276 = vmatprep.subr.bf16.mxu0 0
  %8277 = vmatpush1.bf16.msra.mxu0 %v8255
  %8278 = vmatprep.subr.bf16.mxu0 0
  %8279 = vmatpush1.bf16.msra.mxu0 %v8256
  %8280 = vmatprep.subr.bf16.mxu0 0
  %8281 = vmatpush1.bf16.msra.mxu0 %v8257
  %8282 = vmatprep.subr.bf16.mxu0 0
  %8283 = vmatpush1.bf16.msra.mxu0 0
  %8284 = vmatprep.subr.bf16.mxu0 0
  %8285 = vmatpush1.bf16.msra.mxu0 0
  %8286 = vmatprep.subr.bf16.mxu0 0
  %8287 = vmatpush1.bf16.msra.mxu0 0
  %8288 = vmatprep.subr.bf16.mxu0 0
  %8289 = vmatpush1.bf16.msra.mxu0 0
  %8290 = vmatprep.subr.bf16.mxu0 0
  %8291 = vmatpush1.bf16.msra.mxu0 0
  %8292 = vmatprep.subr.bf16.mxu0 0
  %8293 = vmatpush1.bf16.msra.mxu0 0
  %8294 = vmatprep.subr.bf16.mxu0 0
  %8295 = vmatpush1.bf16.msra.mxu0 0
  %8296 = vmatprep.subr.bf16.mxu0 0
  %8297 = vmatpush1.bf16.msra.mxu0 0
  %8298 = vmatprep.mubr.bf16.mxu0 0
  %8299 = vmatmul.mubr.bf16.gmra.mrb[0].mxu0 %v8094
  %v8300 = vpop.f32.mrb[0].mxu0
  %v8301 = vadd.f32 0.0, %v8300
  %v8302 = vpop.f32.mrb[0].mxu0
  %v8303 = vpop.f32.mrb[0].mxu0
  %v8304 = vpop.f32.mrb[0].mxu0
  %8305 = vdwg.mxu0
  %v8306 = vadd.f32 %v7879, %v8301
  %s8307 = scalar_lea.vmem %s7, 1344
  %v8308 = vld [vmem:[%s8307] sm:$0xf]
  %v8309 = vld [vmem:[%s8307 + $0x4] sm:$0xf]
  %v8310 = vld [vmem:[%s8307 + $0x8] sm:$0xf]
  %v8311 = vld [vmem:[%s8307 + $0xc] sm:$0xf]
  %v8312 = vld [vmem:[%s8307 + $0x10] sm:$0xf]
  %v8313 = vld [vmem:[%s8307 + $0x14] sm:$0xf]
  %v8314 = vld [vmem:[%s8307 + $0x18] sm:$0xf]
  %v8315 = vld [vmem:[%s8307 + $0x1c] sm:$0xf]
  %v8316 = vld [vmem:[%s8307 + $0x20] sm:$0xf]
  %v8317 = vld [vmem:[%s8307 + $0x24] sm:$0xf]
  %v8318 = vld [vmem:[%s8307 + $0x28] sm:$0xf]
  %v8319 = vld [vmem:[%s8307 + $0x2c] sm:$0xf]
  %v8320 = vld [vmem:[%s8307 + $0x30] sm:$0xf]
  %v8321 = vld [vmem:[%s8307 + $0x34] sm:$0xf]
  %v8322 = vld [vmem:[%s8307 + $0x38] sm:$0xf]
  %v8323 = vld [vmem:[%s8307 + $0x3c] sm:$0xf]
  %v8340 = vunpack.c.l.b16 %v8308
  %v8341 = vunpack.c.l.b16 %v8309
  %v8342 = vunpack.c.l.b16 %v8310
  %v8343 = vunpack.c.l.b16 %v8311
  %v8344 = vunpack.c.l.b16 %v8312
  %v8345 = vunpack.c.l.b16 %v8313
  %v8346 = vunpack.c.l.b16 %v8314
  %v8347 = vunpack.c.l.b16 %v8315
  %v8348 = vunpack.c.l.b16 %v8316
  %v8349 = vunpack.c.l.b16 %v8317
  %v8350 = vunpack.c.l.b16 %v8318
  %v8351 = vunpack.c.l.b16 %v8319
  %v8352 = vunpack.c.l.b16 %v8320
  %v8353 = vunpack.c.l.b16 %v8321
  %v8354 = vunpack.c.l.b16 %v8322
  %v8355 = vunpack.c.l.b16 %v8323
  %v8356 = vpack.c.b16 %v8341, %v8340
  %v8357 = vpack.c.b16 %v8343, %v8342
  %v8358 = vpack.c.b16 %v8345, %v8344
  %v8359 = vpack.c.b16 %v8347, %v8346
  %v8360 = vpack.c.b16 %v8349, %v8348
  %v8361 = vpack.c.b16 %v8351, %v8350
  %v8362 = vpack.c.b16 %v8353, %v8352
  %v8363 = vpack.c.b16 %v8355, %v8354
  %8372 = vmatprep.subr.bf16.mxu0 0
  %8373 = vmatpush1.bf16.msra.mxu0 %v8356
  %8374 = vmatprep.subr.bf16.mxu0 0
  %8375 = vmatpush1.bf16.msra.mxu0 %v8357
  %8376 = vmatprep.subr.bf16.mxu0 0
  %8377 = vmatpush1.bf16.msra.mxu0 %v8358
  %8378 = vmatprep.subr.bf16.mxu0 0
  %8379 = vmatpush1.bf16.msra.mxu0 %v8359
  %8380 = vmatprep.subr.bf16.mxu0 0
  %8381 = vmatpush1.bf16.msra.mxu0 %v8360
  %8382 = vmatprep.subr.bf16.mxu0 0
  %8383 = vmatpush1.bf16.msra.mxu0 %v8361
  %8384 = vmatprep.subr.bf16.mxu0 0
  %8385 = vmatpush1.bf16.msra.mxu0 %v8362
  %8386 = vmatprep.subr.bf16.mxu0 0
  %8387 = vmatpush1.bf16.msra.mxu0 %v8363
  %8388 = vmatprep.subr.bf16.mxu0 0
  %8389 = vmatpush1.bf16.msra.mxu0 0
  %8390 = vmatprep.subr.bf16.mxu0 0
  %8391 = vmatpush1.bf16.msra.mxu0 0
  %8392 = vmatprep.subr.bf16.mxu0 0
  %8393 = vmatpush1.bf16.msra.mxu0 0
  %8394 = vmatprep.subr.bf16.mxu0 0
  %8395 = vmatpush1.bf16.msra.mxu0 0
  %8396 = vmatprep.subr.bf16.mxu0 0
  %8397 = vmatpush1.bf16.msra.mxu0 0
  %8398 = vmatprep.subr.bf16.mxu0 0
  %8399 = vmatpush1.bf16.msra.mxu0 0
  %8400 = vmatprep.subr.bf16.mxu0 0
  %8401 = vmatpush1.bf16.msra.mxu0 0
  %8402 = vmatprep.subr.bf16.mxu0 0
  %8403 = vmatpush1.bf16.msra.mxu0 0
  %8404 = vmatprep.mubr.bf16.mxu0 0
  %8405 = vmatmul.mubr.bf16.gmra.mrb[0].mxu0 %v8094
  %v8406 = vpop.f32.mrb[0].mxu0
  %v8407 = vadd.f32 0.0, %v8406
  %v8408 = vpop.f32.mrb[0].mxu0
  %v8409 = vpop.f32.mrb[0].mxu0
  %v8410 = vpop.f32.mrb[0].mxu0
  %8411 = vdwg.mxu0
  %v8412 = vadd.f32 %v7985, %v8407
  %s8413 = scalar_lea.vmem %s7, 1920
  %v8414 = vld [vmem:[%s8413] sm:$0xf]
  %v8415 = vld [vmem:[%s8413 + $0x4] sm:$0xf]
  %v8416 = vld [vmem:[%s8413 + $0x8] sm:$0xf]
  %v8417 = vld [vmem:[%s8413 + $0xc] sm:$0xf]
  %v8418 = vld [vmem:[%s8413 + $0x10] sm:$0xf]
  %v8419 = vld [vmem:[%s8413 + $0x14] sm:$0xf]
  %v8420 = vld [vmem:[%s8413 + $0x18] sm:$0xf]
  %v8421 = vld [vmem:[%s8413 + $0x1c] sm:$0xf]
  %v8422 = vld [vmem:[%s8413 + $0x20] sm:$0xf]
  %v8423 = vld [vmem:[%s8413 + $0x24] sm:$0xf]
  %v8424 = vld [vmem:[%s8413 + $0x28] sm:$0xf]
  %v8425 = vld [vmem:[%s8413 + $0x2c] sm:$0xf]
  %v8426 = vld [vmem:[%s8413 + $0x30] sm:$0xf]
  %v8427 = vld [vmem:[%s8413 + $0x34] sm:$0xf]
  %v8428 = vld [vmem:[%s8413 + $0x38] sm:$0xf]
  %v8429 = vld [vmem:[%s8413 + $0x3c] sm:$0xf]
  %v8446 = vunpack.c.l.b16 %v8414
  %v8447 = vunpack.c.l.b16 %v8415
  %v8448 = vunpack.c.l.b16 %v8416
  %v8449 = vunpack.c.l.b16 %v8417
  %v8450 = vunpack.c.l.b16 %v8418
  %v8451 = vunpack.c.l.b16 %v8419
  %v8452 = vunpack.c.l.b16 %v8420
  %v8453 = vunpack.c.l.b16 %v8421
  %v8454 = vunpack.c.l.b16 %v8422
  %v8455 = vunpack.c.l.b16 %v8423
  %v8456 = vunpack.c.l.b16 %v8424
  %v8457 = vunpack.c.l.b16 %v8425
  %v8458 = vunpack.c.l.b16 %v8426
  %v8459 = vunpack.c.l.b16 %v8427
  %v8460 = vunpack.c.l.b16 %v8428
  %v8461 = vunpack.c.l.b16 %v8429
  %v8462 = vpack.c.b16 %v8447, %v8446
  %v8463 = vpack.c.b16 %v8449, %v8448
  %v8464 = vpack.c.b16 %v8451, %v8450
  %v8465 = vpack.c.b16 %v8453, %v8452
  %v8466 = vpack.c.b16 %v8455, %v8454
  %v8467 = vpack.c.b16 %v8457, %v8456
  %v8468 = vpack.c.b16 %v8459, %v8458
  %v8469 = vpack.c.b16 %v8461, %v8460
  %8478 = vmatprep.subr.bf16.mxu0 0
  %8479 = vmatpush1.bf16.msra.mxu0 %v8462
  %8480 = vmatprep.subr.bf16.mxu0 0
  %8481 = vmatpush1.bf16.msra.mxu0 %v8463
  %8482 = vmatprep.subr.bf16.mxu0 0
  %8483 = vmatpush1.bf16.msra.mxu0 %v8464
  %8484 = vmatprep.subr.bf16.mxu0 0
  %8485 = vmatpush1.bf16.msra.mxu0 %v8465
  %8486 = vmatprep.subr.bf16.mxu0 0
  %8487 = vmatpush1.bf16.msra.mxu0 %v8466
  %8488 = vmatprep.subr.bf16.mxu0 0
  %8489 = vmatpush1.bf16.msra.mxu0 %v8467
  %8490 = vmatprep.subr.bf16.mxu0 0
  %8491 = vmatpush1.bf16.msra.mxu0 %v8468
  %8492 = vmatprep.subr.bf16.mxu0 0
  %8493 = vmatpush1.bf16.msra.mxu0 %v8469
  %8494 = vmatprep.subr.bf16.mxu0 0
  %8495 = vmatpush1.bf16.msra.mxu0 0
  %8496 = vmatprep.subr.bf16.mxu0 0
  %8497 = vmatpush1.bf16.msra.mxu0 0
  %8498 = vmatprep.subr.bf16.mxu0 0
  %8499 = vmatpush1.bf16.msra.mxu0 0
  %8500 = vmatprep.subr.bf16.mxu0 0
  %8501 = vmatpush1.bf16.msra.mxu0 0
  %8502 = vmatprep.subr.bf16.mxu0 0
  %8503 = vmatpush1.bf16.msra.mxu0 0
  %8504 = vmatprep.subr.bf16.mxu0 0
  %8505 = vmatpush1.bf16.msra.mxu0 0
  %8506 = vmatprep.subr.bf16.mxu0 0
  %8507 = vmatpush1.bf16.msra.mxu0 0
  %8508 = vmatprep.subr.bf16.mxu0 0
  %8509 = vmatpush1.bf16.msra.mxu0 0
  %8510 = vmatprep.mubr.bf16.mxu0 0
  %8511 = vmatmul.mubr.bf16.gmra.mrb[0].mxu0 %v8094
  %v8512 = vpop.f32.mrb[0].mxu0
  %v8513 = vadd.f32 0.0, %v8512
  %v8514 = vpop.f32.mrb[0].mxu0
  %v8515 = vpop.f32.mrb[0].mxu0
  %v8516 = vpop.f32.mrb[0].mxu0
  %8517 = vdwg.mxu0
  %v8518 = vadd.f32 %v8091, %v8513
  %s8519 = scalar_lea.vmem [#allocation6], 4
  %v8520 = vld [vmem:[%s8519] ss:$9 sm:$0x1]
  %v8521 = vpack.c.bf16 %v8520, %v8520
  %s8522 = scalar_lea.vmem %s7, 256
  %v8523 = vld [vmem:[%s8522] sm:$0xf]
  %v8524 = vld [vmem:[%s8522 + $0x4] sm:$0xf]
  %v8525 = vld [vmem:[%s8522 + $0x8] sm:$0xf]
  %v8526 = vld [vmem:[%s8522 + $0xc] sm:$0xf]
  %v8527 = vld [vmem:[%s8522 + $0x10] sm:$0xf]
  %v8528 = vld [vmem:[%s8522 + $0x14] sm:$0xf]
  %v8529 = vld [vmem:[%s8522 + $0x18] sm:$0xf]
  %v8530 = vld [vmem:[%s8522 + $0x1c] sm:$0xf]
  %v8531 = vld [vmem:[%s8522 + $0x20] sm:$0xf]
  %v8532 = vld [vmem:[%s8522 + $0x24] sm:$0xf]
  %v8533 = vld [vmem:[%s8522 + $0x28] sm:$0xf]
  %v8534 = vld [vmem:[%s8522 + $0x2c] sm:$0xf]
  %v8535 = vld [vmem:[%s8522 + $0x30] sm:$0xf]
  %v8536 = vld [vmem:[%s8522 + $0x34] sm:$0xf]
  %v8537 = vld [vmem:[%s8522 + $0x38] sm:$0xf]
  %v8538 = vld [vmem:[%s8522 + $0x3c] sm:$0xf]
  %v8555 = vunpack.c.l.b16 %v8523
  %v8556 = vunpack.c.l.b16 %v8524
  %v8557 = vunpack.c.l.b16 %v8525
  %v8558 = vunpack.c.l.b16 %v8526
  %v8559 = vunpack.c.l.b16 %v8527
  %v8560 = vunpack.c.l.b16 %v8528
  %v8561 = vunpack.c.l.b16 %v8529
  %v8562 = vunpack.c.l.b16 %v8530
  %v8563 = vunpack.c.l.b16 %v8531
  %v8564 = vunpack.c.l.b16 %v8532
  %v8565 = vunpack.c.l.b16 %v8533
  %v8566 = vunpack.c.l.b16 %v8534
  %v8567 = vunpack.c.l.b16 %v8535
  %v8568 = vunpack.c.l.b16 %v8536
  %v8569 = vunpack.c.l.b16 %v8537
  %v8570 = vunpack.c.l.b16 %v8538
  %v8571 = vpack.c.b16 %v8556, %v8555
  %v8572 = vpack.c.b16 %v8558, %v8557
  %v8573 = vpack.c.b16 %v8560, %v8559
  %v8574 = vpack.c.b16 %v8562, %v8561
  %v8575 = vpack.c.b16 %v8564, %v8563
  %v8576 = vpack.c.b16 %v8566, %v8565
  %v8577 = vpack.c.b16 %v8568, %v8567
  %v8578 = vpack.c.b16 %v8570, %v8569
  %8587 = vmatprep.subr.bf16.mxu0 0
  %8588 = vmatpush1.bf16.msra.mxu0 %v8571
  %8589 = vmatprep.subr.bf16.mxu0 0
  %8590 = vmatpush1.bf16.msra.mxu0 %v8572
  %8591 = vmatprep.subr.bf16.mxu0 0
  %8592 = vmatpush1.bf16.msra.mxu0 %v8573
  %8593 = vmatprep.subr.bf16.mxu0 0
  %8594 = vmatpush1.bf16.msra.mxu0 %v8574
  %8595 = vmatprep.subr.bf16.mxu0 0
  %8596 = vmatpush1.bf16.msra.mxu0 %v8575
  %8597 = vmatprep.subr.bf16.mxu0 0
  %8598 = vmatpush1.bf16.msra.mxu0 %v8576
  %8599 = vmatprep.subr.bf16.mxu0 0
  %8600 = vmatpush1.bf16.msra.mxu0 %v8577
  %8601 = vmatprep.subr.bf16.mxu0 0
  %8602 = vmatpush1.bf16.msra.mxu0 %v8578
  %8603 = vmatprep.subr.bf16.mxu0 0
  %8604 = vmatpush1.bf16.msra.mxu0 0
  %8605 = vmatprep.subr.bf16.mxu0 0
  %8606 = vmatpush1.bf16.msra.mxu0 0
  %8607 = vmatprep.subr.bf16.mxu0 0
  %8608 = vmatpush1.bf16.msra.mxu0 0
  %8609 = vmatprep.subr.bf16.mxu0 0
  %8610 = vmatpush1.bf16.msra.mxu0 0
  %8611 = vmatprep.subr.bf16.mxu0 0
  %8612 = vmatpush1.bf16.msra.mxu0 0
  %8613 = vmatprep.subr.bf16.mxu0 0
  %8614 = vmatpush1.bf16.msra.mxu0 0
  %8615 = vmatprep.subr.bf16.mxu0 0
  %8616 = vmatpush1.bf16.msra.mxu0 0
  %8617 = vmatprep.subr.bf16.mxu0 0
  %8618 = vmatpush1.bf16.msra.mxu0 0
  %8619 = vmatprep.mubr.bf16.mxu0 0
  %8620 = vmatmul.mubr.bf16.gmra.mrb[0].mxu0 %v8521
  %v8621 = vpop.f32.mrb[0].mxu0
  %v8622 = vadd.f32 0.0, %v8621
  %v8623 = vpop.f32.mrb[0].mxu0
  %v8624 = vpop.f32.mrb[0].mxu0
  %v8625 = vpop.f32.mrb[0].mxu0
  %8626 = vdwg.mxu0
  %v8627 = vadd.f32 %v8200, %v8622
  %s8628 = scalar_lea.vmem %s7, 832
  %v8629 = vld [vmem:[%s8628] sm:$0xf]
  %v8630 = vld [vmem:[%s8628 + $0x4] sm:$0xf]
  %v8631 = vld [vmem:[%s8628 + $0x8] sm:$0xf]
  %v8632 = vld [vmem:[%s8628 + $0xc] sm:$0xf]
  %v8633 = vld [vmem:[%s8628 + $0x10] sm:$0xf]
  %v8634 = vld [vmem:[%s8628 + $0x14] sm:$0xf]
  %v8635 = vld [vmem:[%s8628 + $0x18] sm:$0xf]
  %v8636 = vld [vmem:[%s8628 + $0x1c] sm:$0xf]
  %v8637 = vld [vmem:[%s8628 + $0x20] sm:$0xf]
  %v8638 = vld [vmem:[%s8628 + $0x24] sm:$0xf]
  %v8639 = vld [vmem:[%s8628 + $0x28] sm:$0xf]
  %v8640 = vld [vmem:[%s8628 + $0x2c] sm:$0xf]
  %v8641 = vld [vmem:[%s8628 + $0x30] sm:$0xf]
  %v8642 = vld [vmem:[%s8628 + $0x34] sm:$0xf]
  %v8643 = vld [vmem:[%s8628 + $0x38] sm:$0xf]
  %v8644 = vld [vmem:[%s8628 + $0x3c] sm:$0xf]
  %v8661 = vunpack.c.l.b16 %v8629
  %v8662 = vunpack.c.l.b16 %v8630
  %v8663 = vunpack.c.l.b16 %v8631
  %v8664 = vunpack.c.l.b16 %v8632
  %v8665 = vunpack.c.l.b16 %v8633
  %v8666 = vunpack.c.l.b16 %v8634
  %v8667 = vunpack.c.l.b16 %v8635
  %v8668 = vunpack.c.l.b16 %v8636
  %v8669 = vunpack.c.l.b16 %v8637
  %v8670 = vunpack.c.l.b16 %v8638
  %v8671 = vunpack.c.l.b16 %v8639
  %v8672 = vunpack.c.l.b16 %v8640
  %v8673 = vunpack.c.l.b16 %v8641
  %v8674 = vunpack.c.l.b16 %v8642
  %v8675 = vunpack.c.l.b16 %v8643
  %v8676 = vunpack.c.l.b16 %v8644
  %v8677 = vpack.c.b16 %v8662, %v8661
  %v8678 = vpack.c.b16 %v8664, %v8663
  %v8679 = vpack.c.b16 %v8666, %v8665
  %v8680 = vpack.c.b16 %v8668, %v8667
  %v8681 = vpack.c.b16 %v8670, %v8669
  %v8682 = vpack.c.b16 %v8672, %v8671
  %v8683 = vpack.c.b16 %v8674, %v8673
  %v8684 = vpack.c.b16 %v8676, %v8675
  %8693 = vmatprep.subr.bf16.mxu0 0
  %8694 = vmatpush1.bf16.msra.mxu0 %v8677
  %8695 = vmatprep.subr.bf16.mxu0 0
  %8696 = vmatpush1.bf16.msra.mxu0 %v8678
  %8697 = vmatprep.subr.bf16.mxu0 0
  %8698 = vmatpush1.bf16.msra.mxu0 %v8679
  %8699 = vmatprep.subr.bf16.mxu0 0
  %8700 = vmatpush1.bf16.msra.mxu0 %v8680
  %8701 = vmatprep.subr.bf16.mxu0 0
  %8702 = vmatpush1.bf16.msra.mxu0 %v8681
  %8703 = vmatprep.subr.bf16.mxu0 0
  %8704 = vmatpush1.bf16.msra.mxu0 %v8682
  %8705 = vmatprep.subr.bf16.mxu0 0
  %8706 = vmatpush1.bf16.msra.mxu0 %v8683
  %8707 = vmatprep.subr.bf16.mxu0 0
  %8708 = vmatpush1.bf16.msra.mxu0 %v8684
  %8709 = vmatprep.subr.bf16.mxu0 0
  %8710 = vmatpush1.bf16.msra.mxu0 0
  %8711 = vmatprep.subr.bf16.mxu0 0
  %8712 = vmatpush1.bf16.msra.mxu0 0
  %8713 = vmatprep.subr.bf16.mxu0 0
  %8714 = vmatpush1.bf16.msra.mxu0 0
  %8715 = vmatprep.subr.bf16.mxu0 0
  %8716 = vmatpush1.bf16.msra.mxu0 0
  %8717 = vmatprep.subr.bf16.mxu0 0
  %8718 = vmatpush1.bf16.msra.mxu0 0
  %8719 = vmatprep.subr.bf16.mxu0 0
  %8720 = vmatpush1.bf16.msra.mxu0 0
  %8721 = vmatprep.subr.bf16.mxu0 0
  %8722 = vmatpush1.bf16.msra.mxu0 0
  %8723 = vmatprep.subr.bf16.mxu0 0
  %8724 = vmatpush1.bf16.msra.mxu0 0
  %8725 = vmatprep.mubr.bf16.mxu0 0
  %8726 = vmatmul.mubr.bf16.gmra.mrb[0].mxu0 %v8521
  %v8727 = vpop.f32.mrb[0].mxu0
  %v8728 = vadd.f32 0.0, %v8727
  %v8729 = vpop.f32.mrb[0].mxu0
  %v8730 = vpop.f32.mrb[0].mxu0
  %v8731 = vpop.f32.mrb[0].mxu0
  %8732 = vdwg.mxu0
  %v8733 = vadd.f32 %v8306, %v8728
  %s8734 = scalar_lea.vmem %s7, 1408
  %v8735 = vld [vmem:[%s8734] sm:$0xf]
  %v8736 = vld [vmem:[%s8734 + $0x4] sm:$0xf]
  %v8737 = vld [vmem:[%s8734 + $0x8] sm:$0xf]
  %v8738 = vld [vmem:[%s8734 + $0xc] sm:$0xf]
  %v8739 = vld [vmem:[%s8734 + $0x10] sm:$0xf]
  %v8740 = vld [vmem:[%s8734 + $0x14] sm:$0xf]
  %v8741 = vld [vmem:[%s8734 + $0x18] sm:$0xf]
  %v8742 = vld [vmem:[%s8734 + $0x1c] sm:$0xf]
  %v8743 = vld [vmem:[%s8734 + $0x20] sm:$0xf]
  %v8744 = vld [vmem:[%s8734 + $0x24] sm:$0xf]
  %v8745 = vld [vmem:[%s8734 + $0x28] sm:$0xf]
  %v8746 = vld [vmem:[%s8734 + $0x2c] sm:$0xf]
  %v8747 = vld [vmem:[%s8734 + $0x30] sm:$0xf]
  %v8748 = vld [vmem:[%s8734 + $0x34] sm:$0xf]
  %v8749 = vld [vmem:[%s8734 + $0x38] sm:$0xf]
  %v8750 = vld [vmem:[%s8734 + $0x3c] sm:$0xf]
  %v8767 = vunpack.c.l.b16 %v8735
  %v8768 = vunpack.c.l.b16 %v8736
  %v8769 = vunpack.c.l.b16 %v8737
  %v8770 = vunpack.c.l.b16 %v8738
  %v8771 = vunpack.c.l.b16 %v8739
  %v8772 = vunpack.c.l.b16 %v8740
  %v8773 = vunpack.c.l.b16 %v8741
  %v8774 = vunpack.c.l.b16 %v8742
  %v8775 = vunpack.c.l.b16 %v8743
  %v8776 = vunpack.c.l.b16 %v8744
  %v8777 = vunpack.c.l.b16 %v8745
  %v8778 = vunpack.c.l.b16 %v8746
  %v8779 = vunpack.c.l.b16 %v8747
  %v8780 = vunpack.c.l.b16 %v8748
  %v8781 = vunpack.c.l.b16 %v8749
  %v8782 = vunpack.c.l.b16 %v8750
  %v8783 = vpack.c.b16 %v8768, %v8767
  %v8784 = vpack.c.b16 %v8770, %v8769
  %v8785 = vpack.c.b16 %v8772, %v8771
  %v8786 = vpack.c.b16 %v8774, %v8773
  %v8787 = vpack.c.b16 %v8776, %v8775
  %v8788 = vpack.c.b16 %v8778, %v8777
  %v8789 = vpack.c.b16 %v8780, %v8779
  %v8790 = vpack.c.b16 %v8782, %v8781
  %8799 = vmatprep.subr.bf16.mxu0 0
  %8800 = vmatpush1.bf16.msra.mxu0 %v8783
  %8801 = vmatprep.subr.bf16.mxu0 0
  %8802 = vmatpush1.bf16.msra.mxu0 %v8784
  %8803 = vmatprep.subr.bf16.mxu0 0
  %8804 = vmatpush1.bf16.msra.mxu0 %v8785
  %8805 = vmatprep.subr.bf16.mxu0 0
  %8806 = vmatpush1.bf16.msra.mxu0 %v8786
  %8807 = vmatprep.subr.bf16.mxu0 0
  %8808 = vmatpush1.bf16.msra.mxu0 %v8787
  %8809 = vmatprep.subr.bf16.mxu0 0
  %8810 = vmatpush1.bf16.msra.mxu0 %v8788
  %8811 = vmatprep.subr.bf16.mxu0 0
  %8812 = vmatpush1.bf16.msra.mxu0 %v8789
  %8813 = vmatprep.subr.bf16.mxu0 0
  %8814 = vmatpush1.bf16.msra.mxu0 %v8790
  %8815 = vmatprep.subr.bf16.mxu0 0
  %8816 = vmatpush1.bf16.msra.mxu0 0
  %8817 = vmatprep.subr.bf16.mxu0 0
  %8818 = vmatpush1.bf16.msra.mxu0 0
  %8819 = vmatprep.subr.bf16.mxu0 0
  %8820 = vmatpush1.bf16.msra.mxu0 0
  %8821 = vmatprep.subr.bf16.mxu0 0
  %8822 = vmatpush1.bf16.msra.mxu0 0
  %8823 = vmatprep.subr.bf16.mxu0 0
  %8824 = vmatpush1.bf16.msra.mxu0 0
  %8825 = vmatprep.subr.bf16.mxu0 0
  %8826 = vmatpush1.bf16.msra.mxu0 0
  %8827 = vmatprep.subr.bf16.mxu0 0
  %8828 = vmatpush1.bf16.msra.mxu0 0
  %8829 = vmatprep.subr.bf16.mxu0 0
  %8830 = vmatpush1.bf16.msra.mxu0 0
  %8831 = vmatprep.mubr.bf16.mxu0 0
  %8832 = vmatmul.mubr.bf16.gmra.mrb[0].mxu0 %v8521
  %v8833 = vpop.f32.mrb[0].mxu0
  %v8834 = vadd.f32 0.0, %v8833
  %v8835 = vpop.f32.mrb[0].mxu0
  %v8836 = vpop.f32.mrb[0].mxu0
  %v8837 = vpop.f32.mrb[0].mxu0
  %8838 = vdwg.mxu0
  %v8839 = vadd.f32 %v8412, %v8834
  %s8840 = scalar_lea.vmem %s7, 1984
  %v8841 = vld [vmem:[%s8840] sm:$0xf]
  %v8842 = vld [vmem:[%s8840 + $0x4] sm:$0xf]
  %v8843 = vld [vmem:[%s8840 + $0x8] sm:$0xf]
  %v8844 = vld [vmem:[%s8840 + $0xc] sm:$0xf]
  %v8845 = vld [vmem:[%s8840 + $0x10] sm:$0xf]
  %v8846 = vld [vmem:[%s8840 + $0x14] sm:$0xf]
  %v8847 = vld [vmem:[%s8840 + $0x18] sm:$0xf]
  %v8848 = vld [vmem:[%s8840 + $0x1c] sm:$0xf]
  %v8849 = vld [vmem:[%s8840 + $0x20] sm:$0xf]
  %v8850 = vld [vmem:[%s8840 + $0x24] sm:$0xf]
  %v8851 = vld [vmem:[%s8840 + $0x28] sm:$0xf]
  %v8852 = vld [vmem:[%s8840 + $0x2c] sm:$0xf]
  %v8853 = vld [vmem:[%s8840 + $0x30] sm:$0xf]
  %v8854 = vld [vmem:[%s8840 + $0x34] sm:$0xf]
  %v8855 = vld [vmem:[%s8840 + $0x38] sm:$0xf]
  %v8856 = vld [vmem:[%s8840 + $0x3c] sm:$0xf]
  %v8873 = vunpack.c.l.b16 %v8841
  %v8874 = vunpack.c.l.b16 %v8842
  %v8875 = vunpack.c.l.b16 %v8843
  %v8876 = vunpack.c.l.b16 %v8844
  %v8877 = vunpack.c.l.b16 %v8845
  %v8878 = vunpack.c.l.b16 %v8846
  %v8879 = vunpack.c.l.b16 %v8847
  %v8880 = vunpack.c.l.b16 %v8848
  %v8881 = vunpack.c.l.b16 %v8849
  %v8882 = vunpack.c.l.b16 %v8850
  %v8883 = vunpack.c.l.b16 %v8851
  %v8884 = vunpack.c.l.b16 %v8852
  %v8885 = vunpack.c.l.b16 %v8853
  %v8886 = vunpack.c.l.b16 %v8854
  %v8887 = vunpack.c.l.b16 %v8855
  %v8888 = vunpack.c.l.b16 %v8856
  %v8889 = vpack.c.b16 %v8874, %v8873
  %v8890 = vpack.c.b16 %v8876, %v8875
  %v8891 = vpack.c.b16 %v8878, %v8877
  %v8892 = vpack.c.b16 %v8880, %v8879
  %v8893 = vpack.c.b16 %v8882, %v8881
  %v8894 = vpack.c.b16 %v8884, %v8883
  %v8895 = vpack.c.b16 %v8886, %v8885
  %v8896 = vpack.c.b16 %v8888, %v8887
  %8905 = vmatprep.subr.bf16.mxu0 0
  %8906 = vmatpush1.bf16.msra.mxu0 %v8889
  %8907 = vmatprep.subr.bf16.mxu0 0
  %8908 = vmatpush1.bf16.msra.mxu0 %v8890
  %8909 = vmatprep.subr.bf16.mxu0 0
  %8910 = vmatpush1.bf16.msra.mxu0 %v8891
  %8911 = vmatprep.subr.bf16.mxu0 0
  %8912 = vmatpush1.bf16.msra.mxu0 %v8892
  %8913 = vmatprep.subr.bf16.mxu0 0
  %8914 = vmatpush1.bf16.msra.mxu0 %v8893
  %8915 = vmatprep.subr.bf16.mxu0 0
  %8916 = vmatpush1.bf16.msra.mxu0 %v8894
  %8917 = vmatprep.subr.bf16.mxu0 0
  %8918 = vmatpush1.bf16.msra.mxu0 %v8895
  %8919 = vmatprep.subr.bf16.mxu0 0
  %8920 = vmatpush1.bf16.msra.mxu0 %v8896
  %8921 = vmatprep.subr.bf16.mxu0 0
  %8922 = vmatpush1.bf16.msra.mxu0 0
  %8923 = vmatprep.subr.bf16.mxu0 0
  %8924 = vmatpush1.bf16.msra.mxu0 0
  %8925 = vmatprep.subr.bf16.mxu0 0
  %8926 = vmatpush1.bf16.msra.mxu0 0
  %8927 = vmatprep.subr.bf16.mxu0 0
  %8928 = vmatpush1.bf16.msra.mxu0 0
  %8929 = vmatprep.subr.bf16.mxu0 0
  %8930 = vmatpush1.bf16.msra.mxu0 0
  %8931 = vmatprep.subr.bf16.mxu0 0
  %8932 = vmatpush1.bf16.msra.mxu0 0
  %8933 = vmatprep.subr.bf16.mxu0 0
  %8934 = vmatpush1.bf16.msra.mxu0 0
  %8935 = vmatprep.subr.bf16.mxu0 0
  %8936 = vmatpush1.bf16.msra.mxu0 0
  %8937 = vmatprep.mubr.bf16.mxu0 0
  %8938 = vmatmul.mubr.bf16.gmra.mrb[0].mxu0 %v8521
  %v8939 = vpop.f32.mrb[0].mxu0
  %v8940 = vadd.f32 0.0, %v8939
  %v8941 = vpop.f32.mrb[0].mxu0
  %v8942 = vpop.f32.mrb[0].mxu0
  %v8943 = vpop.f32.mrb[0].mxu0
  %8944 = vdwg.mxu0
  %v8945 = vadd.f32 %v8518, %v8940
  %s8946 = scalar_lea.vmem [#allocation6], 5
  %v8947 = vld [vmem:[%s8946] ss:$9 sm:$0x1]
  %v8948 = vpack.c.bf16 %v8947, %v8947
  %s8949 = scalar_lea.vmem %s7, 320
  %v8950 = vld [vmem:[%s8949] sm:$0xf]
  %v8951 = vld [vmem:[%s8949 + $0x4] sm:$0xf]
  %v8952 = vld [vmem:[%s8949 + $0x8] sm:$0xf]
  %v8953 = vld [vmem:[%s8949 + $0xc] sm:$0xf]
  %v8954 = vld [vmem:[%s8949 + $0x10] sm:$0xf]
  %v8955 = vld [vmem:[%s8949 + $0x14] sm:$0xf]
  %v8956 = vld [vmem:[%s8949 + $0x18] sm:$0xf]
  %v8957 = vld [vmem:[%s8949 + $0x1c] sm:$0xf]
  %v8958 = vld [vmem:[%s8949 + $0x20] sm:$0xf]
  %v8959 = vld [vmem:[%s8949 + $0x24] sm:$0xf]
  %v8960 = vld [vmem:[%s8949 + $0x28] sm:$0xf]
  %v8961 = vld [vmem:[%s8949 + $0x2c] sm:$0xf]
  %v8962 = vld [vmem:[%s8949 + $0x30] sm:$0xf]
  %v8963 = vld [vmem:[%s8949 + $0x34] sm:$0xf]
  %v8964 = vld [vmem:[%s8949 + $0x38] sm:$0xf]
  %v8965 = vld [vmem:[%s8949 + $0x3c] sm:$0xf]
  %v8982 = vunpack.c.l.b16 %v8950
  %v8983 = vunpack.c.l.b16 %v8951
  %v8984 = vunpack.c.l.b16 %v8952
  %v8985 = vunpack.c.l.b16 %v8953
  %v8986 = vunpack.c.l.b16 %v8954
  %v8987 = vunpack.c.l.b16 %v8955
  %v8988 = vunpack.c.l.b16 %v8956
  %v8989 = vunpack.c.l.b16 %v8957
  %v8990 = vunpack.c.l.b16 %v8958
  %v8991 = vunpack.c.l.b16 %v8959
  %v8992 = vunpack.c.l.b16 %v8960
  %v8993 = vunpack.c.l.b16 %v8961
  %v8994 = vunpack.c.l.b16 %v8962
  %v8995 = vunpack.c.l.b16 %v8963
  %v8996 = vunpack.c.l.b16 %v8964
  %v8997 = vunpack.c.l.b16 %v8965
  %v8998 = vpack.c.b16 %v8983, %v8982
  %v8999 = vpack.c.b16 %v8985, %v8984
  %v9000 = vpack.c.b16 %v8987, %v8986
  %v9001 = vpack.c.b16 %v8989, %v8988
  %v9002 = vpack.c.b16 %v8991, %v8990
  %v9003 = vpack.c.b16 %v8993, %v8992
  %v9004 = vpack.c.b16 %v8995, %v8994
  %v9005 = vpack.c.b16 %v8997, %v8996
  %9014 = vmatprep.subr.bf16.mxu0 0
  %9015 = vmatpush1.bf16.msra.mxu0 %v8998
  %9016 = vmatprep.subr.bf16.mxu0 0
  %9017 = vmatpush1.bf16.msra.mxu0 %v8999
  %9018 = vmatprep.subr.bf16.mxu0 0
  %9019 = vmatpush1.bf16.msra.mxu0 %v9000
  %9020 = vmatprep.subr.bf16.mxu0 0
  %9021 = vmatpush1.bf16.msra.mxu0 %v9001
  %9022 = vmatprep.subr.bf16.mxu0 0
  %9023 = vmatpush1.bf16.msra.mxu0 %v9002
  %9024 = vmatprep.subr.bf16.mxu0 0
  %9025 = vmatpush1.bf16.msra.mxu0 %v9003
  %9026 = vmatprep.subr.bf16.mxu0 0
  %9027 = vmatpush1.bf16.msra.mxu0 %v9004
  %9028 = vmatprep.subr.bf16.mxu0 0
  %9029 = vmatpush1.bf16.msra.mxu0 %v9005
  %9030 = vmatprep.subr.bf16.mxu0 0
  %9031 = vmatpush1.bf16.msra.mxu0 0
  %9032 = vmatprep.subr.bf16.mxu0 0
  %9033 = vmatpush1.bf16.msra.mxu0 0
  %9034 = vmatprep.subr.bf16.mxu0 0
  %9035 = vmatpush1.bf16.msra.mxu0 0
  %9036 = vmatprep.subr.bf16.mxu0 0
  %9037 = vmatpush1.bf16.msra.mxu0 0
  %9038 = vmatprep.subr.bf16.mxu0 0
  %9039 = vmatpush1.bf16.msra.mxu0 0
  %9040 = vmatprep.subr.bf16.mxu0 0
  %9041 = vmatpush1.bf16.msra.mxu0 0
  %9042 = vmatprep.subr.bf16.mxu0 0
  %9043 = vmatpush1.bf16.msra.mxu0 0
  %9044 = vmatprep.subr.bf16.mxu0 0
  %9045 = vmatpush1.bf16.msra.mxu0 0
  %9046 = vmatprep.mubr.bf16.mxu0 0
  %9047 = vmatmul.mubr.bf16.gmra.mrb[0].mxu0 %v8948
  %v9048 = vpop.f32.mrb[0].mxu0
  %v9049 = vadd.f32 0.0, %v9048
  %v9050 = vpop.f32.mrb[0].mxu0
  %v9051 = vpop.f32.mrb[0].mxu0
  %v9052 = vpop.f32.mrb[0].mxu0
  %9053 = vdwg.mxu0
  %v9054 = vadd.f32 %v8627, %v9049
  %s9055 = scalar_lea.vmem %s7, 896
  %v9056 = vld [vmem:[%s9055] sm:$0xf]
  %v9057 = vld [vmem:[%s9055 + $0x4] sm:$0xf]
  %v9058 = vld [vmem:[%s9055 + $0x8] sm:$0xf]
  %v9059 = vld [vmem:[%s9055 + $0xc] sm:$0xf]
  %v9060 = vld [vmem:[%s9055 + $0x10] sm:$0xf]
  %v9061 = vld [vmem:[%s9055 + $0x14] sm:$0xf]
  %v9062 = vld [vmem:[%s9055 + $0x18] sm:$0xf]
  %v9063 = vld [vmem:[%s9055 + $0x1c] sm:$0xf]
  %v9064 = vld [vmem:[%s9055 + $0x20] sm:$0xf]
  %v9065 = vld [vmem:[%s9055 + $0x24] sm:$0xf]
  %v9066 = vld [vmem:[%s9055 + $0x28] sm:$0xf]
  %v9067 = vld [vmem:[%s9055 + $0x2c] sm:$0xf]
  %v9068 = vld [vmem:[%s9055 + $0x30] sm:$0xf]
  %v9069 = vld [vmem:[%s9055 + $0x34] sm:$0xf]
  %v9070 = vld [vmem:[%s9055 + $0x38] sm:$0xf]
  %v9071 = vld [vmem:[%s9055 + $0x3c] sm:$0xf]
  %v9088 = vunpack.c.l.b16 %v9056
  %v9089 = vunpack.c.l.b16 %v9057
  %v9090 = vunpack.c.l.b16 %v9058
  %v9091 = vunpack.c.l.b16 %v9059
  %v9092 = vunpack.c.l.b16 %v9060
  %v9093 = vunpack.c.l.b16 %v9061
  %v9094 = vunpack.c.l.b16 %v9062
  %v9095 = vunpack.c.l.b16 %v9063
  %v9096 = vunpack.c.l.b16 %v9064
  %v9097 = vunpack.c.l.b16 %v9065
  %v9098 = vunpack.c.l.b16 %v9066
  %v9099 = vunpack.c.l.b16 %v9067
  %v9100 = vunpack.c.l.b16 %v9068
  %v9101 = vunpack.c.l.b16 %v9069
  %v9102 = vunpack.c.l.b16 %v9070
  %v9103 = vunpack.c.l.b16 %v9071
  %v9104 = vpack.c.b16 %v9089, %v9088
  %v9105 = vpack.c.b16 %v9091, %v9090
  %v9106 = vpack.c.b16 %v9093, %v9092
  %v9107 = vpack.c.b16 %v9095, %v9094
  %v9108 = vpack.c.b16 %v9097, %v9096
  %v9109 = vpack.c.b16 %v9099, %v9098
  %v9110 = vpack.c.b16 %v9101, %v9100
  %v9111 = vpack.c.b16 %v9103, %v9102
  %9120 = vmatprep.subr.bf16.mxu0 0
  %9121 = vmatpush1.bf16.msra.mxu0 %v9104
  %9122 = vmatprep.subr.bf16.mxu0 0
  %9123 = vmatpush1.bf16.msra.mxu0 %v9105
  %9124 = vmatprep.subr.bf16.mxu0 0
  %9125 = vmatpush1.bf16.msra.mxu0 %v9106
  %9126 = vmatprep.subr.bf16.mxu0 0
  %9127 = vmatpush1.bf16.msra.mxu0 %v9107
  %9128 = vmatprep.subr.bf16.mxu0 0
  %9129 = vmatpush1.bf16.msra.mxu0 %v9108
  %9130 = vmatprep.subr.bf16.mxu0 0
  %9131 = vmatpush1.bf16.msra.mxu0 %v9109
  %9132 = vmatprep.subr.bf16.mxu0 0
  %9133 = vmatpush1.bf16.msra.mxu0 %v9110
  %9134 = vmatprep.subr.bf16.mxu0 0
  %9135 = vmatpush1.bf16.msra.mxu0 %v9111
  %9136 = vmatprep.subr.bf16.mxu0 0
  %9137 = vmatpush1.bf16.msra.mxu0 0
  %9138 = vmatprep.subr.bf16.mxu0 0
  %9139 = vmatpush1.bf16.msra.mxu0 0
  %9140 = vmatprep.subr.bf16.mxu0 0
  %9141 = vmatpush1.bf16.msra.mxu0 0
  %9142 = vmatprep.subr.bf16.mxu0 0
  %9143 = vmatpush1.bf16.msra.mxu0 0
  %9144 = vmatprep.subr.bf16.mxu0 0
  %9145 = vmatpush1.bf16.msra.mxu0 0
  %9146 = vmatprep.subr.bf16.mxu0 0
  %9147 = vmatpush1.bf16.msra.mxu0 0
  %9148 = vmatprep.subr.bf16.mxu0 0
  %9149 = vmatpush1.bf16.msra.mxu0 0
  %9150 = vmatprep.subr.bf16.mxu0 0
  %9151 = vmatpush1.bf16.msra.mxu0 0
  %9152 = vmatprep.mubr.bf16.mxu0 0
  %9153 = vmatmul.mubr.bf16.gmra.mrb[0].mxu0 %v8948
  %v9154 = vpop.f32.mrb[0].mxu0
  %v9155 = vadd.f32 0.0, %v9154
  %v9156 = vpop.f32.mrb[0].mxu0
  %v9157 = vpop.f32.mrb[0].mxu0
  %v9158 = vpop.f32.mrb[0].mxu0
  %9159 = vdwg.mxu0
  %v9160 = vadd.f32 %v8733, %v9155
  %s9161 = scalar_lea.vmem %s7, 1472
  %v9162 = vld [vmem:[%s9161] sm:$0xf]
  %v9163 = vld [vmem:[%s9161 + $0x4] sm:$0xf]
  %v9164 = vld [vmem:[%s9161 + $0x8] sm:$0xf]
  %v9165 = vld [vmem:[%s9161 + $0xc] sm:$0xf]
  %v9166 = vld [vmem:[%s9161 + $0x10] sm:$0xf]
  %v9167 = vld [vmem:[%s9161 + $0x14] sm:$0xf]
  %v9168 = vld [vmem:[%s9161 + $0x18] sm:$0xf]
  %v9169 = vld [vmem:[%s9161 + $0x1c] sm:$0xf]
  %v9170 = vld [vmem:[%s9161 + $0x20] sm:$0xf]
  %v9171 = vld [vmem:[%s9161 + $0x24] sm:$0xf]
  %v9172 = vld [vmem:[%s9161 + $0x28] sm:$0xf]
  %v9173 = vld [vmem:[%s9161 + $0x2c] sm:$0xf]
  %v9174 = vld [vmem:[%s9161 + $0x30] sm:$0xf]
  %v9175 = vld [vmem:[%s9161 + $0x34] sm:$0xf]
  %v9176 = vld [vmem:[%s9161 + $0x38] sm:$0xf]
  %v9177 = vld [vmem:[%s9161 + $0x3c] sm:$0xf]
  %v9194 = vunpack.c.l.b16 %v9162
  %v9195 = vunpack.c.l.b16 %v9163
  %v9196 = vunpack.c.l.b16 %v9164
  %v9197 = vunpack.c.l.b16 %v9165
  %v9198 = vunpack.c.l.b16 %v9166
  %v9199 = vunpack.c.l.b16 %v9167
  %v9200 = vunpack.c.l.b16 %v9168
  %v9201 = vunpack.c.l.b16 %v9169
  %v9202 = vunpack.c.l.b16 %v9170
  %v9203 = vunpack.c.l.b16 %v9171
  %v9204 = vunpack.c.l.b16 %v9172
  %v9205 = vunpack.c.l.b16 %v9173
  %v9206 = vunpack.c.l.b16 %v9174
  %v9207 = vunpack.c.l.b16 %v9175
  %v9208 = vunpack.c.l.b16 %v9176
  %v9209 = vunpack.c.l.b16 %v9177
  %v9210 = vpack.c.b16 %v9195, %v9194
  %v9211 = vpack.c.b16 %v9197, %v9196
  %v9212 = vpack.c.b16 %v9199, %v9198
  %v9213 = vpack.c.b16 %v9201, %v9200
  %v9214 = vpack.c.b16 %v9203, %v9202
  %v9215 = vpack.c.b16 %v9205, %v9204
  %v9216 = vpack.c.b16 %v9207, %v9206
  %v9217 = vpack.c.b16 %v9209, %v9208
  %9226 = vmatprep.subr.bf16.mxu0 0
  %9227 = vmatpush1.bf16.msra.mxu0 %v9210
  %9228 = vmatprep.subr.bf16.mxu0 0
  %9229 = vmatpush1.bf16.msra.mxu0 %v9211
  %9230 = vmatprep.subr.bf16.mxu0 0
  %9231 = vmatpush1.bf16.msra.mxu0 %v9212
  %9232 = vmatprep.subr.bf16.mxu0 0
  %9233 = vmatpush1.bf16.msra.mxu0 %v9213
  %9234 = vmatprep.subr.bf16.mxu0 0
  %9235 = vmatpush1.bf16.msra.mxu0 %v9214
  %9236 = vmatprep.subr.bf16.mxu0 0
  %9237 = vmatpush1.bf16.msra.mxu0 %v9215
  %9238 = vmatprep.subr.bf16.mxu0 0
  %9239 = vmatpush1.bf16.msra.mxu0 %v9216
  %9240 = vmatprep.subr.bf16.mxu0 0
  %9241 = vmatpush1.bf16.msra.mxu0 %v9217
  %9242 = vmatprep.subr.bf16.mxu0 0
  %9243 = vmatpush1.bf16.msra.mxu0 0
  %9244 = vmatprep.subr.bf16.mxu0 0
  %9245 = vmatpush1.bf16.msra.mxu0 0
  %9246 = vmatprep.subr.bf16.mxu0 0
  %9247 = vmatpush1.bf16.msra.mxu0 0
  %9248 = vmatprep.subr.bf16.mxu0 0
  %9249 = vmatpush1.bf16.msra.mxu0 0
  %9250 = vmatprep.subr.bf16.mxu0 0
  %9251 = vmatpush1.bf16.msra.mxu0 0
  %9252 = vmatprep.subr.bf16.mxu0 0
  %9253 = vmatpush1.bf16.msra.mxu0 0
  %9254 = vmatprep.subr.bf16.mxu0 0
  %9255 = vmatpush1.bf16.msra.mxu0 0
  %9256 = vmatprep.subr.bf16.mxu0 0
  %9257 = vmatpush1.bf16.msra.mxu0 0
  %9258 = vmatprep.mubr.bf16.mxu0 0
  %9259 = vmatmul.mubr.bf16.gmra.mrb[0].mxu0 %v8948
  %v9260 = vpop.f32.mrb[0].mxu0
  %v9261 = vadd.f32 0.0, %v9260
  %v9262 = vpop.f32.mrb[0].mxu0
  %v9263 = vpop.f32.mrb[0].mxu0
  %v9264 = vpop.f32.mrb[0].mxu0
  %9265 = vdwg.mxu0
  %v9266 = vadd.f32 %v8839, %v9261
  %s9267 = scalar_lea.vmem %s7, 2048
  %v9268 = vld [vmem:[%s9267] sm:$0xf]
  %v9269 = vld [vmem:[%s9267 + $0x4] sm:$0xf]
  %v9270 = vld [vmem:[%s9267 + $0x8] sm:$0xf]
  %v9271 = vld [vmem:[%s9267 + $0xc] sm:$0xf]
  %v9272 = vld [vmem:[%s9267 + $0x10] sm:$0xf]
  %v9273 = vld [vmem:[%s9267 + $0x14] sm:$0xf]
  %v9274 = vld [vmem:[%s9267 + $0x18] sm:$0xf]
  %v9275 = vld [vmem:[%s9267 + $0x1c] sm:$0xf]
  %v9276 = vld [vmem:[%s9267 + $0x20] sm:$0xf]
  %v9277 = vld [vmem:[%s9267 + $0x24] sm:$0xf]
  %v9278 = vld [vmem:[%s9267 + $0x28] sm:$0xf]
  %v9279 = vld [vmem:[%s9267 + $0x2c] sm:$0xf]
  %v9280 = vld [vmem:[%s9267 + $0x30] sm:$0xf]
  %v9281 = vld [vmem:[%s9267 + $0x34] sm:$0xf]
  %v9282 = vld [vmem:[%s9267 + $0x38] sm:$0xf]
  %v9283 = vld [vmem:[%s9267 + $0x3c] sm:$0xf]
  %v9300 = vunpack.c.l.b16 %v9268
  %v9301 = vunpack.c.l.b16 %v9269
  %v9302 = vunpack.c.l.b16 %v9270
  %v9303 = vunpack.c.l.b16 %v9271
  %v9304 = vunpack.c.l.b16 %v9272
  %v9305 = vunpack.c.l.b16 %v9273
  %v9306 = vunpack.c.l.b16 %v9274
  %v9307 = vunpack.c.l.b16 %v9275
  %v9308 = vunpack.c.l.b16 %v9276
  %v9309 = vunpack.c.l.b16 %v9277
  %v9310 = vunpack.c.l.b16 %v9278
  %v9311 = vunpack.c.l.b16 %v9279
  %v9312 = vunpack.c.l.b16 %v9280
  %v9313 = vunpack.c.l.b16 %v9281
  %v9314 = vunpack.c.l.b16 %v9282
  %v9315 = vunpack.c.l.b16 %v9283
  %v9316 = vpack.c.b16 %v9301, %v9300
  %v9317 = vpack.c.b16 %v9303, %v9302
  %v9318 = vpack.c.b16 %v9305, %v9304
  %v9319 = vpack.c.b16 %v9307, %v9306
  %v9320 = vpack.c.b16 %v9309, %v9308
  %v9321 = vpack.c.b16 %v9311, %v9310
  %v9322 = vpack.c.b16 %v9313, %v9312
  %v9323 = vpack.c.b16 %v9315, %v9314
  %9332 = vmatprep.subr.bf16.mxu0 0
  %9333 = vmatpush1.bf16.msra.mxu0 %v9316
  %9334 = vmatprep.subr.bf16.mxu0 0
  %9335 = vmatpush1.bf16.msra.mxu0 %v9317
  %9336 = vmatprep.subr.bf16.mxu0 0
  %9337 = vmatpush1.bf16.msra.mxu0 %v9318
  %9338 = vmatprep.subr.bf16.mxu0 0
  %9339 = vmatpush1.bf16.msra.mxu0 %v9319
  %9340 = vmatprep.subr.bf16.mxu0 0
  %9341 = vmatpush1.bf16.msra.mxu0 %v9320
  %9342 = vmatprep.subr.bf16.mxu0 0
  %9343 = vmatpush1.bf16.msra.mxu0 %v9321
  %9344 = vmatprep.subr.bf16.mxu0 0
  %9345 = vmatpush1.bf16.msra.mxu0 %v9322
  %9346 = vmatprep.subr.bf16.mxu0 0
  %9347 = vmatpush1.bf16.msra.mxu0 %v9323
  %9348 = vmatprep.subr.bf16.mxu0 0
  %9349 = vmatpush1.bf16.msra.mxu0 0
  %9350 = vmatprep.subr.bf16.mxu0 0
  %9351 = vmatpush1.bf16.msra.mxu0 0
  %9352 = vmatprep.subr.bf16.mxu0 0
  %9353 = vmatpush1.bf16.msra.mxu0 0
  %9354 = vmatprep.subr.bf16.mxu0 0
  %9355 = vmatpush1.bf16.msra.mxu0 0
  %9356 = vmatprep.subr.bf16.mxu0 0
  %9357 = vmatpush1.bf16.msra.mxu0 0
  %9358 = vmatprep.subr.bf16.mxu0 0
  %9359 = vmatpush1.bf16.msra.mxu0 0
  %9360 = vmatprep.subr.bf16.mxu0 0
  %9361 = vmatpush1.bf16.msra.mxu0 0
  %9362 = vmatprep.subr.bf16.mxu0 0
  %9363 = vmatpush1.bf16.msra.mxu0 0
  %9364 = vmatprep.mubr.bf16.mxu0 0
  %9365 = vmatmul.mubr.bf16.gmra.mrb[0].mxu0 %v8948
  %v9366 = vpop.f32.mrb[0].mxu0
  %v9367 = vadd.f32 0.0, %v9366
  %v9368 = vpop.f32.mrb[0].mxu0
  %v9369 = vpop.f32.mrb[0].mxu0
  %v9370 = vpop.f32.mrb[0].mxu0
  %9371 = vdwg.mxu0
  %v9372 = vadd.f32 %v8945, %v9367
  %s9373 = scalar_lea.vmem [#allocation6], 6
  %v9374 = vld [vmem:[%s9373] ss:$9 sm:$0x1]
  %v9375 = vpack.c.bf16 %v9374, %v9374
  %s9376 = scalar_lea.vmem %s7, 384
  %v9377 = vld [vmem:[%s9376] sm:$0xf]
  %v9378 = vld [vmem:[%s9376 + $0x4] sm:$0xf]
  %v9379 = vld [vmem:[%s9376 + $0x8] sm:$0xf]
  %v9380 = vld [vmem:[%s9376 + $0xc] sm:$0xf]
  %v9381 = vld [vmem:[%s9376 + $0x10] sm:$0xf]
  %v9382 = vld [vmem:[%s9376 + $0x14] sm:$0xf]
  %v9383 = vld [vmem:[%s9376 + $0x18] sm:$0xf]
  %v9384 = vld [vmem:[%s9376 + $0x1c] sm:$0xf]
  %v9385 = vld [vmem:[%s9376 + $0x20] sm:$0xf]
  %v9386 = vld [vmem:[%s9376 + $0x24] sm:$0xf]
  %v9387 = vld [vmem:[%s9376 + $0x28] sm:$0xf]
  %v9388 = vld [vmem:[%s9376 + $0x2c] sm:$0xf]
  %v9389 = vld [vmem:[%s9376 + $0x30] sm:$0xf]
  %v9390 = vld [vmem:[%s9376 + $0x34] sm:$0xf]
  %v9391 = vld [vmem:[%s9376 + $0x38] sm:$0xf]
  %v9392 = vld [vmem:[%s9376 + $0x3c] sm:$0xf]
  %v9409 = vunpack.c.l.b16 %v9377
  %v9410 = vunpack.c.l.b16 %v9378
  %v9411 = vunpack.c.l.b16 %v9379
  %v9412 = vunpack.c.l.b16 %v9380
  %v9413 = vunpack.c.l.b16 %v9381
  %v9414 = vunpack.c.l.b16 %v9382
  %v9415 = vunpack.c.l.b16 %v9383
  %v9416 = vunpack.c.l.b16 %v9384
  %v9417 = vunpack.c.l.b16 %v9385
  %v9418 = vunpack.c.l.b16 %v9386
  %v9419 = vunpack.c.l.b16 %v9387
  %v9420 = vunpack.c.l.b16 %v9388
  %v9421 = vunpack.c.l.b16 %v9389
  %v9422 = vunpack.c.l.b16 %v9390
  %v9423 = vunpack.c.l.b16 %v9391
  %v9424 = vunpack.c.l.b16 %v9392
  %v9425 = vpack.c.b16 %v9410, %v9409
  %v9426 = vpack.c.b16 %v9412, %v9411
  %v9427 = vpack.c.b16 %v9414, %v9413
  %v9428 = vpack.c.b16 %v9416, %v9415
  %v9429 = vpack.c.b16 %v9418, %v9417
  %v9430 = vpack.c.b16 %v9420, %v9419
  %v9431 = vpack.c.b16 %v9422, %v9421
  %v9432 = vpack.c.b16 %v9424, %v9423
  %9441 = vmatprep.subr.bf16.mxu0 0
  %9442 = vmatpush1.bf16.msra.mxu0 %v9425
  %9443 = vmatprep.subr.bf16.mxu0 0
  %9444 = vmatpush1.bf16.msra.mxu0 %v9426
  %9445 = vmatprep.subr.bf16.mxu0 0
  %9446 = vmatpush1.bf16.msra.mxu0 %v9427
  %9447 = vmatprep.subr.bf16.mxu0 0
  %9448 = vmatpush1.bf16.msra.mxu0 %v9428
  %9449 = vmatprep.subr.bf16.mxu0 0
  %9450 = vmatpush1.bf16.msra.mxu0 %v9429
  %9451 = vmatprep.subr.bf16.mxu0 0
  %9452 = vmatpush1.bf16.msra.mxu0 %v9430
  %9453 = vmatprep.subr.bf16.mxu0 0
  %9454 = vmatpush1.bf16.msra.mxu0 %v9431
  %9455 = vmatprep.subr.bf16.mxu0 0
  %9456 = vmatpush1.bf16.msra.mxu0 %v9432
  %9457 = vmatprep.subr.bf16.mxu0 0
  %9458 = vmatpush1.bf16.msra.mxu0 0
  %9459 = vmatprep.subr.bf16.mxu0 0
  %9460 = vmatpush1.bf16.msra.mxu0 0
  %9461 = vmatprep.subr.bf16.mxu0 0
  %9462 = vmatpush1.bf16.msra.mxu0 0
  %9463 = vmatprep.subr.bf16.mxu0 0
  %9464 = vmatpush1.bf16.msra.mxu0 0
  %9465 = vmatprep.subr.bf16.mxu0 0
  %9466 = vmatpush1.bf16.msra.mxu0 0
  %9467 = vmatprep.subr.bf16.mxu0 0
  %9468 = vmatpush1.bf16.msra.mxu0 0
  %9469 = vmatprep.subr.bf16.mxu0 0
  %9470 = vmatpush1.bf16.msra.mxu0 0
  %9471 = vmatprep.subr.bf16.mxu0 0
  %9472 = vmatpush1.bf16.msra.mxu0 0
  %9473 = vmatprep.mubr.bf16.mxu0 0
  %9474 = vmatmul.mubr.bf16.gmra.mrb[0].mxu0 %v9375
  %v9475 = vpop.f32.mrb[0].mxu0
  %v9476 = vadd.f32 0.0, %v9475
  %v9477 = vpop.f32.mrb[0].mxu0
  %v9478 = vpop.f32.mrb[0].mxu0
  %v9479 = vpop.f32.mrb[0].mxu0
  %9480 = vdwg.mxu0
  %v9481 = vadd.f32 %v9054, %v9476
  %s9482 = scalar_lea.vmem %s7, 960
  %v9483 = vld [vmem:[%s9482] sm:$0xf]
  %v9484 = vld [vmem:[%s9482 + $0x4] sm:$0xf]
  %v9485 = vld [vmem:[%s9482 + $0x8] sm:$0xf]
  %v9486 = vld [vmem:[%s9482 + $0xc] sm:$0xf]
  %v9487 = vld [vmem:[%s9482 + $0x10] sm:$0xf]
  %v9488 = vld [vmem:[%s9482 + $0x14] sm:$0xf]
  %v9489 = vld [vmem:[%s9482 + $0x18] sm:$0xf]
  %v9490 = vld [vmem:[%s9482 + $0x1c] sm:$0xf]
  %v9491 = vld [vmem:[%s9482 + $0x20] sm:$0xf]
  %v9492 = vld [vmem:[%s9482 + $0x24] sm:$0xf]
  %v9493 = vld [vmem:[%s9482 + $0x28] sm:$0xf]
  %v9494 = vld [vmem:[%s9482 + $0x2c] sm:$0xf]
  %v9495 = vld [vmem:[%s9482 + $0x30] sm:$0xf]
  %v9496 = vld [vmem:[%s9482 + $0x34] sm:$0xf]
  %v9497 = vld [vmem:[%s9482 + $0x38] sm:$0xf]
  %v9498 = vld [vmem:[%s9482 + $0x3c] sm:$0xf]
  %v9515 = vunpack.c.l.b16 %v9483
  %v9516 = vunpack.c.l.b16 %v9484
  %v9517 = vunpack.c.l.b16 %v9485
  %v9518 = vunpack.c.l.b16 %v9486
  %v9519 = vunpack.c.l.b16 %v9487
  %v9520 = vunpack.c.l.b16 %v9488
  %v9521 = vunpack.c.l.b16 %v9489
  %v9522 = vunpack.c.l.b16 %v9490
  %v9523 = vunpack.c.l.b16 %v9491
  %v9524 = vunpack.c.l.b16 %v9492
  %v9525 = vunpack.c.l.b16 %v9493
  %v9526 = vunpack.c.l.b16 %v9494
  %v9527 = vunpack.c.l.b16 %v9495
  %v9528 = vunpack.c.l.b16 %v9496
  %v9529 = vunpack.c.l.b16 %v9497
  %v9530 = vunpack.c.l.b16 %v9498
  %v9531 = vpack.c.b16 %v9516, %v9515
  %v9532 = vpack.c.b16 %v9518, %v9517
  %v9533 = vpack.c.b16 %v9520, %v9519
  %v9534 = vpack.c.b16 %v9522, %v9521
  %v9535 = vpack.c.b16 %v9524, %v9523
  %v9536 = vpack.c.b16 %v9526, %v9525
  %v9537 = vpack.c.b16 %v9528, %v9527
  %v9538 = vpack.c.b16 %v9530, %v9529
  %9547 = vmatprep.subr.bf16.mxu0 0
  %9548 = vmatpush1.bf16.msra.mxu0 %v9531
  %9549 = vmatprep.subr.bf16.mxu0 0
  %9550 = vmatpush1.bf16.msra.mxu0 %v9532
  %9551 = vmatprep.subr.bf16.mxu0 0
  %9552 = vmatpush1.bf16.msra.mxu0 %v9533
  %9553 = vmatprep.subr.bf16.mxu0 0
  %9554 = vmatpush1.bf16.msra.mxu0 %v9534
  %9555 = vmatprep.subr.bf16.mxu0 0
  %9556 = vmatpush1.bf16.msra.mxu0 %v9535
  %9557 = vmatprep.subr.bf16.mxu0 0
  %9558 = vmatpush1.bf16.msra.mxu0 %v9536
  %9559 = vmatprep.subr.bf16.mxu0 0
  %9560 = vmatpush1.bf16.msra.mxu0 %v9537
  %9561 = vmatprep.subr.bf16.mxu0 0
  %9562 = vmatpush1.bf16.msra.mxu0 %v9538
  %9563 = vmatprep.subr.bf16.mxu0 0
  %9564 = vmatpush1.bf16.msra.mxu0 0
  %9565 = vmatprep.subr.bf16.mxu0 0
  %9566 = vmatpush1.bf16.msra.mxu0 0
  %9567 = vmatprep.subr.bf16.mxu0 0
  %9568 = vmatpush1.bf16.msra.mxu0 0
  %9569 = vmatprep.subr.bf16.mxu0 0
  %9570 = vmatpush1.bf16.msra.mxu0 0
  %9571 = vmatprep.subr.bf16.mxu0 0
  %9572 = vmatpush1.bf16.msra.mxu0 0
  %9573 = vmatprep.subr.bf16.mxu0 0
  %9574 = vmatpush1.bf16.msra.mxu0 0
  %9575 = vmatprep.subr.bf16.mxu0 0
  %9576 = vmatpush1.bf16.msra.mxu0 0
  %9577 = vmatprep.subr.bf16.mxu0 0
  %9578 = vmatpush1.bf16.msra.mxu0 0
  %9579 = vmatprep.mubr.bf16.mxu0 0
  %9580 = vmatmul.mubr.bf16.gmra.mrb[0].mxu0 %v9375
  %v9581 = vpop.f32.mrb[0].mxu0
  %v9582 = vadd.f32 0.0, %v9581
  %v9583 = vpop.f32.mrb[0].mxu0
  %v9584 = vpop.f32.mrb[0].mxu0
  %v9585 = vpop.f32.mrb[0].mxu0
  %9586 = vdwg.mxu0
  %v9587 = vadd.f32 %v9160, %v9582
  %s9588 = scalar_lea.vmem %s7, 1536
  %v9589 = vld [vmem:[%s9588] sm:$0xf]
  %v9590 = vld [vmem:[%s9588 + $0x4] sm:$0xf]
  %v9591 = vld [vmem:[%s9588 + $0x8] sm:$0xf]
  %v9592 = vld [vmem:[%s9588 + $0xc] sm:$0xf]
  %v9593 = vld [vmem:[%s9588 + $0x10] sm:$0xf]
  %v9594 = vld [vmem:[%s9588 + $0x14] sm:$0xf]
  %v9595 = vld [vmem:[%s9588 + $0x18] sm:$0xf]
  %v9596 = vld [vmem:[%s9588 + $0x1c] sm:$0xf]
  %v9597 = vld [vmem:[%s9588 + $0x20] sm:$0xf]
  %v9598 = vld [vmem:[%s9588 + $0x24] sm:$0xf]
  %v9599 = vld [vmem:[%s9588 + $0x28] sm:$0xf]
  %v9600 = vld [vmem:[%s9588 + $0x2c] sm:$0xf]
  %v9601 = vld [vmem:[%s9588 + $0x30] sm:$0xf]
  %v9602 = vld [vmem:[%s9588 + $0x34] sm:$0xf]
  %v9603 = vld [vmem:[%s9588 + $0x38] sm:$0xf]
  %v9604 = vld [vmem:[%s9588 + $0x3c] sm:$0xf]
  %v9621 = vunpack.c.l.b16 %v9589
  %v9622 = vunpack.c.l.b16 %v9590
  %v9623 = vunpack.c.l.b16 %v9591
  %v9624 = vunpack.c.l.b16 %v9592
  %v9625 = vunpack.c.l.b16 %v9593
  %v9626 = vunpack.c.l.b16 %v9594
  %v9627 = vunpack.c.l.b16 %v9595
  %v9628 = vunpack.c.l.b16 %v9596
  %v9629 = vunpack.c.l.b16 %v9597
  %v9630 = vunpack.c.l.b16 %v9598
  %v9631 = vunpack.c.l.b16 %v9599
  %v9632 = vunpack.c.l.b16 %v9600
  %v9633 = vunpack.c.l.b16 %v9601
  %v9634 = vunpack.c.l.b16 %v9602
  %v9635 = vunpack.c.l.b16 %v9603
  %v9636 = vunpack.c.l.b16 %v9604
  %v9637 = vpack.c.b16 %v9622, %v9621
  %v9638 = vpack.c.b16 %v9624, %v9623
  %v9639 = vpack.c.b16 %v9626, %v9625
  %v9640 = vpack.c.b16 %v9628, %v9627
  %v9641 = vpack.c.b16 %v9630, %v9629
  %v9642 = vpack.c.b16 %v9632, %v9631
  %v9643 = vpack.c.b16 %v9634, %v9633
  %v9644 = vpack.c.b16 %v9636, %v9635
  %9653 = vmatprep.subr.bf16.mxu0 0
  %9654 = vmatpush1.bf16.msra.mxu0 %v9637
  %9655 = vmatprep.subr.bf16.mxu0 0
  %9656 = vmatpush1.bf16.msra.mxu0 %v9638
  %9657 = vmatprep.subr.bf16.mxu0 0
  %9658 = vmatpush1.bf16.msra.mxu0 %v9639
  %9659 = vmatprep.subr.bf16.mxu0 0
  %9660 = vmatpush1.bf16.msra.mxu0 %v9640
  %9661 = vmatprep.subr.bf16.mxu0 0
  %9662 = vmatpush1.bf16.msra.mxu0 %v9641
  %9663 = vmatprep.subr.bf16.mxu0 0
  %9664 = vmatpush1.bf16.msra.mxu0 %v9642
  %9665 = vmatprep.subr.bf16.mxu0 0
  %9666 = vmatpush1.bf16.msra.mxu0 %v9643
  %9667 = vmatprep.subr.bf16.mxu0 0
  %9668 = vmatpush1.bf16.msra.mxu0 %v9644
  %9669 = vmatprep.subr.bf16.mxu0 0
  %9670 = vmatpush1.bf16.msra.mxu0 0
  %9671 = vmatprep.subr.bf16.mxu0 0
  %9672 = vmatpush1.bf16.msra.mxu0 0
  %9673 = vmatprep.subr.bf16.mxu0 0
  %9674 = vmatpush1.bf16.msra.mxu0 0
  %9675 = vmatprep.subr.bf16.mxu0 0
  %9676 = vmatpush1.bf16.msra.mxu0 0
  %9677 = vmatprep.subr.bf16.mxu0 0
  %9678 = vmatpush1.bf16.msra.mxu0 0
  %9679 = vmatprep.subr.bf16.mxu0 0
  %9680 = vmatpush1.bf16.msra.mxu0 0
  %9681 = vmatprep.subr.bf16.mxu0 0
  %9682 = vmatpush1.bf16.msra.mxu0 0
  %9683 = vmatprep.subr.bf16.mxu0 0
  %9684 = vmatpush1.bf16.msra.mxu0 0
  %9685 = vmatprep.mubr.bf16.mxu0 0
  %9686 = vmatmul.mubr.bf16.gmra.mrb[0].mxu0 %v9375
  %v9687 = vpop.f32.mrb[0].mxu0
  %v9688 = vadd.f32 0.0, %v9687
  %v9689 = vpop.f32.mrb[0].mxu0
  %v9690 = vpop.f32.mrb[0].mxu0
  %v9691 = vpop.f32.mrb[0].mxu0
  %9692 = vdwg.mxu0
  %v9693 = vadd.f32 %v9266, %v9688
  %s9694 = scalar_lea.vmem %s7, 2112
  %v9695 = vld [vmem:[%s9694] sm:$0xf]
  %v9696 = vld [vmem:[%s9694 + $0x4] sm:$0xf]
  %v9697 = vld [vmem:[%s9694 + $0x8] sm:$0xf]
  %v9698 = vld [vmem:[%s9694 + $0xc] sm:$0xf]
  %v9699 = vld [vmem:[%s9694 + $0x10] sm:$0xf]
  %v9700 = vld [vmem:[%s9694 + $0x14] sm:$0xf]
  %v9701 = vld [vmem:[%s9694 + $0x18] sm:$0xf]
  %v9702 = vld [vmem:[%s9694 + $0x1c] sm:$0xf]
  %v9703 = vld [vmem:[%s9694 + $0x20] sm:$0xf]
  %v9704 = vld [vmem:[%s9694 + $0x24] sm:$0xf]
  %v9705 = vld [vmem:[%s9694 + $0x28] sm:$0xf]
  %v9706 = vld [vmem:[%s9694 + $0x2c] sm:$0xf]
  %v9707 = vld [vmem:[%s9694 + $0x30] sm:$0xf]
  %v9708 = vld [vmem:[%s9694 + $0x34] sm:$0xf]
  %v9709 = vld [vmem:[%s9694 + $0x38] sm:$0xf]
  %v9710 = vld [vmem:[%s9694 + $0x3c] sm:$0xf]
  %v9727 = vunpack.c.l.b16 %v9695
  %v9728 = vunpack.c.l.b16 %v9696
  %v9729 = vunpack.c.l.b16 %v9697
  %v9730 = vunpack.c.l.b16 %v9698
  %v9731 = vunpack.c.l.b16 %v9699
  %v9732 = vunpack.c.l.b16 %v9700
  %v9733 = vunpack.c.l.b16 %v9701
  %v9734 = vunpack.c.l.b16 %v9702
  %v9735 = vunpack.c.l.b16 %v9703
  %v9736 = vunpack.c.l.b16 %v9704
  %v9737 = vunpack.c.l.b16 %v9705
  %v9738 = vunpack.c.l.b16 %v9706
  %v9739 = vunpack.c.l.b16 %v9707
  %v9740 = vunpack.c.l.b16 %v9708
  %v9741 = vunpack.c.l.b16 %v9709
  %v9742 = vunpack.c.l.b16 %v9710
  %v9743 = vpack.c.b16 %v9728, %v9727
  %v9744 = vpack.c.b16 %v9730, %v9729
  %v9745 = vpack.c.b16 %v9732, %v9731
  %v9746 = vpack.c.b16 %v9734, %v9733
  %v9747 = vpack.c.b16 %v9736, %v9735
  %v9748 = vpack.c.b16 %v9738, %v9737
  %v9749 = vpack.c.b16 %v9740, %v9739
  %v9750 = vpack.c.b16 %v9742, %v9741
  %9759 = vmatprep.subr.bf16.mxu0 0
  %9760 = vmatpush1.bf16.msra.mxu0 %v9743
  %9761 = vmatprep.subr.bf16.mxu0 0
  %9762 = vmatpush1.bf16.msra.mxu0 %v9744
  %9763 = vmatprep.subr.bf16.mxu0 0
  %9764 = vmatpush1.bf16.msra.mxu0 %v9745
  %9765 = vmatprep.subr.bf16.mxu0 0
  %9766 = vmatpush1.bf16.msra.mxu0 %v9746
  %9767 = vmatprep.subr.bf16.mxu0 0
  %9768 = vmatpush1.bf16.msra.mxu0 %v9747
  %9769 = vmatprep.subr.bf16.mxu0 0
  %9770 = vmatpush1.bf16.msra.mxu0 %v9748
  %9771 = vmatprep.subr.bf16.mxu0 0
  %9772 = vmatpush1.bf16.msra.mxu0 %v9749
  %9773 = vmatprep.subr.bf16.mxu0 0
  %9774 = vmatpush1.bf16.msra.mxu0 %v9750
  %9775 = vmatprep.subr.bf16.mxu0 0
  %9776 = vmatpush1.bf16.msra.mxu0 0
  %9777 = vmatprep.subr.bf16.mxu0 0
  %9778 = vmatpush1.bf16.msra.mxu0 0
  %9779 = vmatprep.subr.bf16.mxu0 0
  %9780 = vmatpush1.bf16.msra.mxu0 0
  %9781 = vmatprep.subr.bf16.mxu0 0
  %9782 = vmatpush1.bf16.msra.mxu0 0
  %9783 = vmatprep.subr.bf16.mxu0 0
  %9784 = vmatpush1.bf16.msra.mxu0 0
  %9785 = vmatprep.subr.bf16.mxu0 0
  %9786 = vmatpush1.bf16.msra.mxu0 0
  %9787 = vmatprep.subr.bf16.mxu0 0
  %9788 = vmatpush1.bf16.msra.mxu0 0
  %9789 = vmatprep.subr.bf16.mxu0 0
  %9790 = vmatpush1.bf16.msra.mxu0 0
  %9791 = vmatprep.mubr.bf16.mxu0 0
  %9792 = vmatmul.mubr.bf16.gmra.mrb[0].mxu0 %v9375
  %v9793 = vpop.f32.mrb[0].mxu0
  %v9794 = vadd.f32 0.0, %v9793
  %v9795 = vpop.f32.mrb[0].mxu0
  %v9796 = vpop.f32.mrb[0].mxu0
  %v9797 = vpop.f32.mrb[0].mxu0
  %9798 = vdwg.mxu0
  %v9799 = vadd.f32 %v9372, %v9794
  %s9800 = scalar_lea.vmem [#allocation6], 7
  %v9801 = vld [vmem:[%s9800] ss:$9 sm:$0x1]
  %v9802 = vpack.c.bf16 %v9801, %v9801
  %s9803 = scalar_lea.vmem %s7, 448
  %v9804 = vld [vmem:[%s9803] sm:$0xf]
  %v9805 = vld [vmem:[%s9803 + $0x4] sm:$0xf]
  %v9806 = vld [vmem:[%s9803 + $0x8] sm:$0xf]
  %v9807 = vld [vmem:[%s9803 + $0xc] sm:$0xf]
  %v9808 = vld [vmem:[%s9803 + $0x10] sm:$0xf]
  %v9809 = vld [vmem:[%s9803 + $0x14] sm:$0xf]
  %v9810 = vld [vmem:[%s9803 + $0x18] sm:$0xf]
  %v9811 = vld [vmem:[%s9803 + $0x1c] sm:$0xf]
  %v9812 = vld [vmem:[%s9803 + $0x20] sm:$0xf]
  %v9813 = vld [vmem:[%s9803 + $0x24] sm:$0xf]
  %v9814 = vld [vmem:[%s9803 + $0x28] sm:$0xf]
  %v9815 = vld [vmem:[%s9803 + $0x2c] sm:$0xf]
  %v9816 = vld [vmem:[%s9803 + $0x30] sm:$0xf]
  %v9817 = vld [vmem:[%s9803 + $0x34] sm:$0xf]
  %v9818 = vld [vmem:[%s9803 + $0x38] sm:$0xf]
  %v9819 = vld [vmem:[%s9803 + $0x3c] sm:$0xf]
  %v9836 = vunpack.c.l.b16 %v9804
  %v9837 = vunpack.c.l.b16 %v9805
  %v9838 = vunpack.c.l.b16 %v9806
  %v9839 = vunpack.c.l.b16 %v9807
  %v9840 = vunpack.c.l.b16 %v9808
  %v9841 = vunpack.c.l.b16 %v9809
  %v9842 = vunpack.c.l.b16 %v9810
  %v9843 = vunpack.c.l.b16 %v9811
  %v9844 = vunpack.c.l.b16 %v9812
  %v9845 = vunpack.c.l.b16 %v9813
  %v9846 = vunpack.c.l.b16 %v9814
  %v9847 = vunpack.c.l.b16 %v9815
  %v9848 = vunpack.c.l.b16 %v9816
  %v9849 = vunpack.c.l.b16 %v9817
  %v9850 = vunpack.c.l.b16 %v9818
  %v9851 = vunpack.c.l.b16 %v9819
  %v9852 = vpack.c.b16 %v9837, %v9836
  %v9853 = vpack.c.b16 %v9839, %v9838
  %v9854 = vpack.c.b16 %v9841, %v9840
  %v9855 = vpack.c.b16 %v9843, %v9842
  %v9856 = vpack.c.b16 %v9845, %v9844
  %v9857 = vpack.c.b16 %v9847, %v9846
  %v9858 = vpack.c.b16 %v9849, %v9848
  %v9859 = vpack.c.b16 %v9851, %v9850
  %9868 = vmatprep.subr.bf16.mxu0 0
  %9869 = vmatpush1.bf16.msra.mxu0 %v9852
  %9870 = vmatprep.subr.bf16.mxu0 0
  %9871 = vmatpush1.bf16.msra.mxu0 %v9853
  %9872 = vmatprep.subr.bf16.mxu0 0
  %9873 = vmatpush1.bf16.msra.mxu0 %v9854
  %9874 = vmatprep.subr.bf16.mxu0 0
  %9875 = vmatpush1.bf16.msra.mxu0 %v9855
  %9876 = vmatprep.subr.bf16.mxu0 0
  %9877 = vmatpush1.bf16.msra.mxu0 %v9856
  %9878 = vmatprep.subr.bf16.mxu0 0
  %9879 = vmatpush1.bf16.msra.mxu0 %v9857
  %9880 = vmatprep.subr.bf16.mxu0 0
  %9881 = vmatpush1.bf16.msra.mxu0 %v9858
  %9882 = vmatprep.subr.bf16.mxu0 0
  %9883 = vmatpush1.bf16.msra.mxu0 %v9859
  %9884 = vmatprep.subr.bf16.mxu0 0
  %9885 = vmatpush1.bf16.msra.mxu0 0
  %9886 = vmatprep.subr.bf16.mxu0 0
  %9887 = vmatpush1.bf16.msra.mxu0 0
  %9888 = vmatprep.subr.bf16.mxu0 0
  %9889 = vmatpush1.bf16.msra.mxu0 0
  %9890 = vmatprep.subr.bf16.mxu0 0
  %9891 = vmatpush1.bf16.msra.mxu0 0
  %9892 = vmatprep.subr.bf16.mxu0 0
  %9893 = vmatpush1.bf16.msra.mxu0 0
  %9894 = vmatprep.subr.bf16.mxu0 0
  %9895 = vmatpush1.bf16.msra.mxu0 0
  %9896 = vmatprep.subr.bf16.mxu0 0
  %9897 = vmatpush1.bf16.msra.mxu0 0
  %9898 = vmatprep.subr.bf16.mxu0 0
  %9899 = vmatpush1.bf16.msra.mxu0 0
  %9900 = vmatprep.mubr.bf16.mxu0 0
  %9901 = vmatmul.mubr.bf16.gmra.mrb[0].mxu0 %v9802
  %v9902 = vpop.f32.mrb[0].mxu0
  %v9903 = vadd.f32 0.0, %v9902
  %v9904 = vpop.f32.mrb[0].mxu0
  %v9905 = vpop.f32.mrb[0].mxu0
  %v9906 = vpop.f32.mrb[0].mxu0
  %9907 = vdwg.mxu0
  %v9908 = vadd.f32 %v9481, %v9903
  %s9909 = scalar_lea.vmem %s7, 1024
  %v9910 = vld [vmem:[%s9909] sm:$0xf]
  %v9911 = vld [vmem:[%s9909 + $0x4] sm:$0xf]
  %v9912 = vld [vmem:[%s9909 + $0x8] sm:$0xf]
  %v9913 = vld [vmem:[%s9909 + $0xc] sm:$0xf]
  %v9914 = vld [vmem:[%s9909 + $0x10] sm:$0xf]
  %v9915 = vld [vmem:[%s9909 + $0x14] sm:$0xf]
  %v9916 = vld [vmem:[%s9909 + $0x18] sm:$0xf]
  %v9917 = vld [vmem:[%s9909 + $0x1c] sm:$0xf]
  %v9918 = vld [vmem:[%s9909 + $0x20] sm:$0xf]
  %v9919 = vld [vmem:[%s9909 + $0x24] sm:$0xf]
  %v9920 = vld [vmem:[%s9909 + $0x28] sm:$0xf]
  %v9921 = vld [vmem:[%s9909 + $0x2c] sm:$0xf]
  %v9922 = vld [vmem:[%s9909 + $0x30] sm:$0xf]
  %v9923 = vld [vmem:[%s9909 + $0x34] sm:$0xf]
  %v9924 = vld [vmem:[%s9909 + $0x38] sm:$0xf]
  %v9925 = vld [vmem:[%s9909 + $0x3c] sm:$0xf]
  %v9942 = vunpack.c.l.b16 %v9910
  %v9943 = vunpack.c.l.b16 %v9911
  %v9944 = vunpack.c.l.b16 %v9912
  %v9945 = vunpack.c.l.b16 %v9913
  %v9946 = vunpack.c.l.b16 %v9914
  %v9947 = vunpack.c.l.b16 %v9915
  %v9948 = vunpack.c.l.b16 %v9916
  %v9949 = vunpack.c.l.b16 %v9917
  %v9950 = vunpack.c.l.b16 %v9918
  %v9951 = vunpack.c.l.b16 %v9919
  %v9952 = vunpack.c.l.b16 %v9920
  %v9953 = vunpack.c.l.b16 %v9921
  %v9954 = vunpack.c.l.b16 %v9922
  %v9955 = vunpack.c.l.b16 %v9923
  %v9956 = vunpack.c.l.b16 %v9924
  %v9957 = vunpack.c.l.b16 %v9925
  %v9958 = vpack.c.b16 %v9943, %v9942
  %v9959 = vpack.c.b16 %v9945, %v9944
  %v9960 = vpack.c.b16 %v9947, %v9946
  %v9961 = vpack.c.b16 %v9949, %v9948
  %v9962 = vpack.c.b16 %v9951, %v9950
  %v9963 = vpack.c.b16 %v9953, %v9952
  %v9964 = vpack.c.b16 %v9955, %v9954
  %v9965 = vpack.c.b16 %v9957, %v9956
  %9974 = vmatprep.subr.bf16.mxu0 0
  %9975 = vmatpush1.bf16.msra.mxu0 %v9958
  %9976 = vmatprep.subr.bf16.mxu0 0
  %9977 = vmatpush1.bf16.msra.mxu0 %v9959
  %9978 = vmatprep.subr.bf16.mxu0 0
  %9979 = vmatpush1.bf16.msra.mxu0 %v9960
  %9980 = vmatprep.subr.bf16.mxu0 0
  %9981 = vmatpush1.bf16.msra.mxu0 %v9961
  %9982 = vmatprep.subr.bf16.mxu0 0
  %9983 = vmatpush1.bf16.msra.mxu0 %v9962
  %9984 = vmatprep.subr.bf16.mxu0 0
  %9985 = vmatpush1.bf16.msra.mxu0 %v9963
  %9986 = vmatprep.subr.bf16.mxu0 0
  %9987 = vmatpush1.bf16.msra.mxu0 %v9964
  %9988 = vmatprep.subr.bf16.mxu0 0
  %9989 = vmatpush1.bf16.msra.mxu0 %v9965
  %9990 = vmatprep.subr.bf16.mxu0 0
  %9991 = vmatpush1.bf16.msra.mxu0 0
  %9992 = vmatprep.subr.bf16.mxu0 0
  %9993 = vmatpush1.bf16.msra.mxu0 0
  %9994 = vmatprep.subr.bf16.mxu0 0
  %9995 = vmatpush1.bf16.msra.mxu0 0
  %9996 = vmatprep.subr.bf16.mxu0 0
  %9997 = vmatpush1.bf16.msra.mxu0 0
  %9998 = vmatprep.subr.bf16.mxu0 0
  %9999 = vmatpush1.bf16.msra.mxu0 0
  %10000 = vmatprep.subr.bf16.mxu0 0
  %10001 = vmatpush1.bf16.msra.mxu0 0
  %10002 = vmatprep.subr.bf16.mxu0 0
  %10003 = vmatpush1.bf16.msra.mxu0 0
  %10004 = vmatprep.subr.bf16.mxu0 0
  %10005 = vmatpush1.bf16.msra.mxu0 0
  %10006 = vmatprep.mubr.bf16.mxu0 0
  %10007 = vmatmul.mubr.bf16.gmra.mrb[0].mxu0 %v9802
  %v10008 = vpop.f32.mrb[0].mxu0
  %v10009 = vadd.f32 0.0, %v10008
  %v10010 = vpop.f32.mrb[0].mxu0
  %v10011 = vpop.f32.mrb[0].mxu0
  %v10012 = vpop.f32.mrb[0].mxu0
  %10013 = vdwg.mxu0
  %v10014 = vadd.f32 %v9587, %v10009
  %s10015 = scalar_lea.vmem %s7, 1600
  %v10016 = vld [vmem:[%s10015] sm:$0xf]
  %v10017 = vld [vmem:[%s10015 + $0x4] sm:$0xf]
  %v10018 = vld [vmem:[%s10015 + $0x8] sm:$0xf]
  %v10019 = vld [vmem:[%s10015 + $0xc] sm:$0xf]
  %v10020 = vld [vmem:[%s10015 + $0x10] sm:$0xf]
  %v10021 = vld [vmem:[%s10015 + $0x14] sm:$0xf]
  %v10022 = vld [vmem:[%s10015 + $0x18] sm:$0xf]
  %v10023 = vld [vmem:[%s10015 + $0x1c] sm:$0xf]
  %v10024 = vld [vmem:[%s10015 + $0x20] sm:$0xf]
  %v10025 = vld [vmem:[%s10015 + $0x24] sm:$0xf]
  %v10026 = vld [vmem:[%s10015 + $0x28] sm:$0xf]
  %v10027 = vld [vmem:[%s10015 + $0x2c] sm:$0xf]
  %v10028 = vld [vmem:[%s10015 + $0x30] sm:$0xf]
  %v10029 = vld [vmem:[%s10015 + $0x34] sm:$0xf]
  %v10030 = vld [vmem:[%s10015 + $0x38] sm:$0xf]
  %v10031 = vld [vmem:[%s10015 + $0x3c] sm:$0xf]
  %v10048 = vunpack.c.l.b16 %v10016
  %v10049 = vunpack.c.l.b16 %v10017
  %v10050 = vunpack.c.l.b16 %v10018
  %v10051 = vunpack.c.l.b16 %v10019
  %v10052 = vunpack.c.l.b16 %v10020
  %v10053 = vunpack.c.l.b16 %v10021
  %v10054 = vunpack.c.l.b16 %v10022
  %v10055 = vunpack.c.l.b16 %v10023
  %v10056 = vunpack.c.l.b16 %v10024
  %v10057 = vunpack.c.l.b16 %v10025
  %v10058 = vunpack.c.l.b16 %v10026
  %v10059 = vunpack.c.l.b16 %v10027
  %v10060 = vunpack.c.l.b16 %v10028
  %v10061 = vunpack.c.l.b16 %v10029
  %v10062 = vunpack.c.l.b16 %v10030
  %v10063 = vunpack.c.l.b16 %v10031
  %v10064 = vpack.c.b16 %v10049, %v10048
  %v10065 = vpack.c.b16 %v10051, %v10050
  %v10066 = vpack.c.b16 %v10053, %v10052
  %v10067 = vpack.c.b16 %v10055, %v10054
  %v10068 = vpack.c.b16 %v10057, %v10056
  %v10069 = vpack.c.b16 %v10059, %v10058
  %v10070 = vpack.c.b16 %v10061, %v10060
  %v10071 = vpack.c.b16 %v10063, %v10062
  %10080 = vmatprep.subr.bf16.mxu0 0
  %10081 = vmatpush1.bf16.msra.mxu0 %v10064
  %10082 = vmatprep.subr.bf16.mxu0 0
  %10083 = vmatpush1.bf16.msra.mxu0 %v10065
  %10084 = vmatprep.subr.bf16.mxu0 0
  %10085 = vmatpush1.bf16.msra.mxu0 %v10066
  %10086 = vmatprep.subr.bf16.mxu0 0
  %10087 = vmatpush1.bf16.msra.mxu0 %v10067
  %10088 = vmatprep.subr.bf16.mxu0 0
  %10089 = vmatpush1.bf16.msra.mxu0 %v10068
  %10090 = vmatprep.subr.bf16.mxu0 0
  %10091 = vmatpush1.bf16.msra.mxu0 %v10069
  %10092 = vmatprep.subr.bf16.mxu0 0
  %10093 = vmatpush1.bf16.msra.mxu0 %v10070
  %10094 = vmatprep.subr.bf16.mxu0 0
  %10095 = vmatpush1.bf16.msra.mxu0 %v10071
  %10096 = vmatprep.subr.bf16.mxu0 0
  %10097 = vmatpush1.bf16.msra.mxu0 0
  %10098 = vmatprep.subr.bf16.mxu0 0
  %10099 = vmatpush1.bf16.msra.mxu0 0
  %10100 = vmatprep.subr.bf16.mxu0 0
  %10101 = vmatpush1.bf16.msra.mxu0 0
  %10102 = vmatprep.subr.bf16.mxu0 0
  %10103 = vmatpush1.bf16.msra.mxu0 0
  %10104 = vmatprep.subr.bf16.mxu0 0
  %10105 = vmatpush1.bf16.msra.mxu0 0
  %10106 = vmatprep.subr.bf16.mxu0 0
  %10107 = vmatpush1.bf16.msra.mxu0 0
  %10108 = vmatprep.subr.bf16.mxu0 0
  %10109 = vmatpush1.bf16.msra.mxu0 0
  %10110 = vmatprep.subr.bf16.mxu0 0
  %10111 = vmatpush1.bf16.msra.mxu0 0
  %10112 = vmatprep.mubr.bf16.mxu0 0
  %10113 = vmatmul.mubr.bf16.gmra.mrb[0].mxu0 %v9802
  %v10114 = vpop.f32.mrb[0].mxu0
  %v10115 = vadd.f32 0.0, %v10114
  %v10116 = vpop.f32.mrb[0].mxu0
  %v10117 = vpop.f32.mrb[0].mxu0
  %v10118 = vpop.f32.mrb[0].mxu0
  %10119 = vdwg.mxu0
  %v10120 = vadd.f32 %v9693, %v10115
  %s10121 = scalar_lea.vmem %s7, 2176
  %v10122 = vld [vmem:[%s10121] sm:$0xf]
  %v10123 = vld [vmem:[%s10121 + $0x4] sm:$0xf]
  %v10124 = vld [vmem:[%s10121 + $0x8] sm:$0xf]
  %v10125 = vld [vmem:[%s10121 + $0xc] sm:$0xf]
  %v10126 = vld [vmem:[%s10121 + $0x10] sm:$0xf]
  %v10127 = vld [vmem:[%s10121 + $0x14] sm:$0xf]
  %v10128 = vld [vmem:[%s10121 + $0x18] sm:$0xf]
  %v10129 = vld [vmem:[%s10121 + $0x1c] sm:$0xf]
  %v10130 = vld [vmem:[%s10121 + $0x20] sm:$0xf]
  %v10131 = vld [vmem:[%s10121 + $0x24] sm:$0xf]
  %v10132 = vld [vmem:[%s10121 + $0x28] sm:$0xf]
  %v10133 = vld [vmem:[%s10121 + $0x2c] sm:$0xf]
  %v10134 = vld [vmem:[%s10121 + $0x30] sm:$0xf]
  %v10135 = vld [vmem:[%s10121 + $0x34] sm:$0xf]
  %v10136 = vld [vmem:[%s10121 + $0x38] sm:$0xf]
  %v10137 = vld [vmem:[%s10121 + $0x3c] sm:$0xf]
  %v10154 = vunpack.c.l.b16 %v10122
  %v10155 = vunpack.c.l.b16 %v10123
  %v10156 = vunpack.c.l.b16 %v10124
  %v10157 = vunpack.c.l.b16 %v10125
  %v10158 = vunpack.c.l.b16 %v10126
  %v10159 = vunpack.c.l.b16 %v10127
  %v10160 = vunpack.c.l.b16 %v10128
  %v10161 = vunpack.c.l.b16 %v10129
  %v10162 = vunpack.c.l.b16 %v10130
  %v10163 = vunpack.c.l.b16 %v10131
  %v10164 = vunpack.c.l.b16 %v10132
  %v10165 = vunpack.c.l.b16 %v10133
  %v10166 = vunpack.c.l.b16 %v10134
  %v10167 = vunpack.c.l.b16 %v10135
  %v10168 = vunpack.c.l.b16 %v10136
  %v10169 = vunpack.c.l.b16 %v10137
  %v10170 = vpack.c.b16 %v10155, %v10154
  %v10171 = vpack.c.b16 %v10157, %v10156
  %v10172 = vpack.c.b16 %v10159, %v10158
  %v10173 = vpack.c.b16 %v10161, %v10160
  %v10174 = vpack.c.b16 %v10163, %v10162
  %v10175 = vpack.c.b16 %v10165, %v10164
  %v10176 = vpack.c.b16 %v10167, %v10166
  %v10177 = vpack.c.b16 %v10169, %v10168
  %10186 = vmatprep.subr.bf16.mxu0 0
  %10187 = vmatpush1.bf16.msra.mxu0 %v10170
  %10188 = vmatprep.subr.bf16.mxu0 0
  %10189 = vmatpush1.bf16.msra.mxu0 %v10171
  %10190 = vmatprep.subr.bf16.mxu0 0
  %10191 = vmatpush1.bf16.msra.mxu0 %v10172
  %10192 = vmatprep.subr.bf16.mxu0 0
  %10193 = vmatpush1.bf16.msra.mxu0 %v10173
  %10194 = vmatprep.subr.bf16.mxu0 0
  %10195 = vmatpush1.bf16.msra.mxu0 %v10174
  %10196 = vmatprep.subr.bf16.mxu0 0
  %10197 = vmatpush1.bf16.msra.mxu0 %v10175
  %10198 = vmatprep.subr.bf16.mxu0 0
  %10199 = vmatpush1.bf16.msra.mxu0 %v10176
  %10200 = vmatprep.subr.bf16.mxu0 0
  %10201 = vmatpush1.bf16.msra.mxu0 %v10177
  %10202 = vmatprep.subr.bf16.mxu0 0
  %10203 = vmatpush1.bf16.msra.mxu0 0
  %10204 = vmatprep.subr.bf16.mxu0 0
  %10205 = vmatpush1.bf16.msra.mxu0 0
  %10206 = vmatprep.subr.bf16.mxu0 0
  %10207 = vmatpush1.bf16.msra.mxu0 0
  %10208 = vmatprep.subr.bf16.mxu0 0
  %10209 = vmatpush1.bf16.msra.mxu0 0
  %10210 = vmatprep.subr.bf16.mxu0 0
  %10211 = vmatpush1.bf16.msra.mxu0 0
  %10212 = vmatprep.subr.bf16.mxu0 0
  %10213 = vmatpush1.bf16.msra.mxu0 0
  %10214 = vmatprep.subr.bf16.mxu0 0
  %10215 = vmatpush1.bf16.msra.mxu0 0
  %10216 = vmatprep.subr.bf16.mxu0 0
  %10217 = vmatpush1.bf16.msra.mxu0 0
  %10218 = vmatprep.mubr.bf16.mxu0 0
  %10219 = vmatmul.mubr.bf16.gmra.mrb[0].mxu0 %v9802
  %v10220 = vpop.f32.mrb[0].mxu0
  %v10221 = vadd.f32 0.0, %v10220
  %v10222 = vpop.f32.mrb[0].mxu0
  %v10223 = vpop.f32.mrb[0].mxu0
  %v10224 = vpop.f32.mrb[0].mxu0
  %10225 = vdwg.mxu0
  %v10226 = vadd.f32 %v9799, %v10221
  %s10227 = scalar_lea.vmem [#allocation6], 8
  %v10228 = vld [vmem:[%s10227] ss:$9 sm:$0x1]
  %v10229 = vpack.c.bf16 %v10228, %v10228
  %s10230 = scalar_lea.vmem %s7, 512
  %v10231 = vld [vmem:[%s10230] sm:$0xf]
  %v10232 = vld [vmem:[%s10230 + $0x4] sm:$0xf]
  %v10233 = vld [vmem:[%s10230 + $0x8] sm:$0xf]
  %v10234 = vld [vmem:[%s10230 + $0xc] sm:$0xf]
  %v10235 = vld [vmem:[%s10230 + $0x10] sm:$0xf]
  %v10236 = vld [vmem:[%s10230 + $0x14] sm:$0xf]
  %v10237 = vld [vmem:[%s10230 + $0x18] sm:$0xf]
  %v10238 = vld [vmem:[%s10230 + $0x1c] sm:$0xf]
  %v10239 = vld [vmem:[%s10230 + $0x20] sm:$0xf]
  %v10240 = vld [vmem:[%s10230 + $0x24] sm:$0xf]
  %v10241 = vld [vmem:[%s10230 + $0x28] sm:$0xf]
  %v10242 = vld [vmem:[%s10230 + $0x2c] sm:$0xf]
  %v10243 = vld [vmem:[%s10230 + $0x30] sm:$0xf]
  %v10244 = vld [vmem:[%s10230 + $0x34] sm:$0xf]
  %v10245 = vld [vmem:[%s10230 + $0x38] sm:$0xf]
  %v10246 = vld [vmem:[%s10230 + $0x3c] sm:$0xf]
  %v10263 = vunpack.c.l.b16 %v10231
  %v10264 = vunpack.c.l.b16 %v10232
  %v10265 = vunpack.c.l.b16 %v10233
  %v10266 = vunpack.c.l.b16 %v10234
  %v10267 = vunpack.c.l.b16 %v10235
  %v10268 = vunpack.c.l.b16 %v10236
  %v10269 = vunpack.c.l.b16 %v10237
  %v10270 = vunpack.c.l.b16 %v10238
  %v10271 = vunpack.c.l.b16 %v10239
  %v10272 = vunpack.c.l.b16 %v10240
  %v10273 = vunpack.c.l.b16 %v10241
  %v10274 = vunpack.c.l.b16 %v10242
  %v10275 = vunpack.c.l.b16 %v10243
  %v10276 = vunpack.c.l.b16 %v10244
  %v10277 = vunpack.c.l.b16 %v10245
  %v10278 = vunpack.c.l.b16 %v10246
  %v10279 = vpack.c.b16 %v10264, %v10263
  %v10280 = vpack.c.b16 %v10266, %v10265
  %v10281 = vpack.c.b16 %v10268, %v10267
  %v10282 = vpack.c.b16 %v10270, %v10269
  %v10283 = vpack.c.b16 %v10272, %v10271
  %v10284 = vpack.c.b16 %v10274, %v10273
  %v10285 = vpack.c.b16 %v10276, %v10275
  %v10286 = vpack.c.b16 %v10278, %v10277
  %10295 = vmatprep.subr.bf16.mxu0 0
  %10296 = vmatpush1.bf16.msra.mxu0 %v10279
  %10297 = vmatprep.subr.bf16.mxu0 0
  %10298 = vmatpush1.bf16.msra.mxu0 %v10280
  %10299 = vmatprep.subr.bf16.mxu0 0
  %10300 = vmatpush1.bf16.msra.mxu0 %v10281
  %10301 = vmatprep.subr.bf16.mxu0 0
  %10302 = vmatpush1.bf16.msra.mxu0 %v10282
  %10303 = vmatprep.subr.bf16.mxu0 0
  %10304 = vmatpush1.bf16.msra.mxu0 %v10283
  %10305 = vmatprep.subr.bf16.mxu0 0
  %10306 = vmatpush1.bf16.msra.mxu0 %v10284
  %10307 = vmatprep.subr.bf16.mxu0 0
  %10308 = vmatpush1.bf16.msra.mxu0 %v10285
  %10309 = vmatprep.subr.bf16.mxu0 0
  %10310 = vmatpush1.bf16.msra.mxu0 %v10286
  %10311 = vmatprep.subr.bf16.mxu0 0
  %10312 = vmatpush1.bf16.msra.mxu0 0
  %10313 = vmatprep.subr.bf16.mxu0 0
  %10314 = vmatpush1.bf16.msra.mxu0 0
  %10315 = vmatprep.subr.bf16.mxu0 0
  %10316 = vmatpush1.bf16.msra.mxu0 0
  %10317 = vmatprep.subr.bf16.mxu0 0
  %10318 = vmatpush1.bf16.msra.mxu0 0
  %10319 = vmatprep.subr.bf16.mxu0 0
  %10320 = vmatpush1.bf16.msra.mxu0 0
  %10321 = vmatprep.subr.bf16.mxu0 0
  %10322 = vmatpush1.bf16.msra.mxu0 0
  %10323 = vmatprep.subr.bf16.mxu0 0
  %10324 = vmatpush1.bf16.msra.mxu0 0
  %10325 = vmatprep.subr.bf16.mxu0 0
  %10326 = vmatpush1.bf16.msra.mxu0 0
  %10327 = vmatprep.mubr.bf16.mxu0 0
  %10328 = vmatmul.mubr.bf16.gmra.mrb[0].mxu0 %v10229
  %v10329 = vpop.f32.mrb[0].mxu0
  %v10330 = vadd.f32 0.0, %v10329
  %v10331 = vpop.f32.mrb[0].mxu0
  %v10332 = vpop.f32.mrb[0].mxu0
  %v10333 = vpop.f32.mrb[0].mxu0
  %10334 = vdwg.mxu0
  %v10335 = vadd.f32 %v9908, %v10330
  %s10336 = scalar_lea.vmem %s7, 1088
  %v10337 = vld [vmem:[%s10336] sm:$0xf]
  %v10338 = vld [vmem:[%s10336 + $0x4] sm:$0xf]
  %v10339 = vld [vmem:[%s10336 + $0x8] sm:$0xf]
  %v10340 = vld [vmem:[%s10336 + $0xc] sm:$0xf]
  %v10341 = vld [vmem:[%s10336 + $0x10] sm:$0xf]
  %v10342 = vld [vmem:[%s10336 + $0x14] sm:$0xf]
  %v10343 = vld [vmem:[%s10336 + $0x18] sm:$0xf]
  %v10344 = vld [vmem:[%s10336 + $0x1c] sm:$0xf]
  %v10345 = vld [vmem:[%s10336 + $0x20] sm:$0xf]
  %v10346 = vld [vmem:[%s10336 + $0x24] sm:$0xf]
  %v10347 = vld [vmem:[%s10336 + $0x28] sm:$0xf]
  %v10348 = vld [vmem:[%s10336 + $0x2c] sm:$0xf]
  %v10349 = vld [vmem:[%s10336 + $0x30] sm:$0xf]
  %v10350 = vld [vmem:[%s10336 + $0x34] sm:$0xf]
  %v10351 = vld [vmem:[%s10336 + $0x38] sm:$0xf]
  %v10352 = vld [vmem:[%s10336 + $0x3c] sm:$0xf]
  %v10369 = vunpack.c.l.b16 %v10337
  %v10370 = vunpack.c.l.b16 %v10338
  %v10371 = vunpack.c.l.b16 %v10339
  %v10372 = vunpack.c.l.b16 %v10340
  %v10373 = vunpack.c.l.b16 %v10341
  %v10374 = vunpack.c.l.b16 %v10342
  %v10375 = vunpack.c.l.b16 %v10343
  %v10376 = vunpack.c.l.b16 %v10344
  %v10377 = vunpack.c.l.b16 %v10345
  %v10378 = vunpack.c.l.b16 %v10346
  %v10379 = vunpack.c.l.b16 %v10347
  %v10380 = vunpack.c.l.b16 %v10348
  %v10381 = vunpack.c.l.b16 %v10349
  %v10382 = vunpack.c.l.b16 %v10350
  %v10383 = vunpack.c.l.b16 %v10351
  %v10384 = vunpack.c.l.b16 %v10352
  %v10385 = vpack.c.b16 %v10370, %v10369
  %v10386 = vpack.c.b16 %v10372, %v10371
  %v10387 = vpack.c.b16 %v10374, %v10373
  %v10388 = vpack.c.b16 %v10376, %v10375
  %v10389 = vpack.c.b16 %v10378, %v10377
  %v10390 = vpack.c.b16 %v10380, %v10379
  %v10391 = vpack.c.b16 %v10382, %v10381
  %v10392 = vpack.c.b16 %v10384, %v10383
  %10401 = vmatprep.subr.bf16.mxu0 0
  %10402 = vmatpush1.bf16.msra.mxu0 %v10385
  %10403 = vmatprep.subr.bf16.mxu0 0
  %10404 = vmatpush1.bf16.msra.mxu0 %v10386
  %10405 = vmatprep.subr.bf16.mxu0 0
  %10406 = vmatpush1.bf16.msra.mxu0 %v10387
  %10407 = vmatprep.subr.bf16.mxu0 0
  %10408 = vmatpush1.bf16.msra.mxu0 %v10388
  %10409 = vmatprep.subr.bf16.mxu0 0
  %10410 = vmatpush1.bf16.msra.mxu0 %v10389
  %10411 = vmatprep.subr.bf16.mxu0 0
  %10412 = vmatpush1.bf16.msra.mxu0 %v10390
  %10413 = vmatprep.subr.bf16.mxu0 0
  %10414 = vmatpush1.bf16.msra.mxu0 %v10391
  %10415 = vmatprep.subr.bf16.mxu0 0
  %10416 = vmatpush1.bf16.msra.mxu0 %v10392
  %10417 = vmatprep.subr.bf16.mxu0 0
  %10418 = vmatpush1.bf16.msra.mxu0 0
  %10419 = vmatprep.subr.bf16.mxu0 0
  %10420 = vmatpush1.bf16.msra.mxu0 0
  %10421 = vmatprep.subr.bf16.mxu0 0
  %10422 = vmatpush1.bf16.msra.mxu0 0
  %10423 = vmatprep.subr.bf16.mxu0 0
  %10424 = vmatpush1.bf16.msra.mxu0 0
  %10425 = vmatprep.subr.bf16.mxu0 0
  %10426 = vmatpush1.bf16.msra.mxu0 0
  %10427 = vmatprep.subr.bf16.mxu0 0
  %10428 = vmatpush1.bf16.msra.mxu0 0
  %10429 = vmatprep.subr.bf16.mxu0 0
  %10430 = vmatpush1.bf16.msra.mxu0 0
  %10431 = vmatprep.subr.bf16.mxu0 0
  %10432 = vmatpush1.bf16.msra.mxu0 0
  %10433 = vmatprep.mubr.bf16.mxu0 0
  %10434 = vmatmul.mubr.bf16.gmra.mrb[0].mxu0 %v10229
  %v10435 = vpop.f32.mrb[0].mxu0
  %v10436 = vadd.f32 0.0, %v10435
  %v10437 = vpop.f32.mrb[0].mxu0
  %v10438 = vpop.f32.mrb[0].mxu0
  %v10439 = vpop.f32.mrb[0].mxu0
  %10440 = vdwg.mxu0
  %v10441 = vadd.f32 %v10014, %v10436
  %s10442 = scalar_lea.vmem %s7, 1664
  %v10443 = vld [vmem:[%s10442] sm:$0xf]
  %v10444 = vld [vmem:[%s10442 + $0x4] sm:$0xf]
  %v10445 = vld [vmem:[%s10442 + $0x8] sm:$0xf]
  %v10446 = vld [vmem:[%s10442 + $0xc] sm:$0xf]
  %v10447 = vld [vmem:[%s10442 + $0x10] sm:$0xf]
  %v10448 = vld [vmem:[%s10442 + $0x14] sm:$0xf]
  %v10449 = vld [vmem:[%s10442 + $0x18] sm:$0xf]
  %v10450 = vld [vmem:[%s10442 + $0x1c] sm:$0xf]
  %v10451 = vld [vmem:[%s10442 + $0x20] sm:$0xf]
  %v10452 = vld [vmem:[%s10442 + $0x24] sm:$0xf]
  %v10453 = vld [vmem:[%s10442 + $0x28] sm:$0xf]
  %v10454 = vld [vmem:[%s10442 + $0x2c] sm:$0xf]
  %v10455 = vld [vmem:[%s10442 + $0x30] sm:$0xf]
  %v10456 = vld [vmem:[%s10442 + $0x34] sm:$0xf]
  %v10457 = vld [vmem:[%s10442 + $0x38] sm:$0xf]
  %v10458 = vld [vmem:[%s10442 + $0x3c] sm:$0xf]
  %v10475 = vunpack.c.l.b16 %v10443
  %v10476 = vunpack.c.l.b16 %v10444
  %v10477 = vunpack.c.l.b16 %v10445
  %v10478 = vunpack.c.l.b16 %v10446
  %v10479 = vunpack.c.l.b16 %v10447
  %v10480 = vunpack.c.l.b16 %v10448
  %v10481 = vunpack.c.l.b16 %v10449
  %v10482 = vunpack.c.l.b16 %v10450
  %v10483 = vunpack.c.l.b16 %v10451
  %v10484 = vunpack.c.l.b16 %v10452
  %v10485 = vunpack.c.l.b16 %v10453
  %v10486 = vunpack.c.l.b16 %v10454
  %v10487 = vunpack.c.l.b16 %v10455
  %v10488 = vunpack.c.l.b16 %v10456
  %v10489 = vunpack.c.l.b16 %v10457
  %v10490 = vunpack.c.l.b16 %v10458
  %v10491 = vpack.c.b16 %v10476, %v10475
  %v10492 = vpack.c.b16 %v10478, %v10477
  %v10493 = vpack.c.b16 %v10480, %v10479
  %v10494 = vpack.c.b16 %v10482, %v10481
  %v10495 = vpack.c.b16 %v10484, %v10483
  %v10496 = vpack.c.b16 %v10486, %v10485
  %v10497 = vpack.c.b16 %v10488, %v10487
  %v10498 = vpack.c.b16 %v10490, %v10489
  %10507 = vmatprep.subr.bf16.mxu0 0
  %10508 = vmatpush1.bf16.msra.mxu0 %v10491
  %10509 = vmatprep.subr.bf16.mxu0 0
  %10510 = vmatpush1.bf16.msra.mxu0 %v10492
  %10511 = vmatprep.subr.bf16.mxu0 0
  %10512 = vmatpush1.bf16.msra.mxu0 %v10493
  %10513 = vmatprep.subr.bf16.mxu0 0
  %10514 = vmatpush1.bf16.msra.mxu0 %v10494
  %10515 = vmatprep.subr.bf16.mxu0 0
  %10516 = vmatpush1.bf16.msra.mxu0 %v10495
  %10517 = vmatprep.subr.bf16.mxu0 0
  %10518 = vmatpush1.bf16.msra.mxu0 %v10496
  %10519 = vmatprep.subr.bf16.mxu0 0
  %10520 = vmatpush1.bf16.msra.mxu0 %v10497
  %10521 = vmatprep.subr.bf16.mxu0 0
  %10522 = vmatpush1.bf16.msra.mxu0 %v10498
  %10523 = vmatprep.subr.bf16.mxu0 0
  %10524 = vmatpush1.bf16.msra.mxu0 0
  %10525 = vmatprep.subr.bf16.mxu0 0
  %10526 = vmatpush1.bf16.msra.mxu0 0
  %10527 = vmatprep.subr.bf16.mxu0 0
  %10528 = vmatpush1.bf16.msra.mxu0 0
  %10529 = vmatprep.subr.bf16.mxu0 0
  %10530 = vmatpush1.bf16.msra.mxu0 0
  %10531 = vmatprep.subr.bf16.mxu0 0
  %10532 = vmatpush1.bf16.msra.mxu0 0
  %10533 = vmatprep.subr.bf16.mxu0 0
  %10534 = vmatpush1.bf16.msra.mxu0 0
  %10535 = vmatprep.subr.bf16.mxu0 0
  %10536 = vmatpush1.bf16.msra.mxu0 0
  %10537 = vmatprep.subr.bf16.mxu0 0
  %10538 = vmatpush1.bf16.msra.mxu0 0
  %10539 = vmatprep.mubr.bf16.mxu0 0
  %10540 = vmatmul.mubr.bf16.gmra.mrb[0].mxu0 %v10229
  %v10541 = vpop.f32.mrb[0].mxu0
  %v10542 = vadd.f32 0.0, %v10541
  %v10543 = vpop.f32.mrb[0].mxu0
  %v10544 = vpop.f32.mrb[0].mxu0
  %v10545 = vpop.f32.mrb[0].mxu0
  %10546 = vdwg.mxu0
  %v10547 = vadd.f32 %v10120, %v10542
  %s10548 = scalar_lea.vmem %s7, 2240
  %v10549 = vld [vmem:[%s10548] sm:$0xf]
  %v10550 = vld [vmem:[%s10548 + $0x4] sm:$0xf]
  %v10551 = vld [vmem:[%s10548 + $0x8] sm:$0xf]
  %v10552 = vld [vmem:[%s10548 + $0xc] sm:$0xf]
  %v10553 = vld [vmem:[%s10548 + $0x10] sm:$0xf]
  %v10554 = vld [vmem:[%s10548 + $0x14] sm:$0xf]
  %v10555 = vld [vmem:[%s10548 + $0x18] sm:$0xf]
  %v10556 = vld [vmem:[%s10548 + $0x1c] sm:$0xf]
  %v10557 = vld [vmem:[%s10548 + $0x20] sm:$0xf]
  %v10558 = vld [vmem:[%s10548 + $0x24] sm:$0xf]
  %v10559 = vld [vmem:[%s10548 + $0x28] sm:$0xf]
  %v10560 = vld [vmem:[%s10548 + $0x2c] sm:$0xf]
  %v10561 = vld [vmem:[%s10548 + $0x30] sm:$0xf]
  %v10562 = vld [vmem:[%s10548 + $0x34] sm:$0xf]
  %v10563 = vld [vmem:[%s10548 + $0x38] sm:$0xf]
  %v10564 = vld [vmem:[%s10548 + $0x3c] sm:$0xf]
  %v10581 = vunpack.c.l.b16 %v10549
  %v10582 = vunpack.c.l.b16 %v10550
  %v10583 = vunpack.c.l.b16 %v10551
  %v10584 = vunpack.c.l.b16 %v10552
  %v10585 = vunpack.c.l.b16 %v10553
  %v10586 = vunpack.c.l.b16 %v10554
  %v10587 = vunpack.c.l.b16 %v10555
  %v10588 = vunpack.c.l.b16 %v10556
  %v10589 = vunpack.c.l.b16 %v10557
  %v10590 = vunpack.c.l.b16 %v10558
  %v10591 = vunpack.c.l.b16 %v10559
  %v10592 = vunpack.c.l.b16 %v10560
  %v10593 = vunpack.c.l.b16 %v10561
  %v10594 = vunpack.c.l.b16 %v10562
  %v10595 = vunpack.c.l.b16 %v10563
  %v10596 = vunpack.c.l.b16 %v10564
  %v10597 = vpack.c.b16 %v10582, %v10581
  %v10598 = vpack.c.b16 %v10584, %v10583
  %v10599 = vpack.c.b16 %v10586, %v10585
  %v10600 = vpack.c.b16 %v10588, %v10587
  %v10601 = vpack.c.b16 %v10590, %v10589
  %v10602 = vpack.c.b16 %v10592, %v10591
  %v10603 = vpack.c.b16 %v10594, %v10593
  %v10604 = vpack.c.b16 %v10596, %v10595
  %10613 = vmatprep.subr.bf16.mxu0 0
  %10614 = vmatpush1.bf16.msra.mxu0 %v10597
  %10615 = vmatprep.subr.bf16.mxu0 0
  %10616 = vmatpush1.bf16.msra.mxu0 %v10598
  %10617 = vmatprep.subr.bf16.mxu0 0
  %10618 = vmatpush1.bf16.msra.mxu0 %v10599
  %10619 = vmatprep.subr.bf16.mxu0 0
  %10620 = vmatpush1.bf16.msra.mxu0 %v10600
  %10621 = vmatprep.subr.bf16.mxu0 0
  %10622 = vmatpush1.bf16.msra.mxu0 %v10601
  %10623 = vmatprep.subr.bf16.mxu0 0
  %10624 = vmatpush1.bf16.msra.mxu0 %v10602
  %10625 = vmatprep.subr.bf16.mxu0 0
  %10626 = vmatpush1.bf16.msra.mxu0 %v10603
  %10627 = vmatprep.subr.bf16.mxu0 0
  %10628 = vmatpush1.bf16.msra.mxu0 %v10604
  %10629 = vmatprep.subr.bf16.mxu0 0
  %10630 = vmatpush1.bf16.msra.mxu0 0
  %10631 = vmatprep.subr.bf16.mxu0 0
  %10632 = vmatpush1.bf16.msra.mxu0 0
  %10633 = vmatprep.subr.bf16.mxu0 0
  %10634 = vmatpush1.bf16.msra.mxu0 0
  %10635 = vmatprep.subr.bf16.mxu0 0
  %10636 = vmatpush1.bf16.msra.mxu0 0
  %10637 = vmatprep.subr.bf16.mxu0 0
  %10638 = vmatpush1.bf16.msra.mxu0 0
  %10639 = vmatprep.subr.bf16.mxu0 0
  %10640 = vmatpush1.bf16.msra.mxu0 0
  %10641 = vmatprep.subr.bf16.mxu0 0
  %10642 = vmatpush1.bf16.msra.mxu0 0
  %10643 = vmatprep.subr.bf16.mxu0 0
  %10644 = vmatpush1.bf16.msra.mxu0 0
  %10645 = vmatprep.mubr.bf16.mxu0 0
  %10646 = vmatmul.mubr.bf16.gmra.mrb[0].mxu0 %v10229
  %v10647 = vpop.f32.mrb[0].mxu0
  %v10648 = vadd.f32 0.0, %v10647
  %v10649 = vpop.f32.mrb[0].mxu0
  %v10650 = vpop.f32.mrb[0].mxu0
  %v10651 = vpop.f32.mrb[0].mxu0
  %10652 = vdwg.mxu0
  %v10653 = vadd.f32 %v10226, %v10648
  %v10654 = vtanh.pop %v10335
  %v10655 = vpack.c.bf16 %v10654, %v10654
  %v10656 = vld [vmem:[%s9] sm:$0xf]
  %v10657 = vld [vmem:[%s9 + $0x4] sm:$0xf]
  %v10658 = vld [vmem:[%s9 + $0x8] sm:$0xf]
  %v10659 = vld [vmem:[%s9 + $0xc] sm:$0xf]
  %v10660 = vld [vmem:[%s9 + $0x10] sm:$0xf]
  %v10661 = vld [vmem:[%s9 + $0x14] sm:$0xf]
  %v10662 = vld [vmem:[%s9 + $0x18] sm:$0xf]
  %v10663 = vld [vmem:[%s9 + $0x1c] sm:$0xf]
  %v10664 = vld [vmem:[%s9 + $0x20] sm:$0xf]
  %v10665 = vld [vmem:[%s9 + $0x24] sm:$0xf]
  %v10666 = vld [vmem:[%s9 + $0x28] sm:$0xf]
  %v10667 = vld [vmem:[%s9 + $0x2c] sm:$0xf]
  %v10668 = vld [vmem:[%s9 + $0x30] sm:$0xf]
  %v10669 = vld [vmem:[%s9 + $0x34] sm:$0xf]
  %v10670 = vld [vmem:[%s9 + $0x38] sm:$0xf]
  %v10671 = vld [vmem:[%s9 + $0x3c] sm:$0xf]
  %v10672 = vld [vmem:[%s10] sm:$0x1]
  %v10689 = vunpack.c.l.b16 %v10656
  %v10690 = vunpack.c.l.b16 %v10657
  %v10691 = vunpack.c.l.b16 %v10658
  %v10692 = vunpack.c.l.b16 %v10659
  %v10693 = vunpack.c.l.b16 %v10660
  %v10694 = vunpack.c.l.b16 %v10661
  %v10695 = vunpack.c.l.b16 %v10662
  %v10696 = vunpack.c.l.b16 %v10663
  %v10697 = vunpack.c.l.b16 %v10664
  %v10698 = vunpack.c.l.b16 %v10665
  %v10699 = vunpack.c.l.b16 %v10666
  %v10700 = vunpack.c.l.b16 %v10667
  %v10701 = vunpack.c.l.b16 %v10668
  %v10702 = vunpack.c.l.b16 %v10669
  %v10703 = vunpack.c.l.b16 %v10670
  %v10704 = vunpack.c.l.b16 %v10671
  %v10705 = vpack.c.b16 %v10690, %v10689
  %v10706 = vpack.c.b16 %v10692, %v10691
  %v10707 = vpack.c.b16 %v10694, %v10693
  %v10708 = vpack.c.b16 %v10696, %v10695
  %v10709 = vpack.c.b16 %v10698, %v10697
  %v10710 = vpack.c.b16 %v10700, %v10699
  %v10711 = vpack.c.b16 %v10702, %v10701
  %v10712 = vpack.c.b16 %v10704, %v10703
  %10721 = vmatprep.subr.bf16.mxu0 0
  %10722 = vmatpush1.bf16.msra.mxu0 %v10705
  %10723 = vmatprep.subr.bf16.mxu0 0
  %10724 = vmatpush1.bf16.msra.mxu0 %v10706
  %10725 = vmatprep.subr.bf16.mxu0 0
  %10726 = vmatpush1.bf16.msra.mxu0 %v10707
  %10727 = vmatprep.subr.bf16.mxu0 0
  %10728 = vmatpush1.bf16.msra.mxu0 %v10708
  %10729 = vmatprep.subr.bf16.mxu0 0
  %10730 = vmatpush1.bf16.msra.mxu0 %v10709
  %10731 = vmatprep.subr.bf16.mxu0 0
  %10732 = vmatpush1.bf16.msra.mxu0 %v10710
  %10733 = vmatprep.subr.bf16.mxu0 0
  %10734 = vmatpush1.bf16.msra.mxu0 %v10711
  %10735 = vmatprep.subr.bf16.mxu0 0
  %10736 = vmatpush1.bf16.msra.mxu0 %v10712
  %10737 = vmatprep.subr.bf16.mxu0 0
  %10738 = vmatpush1.bf16.msra.mxu0 0
  %10739 = vmatprep.subr.bf16.mxu0 0
  %10740 = vmatpush1.bf16.msra.mxu0 0
  %10741 = vmatprep.subr.bf16.mxu0 0
  %10742 = vmatpush1.bf16.msra.mxu0 0
  %10743 = vmatprep.subr.bf16.mxu0 0
  %10744 = vmatpush1.bf16.msra.mxu0 0
  %10745 = vmatprep.subr.bf16.mxu0 0
  %10746 = vmatpush1.bf16.msra.mxu0 0
  %10747 = vmatprep.subr.bf16.mxu0 0
  %10748 = vmatpush1.bf16.msra.mxu0 0
  %10749 = vmatprep.subr.bf16.mxu0 0
  %10750 = vmatpush1.bf16.msra.mxu0 0
  %10751 = vmatprep.subr.bf16.mxu0 0
  %10752 = vmatpush1.bf16.msra.mxu0 0
  %10753 = vmatprep.mubr.bf16.mxu0 0
  %10754 = vmatmul.mubr.bf16.gmra.mrb[0].mxu0 %v10655
  %v10755 = vpop.f32.mrb[0].mxu0
  %v10756 = vadd.f32 %v10672, %v10755
  %v10757 = vpop.f32.mrb[0].mxu0
  %v10758 = vpop.f32.mrb[0].mxu0
  %v10759 = vpop.f32.mrb[0].mxu0
  %10760 = vdwg.mxu0
  %vm10761 = vcmask 73728
  %10762 = vst.msk [vmem:[%s11] sm:$0x1] %vm10761, %v10756
  %v10763 = vtanh.pop %v10441
  %v10764 = vpack.c.bf16 %v10763, %v10763
  %v10765 = vld [vmem:[%s9] sm:$0xf]
  %v10766 = vld [vmem:[%s9 + $0x4] sm:$0xf]
  %v10767 = vld [vmem:[%s9 + $0x8] sm:$0xf]
  %v10768 = vld [vmem:[%s9 + $0xc] sm:$0xf]
  %v10769 = vld [vmem:[%s9 + $0x10] sm:$0xf]
  %v10770 = vld [vmem:[%s9 + $0x14] sm:$0xf]
  %v10771 = vld [vmem:[%s9 + $0x18] sm:$0xf]
  %v10772 = vld [vmem:[%s9 + $0x1c] sm:$0xf]
  %v10773 = vld [vmem:[%s9 + $0x20] sm:$0xf]
  %v10774 = vld [vmem:[%s9 + $0x24] sm:$0xf]
  %v10775 = vld [vmem:[%s9 + $0x28] sm:$0xf]
  %v10776 = vld [vmem:[%s9 + $0x2c] sm:$0xf]
  %v10777 = vld [vmem:[%s9 + $0x30] sm:$0xf]
  %v10778 = vld [vmem:[%s9 + $0x34] sm:$0xf]
  %v10779 = vld [vmem:[%s9 + $0x38] sm:$0xf]
  %v10780 = vld [vmem:[%s9 + $0x3c] sm:$0xf]
  %v10781 = vld [vmem:[%s10] sm:$0x1]
  %v10798 = vunpack.c.l.b16 %v10765
  %v10799 = vunpack.c.l.b16 %v10766
  %v10800 = vunpack.c.l.b16 %v10767
  %v10801 = vunpack.c.l.b16 %v10768
  %v10802 = vunpack.c.l.b16 %v10769
  %v10803 = vunpack.c.l.b16 %v10770
  %v10804 = vunpack.c.l.b16 %v10771
  %v10805 = vunpack.c.l.b16 %v10772
  %v10806 = vunpack.c.l.b16 %v10773
  %v10807 = vunpack.c.l.b16 %v10774
  %v10808 = vunpack.c.l.b16 %v10775
  %v10809 = vunpack.c.l.b16 %v10776
  %v10810 = vunpack.c.l.b16 %v10777
  %v10811 = vunpack.c.l.b16 %v10778
  %v10812 = vunpack.c.l.b16 %v10779
  %v10813 = vunpack.c.l.b16 %v10780
  %v10814 = vpack.c.b16 %v10799, %v10798
  %v10815 = vpack.c.b16 %v10801, %v10800
  %v10816 = vpack.c.b16 %v10803, %v10802
  %v10817 = vpack.c.b16 %v10805, %v10804
  %v10818 = vpack.c.b16 %v10807, %v10806
  %v10819 = vpack.c.b16 %v10809, %v10808
  %v10820 = vpack.c.b16 %v10811, %v10810
  %v10821 = vpack.c.b16 %v10813, %v10812
  %10830 = vmatprep.subr.bf16.mxu0 0
  %10831 = vmatpush1.bf16.msra.mxu0 %v10814
  %10832 = vmatprep.subr.bf16.mxu0 0
  %10833 = vmatpush1.bf16.msra.mxu0 %v10815
  %10834 = vmatprep.subr.bf16.mxu0 0
  %10835 = vmatpush1.bf16.msra.mxu0 %v10816
  %10836 = vmatprep.subr.bf16.mxu0 0
  %10837 = vmatpush1.bf16.msra.mxu0 %v10817
  %10838 = vmatprep.subr.bf16.mxu0 0
  %10839 = vmatpush1.bf16.msra.mxu0 %v10818
  %10840 = vmatprep.subr.bf16.mxu0 0
  %10841 = vmatpush1.bf16.msra.mxu0 %v10819
  %10842 = vmatprep.subr.bf16.mxu0 0
  %10843 = vmatpush1.bf16.msra.mxu0 %v10820
  %10844 = vmatprep.subr.bf16.mxu0 0
  %10845 = vmatpush1.bf16.msra.mxu0 %v10821
  %10846 = vmatprep.subr.bf16.mxu0 0
  %10847 = vmatpush1.bf16.msra.mxu0 0
  %10848 = vmatprep.subr.bf16.mxu0 0
  %10849 = vmatpush1.bf16.msra.mxu0 0
  %10850 = vmatprep.subr.bf16.mxu0 0
  %10851 = vmatpush1.bf16.msra.mxu0 0
  %10852 = vmatprep.subr.bf16.mxu0 0
  %10853 = vmatpush1.bf16.msra.mxu0 0
  %10854 = vmatprep.subr.bf16.mxu0 0
  %10855 = vmatpush1.bf16.msra.mxu0 0
  %10856 = vmatprep.subr.bf16.mxu0 0
  %10857 = vmatpush1.bf16.msra.mxu0 0
  %10858 = vmatprep.subr.bf16.mxu0 0
  %10859 = vmatpush1.bf16.msra.mxu0 0
  %10860 = vmatprep.subr.bf16.mxu0 0
  %10861 = vmatpush1.bf16.msra.mxu0 0
  %10862 = vmatprep.mubr.bf16.mxu0 0
  %10863 = vmatmul.mubr.bf16.gmra.mrb[0].mxu0 %v10764
  %v10864 = vpop.f32.mrb[0].mxu0
  %v10865 = vadd.f32 %v10781, %v10864
  %v10866 = vpop.f32.mrb[0].mxu0
  %v10867 = vpop.f32.mrb[0].mxu0
  %v10868 = vpop.f32.mrb[0].mxu0
  %10869 = vdwg.mxu0
  %10870 = vst.msk [vmem:[%s11 + $0x1] sm:$0x1] %vm10761, %v10865
  %v10871 = vtanh.pop %v10547
  %v10872 = vpack.c.bf16 %v10871, %v10871
  %v10873 = vld [vmem:[%s9] sm:$0xf]
  %v10874 = vld [vmem:[%s9 + $0x4] sm:$0xf]
  %v10875 = vld [vmem:[%s9 + $0x8] sm:$0xf]
  %v10876 = vld [vmem:[%s9 + $0xc] sm:$0xf]
  %v10877 = vld [vmem:[%s9 + $0x10] sm:$0xf]
  %v10878 = vld [vmem:[%s9 + $0x14] sm:$0xf]
  %v10879 = vld [vmem:[%s9 + $0x18] sm:$0xf]
  %v10880 = vld [vmem:[%s9 + $0x1c] sm:$0xf]
  %v10881 = vld [vmem:[%s9 + $0x20] sm:$0xf]
  %v10882 = vld [vmem:[%s9 + $0x24] sm:$0xf]
  %v10883 = vld [vmem:[%s9 + $0x28] sm:$0xf]
  %v10884 = vld [vmem:[%s9 + $0x2c] sm:$0xf]
  %v10885 = vld [vmem:[%s9 + $0x30] sm:$0xf]
  %v10886 = vld [vmem:[%s9 + $0x34] sm:$0xf]
  %v10887 = vld [vmem:[%s9 + $0x38] sm:$0xf]
  %v10888 = vld [vmem:[%s9 + $0x3c] sm:$0xf]
  %v10889 = vld [vmem:[%s10] sm:$0x1]
  %v10906 = vunpack.c.l.b16 %v10873
  %v10907 = vunpack.c.l.b16 %v10874
  %v10908 = vunpack.c.l.b16 %v10875
  %v10909 = vunpack.c.l.b16 %v10876
  %v10910 = vunpack.c.l.b16 %v10877
  %v10911 = vunpack.c.l.b16 %v10878
  %v10912 = vunpack.c.l.b16 %v10879
  %v10913 = vunpack.c.l.b16 %v10880
  %v10914 = vunpack.c.l.b16 %v10881
  %v10915 = vunpack.c.l.b16 %v10882
  %v10916 = vunpack.c.l.b16 %v10883
  %v10917 = vunpack.c.l.b16 %v10884
  %v10918 = vunpack.c.l.b16 %v10885
  %v10919 = vunpack.c.l.b16 %v10886
  %v10920 = vunpack.c.l.b16 %v10887
  %v10921 = vunpack.c.l.b16 %v10888
  %v10922 = vpack.c.b16 %v10907, %v10906
  %v10923 = vpack.c.b16 %v10909, %v10908
  %v10924 = vpack.c.b16 %v10911, %v10910
  %v10925 = vpack.c.b16 %v10913, %v10912
  %v10926 = vpack.c.b16 %v10915, %v10914
  %v10927 = vpack.c.b16 %v10917, %v10916
  %v10928 = vpack.c.b16 %v10919, %v10918
  %v10929 = vpack.c.b16 %v10921, %v10920
  %10938 = vmatprep.subr.bf16.mxu0 0
  %10939 = vmatpush1.bf16.msra.mxu0 %v10922
  %10940 = vmatprep.subr.bf16.mxu0 0
  %10941 = vmatpush1.bf16.msra.mxu0 %v10923
  %10942 = vmatprep.subr.bf16.mxu0 0
  %10943 = vmatpush1.bf16.msra.mxu0 %v10924
  %10944 = vmatprep.subr.bf16.mxu0 0
  %10945 = vmatpush1.bf16.msra.mxu0 %v10925
  %10946 = vmatprep.subr.bf16.mxu0 0
  %10947 = vmatpush1.bf16.msra.mxu0 %v10926
  %10948 = vmatprep.subr.bf16.mxu0 0
  %10949 = vmatpush1.bf16.msra.mxu0 %v10927
  %10950 = vmatprep.subr.bf16.mxu0 0
  %10951 = vmatpush1.bf16.msra.mxu0 %v10928
  %10952 = vmatprep.subr.bf16.mxu0 0
  %10953 = vmatpush1.bf16.msra.mxu0 %v10929
  %10954 = vmatprep.subr.bf16.mxu0 0
  %10955 = vmatpush1.bf16.msra.mxu0 0
  %10956 = vmatprep.subr.bf16.mxu0 0
  %10957 = vmatpush1.bf16.msra.mxu0 0
  %10958 = vmatprep.subr.bf16.mxu0 0
  %10959 = vmatpush1.bf16.msra.mxu0 0
  %10960 = vmatprep.subr.bf16.mxu0 0
  %10961 = vmatpush1.bf16.msra.mxu0 0
  %10962 = vmatprep.subr.bf16.mxu0 0
  %10963 = vmatpush1.bf16.msra.mxu0 0
  %10964 = vmatprep.subr.bf16.mxu0 0
  %10965 = vmatpush1.bf16.msra.mxu0 0
  %10966 = vmatprep.subr.bf16.mxu0 0
  %10967 = vmatpush1.bf16.msra.mxu0 0
  %10968 = vmatprep.subr.bf16.mxu0 0
  %10969 = vmatpush1.bf16.msra.mxu0 0
  %10970 = vmatprep.mubr.bf16.mxu0 0
  %10971 = vmatmul.mubr.bf16.gmra.mrb[0].mxu0 %v10872
  %v10972 = vpop.f32.mrb[0].mxu0
  %v10973 = vadd.f32 %v10889, %v10972
  %v10974 = vpop.f32.mrb[0].mxu0
  %v10975 = vpop.f32.mrb[0].mxu0
  %v10976 = vpop.f32.mrb[0].mxu0
  %10977 = vdwg.mxu0
  %10978 = vst.msk [vmem:[%s11 + $0x2] sm:$0x1] %vm10761, %v10973
  %v10979 = vtanh.pop %v10653
  %v10980 = vpack.c.bf16 %v10979, %v10979
  %v10981 = vld [vmem:[%s9] sm:$0xf]
  %v10982 = vld [vmem:[%s9 + $0x4] sm:$0xf]
  %v10983 = vld [vmem:[%s9 + $0x8] sm:$0xf]
  %v10984 = vld [vmem:[%s9 + $0xc] sm:$0xf]
  %v10985 = vld [vmem:[%s9 + $0x10] sm:$0xf]
  %v10986 = vld [vmem:[%s9 + $0x14] sm:$0xf]
  %v10987 = vld [vmem:[%s9 + $0x18] sm:$0xf]
  %v10988 = vld [vmem:[%s9 + $0x1c] sm:$0xf]
  %v10989 = vld [vmem:[%s9 + $0x20] sm:$0xf]
  %v10990 = vld [vmem:[%s9 + $0x24] sm:$0xf]
  %v10991 = vld [vmem:[%s9 + $0x28] sm:$0xf]
  %v10992 = vld [vmem:[%s9 + $0x2c] sm:$0xf]
  %v10993 = vld [vmem:[%s9 + $0x30] sm:$0xf]
  %v10994 = vld [vmem:[%s9 + $0x34] sm:$0xf]
  %v10995 = vld [vmem:[%s9 + $0x38] sm:$0xf]
  %v10996 = vld [vmem:[%s9 + $0x3c] sm:$0xf]
  %v10997 = vld [vmem:[%s10] sm:$0x1]
  %v11014 = vunpack.c.l.b16 %v10981
  %v11015 = vunpack.c.l.b16 %v10982
  %v11016 = vunpack.c.l.b16 %v10983
  %v11017 = vunpack.c.l.b16 %v10984
  %v11018 = vunpack.c.l.b16 %v10985
  %v11019 = vunpack.c.l.b16 %v10986
  %v11020 = vunpack.c.l.b16 %v10987
  %v11021 = vunpack.c.l.b16 %v10988
  %v11022 = vunpack.c.l.b16 %v10989
  %v11023 = vunpack.c.l.b16 %v10990
  %v11024 = vunpack.c.l.b16 %v10991
  %v11025 = vunpack.c.l.b16 %v10992
  %v11026 = vunpack.c.l.b16 %v10993
  %v11027 = vunpack.c.l.b16 %v10994
  %v11028 = vunpack.c.l.b16 %v10995
  %v11029 = vunpack.c.l.b16 %v10996
  %v11030 = vpack.c.b16 %v11015, %v11014
  %v11031 = vpack.c.b16 %v11017, %v11016
  %v11032 = vpack.c.b16 %v11019, %v11018
  %v11033 = vpack.c.b16 %v11021, %v11020
  %v11034 = vpack.c.b16 %v11023, %v11022
  %v11035 = vpack.c.b16 %v11025, %v11024
  %v11036 = vpack.c.b16 %v11027, %v11026
  %v11037 = vpack.c.b16 %v11029, %v11028
  %11046 = vmatprep.subr.bf16.mxu0 0
  %11047 = vmatpush1.bf16.msra.mxu0 %v11030
  %11048 = vmatprep.subr.bf16.mxu0 0
  %11049 = vmatpush1.bf16.msra.mxu0 %v11031
  %11050 = vmatprep.subr.bf16.mxu0 0
  %11051 = vmatpush1.bf16.msra.mxu0 %v11032
  %11052 = vmatprep.subr.bf16.mxu0 0
  %11053 = vmatpush1.bf16.msra.mxu0 %v11033
  %11054 = vmatprep.subr.bf16.mxu0 0
  %11055 = vmatpush1.bf16.msra.mxu0 %v11034
  %11056 = vmatprep.subr.bf16.mxu0 0
  %11057 = vmatpush1.bf16.msra.mxu0 %v11035
  %11058 = vmatprep.subr.bf16.mxu0 0
  %11059 = vmatpush1.bf16.msra.mxu0 %v11036
  %11060 = vmatprep.subr.bf16.mxu0 0
  %11061 = vmatpush1.bf16.msra.mxu0 %v11037
  %11062 = vmatprep.subr.bf16.mxu0 0
  %11063 = vmatpush1.bf16.msra.mxu0 0
  %11064 = vmatprep.subr.bf16.mxu0 0
  %11065 = vmatpush1.bf16.msra.mxu0 0
  %11066 = vmatprep.subr.bf16.mxu0 0
  %11067 = vmatpush1.bf16.msra.mxu0 0
  %11068 = vmatprep.subr.bf16.mxu0 0
  %11069 = vmatpush1.bf16.msra.mxu0 0
  %11070 = vmatprep.subr.bf16.mxu0 0
  %11071 = vmatpush1.bf16.msra.mxu0 0
  %11072 = vmatprep.subr.bf16.mxu0 0
  %11073 = vmatpush1.bf16.msra.mxu0 0
  %11074 = vmatprep.subr.bf16.mxu0 0
  %11075 = vmatpush1.bf16.msra.mxu0 0
  %11076 = vmatprep.subr.bf16.mxu0 0
  %11077 = vmatpush1.bf16.msra.mxu0 0
  %11078 = vmatprep.mubr.bf16.mxu0 0
  %11079 = vmatmul.mubr.bf16.gmra.mrb[0].mxu0 %v10980
  %v11080 = vpop.f32.mrb[0].mxu0
  %v11081 = vadd.f32 %v10997, %v11080
  %v11082 = vpop.f32.mrb[0].mxu0
  %v11083 = vpop.f32.mrb[0].mxu0
  %v11084 = vpop.f32.mrb[0].mxu0
  %11085 = vdwg.mxu0
  %11086 = vst.msk [vmem:[%s11 + $0x3] sm:$0x1] %vm10761, %v11081
  // Predicated region
  $region46: #{mnist_forward.1} parent=0 // pred_check
    _
  $region47: #{mnist_forward.1} parent=0 // pred_check_branch
    %11088 = sbr.rel (0) target = $region49
  $region48: #{mnist_forward.1} parent=0 // pred_region
    _
  $region49: #{mnist_forward.1} parent=0 // pred_fallthru
    _
  // Predicated region
  $region50: #{mnist_forward.1} parent=0 // pred_check
    _
  $region51: #{mnist_forward.1} parent=0 // pred_check_branch
    %11090 = sbr.rel (0) target = $region53
  $region52: #{mnist_forward.1} parent=0 // pred_region
    _
  $region53: #{mnist_forward.1} parent=0 // pred_fallthru
    _

</llo_original>
